<compile_context>
chip_gen: v7x
topology: tpu7x:2x2x1
jax: 0.10.0
libtpu: 0.0.40
codegen_flags: <defaults>
</compile_context>

<pallas_src>
import functools
import math

import jax
import jax.numpy as jnp
from jax import lax
from jax.experimental import pallas as pl
from jax.experimental.pallas import tpu as pltpu

MOD = 12          # args.modulation (fixed by the forward's assert: last dim == 12)
CNN_DIM = 32      # args.CNN_dim    (synthetic choice)
N_BLOCKS = 1366   # forward asserts the reshaped sequence length is 1366
L_PAD = 1408      # 11 * 128  -> lane-dense length per batch item
C_IN_PAD = 16     # pad 12 input channels to 16 so the tap-stack concat is 8-aligned
BN_EPS = 1e-5
_SQRT_HALF = 0.7071067811865476


def _erf(x):
    # Abramowitz & Stegun 7.1.26; exp/mul/div only (guaranteed Mosaic lowering).
    s = jnp.where(x < 0.0, -1.0, 1.0)
    a = jnp.abs(x)
    t = 1.0 / (1.0 + 0.3275911 * a)
    poly = t * (0.254829592 + t * (-0.284496736 + t * (1.421413741
           + t * (-1.453152027 + t * 1.061405429))))
    return s * (1.0 - poly * jnp.exp(-a * a))


def _gelu(x):
    # Matches torch.nn.functional.gelu (exact / erf formulation).
    return 0.5 * x * (1.0 + _erf(x * _SQRT_HALF))


def _cnn_reduce_kernel(x_ref, valid_ref,
                       w1_ref, g1_ref, be1_ref,
                       w2_ref, g2_ref, be2_ref,
                       o_ref, *, inv_n):
    Lt = x_ref.shape[1]                       # B * L_PAD (lane axis, multiple of 128)
    x = x_ref[...]                            # (C_IN_PAD, Lt)
    valid = valid_ref[...]                    # (1, Lt) float {0,1}

    # ---- conv1: three lane-shifted copies stacked along sublanes -> one matmul ----
    # pltpu.roll matches jnp.roll: roll(x, 1)[l] = x[l-1]; roll(x, Lt-1)[l] = x[l+1].
    # The zero gap between batches (cols 1366..1407 of each batch slot) makes both
    # edge reads zero at every real-column boundary, so no per-shift masking needed.
    prev1 = pltpu.roll(x, shift=1, axis=1)
    next1 = pltpu.roll(x, shift=Lt - 1, axis=1)
    stack1 = jnp.concatenate([prev1, x, next1], axis=0)          # (3*C_IN_PAD, Lt)
    h1 = jnp.dot(w1_ref[...], stack1,
                 preferred_element_type=jnp.float32)             # (32, Lt)
    h1 = h1 * valid                                              # zero padded columns

    # ---- bn1 (training-mode batch stats, single pass) + gelu ----
    s1 = jnp.sum(h1, axis=1, keepdims=True)                      # (32, 1)
    q1 = jnp.sum(h1 * h1, axis=1, keepdims=True)
    mean1 = s1 * inv_n
    var1 = jnp.maximum(q1 * inv_n - mean1 * mean1, 0.0)
    scale1 = lax.rsqrt(var1 + BN_EPS) * g1_ref[...]              # (32, 1)
    shift1 = be1_ref[...] - mean1 * scale1
    a1 = _gelu(h1 * scale1 + shift1) * valid                     # (32, Lt), 0 in pad cols

    # ---- conv2 ----
    prev2 = pltpu.roll(a1, shift=1, axis=1)
    next2 = pltpu.roll(a1, shift=Lt - 1, axis=1)
    stack2 = jnp.concatenate([prev2, a1, next2], axis=0)         # (96, Lt)
    h2 = jnp.dot(w2_ref[...], stack2,
                 preferred_element_type=jnp.float32)             # (12, Lt)
    h2 = h2 * valid

    # ---- bn2 + gelu ----
    s2 = jnp.sum(h2, axis=1, keepdims=True)                      # (12, 1)
    q2 = jnp.sum(h2 * h2, axis=1, keepdims=True)
    mean2 = s2 * inv_n
    var2 = jnp.maximum(q2 * inv_n - mean2 * mean2, 0.0)
    scale2 = lax.rsqrt(var2 + BN_EPS) * g2_ref[...]
    shift2 = be2_ref[...] - mean2 * scale2
    # Pad columns of the output are sliced off in the wrapper; no mask needed here.
    o_ref[...] = _gelu(h2 * scale2 + shift2).astype(o_ref.dtype)


def _pallas_cnn(xk, valid, w1s, g1, be1, w2s, g2, be2, n_real):
    c_out, lt = MOD, xk.shape[1]
    kern = functools.partial(_cnn_reduce_kernel, inv_n=1.0 / float(n_real))
    vmem = pl.BlockSpec(memory_space=pltpu.MemorySpace.VMEM)     # full arrays in VMEM

    # Exact roofline-style hints for XLA's scheduler.
    flops = 2 * (CNN_DIM * 3 * C_IN_PAD + MOD * 3 * CNN_DIM) * lt
    transcendentals = (CNN_DIM + MOD) * lt                       # one exp per gelu elem
    bytes_accessed = 4 * ((C_IN_PAD + 1 + MOD) * lt              # x, valid, out
                          + CNN_DIM * 3 * C_IN_PAD + MOD * 3 * CNN_DIM
                          + 2 * (CNN_DIM + MOD))

    return pl.pallas_call(
        kern,
        out_shape=jax.ShapeDtypeStruct((c_out, lt), jnp.float32),
        in_specs=[vmem] * 8,
        out_specs=vmem,
        cost_estimate=pl.CostEstimate(
            flops=flops, transcendentals=transcendentals,
            bytes_accessed=bytes_accessed),
    )(xk, valid, w1s, g1, be1, w2s, g2, be2)


def cnn_reduce(x, params, modulation=MOD):
    # Padding / view / permute glue stays in plain JAX (fused into one copy by XLA).
    B, seq_len = x.shape
    desired = math.ceil(seq_len / modulation) * modulation
    pad = desired - seq_len
    if pad > 0:
        x = jnp.pad(x, ((0, 0), (0, pad)))
    x = x.reshape(B, desired // modulation, modulation)
    assert x.shape[1] == N_BLOCKS and x.shape[2] == MOD, f"x.shape is {x.shape}"
    x = x.astype(jnp.float32)

    # (B, L, C) -> zero-pad L to 1408 and C to 16 -> (C, B*L_PAD) lane-concat of batches.
    x = jnp.pad(x, ((0, 0), (0, L_PAD - N_BLOCKS), (0, C_IN_PAD - MOD)))
    xk = jnp.transpose(x, (2, 0, 1)).reshape(C_IN_PAD, B * L_PAD)

    # {0,1} column-valid mask (real columns of each batch item).
    valid_row = (jnp.arange(L_PAD) < N_BLOCKS).astype(jnp.float32)
    valid = jnp.broadcast_to(valid_row[None, :], (B, L_PAD)).reshape(1, B * L_PAD)

    # Stacked conv weights: (C_out, 3*C_in) ordered [k=0 (prev) | k=1 (center) | k=2 (next)].
    # Conv biases b1/b2 are omitted: they are cancelled exactly by the BN mean subtraction.
    w1 = jnp.pad(params["w1"], ((0, 0), (0, C_IN_PAD - MOD), (0, 0)))       # (32, 16, 3)
    w1s = jnp.concatenate([w1[:, :, 0], w1[:, :, 1], w1[:, :, 2]], axis=1)  # (32, 48)
    w2 = params["w2"]                                                        # (12, 32, 3)
    w2s = jnp.concatenate([w2[:, :, 0], w2[:, :, 1], w2[:, :, 2]], axis=1)  # (12, 96)

    g1 = params["g1"].reshape(-1, 1)
    be1 = params["be1"].reshape(-1, 1)
    g2 = params["g2"].reshape(-1, 1)
    be2 = params["be2"].reshape(-1, 1)

    y = _pallas_cnn(xk, valid, w1s, g1, be1, w2s, g2, be2, B * N_BLOCKS)  # (12, B*L_PAD)
    y = y.reshape(MOD, B, L_PAD)[:, :, :N_BLOCKS]                         # (12, B, 1366)
    return jnp.transpose(y, (1, 2, 0))                                    # (B, 1366, 12)


def init_params(key):
    # Deterministic synthetic init mirroring torch defaults (kaiming-uniform-ish conv
    # weights/biases; BN gamma=1, beta=0).  b1/b2 are kept for fidelity but are not
    # passed to the kernel (mathematically dead under training-mode BatchNorm).
    k0, k1, k2, k3 = jax.random.split(key, 4)
    bound1 = 1.0 / math.sqrt(MOD * 3)
    bound2 = 1.0 / math.sqrt(CNN_DIM * 3)
    return dict(
        w1=jax.random.uniform(k0, (CNN_DIM, MOD, 3), jnp.float32, -bound1, bound1),
        b1=jax.random.uniform(k1, (CNN_DIM,), jnp.float32, -bound1, bound1),
        g1=jnp.ones((CNN_DIM,), jnp.float32),
        be1=jnp.zeros((CNN_DIM,), jnp.float32),
        w2=jax.random.uniform(k2, (MOD, CNN_DIM, 3), jnp.float32, -bound2, bound2),
        b2=jax.random.uniform(k3, (MOD,), jnp.float32, -bound2, bound2),
        g2=jnp.ones((MOD,), jnp.float32),
        be2=jnp.zeros((MOD,), jnp.float32),
    )


if __name__ == "__main__":
    key = jax.random.PRNGKey(0)
    k_x, k_p = jax.random.split(key)
    # seq_len chosen so that ceil(seq/12)*12 = 16392 -> 1366 blocks of 12 (required by
    # the forward's assert); 16385 also exercises the zero-padding branch.
    batch, seq_len = 2, 16385
    x = jax.random.normal(k_x, (batch, seq_len), jnp.float32)
    params = init_params(k_p)

    y = jax.jit(cnn_reduce)(x, params)
    y = jax.block_until_ready(y)
    assert y.shape == (batch, N_BLOCKS, MOD), y.shape
    assert bool(jnp.all(jnp.isfinite(y)))
    print("KERNEL_OK")
</pallas_src>

<mosaic_0001>
module attributes {stable_mosaic.version = 11 : i64} {
  func.func @_cnn_reduce_kernel(%arg0: memref<16x2816xf32, #tpu.memory_space<vmem>>, %arg1: memref<1x2816xf32, #tpu.memory_space<vmem>>, %arg2: memref<32x48xf32, #tpu.memory_space<vmem>>, %arg3: memref<32x1xf32, #tpu.memory_space<vmem>>, %arg4: memref<32x1xf32, #tpu.memory_space<vmem>>, %arg5: memref<12x96xf32, #tpu.memory_space<vmem>>, %arg6: memref<12x1xf32, #tpu.memory_space<vmem>>, %arg7: memref<12x1xf32, #tpu.memory_space<vmem>>, %arg8: memref<12x2816xf32, #tpu.memory_space<vmem>>) attributes {dimension_semantics = [], scalar_prefetch = 0 : i64, scratch_operands = 0 : i64, tpu.core_type = #tpu.core_type<tc>} {
    %c0 = arith.constant 0 : index
    %c0_0 = arith.constant 0 : index
    %0 = vector.load %arg0[%c0, %c0_0] : memref<16x2816xf32, #tpu.memory_space<vmem>>, vector<16x2816xf32>
    %c0_1 = arith.constant 0 : index
    %c0_2 = arith.constant 0 : index
    %1 = vector.load %arg1[%c0_1, %c0_2] : memref<1x2816xf32, #tpu.memory_space<vmem>>, vector<1x2816xf32>
    %c1_i32 = arith.constant 1 : i32
    %2 = tpu.dynamic_rotate %0 by %c1_i32 dim 1 : vector<16x2816xf32>, i32 -> vector<16x2816xf32>
    %c2815_i32 = arith.constant 2815 : i32
    %3 = tpu.dynamic_rotate %0 by %c2815_i32 dim 1 : vector<16x2816xf32>, i32 -> vector<16x2816xf32>
    %4 = tpu.concatenate %2, %0, %3 in 0 : vector<16x2816xf32>, vector<16x2816xf32>, vector<16x2816xf32> -> vector<48x2816xf32>
    %c0_3 = arith.constant 0 : index
    %c0_4 = arith.constant 0 : index
    %5 = vector.load %arg2[%c0_3, %c0_4] : memref<32x48xf32, #tpu.memory_space<vmem>>, vector<32x48xf32>
    %cst = arith.constant dense<0.000000e+00> : vector<32x2816xf32>
    %6 = tpu.matmul %5, %4, %cst {dimension_numbers = #tpu.dot_dimension_numbers<[1], [0], [0], [1], [0, 0, 1, 1], [], []>} : vector<32x48xf32>, vector<48x2816xf32>, vector<32x2816xf32> -> vector<32x2816xf32>
    %7 = vector.broadcast %1 : vector<1x2816xf32> to vector<32x2816xf32>
    %8 = arith.mulf %6, %7 : vector<32x2816xf32>
    %cst_5 = arith.constant dense<0.000000e+00> : vector<32xf32>
    %9 = vector.multi_reduction <add>, %8, %cst_5 [1] : vector<32x2816xf32> to vector<32xf32>
    %10 = vector.shape_cast %9 : vector<32xf32> to vector<32x1xf32>
    %11 = arith.mulf %8, %8 : vector<32x2816xf32>
    %cst_6 = arith.constant dense<0.000000e+00> : vector<32xf32>
    %12 = vector.multi_reduction <add>, %11, %cst_6 [1] : vector<32x2816xf32> to vector<32xf32>
    %13 = vector.shape_cast %12 : vector<32xf32> to vector<32x1xf32>
    %cst_7 = arith.constant 3.66032211E-4 : f32
    %14 = vector.broadcast %cst_7 : f32 to vector<32x1xf32>
    %15 = arith.mulf %10, %14 : vector<32x1xf32>
    %cst_8 = arith.constant 3.66032211E-4 : f32
    %16 = vector.broadcast %cst_8 : f32 to vector<32x1xf32>
    %17 = arith.mulf %13, %16 : vector<32x1xf32>
    %18 = arith.mulf %15, %15 : vector<32x1xf32>
    %19 = arith.subf %17, %18 : vector<32x1xf32>
    %cst_9 = arith.constant 0.000000e+00 : f32
    %20 = vector.broadcast %cst_9 : f32 to vector<32x1xf32>
    %21 = arith.maximumf %19, %20 : vector<32x1xf32>
    %cst_10 = arith.constant 9.99999974E-6 : f32
    %22 = vector.broadcast %cst_10 : f32 to vector<32x1xf32>
    %23 = arith.addf %21, %22 : vector<32x1xf32>
    %24 = math.rsqrt %23 : vector<32x1xf32>
    %c0_11 = arith.constant 0 : index
    %c0_12 = arith.constant 0 : index
    %25 = vector.load %arg3[%c0_11, %c0_12] : memref<32x1xf32, #tpu.memory_space<vmem>>, vector<32x1xf32>
    %26 = arith.mulf %24, %25 : vector<32x1xf32>
    %c0_13 = arith.constant 0 : index
    %c0_14 = arith.constant 0 : index
    %27 = vector.load %arg4[%c0_13, %c0_14] : memref<32x1xf32, #tpu.memory_space<vmem>>, vector<32x1xf32>
    %28 = arith.mulf %15, %26 : vector<32x1xf32>
    %29 = arith.subf %27, %28 : vector<32x1xf32>
    %30 = vector.broadcast %26 : vector<32x1xf32> to vector<32x2816xf32>
    %31 = arith.mulf %8, %30 : vector<32x2816xf32>
    %32 = vector.broadcast %29 : vector<32x1xf32> to vector<32x2816xf32>
    %33 = arith.addf %31, %32 : vector<32x2816xf32>
    %cst_15 = arith.constant 5.000000e-01 : f32
    %34 = vector.broadcast %cst_15 : f32 to vector<32x2816xf32>
    %35 = arith.mulf %34, %33 : vector<32x2816xf32>
    %cst_16 = arith.constant 0.707106769 : f32
    %36 = vector.broadcast %cst_16 : f32 to vector<32x2816xf32>
    %37 = arith.mulf %33, %36 : vector<32x2816xf32>
    %cst_17 = arith.constant 0.000000e+00 : f32
    %38 = vector.broadcast %cst_17 : f32 to vector<32x2816xf32>
    %39 = arith.cmpf olt, %37, %38 : vector<32x2816xf32>
    %cst_18 = arith.constant -1.000000e+00 : f32
    %cst_19 = arith.constant 1.000000e+00 : f32
    %40 = vector.broadcast %cst_18 : f32 to vector<32x2816xf32>
    %41 = vector.broadcast %cst_19 : f32 to vector<32x2816xf32>
    %42 = arith.select %39, %40, %41 : vector<32x2816xi1>, vector<32x2816xf32>
    %43 = math.absf %37 : vector<32x2816xf32>
    %cst_20 = arith.constant 0.327591091 : f32
    %44 = vector.broadcast %cst_20 : f32 to vector<32x2816xf32>
    %45 = arith.mulf %44, %43 : vector<32x2816xf32>
    %cst_21 = arith.constant 1.000000e+00 : f32
    %46 = vector.broadcast %cst_21 : f32 to vector<32x2816xf32>
    %47 = arith.addf %46, %45 : vector<32x2816xf32>
    %cst_22 = arith.constant 1.000000e+00 : f32
    %48 = vector.broadcast %cst_22 : f32 to vector<32x2816xf32>
    %49 = arith.divf %48, %47 : vector<32x2816xf32>
    %cst_23 = arith.constant 1.06140542 : f32
    %50 = vector.broadcast %cst_23 : f32 to vector<32x2816xf32>
    %51 = arith.mulf %49, %50 : vector<32x2816xf32>
    %cst_24 = arith.constant -1.45315206 : f32
    %52 = vector.broadcast %cst_24 : f32 to vector<32x2816xf32>
    %53 = arith.addf %52, %51 : vector<32x2816xf32>
    %54 = arith.mulf %49, %53 : vector<32x2816xf32>
    %cst_25 = arith.constant 1.42141378 : f32
    %55 = vector.broadcast %cst_25 : f32 to vector<32x2816xf32>
    %56 = arith.addf %55, %54 : vector<32x2816xf32>
    %57 = arith.mulf %49, %56 : vector<32x2816xf32>
    %cst_26 = arith.constant -0.284496725 : f32
    %58 = vector.broadcast %cst_26 : f32 to vector<32x2816xf32>
    %59 = arith.addf %58, %57 : vector<32x2816xf32>
    %60 = arith.mulf %49, %59 : vector<32x2816xf32>
    %cst_27 = arith.constant 0.254829586 : f32
    %61 = vector.broadcast %cst_27 : f32 to vector<32x2816xf32>
    %62 = arith.addf %61, %60 : vector<32x2816xf32>
    %63 = arith.mulf %49, %62 : vector<32x2816xf32>
    %cst_28 = arith.constant 0.000000e+00 : f32
    %64 = vector.broadcast %cst_28 : f32 to vector<32x2816xf32>
    %65 = arith.subf %64, %43 : vector<32x2816xf32>
    %66 = arith.mulf %65, %43 : vector<32x2816xf32>
    %67 = math.exp %66 : vector<32x2816xf32>
    %68 = arith.mulf %63, %67 : vector<32x2816xf32>
    %cst_29 = arith.constant 1.000000e+00 : f32
    %69 = vector.broadcast %cst_29 : f32 to vector<32x2816xf32>
    %70 = arith.subf %69, %68 : vector<32x2816xf32>
    %71 = arith.mulf %42, %70 : vector<32x2816xf32>
    %cst_30 = arith.constant 1.000000e+00 : f32
    %72 = vector.broadcast %cst_30 : f32 to vector<32x2816xf32>
    %73 = arith.addf %72, %71 : vector<32x2816xf32>
    %74 = arith.mulf %35, %73 : vector<32x2816xf32>
    %75 = vector.broadcast %1 : vector<1x2816xf32> to vector<32x2816xf32>
    %76 = arith.mulf %74, %75 : vector<32x2816xf32>
    %c1_i32_31 = arith.constant 1 : i32
    %77 = tpu.dynamic_rotate %76 by %c1_i32_31 dim 1 : vector<32x2816xf32>, i32 -> vector<32x2816xf32>
    %c2815_i32_32 = arith.constant 2815 : i32
    %78 = tpu.dynamic_rotate %76 by %c2815_i32_32 dim 1 : vector<32x2816xf32>, i32 -> vector<32x2816xf32>
    %79 = tpu.concatenate %77, %76, %78 in 0 : vector<32x2816xf32>, vector<32x2816xf32>, vector<32x2816xf32> -> vector<96x2816xf32>
    %c0_33 = arith.constant 0 : index
    %c0_34 = arith.constant 0 : index
    %80 = vector.load %arg5[%c0_33, %c0_34] : memref<12x96xf32, #tpu.memory_space<vmem>>, vector<12x96xf32>
    %cst_35 = arith.constant dense<0.000000e+00> : vector<12x2816xf32>
    %81 = tpu.matmul %80, %79, %cst_35 {dimension_numbers = #tpu.dot_dimension_numbers<[1], [0], [0], [1], [0, 0, 1, 1], [], []>} : vector<12x96xf32>, vector<96x2816xf32>, vector<12x2816xf32> -> vector<12x2816xf32>
    %82 = vector.broadcast %1 : vector<1x2816xf32> to vector<12x2816xf32>
    %83 = arith.mulf %81, %82 : vector<12x2816xf32>
    %cst_36 = arith.constant dense<0.000000e+00> : vector<12xf32>
    %84 = vector.multi_reduction <add>, %83, %cst_36 [1] : vector<12x2816xf32> to vector<12xf32>
    %85 = vector.shape_cast %84 : vector<12xf32> to vector<12x1xf32>
    %86 = arith.mulf %83, %83 : vector<12x2816xf32>
    %cst_37 = arith.constant dense<0.000000e+00> : vector<12xf32>
    %87 = vector.multi_reduction <add>, %86, %cst_37 [1] : vector<12x2816xf32> to vector<12xf32>
    %88 = vector.shape_cast %87 : vector<12xf32> to vector<12x1xf32>
    %cst_38 = arith.constant 3.66032211E-4 : f32
    %89 = vector.broadcast %cst_38 : f32 to vector<12x1xf32>
    %90 = arith.mulf %85, %89 : vector<12x1xf32>
    %cst_39 = arith.constant 3.66032211E-4 : f32
    %91 = vector.broadcast %cst_39 : f32 to vector<12x1xf32>
    %92 = arith.mulf %88, %91 : vector<12x1xf32>
    %93 = arith.mulf %90, %90 : vector<12x1xf32>
    %94 = arith.subf %92, %93 : vector<12x1xf32>
    %cst_40 = arith.constant 0.000000e+00 : f32
    %95 = vector.broadcast %cst_40 : f32 to vector<12x1xf32>
    %96 = arith.maximumf %94, %95 : vector<12x1xf32>
    %cst_41 = arith.constant 9.99999974E-6 : f32
    %97 = vector.broadcast %cst_41 : f32 to vector<12x1xf32>
    %98 = arith.addf %96, %97 : vector<12x1xf32>
    %99 = math.rsqrt %98 : vector<12x1xf32>
    %c0_42 = arith.constant 0 : index
    %c0_43 = arith.constant 0 : index
    %100 = vector.load %arg6[%c0_42, %c0_43] : memref<12x1xf32, #tpu.memory_space<vmem>>, vector<12x1xf32>
    %101 = arith.mulf %99, %100 : vector<12x1xf32>
    %c0_44 = arith.constant 0 : index
    %c0_45 = arith.constant 0 : index
    %102 = vector.load %arg7[%c0_44, %c0_45] : memref<12x1xf32, #tpu.memory_space<vmem>>, vector<12x1xf32>
    %103 = arith.mulf %90, %101 : vector<12x1xf32>
    %104 = arith.subf %102, %103 : vector<12x1xf32>
    %105 = vector.broadcast %101 : vector<12x1xf32> to vector<12x2816xf32>
    %106 = arith.mulf %83, %105 : vector<12x2816xf32>
    %107 = vector.broadcast %104 : vector<12x1xf32> to vector<12x2816xf32>
    %108 = arith.addf %106, %107 : vector<12x2816xf32>
    %cst_46 = arith.constant 5.000000e-01 : f32
    %109 = vector.broadcast %cst_46 : f32 to vector<12x2816xf32>
    %110 = arith.mulf %109, %108 : vector<12x2816xf32>
    %cst_47 = arith.constant 0.707106769 : f32
    %111 = vector.broadcast %cst_47 : f32 to vector<12x2816xf32>
    %112 = arith.mulf %108, %111 : vector<12x2816xf32>
    %cst_48 = arith.constant 0.000000e+00 : f32
    %113 = vector.broadcast %cst_48 : f32 to vector<12x2816xf32>
    %114 = arith.cmpf olt, %112, %113 : vector<12x2816xf32>
    %cst_49 = arith.constant -1.000000e+00 : f32
    %cst_50 = arith.constant 1.000000e+00 : f32
    %115 = vector.broadcast %cst_49 : f32 to vector<12x2816xf32>
    %116 = vector.broadcast %cst_50 : f32 to vector<12x2816xf32>
    %117 = arith.select %114, %115, %116 : vector<12x2816xi1>, vector<12x2816xf32>
    %118 = math.absf %112 : vector<12x2816xf32>
    %cst_51 = arith.constant 0.327591091 : f32
    %119 = vector.broadcast %cst_51 : f32 to vector<12x2816xf32>
    %120 = arith.mulf %119, %118 : vector<12x2816xf32>
    %cst_52 = arith.constant 1.000000e+00 : f32
    %121 = vector.broadcast %cst_52 : f32 to vector<12x2816xf32>
    %122 = arith.addf %121, %120 : vector<12x2816xf32>
    %cst_53 = arith.constant 1.000000e+00 : f32
    %123 = vector.broadcast %cst_53 : f32 to vector<12x2816xf32>
    %124 = arith.divf %123, %122 : vector<12x2816xf32>
    %cst_54 = arith.constant 1.06140542 : f32
    %125 = vector.broadcast %cst_54 : f32 to vector<12x2816xf32>
    %126 = arith.mulf %124, %125 : vector<12x2816xf32>
    %cst_55 = arith.constant -1.45315206 : f32
    %127 = vector.broadcast %cst_55 : f32 to vector<12x2816xf32>
    %128 = arith.addf %127, %126 : vector<12x2816xf32>
    %129 = arith.mulf %124, %128 : vector<12x2816xf32>
    %cst_56 = arith.constant 1.42141378 : f32
    %130 = vector.broadcast %cst_56 : f32 to vector<12x2816xf32>
    %131 = arith.addf %130, %129 : vector<12x2816xf32>
    %132 = arith.mulf %124, %131 : vector<12x2816xf32>
    %cst_57 = arith.constant -0.284496725 : f32
    %133 = vector.broadcast %cst_57 : f32 to vector<12x2816xf32>
    %134 = arith.addf %133, %132 : vector<12x2816xf32>
    %135 = arith.mulf %124, %134 : vector<12x2816xf32>
    %cst_58 = arith.constant 0.254829586 : f32
    %136 = vector.broadcast %cst_58 : f32 to vector<12x2816xf32>
    %137 = arith.addf %136, %135 : vector<12x2816xf32>
    %138 = arith.mulf %124, %137 : vector<12x2816xf32>
    %cst_59 = arith.constant 0.000000e+00 : f32
    %139 = vector.broadcast %cst_59 : f32 to vector<12x2816xf32>
    %140 = arith.subf %139, %118 : vector<12x2816xf32>
    %141 = arith.mulf %140, %118 : vector<12x2816xf32>
    %142 = math.exp %141 : vector<12x2816xf32>
    %143 = arith.mulf %138, %142 : vector<12x2816xf32>
    %cst_60 = arith.constant 1.000000e+00 : f32
    %144 = vector.broadcast %cst_60 : f32 to vector<12x2816xf32>
    %145 = arith.subf %144, %143 : vector<12x2816xf32>
    %146 = arith.mulf %117, %145 : vector<12x2816xf32>
    %cst_61 = arith.constant 1.000000e+00 : f32
    %147 = vector.broadcast %cst_61 : f32 to vector<12x2816xf32>
    %148 = arith.addf %147, %146 : vector<12x2816xf32>
    %149 = arith.mulf %110, %148 : vector<12x2816xf32>
    %c0_62 = arith.constant 0 : index
    %c0_63 = arith.constant 0 : index
    %150 = vector.load %arg8[%c0_62, %c0_63] : memref<12x2816xf32, #tpu.memory_space<vmem>>, vector<12x2816xf32>
    tpu.vector_store %arg8[%c0_62, %c0_63], %149 {strides = array<i32>} : memref<12x2816xf32, #tpu.memory_space<vmem>>, vector<12x2816xf32>,
    return
  }
}

</mosaic_0001>

<llo_original>
// kernel: cnn_reduce.1
$region0: #{cnn_reduce.1}
  #allocation0 [shape = 'u32[]', space=smem, size = 0x4, offset = 0x4, fixed_abs, tag = 'smem constant byte address 0x4 - core index']
  #allocation1 [shape = 'u32[144,128]{1,0:T(1,128)}', space=vmem, size = 0x12000, scoped, tag = 'internal scratch']
  %s0 = inlined_call_operand.vmem [shape: f32[16,2816], index: 0, kind: input, shape index: {}]
  %s1 = inlined_call_operand.vmem [shape: f32[1,2816], index: 1, kind: input, shape index: {}]
  %s2 = inlined_call_operand.vmem [shape: f32[32,48], index: 2, kind: input, shape index: {}]
  %s3 = inlined_call_operand.vmem [shape: f32[32,1], index: 3, kind: input, shape index: {}]
  %s4 = inlined_call_operand.vmem [shape: f32[32,1], index: 4, kind: input, shape index: {}]
  %s5 = inlined_call_operand.vmem [shape: f32[12,96], index: 5, kind: input, shape index: {}]
  %s6 = inlined_call_operand.vmem [shape: f32[12,1], index: 6, kind: input, shape index: {}]
  %s7 = inlined_call_operand.vmem [shape: f32[12,1], index: 7, kind: input, shape index: {}]
  %s8 = inlined_call_operand.vmem [shape: f32[12,2816], index: 8, kind: output, shape index: {}]
  %s9 = sld [smem:[#allocation0]]
  $region42: #{cnn_reduce.1} parent=0
    _
  %s11 = ssub.s32 1, %s9
  %s12 = scalar_select 0, %s11, %s9
  // Predicated region
  $region2: #{cnn_reduce.1} parent=0 // pred_check
    _
  $region3: #{cnn_reduce.1} parent=0 // pred_check_branch
    %14 = sbr.rel (0) target = $region5
  $region4: #{cnn_reduce.1} parent=0 // pred_region
    _
  $region5: #{cnn_reduce.1} parent=0 // pred_fallthru
    _
  // Predicated region
  $region6: #{cnn_reduce.1} parent=0 // pred_check
    _
  $region7: #{cnn_reduce.1} parent=0 // pred_check_branch
    %16 = sbr.rel (0) target = $region9
  $region8: #{cnn_reduce.1} parent=0 // pred_region
    _
  $region9: #{cnn_reduce.1} parent=0 // pred_fallthru
    _
  // Predicated region
  $region10: #{cnn_reduce.1} parent=0 // pred_check
    _
  $region11: #{cnn_reduce.1} parent=0 // pred_check_branch
    %18 = sbr.rel (0) target = $region13
  $region12: #{cnn_reduce.1} parent=0 // pred_region
    _
  $region13: #{cnn_reduce.1} parent=0 // pred_fallthru
    _
  // Predicated region
  $region14: #{cnn_reduce.1} parent=0 // pred_check
    _
  $region15: #{cnn_reduce.1} parent=0 // pred_check_branch
    %20 = sbr.rel (0) target = $region17
  $region16: #{cnn_reduce.1} parent=0 // pred_region
    _
  $region17: #{cnn_reduce.1} parent=0 // pred_fallthru
    _
  // Predicated region
  $region18: #{cnn_reduce.1} parent=0 // pred_check
    _
  $region19: #{cnn_reduce.1} parent=0 // pred_check_branch
    %22 = sbr.rel (0) target = $region21
  $region20: #{cnn_reduce.1} parent=0 // pred_region
    _
  $region21: #{cnn_reduce.1} parent=0 // pred_fallthru
    _
  // Predicated region
  $region22: #{cnn_reduce.1} parent=0 // pred_check
    _
  $region23: #{cnn_reduce.1} parent=0 // pred_check_branch
    %24 = sbr.rel (0) target = $region25
  $region24: #{cnn_reduce.1} parent=0 // pred_region
    _
  $region25: #{cnn_reduce.1} parent=0 // pred_fallthru
    _
  // Predicated region
  $region26: #{cnn_reduce.1} parent=0 // pred_check
    _
  $region27: #{cnn_reduce.1} parent=0 // pred_check_branch
    %26 = sbr.rel (0) target = $region29
  $region28: #{cnn_reduce.1} parent=0 // pred_region
    _
  $region29: #{cnn_reduce.1} parent=0 // pred_fallthru
    _
  // Predicated region
  $region30: #{cnn_reduce.1} parent=0 // pred_check
    _
  $region31: #{cnn_reduce.1} parent=0 // pred_check_branch
    %28 = sbr.rel (0) target = $region33
  $region32: #{cnn_reduce.1} parent=0 // pred_region
    _
  $region33: #{cnn_reduce.1} parent=0 // pred_fallthru
    _
  %v29 = vld [vmem:[%s0] sm:$0xff]
  %v30 = vld [vmem:[%s0 + $0x8] sm:$0xff]
  %v31 = vld [vmem:[%s0 + $0x10] sm:$0xff]
  %v32 = vld [vmem:[%s0 + $0x18] sm:$0xff]
  %v33 = vld [vmem:[%s0 + $0x20] sm:$0xff]
  %v34 = vld [vmem:[%s0 + $0x28] sm:$0xff]
  %v35 = vld [vmem:[%s0 + $0x30] sm:$0xff]
  %v36 = vld [vmem:[%s0 + $0x38] sm:$0xff]
  %v37 = vld [vmem:[%s0 + $0x40] sm:$0xff]
  %v38 = vld [vmem:[%s0 + $0x48] sm:$0xff]
  %v39 = vld [vmem:[%s0 + $0x50] sm:$0xff]
  %v40 = vld [vmem:[%s0 + $0x58] sm:$0xff]
  %v41 = vld [vmem:[%s0 + $0x60] sm:$0xff]
  %v42 = vld [vmem:[%s0 + $0x68] sm:$0xff]
  %v43 = vld [vmem:[%s0 + $0x70] sm:$0xff]
  %v44 = vld [vmem:[%s0 + $0x78] sm:$0xff]
  %v45 = vld [vmem:[%s0 + $0x80] sm:$0xff]
  %v46 = vld [vmem:[%s0 + $0x88] sm:$0xff]
  %v47 = vld [vmem:[%s0 + $0x90] sm:$0xff]
  %v48 = vld [vmem:[%s0 + $0x98] sm:$0xff]
  %v49 = vld [vmem:[%s0 + $0xa0] sm:$0xff]
  %v50 = vld [vmem:[%s0 + $0xa8] sm:$0xff]
  %v51 = vld [vmem:[%s0 + $0xb0] sm:$0xff]
  %v52 = vld [vmem:[%s0 + $0xb8] sm:$0xff]
  %v53 = vld [vmem:[%s0 + $0xc0] sm:$0xff]
  %v54 = vld [vmem:[%s0 + $0xc8] sm:$0xff]
  %v55 = vld [vmem:[%s0 + $0xd0] sm:$0xff]
  %v56 = vld [vmem:[%s0 + $0xd8] sm:$0xff]
  %v57 = vld [vmem:[%s0 + $0xe0] sm:$0xff]
  %v58 = vld [vmem:[%s0 + $0xe8] sm:$0xff]
  %v59 = vld [vmem:[%s0 + $0xf0] sm:$0xff]
  %v60 = vld [vmem:[%s0 + $0xf8] sm:$0xff]
  %v61 = vld [vmem:[%s0 + $0x100] sm:$0xff]
  %v62 = vld [vmem:[%s0 + $0x108] sm:$0xff]
  %v63 = vld [vmem:[%s0 + $0x110] sm:$0xff]
  %v64 = vld [vmem:[%s0 + $0x118] sm:$0xff]
  %v65 = vld [vmem:[%s0 + $0x120] sm:$0xff]
  %v66 = vld [vmem:[%s0 + $0x128] sm:$0xff]
  %v67 = vld [vmem:[%s0 + $0x130] sm:$0xff]
  %v68 = vld [vmem:[%s0 + $0x138] sm:$0xff]
  %v69 = vld [vmem:[%s0 + $0x140] sm:$0xff]
  %v70 = vld [vmem:[%s0 + $0x148] sm:$0xff]
  %v71 = vld [vmem:[%s0 + $0x150] sm:$0xff]
  %v72 = vld [vmem:[%s0 + $0x158] sm:$0xff]
  %v73 = vld [vmem:[%s1] sm:$0xff]
  %v74 = vld [vmem:[%s1 + $0x8] sm:$0xff]
  %v75 = vld [vmem:[%s1 + $0x10] sm:$0x3f]
  %76 = vrot.lane.b32.xlu0 %v29, 1
  %v77 = vpop.permute.xlu0 %76
  %78 = vrot.lane.b32.xlu0 %v51, 1
  %v79 = vpop.permute.xlu0 %78
  %80 = vrot.lane.b32.xlu0 %v30, 1
  %v81 = vpop.permute.xlu0 %80
  %82 = vrot.lane.b32.xlu0 %v52, 1
  %v83 = vpop.permute.xlu0 %82
  %84 = vrot.lane.b32.xlu0 %v31, 1
  %v85 = vpop.permute.xlu0 %84
  %86 = vrot.lane.b32.xlu0 %v53, 1
  %v87 = vpop.permute.xlu0 %86
  %88 = vrot.lane.b32.xlu0 %v32, 1
  %v89 = vpop.permute.xlu0 %88
  %90 = vrot.lane.b32.xlu0 %v54, 1
  %v91 = vpop.permute.xlu0 %90
  %92 = vrot.lane.b32.xlu0 %v33, 1
  %v93 = vpop.permute.xlu0 %92
  %94 = vrot.lane.b32.xlu0 %v55, 1
  %v95 = vpop.permute.xlu0 %94
  %96 = vrot.lane.b32.xlu0 %v34, 1
  %v97 = vpop.permute.xlu0 %96
  %98 = vrot.lane.b32.xlu0 %v56, 1
  %v99 = vpop.permute.xlu0 %98
  %100 = vrot.lane.b32.xlu0 %v35, 1
  %v101 = vpop.permute.xlu0 %100
  %102 = vrot.lane.b32.xlu0 %v57, 1
  %v103 = vpop.permute.xlu0 %102
  %104 = vrot.lane.b32.xlu0 %v36, 1
  %v105 = vpop.permute.xlu0 %104
  %106 = vrot.lane.b32.xlu0 %v58, 1
  %v107 = vpop.permute.xlu0 %106
  %108 = vrot.lane.b32.xlu0 %v37, 1
  %v109 = vpop.permute.xlu0 %108
  %110 = vrot.lane.b32.xlu0 %v59, 1
  %v111 = vpop.permute.xlu0 %110
  %112 = vrot.lane.b32.xlu0 %v38, 1
  %v113 = vpop.permute.xlu0 %112
  %114 = vrot.lane.b32.xlu0 %v60, 1
  %v115 = vpop.permute.xlu0 %114
  %116 = vrot.lane.b32.xlu0 %v39, 1
  %v117 = vpop.permute.xlu0 %116
  %118 = vrot.lane.b32.xlu0 %v61, 1
  %v119 = vpop.permute.xlu0 %118
  %120 = vrot.lane.b32.xlu0 %v40, 1
  %v121 = vpop.permute.xlu0 %120
  %122 = vrot.lane.b32.xlu0 %v62, 1
  %v123 = vpop.permute.xlu0 %122
  %124 = vrot.lane.b32.xlu0 %v41, 1
  %v125 = vpop.permute.xlu0 %124
  %126 = vrot.lane.b32.xlu0 %v63, 1
  %v127 = vpop.permute.xlu0 %126
  %128 = vrot.lane.b32.xlu0 %v42, 1
  %v129 = vpop.permute.xlu0 %128
  %130 = vrot.lane.b32.xlu0 %v64, 1
  %v131 = vpop.permute.xlu0 %130
  %132 = vrot.lane.b32.xlu0 %v43, 1
  %v133 = vpop.permute.xlu0 %132
  %134 = vrot.lane.b32.xlu0 %v65, 1
  %v135 = vpop.permute.xlu0 %134
  %136 = vrot.lane.b32.xlu0 %v44, 1
  %v137 = vpop.permute.xlu0 %136
  %138 = vrot.lane.b32.xlu0 %v66, 1
  %v139 = vpop.permute.xlu0 %138
  %140 = vrot.lane.b32.xlu0 %v45, 1
  %v141 = vpop.permute.xlu0 %140
  %142 = vrot.lane.b32.xlu0 %v67, 1
  %v143 = vpop.permute.xlu0 %142
  %144 = vrot.lane.b32.xlu0 %v46, 1
  %v145 = vpop.permute.xlu0 %144
  %146 = vrot.lane.b32.xlu0 %v68, 1
  %v147 = vpop.permute.xlu0 %146
  %148 = vrot.lane.b32.xlu0 %v47, 1
  %v149 = vpop.permute.xlu0 %148
  %150 = vrot.lane.b32.xlu0 %v69, 1
  %v151 = vpop.permute.xlu0 %150
  %152 = vrot.lane.b32.xlu0 %v48, 1
  %v153 = vpop.permute.xlu0 %152
  %154 = vrot.lane.b32.xlu0 %v70, 1
  %v155 = vpop.permute.xlu0 %154
  %156 = vrot.lane.b32.xlu0 %v49, 1
  %v157 = vpop.permute.xlu0 %156
  %158 = vrot.lane.b32.xlu0 %v71, 1
  %v159 = vpop.permute.xlu0 %158
  %160 = vrot.lane.b32.xlu0 %v50, 1
  %v161 = vpop.permute.xlu0 %160
  %162 = vrot.lane.b32.xlu0 %v72, 1
  %v163 = vpop.permute.xlu0 %162
  %v164 = vlaneseq
  %v165 = vand.u32 %v164, 127
  %vm166 = vcmp.lt.s32.totalorder %v165, 1
  %v167 = vsel %vm166, %v157, %v161
  %v168 = vsel %vm166, %v159, %v163
  %v169 = vsel %vm166, %v153, %v157
  %v170 = vsel %vm166, %v155, %v159
  %v171 = vsel %vm166, %v149, %v153
  %v172 = vsel %vm166, %v151, %v155
  %v173 = vsel %vm166, %v145, %v149
  %v174 = vsel %vm166, %v147, %v151
  %v175 = vsel %vm166, %v141, %v145
  %v176 = vsel %vm166, %v143, %v147
  %v177 = vsel %vm166, %v137, %v141
  %v178 = vsel %vm166, %v139, %v143
  %v179 = vsel %vm166, %v133, %v137
  %v180 = vsel %vm166, %v135, %v139
  %v181 = vsel %vm166, %v129, %v133
  %v182 = vsel %vm166, %v131, %v135
  %v183 = vsel %vm166, %v125, %v129
  %v184 = vsel %vm166, %v127, %v131
  %v185 = vsel %vm166, %v121, %v125
  %v186 = vsel %vm166, %v123, %v127
  %v187 = vsel %vm166, %v117, %v121
  %v188 = vsel %vm166, %v119, %v123
  %v189 = vsel %vm166, %v113, %v117
  %v190 = vsel %vm166, %v115, %v119
  %v191 = vsel %vm166, %v109, %v113
  %v192 = vsel %vm166, %v111, %v115
  %v193 = vsel %vm166, %v105, %v109
  %v194 = vsel %vm166, %v107, %v111
  %v195 = vsel %vm166, %v101, %v105
  %v196 = vsel %vm166, %v103, %v107
  %v197 = vsel %vm166, %v97, %v101
  %v198 = vsel %vm166, %v99, %v103
  %v199 = vsel %vm166, %v93, %v97
  %v200 = vsel %vm166, %v95, %v99
  %v201 = vsel %vm166, %v89, %v93
  %v202 = vsel %vm166, %v91, %v95
  %v203 = vsel %vm166, %v85, %v89
  %v204 = vsel %vm166, %v87, %v91
  %v205 = vsel %vm166, %v81, %v85
  %v206 = vsel %vm166, %v83, %v87
  %v207 = vsel %vm166, %v77, %v81
  %v208 = vsel %vm166, %v79, %v83
  %v209 = vsel %vm166, %v161, %v77
  %v210 = vsel %vm166, %v163, %v79
  %211 = vrot.lane.b32.xlu0 %v29, 127
  %v212 = vpop.permute.xlu0 %211
  %213 = vrot.lane.b32.xlu0 %v51, 127
  %v214 = vpop.permute.xlu0 %213
  %215 = vrot.lane.b32.xlu0 %v30, 127
  %v216 = vpop.permute.xlu0 %215
  %217 = vrot.lane.b32.xlu0 %v52, 127
  %v218 = vpop.permute.xlu0 %217
  %219 = vrot.lane.b32.xlu0 %v31, 127
  %v220 = vpop.permute.xlu0 %219
  %221 = vrot.lane.b32.xlu0 %v53, 127
  %v222 = vpop.permute.xlu0 %221
  %223 = vrot.lane.b32.xlu0 %v32, 127
  %v224 = vpop.permute.xlu0 %223
  %225 = vrot.lane.b32.xlu0 %v54, 127
  %v226 = vpop.permute.xlu0 %225
  %227 = vrot.lane.b32.xlu0 %v33, 127
  %v228 = vpop.permute.xlu0 %227
  %229 = vrot.lane.b32.xlu0 %v55, 127
  %v230 = vpop.permute.xlu0 %229
  %231 = vrot.lane.b32.xlu0 %v34, 127
  %v232 = vpop.permute.xlu0 %231
  %233 = vrot.lane.b32.xlu0 %v56, 127
  %v234 = vpop.permute.xlu0 %233
  %235 = vrot.lane.b32.xlu0 %v35, 127
  %v236 = vpop.permute.xlu0 %235
  %237 = vrot.lane.b32.xlu0 %v57, 127
  %v238 = vpop.permute.xlu0 %237
  %239 = vrot.lane.b32.xlu0 %v36, 127
  %v240 = vpop.permute.xlu0 %239
  %241 = vrot.lane.b32.xlu0 %v58, 127
  %v242 = vpop.permute.xlu0 %241
  %243 = vrot.lane.b32.xlu0 %v37, 127
  %v244 = vpop.permute.xlu0 %243
  %245 = vrot.lane.b32.xlu0 %v59, 127
  %v246 = vpop.permute.xlu0 %245
  %247 = vrot.lane.b32.xlu0 %v38, 127
  %v248 = vpop.permute.xlu0 %247
  %249 = vrot.lane.b32.xlu0 %v60, 127
  %v250 = vpop.permute.xlu0 %249
  %251 = vrot.lane.b32.xlu0 %v39, 127
  %v252 = vpop.permute.xlu0 %251
  %253 = vrot.lane.b32.xlu0 %v61, 127
  %v254 = vpop.permute.xlu0 %253
  %255 = vrot.lane.b32.xlu0 %v40, 127
  %v256 = vpop.permute.xlu0 %255
  %257 = vrot.lane.b32.xlu0 %v62, 127
  %v258 = vpop.permute.xlu0 %257
  %259 = vrot.lane.b32.xlu0 %v41, 127
  %v260 = vpop.permute.xlu0 %259
  %261 = vrot.lane.b32.xlu0 %v63, 127
  %v262 = vpop.permute.xlu0 %261
  %263 = vrot.lane.b32.xlu0 %v42, 127
  %v264 = vpop.permute.xlu0 %263
  %265 = vrot.lane.b32.xlu0 %v64, 127
  %v266 = vpop.permute.xlu0 %265
  %267 = vrot.lane.b32.xlu0 %v43, 127
  %v268 = vpop.permute.xlu0 %267
  %269 = vrot.lane.b32.xlu0 %v65, 127
  %v270 = vpop.permute.xlu0 %269
  %271 = vrot.lane.b32.xlu0 %v44, 127
  %v272 = vpop.permute.xlu0 %271
  %273 = vrot.lane.b32.xlu0 %v66, 127
  %v274 = vpop.permute.xlu0 %273
  %275 = vrot.lane.b32.xlu0 %v45, 127
  %v276 = vpop.permute.xlu0 %275
  %277 = vrot.lane.b32.xlu0 %v67, 127
  %v278 = vpop.permute.xlu0 %277
  %279 = vrot.lane.b32.xlu0 %v46, 127
  %v280 = vpop.permute.xlu0 %279
  %281 = vrot.lane.b32.xlu0 %v68, 127
  %v282 = vpop.permute.xlu0 %281
  %283 = vrot.lane.b32.xlu0 %v47, 127
  %v284 = vpop.permute.xlu0 %283
  %285 = vrot.lane.b32.xlu0 %v69, 127
  %v286 = vpop.permute.xlu0 %285
  %287 = vrot.lane.b32.xlu0 %v48, 127
  %v288 = vpop.permute.xlu0 %287
  %289 = vrot.lane.b32.xlu0 %v70, 127
  %v290 = vpop.permute.xlu0 %289
  %291 = vrot.lane.b32.xlu0 %v49, 127
  %v292 = vpop.permute.xlu0 %291
  %293 = vrot.lane.b32.xlu0 %v71, 127
  %v294 = vpop.permute.xlu0 %293
  %295 = vrot.lane.b32.xlu0 %v50, 127
  %v296 = vpop.permute.xlu0 %295
  %297 = vrot.lane.b32.xlu0 %v72, 127
  %v298 = vpop.permute.xlu0 %297
  %vm299 = vcmp.lt.s32.totalorder %v165, 127
  %v300 = vsel %vm299, %v292, %v296
  %v301 = vsel %vm299, %v294, %v298
  %v302 = vsel %vm299, %v288, %v292
  %v303 = vsel %vm299, %v290, %v294
  %v304 = vsel %vm299, %v284, %v288
  %v305 = vsel %vm299, %v286, %v290
  %v306 = vsel %vm299, %v280, %v284
  %v307 = vsel %vm299, %v282, %v286
  %v308 = vsel %vm299, %v276, %v280
  %v309 = vsel %vm299, %v278, %v282
  %v310 = vsel %vm299, %v272, %v276
  %v311 = vsel %vm299, %v274, %v278
  %v312 = vsel %vm299, %v268, %v272
  %v313 = vsel %vm299, %v270, %v274
  %v314 = vsel %vm299, %v264, %v268
  %v315 = vsel %vm299, %v266, %v270
  %v316 = vsel %vm299, %v260, %v264
  %v317 = vsel %vm299, %v262, %v266
  %v318 = vsel %vm299, %v256, %v260
  %v319 = vsel %vm299, %v258, %v262
  %v320 = vsel %vm299, %v252, %v256
  %v321 = vsel %vm299, %v254, %v258
  %v322 = vsel %vm299, %v248, %v252
  %v323 = vsel %vm299, %v250, %v254
  %v324 = vsel %vm299, %v244, %v248
  %v325 = vsel %vm299, %v246, %v250
  %v326 = vsel %vm299, %v240, %v244
  %v327 = vsel %vm299, %v242, %v246
  %v328 = vsel %vm299, %v236, %v240
  %v329 = vsel %vm299, %v238, %v242
  %v330 = vsel %vm299, %v232, %v236
  %v331 = vsel %vm299, %v234, %v238
  %v332 = vsel %vm299, %v228, %v232
  %v333 = vsel %vm299, %v230, %v234
  %v334 = vsel %vm299, %v224, %v228
  %v335 = vsel %vm299, %v226, %v230
  %v336 = vsel %vm299, %v220, %v224
  %v337 = vsel %vm299, %v222, %v226
  %v338 = vsel %vm299, %v216, %v220
  %v339 = vsel %vm299, %v218, %v222
  %v340 = vsel %vm299, %v212, %v216
  %v341 = vsel %vm299, %v214, %v218
  %v342 = vsel %vm299, %v296, %v212
  %v343 = vsel %vm299, %v298, %v214
  %v344 = vld [vmem:[%s2] sm:$0xff]
  %v345 = vld [vmem:[%s2 + $0x8] sm:$0xff]
  %v346 = vld [vmem:[%s2 + $0x10] sm:$0xff]
  %v347 = vld [vmem:[%s2 + $0x18] sm:$0xff]
  %vm348 = vcmask 392192
  %v350 = vsel %vm348, %v344, 0
  %v353 = vsel %vm348, %v345, 0
  %v356 = vsel %vm348, %v346, 0
  %v359 = vsel %vm348, %v347, 0
  %361 = vmatprep.subr.mxu0 %v207
  %362 = vmatpush1.msra.mxu0 %v209
  %363 = vmatprep.subr.mxu0 %v208
  %364 = vmatpush1.msra.mxu0 %v210
  %365 = vmatprep.subr.mxu0 %v30
  %366 = vmatpush1.msra.mxu0 %v29
  %367 = vmatprep.subr.mxu0 %v52
  %368 = vmatpush1.msra.mxu0 %v51
  %369 = vmatprep.subr.mxu0 %v338
  %370 = vmatpush1.msra.mxu0 %v340
  %371 = vmatprep.subr.mxu0 %v339
  %372 = vmatpush1.msra.mxu0 %v341
  %373 = vmatprep.subr.mxu0 0.0
  %374 = vmatpush1.msra.mxu0 0.0
  %375 = vmatprep.subr.mxu0 0.0
  %376 = vmatpush1.msra.mxu0 0.0
  %377 = vmatprep.subr.mxu0 0.0
  %378 = vmatpush1.msra.mxu0 0.0
  %379 = vmatprep.subr.mxu0 0.0
  %380 = vmatpush1.msra.mxu0 0.0
  %381 = vmatprep.subr.mxu0 0.0
  %382 = vmatpush1.msra.mxu0 0.0
  %383 = vmatprep.subr.mxu0 0.0
  %384 = vmatpush1.msra.mxu0 0.0
  %385 = vmatprep.subr.mxu0 0.0
  %386 = vmatpush1.msra.mxu0 0.0
  %387 = vmatprep.subr.mxu0 0.0
  %388 = vmatpush1.msra.mxu0 0.0
  %389 = vmatprep.subr.mxu0 0.0
  %390 = vmatpush1.msra.mxu0 0.0
  %391 = vmatprep.subr.mxu0 0.0
  %392 = vmatpush1.msra.mxu0 0.0
  %393 = vmatprep.subr.mxu0 0.0
  %394 = vmatpush1.msra.mxu0 0.0
  %395 = vmatprep.subr.mxu0 0.0
  %396 = vmatpush1.msra.mxu0 0.0
  %397 = vmatprep.subr.mxu0 0.0
  %398 = vmatpush1.msra.mxu0 0.0
  %399 = vmatprep.subr.mxu0 0.0
  %400 = vmatpush1.msra.mxu0 0.0
  %401 = vmatprep.subr.mxu0 0.0
  %402 = vmatpush1.msra.mxu0 0.0
  %403 = vmatprep.subr.mxu0 0.0
  %404 = vmatpush1.msra.mxu0 0.0
  %405 = vmatprep.subr.mxu0 0.0
  %406 = vmatpush1.msra.mxu0 0.0
  %407 = vmatprep.subr.mxu0 0.0
  %408 = vmatpush1.msra.mxu0 0.0
  %409 = vmatprep.subr.mxu0 0.0
  %410 = vmatpush1.msra.mxu0 0.0
  %411 = vmatprep.subr.mxu0 0.0
  %412 = vmatpush1.msra.mxu0 0.0
  %413 = vmatprep.subr.mxu0 0.0
  %414 = vmatpush1.msra.mxu0 0.0
  %415 = vmatprep.subr.mxu0 0.0
  %416 = vmatpush1.msra.mxu0 0.0
  %417 = vmatprep.subr.mxu0 0.0
  %418 = vmatpush1.msra.mxu0 0.0
  %419 = vmatprep.subr.mxu0 0.0
  %420 = vmatpush1.msra.mxu0 0.0
  %421 = vmatprep.subr.mxu0 0.0
  %422 = vmatpush1.msra.mxu0 0.0
  %423 = vmatprep.subr.mxu0 0.0
  %424 = vmatpush1.msra.mxu0 0.0
  %425 = vmatprep.mubr.f32.mxu0 0.0
  %426 = vmatmul.mubr.f32.gmra.mrb[0].mxu0 %v350
  %v427 = vpop.f32.mrb[0].mxu0
  %v428 = vadd.f32 0.0, %v427
  %v429 = vpop.f32.mrb[0].mxu0
  %v430 = vadd.f32 0.0, %v429
  %431 = vmatprep.mubr.f32.mxu0 0.0
  %432 = vmatmul.mubr.f32.gmra.mrb[0].mxu0 %v353
  %v433 = vpop.f32.mrb[0].mxu0
  %v434 = vadd.f32 0.0, %v433
  %v435 = vpop.f32.mrb[0].mxu0
  %v436 = vadd.f32 0.0, %v435
  %437 = vmatprep.mubr.f32.mxu0 0.0
  %438 = vmatmul.mubr.f32.gmra.mrb[0].mxu0 %v356
  %v439 = vpop.f32.mrb[0].mxu0
  %v440 = vadd.f32 0.0, %v439
  %v441 = vpop.f32.mrb[0].mxu0
  %v442 = vadd.f32 0.0, %v441
  %443 = vmatprep.mubr.f32.mxu0 0.0
  %444 = vmatmul.mubr.f32.gmra.mrb[0].mxu0 %v359
  %v445 = vpop.f32.mrb[0].mxu0
  %v446 = vadd.f32 0.0, %v445
  %v447 = vpop.f32.mrb[0].mxu0
  %v448 = vadd.f32 0.0, %v447
  %449 = vdwg.mxu0
  %450 = vmatprep.subr.mxu0 %v203
  %451 = vmatpush1.msra.mxu0 %v205
  %452 = vmatprep.subr.mxu0 %v204
  %453 = vmatpush1.msra.mxu0 %v206
  %454 = vmatprep.subr.mxu0 %v32
  %455 = vmatpush1.msra.mxu0 %v31
  %456 = vmatprep.subr.mxu0 %v54
  %457 = vmatpush1.msra.mxu0 %v53
  %458 = vmatprep.subr.mxu0 %v334
  %459 = vmatpush1.msra.mxu0 %v336
  %460 = vmatprep.subr.mxu0 %v335
  %461 = vmatpush1.msra.mxu0 %v337
  %462 = vmatprep.subr.mxu0 0.0
  %463 = vmatpush1.msra.mxu0 0.0
  %464 = vmatprep.subr.mxu0 0.0
  %465 = vmatpush1.msra.mxu0 0.0
  %466 = vmatprep.subr.mxu0 0.0
  %467 = vmatpush1.msra.mxu0 0.0
  %468 = vmatprep.subr.mxu0 0.0
  %469 = vmatpush1.msra.mxu0 0.0
  %470 = vmatprep.subr.mxu0 0.0
  %471 = vmatpush1.msra.mxu0 0.0
  %472 = vmatprep.subr.mxu0 0.0
  %473 = vmatpush1.msra.mxu0 0.0
  %474 = vmatprep.subr.mxu0 0.0
  %475 = vmatpush1.msra.mxu0 0.0
  %476 = vmatprep.subr.mxu0 0.0
  %477 = vmatpush1.msra.mxu0 0.0
  %478 = vmatprep.subr.mxu0 0.0
  %479 = vmatpush1.msra.mxu0 0.0
  %480 = vmatprep.subr.mxu0 0.0
  %481 = vmatpush1.msra.mxu0 0.0
  %482 = vmatprep.subr.mxu0 0.0
  %483 = vmatpush1.msra.mxu0 0.0
  %484 = vmatprep.subr.mxu0 0.0
  %485 = vmatpush1.msra.mxu0 0.0
  %486 = vmatprep.subr.mxu0 0.0
  %487 = vmatpush1.msra.mxu0 0.0
  %488 = vmatprep.subr.mxu0 0.0
  %489 = vmatpush1.msra.mxu0 0.0
  %490 = vmatprep.subr.mxu0 0.0
  %491 = vmatpush1.msra.mxu0 0.0
  %492 = vmatprep.subr.mxu0 0.0
  %493 = vmatpush1.msra.mxu0 0.0
  %494 = vmatprep.subr.mxu0 0.0
  %495 = vmatpush1.msra.mxu0 0.0
  %496 = vmatprep.subr.mxu0 0.0
  %497 = vmatpush1.msra.mxu0 0.0
  %498 = vmatprep.subr.mxu0 0.0
  %499 = vmatpush1.msra.mxu0 0.0
  %500 = vmatprep.subr.mxu0 0.0
  %501 = vmatpush1.msra.mxu0 0.0
  %502 = vmatprep.subr.mxu0 0.0
  %503 = vmatpush1.msra.mxu0 0.0
  %504 = vmatprep.subr.mxu0 0.0
  %505 = vmatpush1.msra.mxu0 0.0
  %506 = vmatprep.subr.mxu0 0.0
  %507 = vmatpush1.msra.mxu0 0.0
  %508 = vmatprep.subr.mxu0 0.0
  %509 = vmatpush1.msra.mxu0 0.0
  %510 = vmatprep.subr.mxu0 0.0
  %511 = vmatpush1.msra.mxu0 0.0
  %512 = vmatprep.subr.mxu0 0.0
  %513 = vmatpush1.msra.mxu0 0.0
  %514 = vmatprep.mubr.f32.mxu0 0.0
  %515 = vmatmul.mubr.f32.gmra.mrb[0].mxu0 %v350
  %v516 = vpop.f32.mrb[0].mxu0
  %v517 = vadd.f32 0.0, %v516
  %v518 = vpop.f32.mrb[0].mxu0
  %v519 = vadd.f32 0.0, %v518
  %520 = vmatprep.mubr.f32.mxu0 0.0
  %521 = vmatmul.mubr.f32.gmra.mrb[0].mxu0 %v353
  %v522 = vpop.f32.mrb[0].mxu0
  %v523 = vadd.f32 0.0, %v522
  %v524 = vpop.f32.mrb[0].mxu0
  %v525 = vadd.f32 0.0, %v524
  %526 = vmatprep.mubr.f32.mxu0 0.0
  %527 = vmatmul.mubr.f32.gmra.mrb[0].mxu0 %v356
  %v528 = vpop.f32.mrb[0].mxu0
  %v529 = vadd.f32 0.0, %v528
  %v530 = vpop.f32.mrb[0].mxu0
  %v531 = vadd.f32 0.0, %v530
  %532 = vmatprep.mubr.f32.mxu0 0.0
  %533 = vmatmul.mubr.f32.gmra.mrb[0].mxu0 %v359
  %v534 = vpop.f32.mrb[0].mxu0
  %v535 = vadd.f32 0.0, %v534
  %v536 = vpop.f32.mrb[0].mxu0
  %v537 = vadd.f32 0.0, %v536
  %538 = vdwg.mxu0
  %539 = vmatprep.subr.mxu0 %v199
  %540 = vmatpush1.msra.mxu0 %v201
  %541 = vmatprep.subr.mxu0 %v200
  %542 = vmatpush1.msra.mxu0 %v202
  %543 = vmatprep.subr.mxu0 %v34
  %544 = vmatpush1.msra.mxu0 %v33
  %545 = vmatprep.subr.mxu0 %v56
  %546 = vmatpush1.msra.mxu0 %v55
  %547 = vmatprep.subr.mxu0 %v330
  %548 = vmatpush1.msra.mxu0 %v332
  %549 = vmatprep.subr.mxu0 %v331
  %550 = vmatpush1.msra.mxu0 %v333
  %551 = vmatprep.subr.mxu0 0.0
  %552 = vmatpush1.msra.mxu0 0.0
  %553 = vmatprep.subr.mxu0 0.0
  %554 = vmatpush1.msra.mxu0 0.0
  %555 = vmatprep.subr.mxu0 0.0
  %556 = vmatpush1.msra.mxu0 0.0
  %557 = vmatprep.subr.mxu0 0.0
  %558 = vmatpush1.msra.mxu0 0.0
  %559 = vmatprep.subr.mxu0 0.0
  %560 = vmatpush1.msra.mxu0 0.0
  %561 = vmatprep.subr.mxu0 0.0
  %562 = vmatpush1.msra.mxu0 0.0
  %563 = vmatprep.subr.mxu0 0.0
  %564 = vmatpush1.msra.mxu0 0.0
  %565 = vmatprep.subr.mxu0 0.0
  %566 = vmatpush1.msra.mxu0 0.0
  %567 = vmatprep.subr.mxu0 0.0
  %568 = vmatpush1.msra.mxu0 0.0
  %569 = vmatprep.subr.mxu0 0.0
  %570 = vmatpush1.msra.mxu0 0.0
  %571 = vmatprep.subr.mxu0 0.0
  %572 = vmatpush1.msra.mxu0 0.0
  %573 = vmatprep.subr.mxu0 0.0
  %574 = vmatpush1.msra.mxu0 0.0
  %575 = vmatprep.subr.mxu0 0.0
  %576 = vmatpush1.msra.mxu0 0.0
  %577 = vmatprep.subr.mxu0 0.0
  %578 = vmatpush1.msra.mxu0 0.0
  %579 = vmatprep.subr.mxu0 0.0
  %580 = vmatpush1.msra.mxu0 0.0
  %581 = vmatprep.subr.mxu0 0.0
  %582 = vmatpush1.msra.mxu0 0.0
  %583 = vmatprep.subr.mxu0 0.0
  %584 = vmatpush1.msra.mxu0 0.0
  %585 = vmatprep.subr.mxu0 0.0
  %586 = vmatpush1.msra.mxu0 0.0
  %587 = vmatprep.subr.mxu0 0.0
  %588 = vmatpush1.msra.mxu0 0.0
  %589 = vmatprep.subr.mxu0 0.0
  %590 = vmatpush1.msra.mxu0 0.0
  %591 = vmatprep.subr.mxu0 0.0
  %592 = vmatpush1.msra.mxu0 0.0
  %593 = vmatprep.subr.mxu0 0.0
  %594 = vmatpush1.msra.mxu0 0.0
  %595 = vmatprep.subr.mxu0 0.0
  %596 = vmatpush1.msra.mxu0 0.0
  %597 = vmatprep.subr.mxu0 0.0
  %598 = vmatpush1.msra.mxu0 0.0
  %599 = vmatprep.subr.mxu0 0.0
  %600 = vmatpush1.msra.mxu0 0.0
  %601 = vmatprep.subr.mxu0 0.0
  %602 = vmatpush1.msra.mxu0 0.0
  %603 = vmatprep.mubr.f32.mxu0 0.0
  %604 = vmatmul.mubr.f32.gmra.mrb[0].mxu0 %v350
  %v605 = vpop.f32.mrb[0].mxu0
  %v606 = vadd.f32 0.0, %v605
  %v607 = vpop.f32.mrb[0].mxu0
  %v608 = vadd.f32 0.0, %v607
  %609 = vmatprep.mubr.f32.mxu0 0.0
  %610 = vmatmul.mubr.f32.gmra.mrb[0].mxu0 %v353
  %v611 = vpop.f32.mrb[0].mxu0
  %v612 = vadd.f32 0.0, %v611
  %v613 = vpop.f32.mrb[0].mxu0
  %v614 = vadd.f32 0.0, %v613
  %615 = vmatprep.mubr.f32.mxu0 0.0
  %616 = vmatmul.mubr.f32.gmra.mrb[0].mxu0 %v356
  %v617 = vpop.f32.mrb[0].mxu0
  %v618 = vadd.f32 0.0, %v617
  %v619 = vpop.f32.mrb[0].mxu0
  %v620 = vadd.f32 0.0, %v619
  %621 = vmatprep.mubr.f32.mxu0 0.0
  %622 = vmatmul.mubr.f32.gmra.mrb[0].mxu0 %v359
  %v623 = vpop.f32.mrb[0].mxu0
  %v624 = vadd.f32 0.0, %v623
  %v625 = vpop.f32.mrb[0].mxu0
  %v626 = vadd.f32 0.0, %v625
  %627 = vdwg.mxu0
  %628 = vmatprep.subr.mxu0 %v195
  %629 = vmatpush1.msra.mxu0 %v197
  %630 = vmatprep.subr.mxu0 %v196
  %631 = vmatpush1.msra.mxu0 %v198
  %632 = vmatprep.subr.mxu0 %v36
  %633 = vmatpush1.msra.mxu0 %v35
  %634 = vmatprep.subr.mxu0 %v58
  %635 = vmatpush1.msra.mxu0 %v57
  %636 = vmatprep.subr.mxu0 %v326
  %637 = vmatpush1.msra.mxu0 %v328
  %638 = vmatprep.subr.mxu0 %v327
  %639 = vmatpush1.msra.mxu0 %v329
  %640 = vmatprep.subr.mxu0 0.0
  %641 = vmatpush1.msra.mxu0 0.0
  %642 = vmatprep.subr.mxu0 0.0
  %643 = vmatpush1.msra.mxu0 0.0
  %644 = vmatprep.subr.mxu0 0.0
  %645 = vmatpush1.msra.mxu0 0.0
  %646 = vmatprep.subr.mxu0 0.0
  %647 = vmatpush1.msra.mxu0 0.0
  %648 = vmatprep.subr.mxu0 0.0
  %649 = vmatpush1.msra.mxu0 0.0
  %650 = vmatprep.subr.mxu0 0.0
  %651 = vmatpush1.msra.mxu0 0.0
  %652 = vmatprep.subr.mxu0 0.0
  %653 = vmatpush1.msra.mxu0 0.0
  %654 = vmatprep.subr.mxu0 0.0
  %655 = vmatpush1.msra.mxu0 0.0
  %656 = vmatprep.subr.mxu0 0.0
  %657 = vmatpush1.msra.mxu0 0.0
  %658 = vmatprep.subr.mxu0 0.0
  %659 = vmatpush1.msra.mxu0 0.0
  %660 = vmatprep.subr.mxu0 0.0
  %661 = vmatpush1.msra.mxu0 0.0
  %662 = vmatprep.subr.mxu0 0.0
  %663 = vmatpush1.msra.mxu0 0.0
  %664 = vmatprep.subr.mxu0 0.0
  %665 = vmatpush1.msra.mxu0 0.0
  %666 = vmatprep.subr.mxu0 0.0
  %667 = vmatpush1.msra.mxu0 0.0
  %668 = vmatprep.subr.mxu0 0.0
  %669 = vmatpush1.msra.mxu0 0.0
  %670 = vmatprep.subr.mxu0 0.0
  %671 = vmatpush1.msra.mxu0 0.0
  %672 = vmatprep.subr.mxu0 0.0
  %673 = vmatpush1.msra.mxu0 0.0
  %674 = vmatprep.subr.mxu0 0.0
  %675 = vmatpush1.msra.mxu0 0.0
  %676 = vmatprep.subr.mxu0 0.0
  %677 = vmatpush1.msra.mxu0 0.0
  %678 = vmatprep.subr.mxu0 0.0
  %679 = vmatpush1.msra.mxu0 0.0
  %680 = vmatprep.subr.mxu0 0.0
  %681 = vmatpush1.msra.mxu0 0.0
  %682 = vmatprep.subr.mxu0 0.0
  %683 = vmatpush1.msra.mxu0 0.0
  %684 = vmatprep.subr.mxu0 0.0
  %685 = vmatpush1.msra.mxu0 0.0
  %686 = vmatprep.subr.mxu0 0.0
  %687 = vmatpush1.msra.mxu0 0.0
  %688 = vmatprep.subr.mxu0 0.0
  %689 = vmatpush1.msra.mxu0 0.0
  %690 = vmatprep.subr.mxu0 0.0
  %691 = vmatpush1.msra.mxu0 0.0
  %692 = vmatprep.mubr.f32.mxu0 0.0
  %693 = vmatmul.mubr.f32.gmra.mrb[0].mxu0 %v350
  %v694 = vpop.f32.mrb[0].mxu0
  %v695 = vadd.f32 0.0, %v694
  %v696 = vpop.f32.mrb[0].mxu0
  %v697 = vadd.f32 0.0, %v696
  %698 = vmatprep.mubr.f32.mxu0 0.0
  %699 = vmatmul.mubr.f32.gmra.mrb[0].mxu0 %v353
  %v700 = vpop.f32.mrb[0].mxu0
  %v701 = vadd.f32 0.0, %v700
  %v702 = vpop.f32.mrb[0].mxu0
  %v703 = vadd.f32 0.0, %v702
  %704 = vmatprep.mubr.f32.mxu0 0.0
  %705 = vmatmul.mubr.f32.gmra.mrb[0].mxu0 %v356
  %v706 = vpop.f32.mrb[0].mxu0
  %v707 = vadd.f32 0.0, %v706
  %v708 = vpop.f32.mrb[0].mxu0
  %v709 = vadd.f32 0.0, %v708
  %710 = vmatprep.mubr.f32.mxu0 0.0
  %711 = vmatmul.mubr.f32.gmra.mrb[0].mxu0 %v359
  %v712 = vpop.f32.mrb[0].mxu0
  %v713 = vadd.f32 0.0, %v712
  %v714 = vpop.f32.mrb[0].mxu0
  %v715 = vadd.f32 0.0, %v714
  %716 = vdwg.mxu0
  %717 = vmatprep.subr.mxu0 %v191
  %718 = vmatpush1.msra.mxu0 %v193
  %719 = vmatprep.subr.mxu0 %v192
  %720 = vmatpush1.msra.mxu0 %v194
  %721 = vmatprep.subr.mxu0 %v38
  %722 = vmatpush1.msra.mxu0 %v37
  %723 = vmatprep.subr.mxu0 %v60
  %724 = vmatpush1.msra.mxu0 %v59
  %725 = vmatprep.subr.mxu0 %v322
  %726 = vmatpush1.msra.mxu0 %v324
  %727 = vmatprep.subr.mxu0 %v323
  %728 = vmatpush1.msra.mxu0 %v325
  %729 = vmatprep.subr.mxu0 0.0
  %730 = vmatpush1.msra.mxu0 0.0
  %731 = vmatprep.subr.mxu0 0.0
  %732 = vmatpush1.msra.mxu0 0.0
  %733 = vmatprep.subr.mxu0 0.0
  %734 = vmatpush1.msra.mxu0 0.0
  %735 = vmatprep.subr.mxu0 0.0
  %736 = vmatpush1.msra.mxu0 0.0
  %737 = vmatprep.subr.mxu0 0.0
  %738 = vmatpush1.msra.mxu0 0.0
  %739 = vmatprep.subr.mxu0 0.0
  %740 = vmatpush1.msra.mxu0 0.0
  %741 = vmatprep.subr.mxu0 0.0
  %742 = vmatpush1.msra.mxu0 0.0
  %743 = vmatprep.subr.mxu0 0.0
  %744 = vmatpush1.msra.mxu0 0.0
  %745 = vmatprep.subr.mxu0 0.0
  %746 = vmatpush1.msra.mxu0 0.0
  %747 = vmatprep.subr.mxu0 0.0
  %748 = vmatpush1.msra.mxu0 0.0
  %749 = vmatprep.subr.mxu0 0.0
  %750 = vmatpush1.msra.mxu0 0.0
  %751 = vmatprep.subr.mxu0 0.0
  %752 = vmatpush1.msra.mxu0 0.0
  %753 = vmatprep.subr.mxu0 0.0
  %754 = vmatpush1.msra.mxu0 0.0
  %755 = vmatprep.subr.mxu0 0.0
  %756 = vmatpush1.msra.mxu0 0.0
  %757 = vmatprep.subr.mxu0 0.0
  %758 = vmatpush1.msra.mxu0 0.0
  %759 = vmatprep.subr.mxu0 0.0
  %760 = vmatpush1.msra.mxu0 0.0
  %761 = vmatprep.subr.mxu0 0.0
  %762 = vmatpush1.msra.mxu0 0.0
  %763 = vmatprep.subr.mxu0 0.0
  %764 = vmatpush1.msra.mxu0 0.0
  %765 = vmatprep.subr.mxu0 0.0
  %766 = vmatpush1.msra.mxu0 0.0
  %767 = vmatprep.subr.mxu0 0.0
  %768 = vmatpush1.msra.mxu0 0.0
  %769 = vmatprep.subr.mxu0 0.0
  %770 = vmatpush1.msra.mxu0 0.0
  %771 = vmatprep.subr.mxu0 0.0
  %772 = vmatpush1.msra.mxu0 0.0
  %773 = vmatprep.subr.mxu0 0.0
  %774 = vmatpush1.msra.mxu0 0.0
  %775 = vmatprep.subr.mxu0 0.0
  %776 = vmatpush1.msra.mxu0 0.0
  %777 = vmatprep.subr.mxu0 0.0
  %778 = vmatpush1.msra.mxu0 0.0
  %779 = vmatprep.subr.mxu0 0.0
  %780 = vmatpush1.msra.mxu0 0.0
  %781 = vmatprep.mubr.f32.mxu0 0.0
  %782 = vmatmul.mubr.f32.gmra.mrb[0].mxu0 %v350
  %v783 = vpop.f32.mrb[0].mxu0
  %v784 = vadd.f32 0.0, %v783
  %v785 = vpop.f32.mrb[0].mxu0
  %v786 = vadd.f32 0.0, %v785
  %787 = vmatprep.mubr.f32.mxu0 0.0
  %788 = vmatmul.mubr.f32.gmra.mrb[0].mxu0 %v353
  %v789 = vpop.f32.mrb[0].mxu0
  %v790 = vadd.f32 0.0, %v789
  %v791 = vpop.f32.mrb[0].mxu0
  %v792 = vadd.f32 0.0, %v791
  %793 = vmatprep.mubr.f32.mxu0 0.0
  %794 = vmatmul.mubr.f32.gmra.mrb[0].mxu0 %v356
  %v795 = vpop.f32.mrb[0].mxu0
  %v796 = vadd.f32 0.0, %v795
  %v797 = vpop.f32.mrb[0].mxu0
  %v798 = vadd.f32 0.0, %v797
  %799 = vmatprep.mubr.f32.mxu0 0.0
  %800 = vmatmul.mubr.f32.gmra.mrb[0].mxu0 %v359
  %v801 = vpop.f32.mrb[0].mxu0
  %v802 = vadd.f32 0.0, %v801
  %v803 = vpop.f32.mrb[0].mxu0
  %v804 = vadd.f32 0.0, %v803
  %805 = vdwg.mxu0
  %806 = vmatprep.subr.mxu0 %v187
  %807 = vmatpush1.msra.mxu0 %v189
  %808 = vmatprep.subr.mxu0 %v188
  %809 = vmatpush1.msra.mxu0 %v190
  %810 = vmatprep.subr.mxu0 %v40
  %811 = vmatpush1.msra.mxu0 %v39
  %812 = vmatprep.subr.mxu0 %v62
  %813 = vmatpush1.msra.mxu0 %v61
  %814 = vmatprep.subr.mxu0 %v318
  %815 = vmatpush1.msra.mxu0 %v320
  %816 = vmatprep.subr.mxu0 %v319
  %817 = vmatpush1.msra.mxu0 %v321
  %818 = vmatprep.subr.mxu0 0.0
  %819 = vmatpush1.msra.mxu0 0.0
  %820 = vmatprep.subr.mxu0 0.0
  %821 = vmatpush1.msra.mxu0 0.0
  %822 = vmatprep.subr.mxu0 0.0
  %823 = vmatpush1.msra.mxu0 0.0
  %824 = vmatprep.subr.mxu0 0.0
  %825 = vmatpush1.msra.mxu0 0.0
  %826 = vmatprep.subr.mxu0 0.0
  %827 = vmatpush1.msra.mxu0 0.0
  %828 = vmatprep.subr.mxu0 0.0
  %829 = vmatpush1.msra.mxu0 0.0
  %830 = vmatprep.subr.mxu0 0.0
  %831 = vmatpush1.msra.mxu0 0.0
  %832 = vmatprep.subr.mxu0 0.0
  %833 = vmatpush1.msra.mxu0 0.0
  %834 = vmatprep.subr.mxu0 0.0
  %835 = vmatpush1.msra.mxu0 0.0
  %836 = vmatprep.subr.mxu0 0.0
  %837 = vmatpush1.msra.mxu0 0.0
  %838 = vmatprep.subr.mxu0 0.0
  %839 = vmatpush1.msra.mxu0 0.0
  %840 = vmatprep.subr.mxu0 0.0
  %841 = vmatpush1.msra.mxu0 0.0
  %842 = vmatprep.subr.mxu0 0.0
  %843 = vmatpush1.msra.mxu0 0.0
  %844 = vmatprep.subr.mxu0 0.0
  %845 = vmatpush1.msra.mxu0 0.0
  %846 = vmatprep.subr.mxu0 0.0
  %847 = vmatpush1.msra.mxu0 0.0
  %848 = vmatprep.subr.mxu0 0.0
  %849 = vmatpush1.msra.mxu0 0.0
  %850 = vmatprep.subr.mxu0 0.0
  %851 = vmatpush1.msra.mxu0 0.0
  %852 = vmatprep.subr.mxu0 0.0
  %853 = vmatpush1.msra.mxu0 0.0
  %854 = vmatprep.subr.mxu0 0.0
  %855 = vmatpush1.msra.mxu0 0.0
  %856 = vmatprep.subr.mxu0 0.0
  %857 = vmatpush1.msra.mxu0 0.0
  %858 = vmatprep.subr.mxu0 0.0
  %859 = vmatpush1.msra.mxu0 0.0
  %860 = vmatprep.subr.mxu0 0.0
  %861 = vmatpush1.msra.mxu0 0.0
  %862 = vmatprep.subr.mxu0 0.0
  %863 = vmatpush1.msra.mxu0 0.0
  %864 = vmatprep.subr.mxu0 0.0
  %865 = vmatpush1.msra.mxu0 0.0
  %866 = vmatprep.subr.mxu0 0.0
  %867 = vmatpush1.msra.mxu0 0.0
  %868 = vmatprep.subr.mxu0 0.0
  %869 = vmatpush1.msra.mxu0 0.0
  %870 = vmatprep.mubr.f32.mxu0 0.0
  %871 = vmatmul.mubr.f32.gmra.mrb[0].mxu0 %v350
  %v872 = vpop.f32.mrb[0].mxu0
  %v873 = vadd.f32 0.0, %v872
  %v874 = vpop.f32.mrb[0].mxu0
  %v875 = vadd.f32 0.0, %v874
  %876 = vmatprep.mubr.f32.mxu0 0.0
  %877 = vmatmul.mubr.f32.gmra.mrb[0].mxu0 %v353
  %v878 = vpop.f32.mrb[0].mxu0
  %v879 = vadd.f32 0.0, %v878
  %v880 = vpop.f32.mrb[0].mxu0
  %v881 = vadd.f32 0.0, %v880
  %882 = vmatprep.mubr.f32.mxu0 0.0
  %883 = vmatmul.mubr.f32.gmra.mrb[0].mxu0 %v356
  %v884 = vpop.f32.mrb[0].mxu0
  %v885 = vadd.f32 0.0, %v884
  %v886 = vpop.f32.mrb[0].mxu0
  %v887 = vadd.f32 0.0, %v886
  %888 = vmatprep.mubr.f32.mxu0 0.0
  %889 = vmatmul.mubr.f32.gmra.mrb[0].mxu0 %v359
  %v890 = vpop.f32.mrb[0].mxu0
  %v891 = vadd.f32 0.0, %v890
  %v892 = vpop.f32.mrb[0].mxu0
  %v893 = vadd.f32 0.0, %v892
  %894 = vdwg.mxu0
  %895 = vmatprep.subr.mxu0 %v183
  %896 = vmatpush1.msra.mxu0 %v185
  %897 = vmatprep.subr.mxu0 %v184
  %898 = vmatpush1.msra.mxu0 %v186
  %899 = vmatprep.subr.mxu0 %v42
  %900 = vmatpush1.msra.mxu0 %v41
  %901 = vmatprep.subr.mxu0 %v64
  %902 = vmatpush1.msra.mxu0 %v63
  %903 = vmatprep.subr.mxu0 %v314
  %904 = vmatpush1.msra.mxu0 %v316
  %905 = vmatprep.subr.mxu0 %v315
  %906 = vmatpush1.msra.mxu0 %v317
  %907 = vmatprep.subr.mxu0 0.0
  %908 = vmatpush1.msra.mxu0 0.0
  %909 = vmatprep.subr.mxu0 0.0
  %910 = vmatpush1.msra.mxu0 0.0
  %911 = vmatprep.subr.mxu0 0.0
  %912 = vmatpush1.msra.mxu0 0.0
  %913 = vmatprep.subr.mxu0 0.0
  %914 = vmatpush1.msra.mxu0 0.0
  %915 = vmatprep.subr.mxu0 0.0
  %916 = vmatpush1.msra.mxu0 0.0
  %917 = vmatprep.subr.mxu0 0.0
  %918 = vmatpush1.msra.mxu0 0.0
  %919 = vmatprep.subr.mxu0 0.0
  %920 = vmatpush1.msra.mxu0 0.0
  %921 = vmatprep.subr.mxu0 0.0
  %922 = vmatpush1.msra.mxu0 0.0
  %923 = vmatprep.subr.mxu0 0.0
  %924 = vmatpush1.msra.mxu0 0.0
  %925 = vmatprep.subr.mxu0 0.0
  %926 = vmatpush1.msra.mxu0 0.0
  %927 = vmatprep.subr.mxu0 0.0
  %928 = vmatpush1.msra.mxu0 0.0
  %929 = vmatprep.subr.mxu0 0.0
  %930 = vmatpush1.msra.mxu0 0.0
  %931 = vmatprep.subr.mxu0 0.0
  %932 = vmatpush1.msra.mxu0 0.0
  %933 = vmatprep.subr.mxu0 0.0
  %934 = vmatpush1.msra.mxu0 0.0
  %935 = vmatprep.subr.mxu0 0.0
  %936 = vmatpush1.msra.mxu0 0.0
  %937 = vmatprep.subr.mxu0 0.0
  %938 = vmatpush1.msra.mxu0 0.0
  %939 = vmatprep.subr.mxu0 0.0
  %940 = vmatpush1.msra.mxu0 0.0
  %941 = vmatprep.subr.mxu0 0.0
  %942 = vmatpush1.msra.mxu0 0.0
  %943 = vmatprep.subr.mxu0 0.0
  %944 = vmatpush1.msra.mxu0 0.0
  %945 = vmatprep.subr.mxu0 0.0
  %946 = vmatpush1.msra.mxu0 0.0
  %947 = vmatprep.subr.mxu0 0.0
  %948 = vmatpush1.msra.mxu0 0.0
  %949 = vmatprep.subr.mxu0 0.0
  %950 = vmatpush1.msra.mxu0 0.0
  %951 = vmatprep.subr.mxu0 0.0
  %952 = vmatpush1.msra.mxu0 0.0
  %953 = vmatprep.subr.mxu0 0.0
  %954 = vmatpush1.msra.mxu0 0.0
  %955 = vmatprep.subr.mxu0 0.0
  %956 = vmatpush1.msra.mxu0 0.0
  %957 = vmatprep.subr.mxu0 0.0
  %958 = vmatpush1.msra.mxu0 0.0
  %959 = vmatprep.mubr.f32.mxu0 0.0
  %960 = vmatmul.mubr.f32.gmra.mrb[0].mxu0 %v350
  %v961 = vpop.f32.mrb[0].mxu0
  %v962 = vadd.f32 0.0, %v961
  %v963 = vpop.f32.mrb[0].mxu0
  %v964 = vadd.f32 0.0, %v963
  %965 = vmatprep.mubr.f32.mxu0 0.0
  %966 = vmatmul.mubr.f32.gmra.mrb[0].mxu0 %v353
  %v967 = vpop.f32.mrb[0].mxu0
  %v968 = vadd.f32 0.0, %v967
  %v969 = vpop.f32.mrb[0].mxu0
  %v970 = vadd.f32 0.0, %v969
  %971 = vmatprep.mubr.f32.mxu0 0.0
  %972 = vmatmul.mubr.f32.gmra.mrb[0].mxu0 %v356
  %v973 = vpop.f32.mrb[0].mxu0
  %v974 = vadd.f32 0.0, %v973
  %v975 = vpop.f32.mrb[0].mxu0
  %v976 = vadd.f32 0.0, %v975
  %977 = vmatprep.mubr.f32.mxu0 0.0
  %978 = vmatmul.mubr.f32.gmra.mrb[0].mxu0 %v359
  %v979 = vpop.f32.mrb[0].mxu0
  %v980 = vadd.f32 0.0, %v979
  %v981 = vpop.f32.mrb[0].mxu0
  %v982 = vadd.f32 0.0, %v981
  %983 = vdwg.mxu0
  %984 = vmatprep.subr.mxu0 %v179
  %985 = vmatpush1.msra.mxu0 %v181
  %986 = vmatprep.subr.mxu0 %v180
  %987 = vmatpush1.msra.mxu0 %v182
  %988 = vmatprep.subr.mxu0 %v44
  %989 = vmatpush1.msra.mxu0 %v43
  %990 = vmatprep.subr.mxu0 %v66
  %991 = vmatpush1.msra.mxu0 %v65
  %992 = vmatprep.subr.mxu0 %v310
  %993 = vmatpush1.msra.mxu0 %v312
  %994 = vmatprep.subr.mxu0 %v311
  %995 = vmatpush1.msra.mxu0 %v313
  %996 = vmatprep.subr.mxu0 0.0
  %997 = vmatpush1.msra.mxu0 0.0
  %998 = vmatprep.subr.mxu0 0.0
  %999 = vmatpush1.msra.mxu0 0.0
  %1000 = vmatprep.subr.mxu0 0.0
  %1001 = vmatpush1.msra.mxu0 0.0
  %1002 = vmatprep.subr.mxu0 0.0
  %1003 = vmatpush1.msra.mxu0 0.0
  %1004 = vmatprep.subr.mxu0 0.0
  %1005 = vmatpush1.msra.mxu0 0.0
  %1006 = vmatprep.subr.mxu0 0.0
  %1007 = vmatpush1.msra.mxu0 0.0
  %1008 = vmatprep.subr.mxu0 0.0
  %1009 = vmatpush1.msra.mxu0 0.0
  %1010 = vmatprep.subr.mxu0 0.0
  %1011 = vmatpush1.msra.mxu0 0.0
  %1012 = vmatprep.subr.mxu0 0.0
  %1013 = vmatpush1.msra.mxu0 0.0
  %1014 = vmatprep.subr.mxu0 0.0
  %1015 = vmatpush1.msra.mxu0 0.0
  %1016 = vmatprep.subr.mxu0 0.0
  %1017 = vmatpush1.msra.mxu0 0.0
  %1018 = vmatprep.subr.mxu0 0.0
  %1019 = vmatpush1.msra.mxu0 0.0
  %1020 = vmatprep.subr.mxu0 0.0
  %1021 = vmatpush1.msra.mxu0 0.0
  %1022 = vmatprep.subr.mxu0 0.0
  %1023 = vmatpush1.msra.mxu0 0.0
  %1024 = vmatprep.subr.mxu0 0.0
  %1025 = vmatpush1.msra.mxu0 0.0
  %1026 = vmatprep.subr.mxu0 0.0
  %1027 = vmatpush1.msra.mxu0 0.0
  %1028 = vmatprep.subr.mxu0 0.0
  %1029 = vmatpush1.msra.mxu0 0.0
  %1030 = vmatprep.subr.mxu0 0.0
  %1031 = vmatpush1.msra.mxu0 0.0
  %1032 = vmatprep.subr.mxu0 0.0
  %1033 = vmatpush1.msra.mxu0 0.0
  %1034 = vmatprep.subr.mxu0 0.0
  %1035 = vmatpush1.msra.mxu0 0.0
  %1036 = vmatprep.subr.mxu0 0.0
  %1037 = vmatpush1.msra.mxu0 0.0
  %1038 = vmatprep.subr.mxu0 0.0
  %1039 = vmatpush1.msra.mxu0 0.0
  %1040 = vmatprep.subr.mxu0 0.0
  %1041 = vmatpush1.msra.mxu0 0.0
  %1042 = vmatprep.subr.mxu0 0.0
  %1043 = vmatpush1.msra.mxu0 0.0
  %1044 = vmatprep.subr.mxu0 0.0
  %1045 = vmatpush1.msra.mxu0 0.0
  %1046 = vmatprep.subr.mxu0 0.0
  %1047 = vmatpush1.msra.mxu0 0.0
  %1048 = vmatprep.mubr.f32.mxu0 0.0
  %1049 = vmatmul.mubr.f32.gmra.mrb[0].mxu0 %v350
  %v1050 = vpop.f32.mrb[0].mxu0
  %v1051 = vadd.f32 0.0, %v1050
  %v1052 = vpop.f32.mrb[0].mxu0
  %v1053 = vadd.f32 0.0, %v1052
  %1054 = vmatprep.mubr.f32.mxu0 0.0
  %1055 = vmatmul.mubr.f32.gmra.mrb[0].mxu0 %v353
  %v1056 = vpop.f32.mrb[0].mxu0
  %v1057 = vadd.f32 0.0, %v1056
  %v1058 = vpop.f32.mrb[0].mxu0
  %v1059 = vadd.f32 0.0, %v1058
  %1060 = vmatprep.mubr.f32.mxu0 0.0
  %1061 = vmatmul.mubr.f32.gmra.mrb[0].mxu0 %v356
  %v1062 = vpop.f32.mrb[0].mxu0
  %v1063 = vadd.f32 0.0, %v1062
  %v1064 = vpop.f32.mrb[0].mxu0
  %v1065 = vadd.f32 0.0, %v1064
  %1066 = vmatprep.mubr.f32.mxu0 0.0
  %1067 = vmatmul.mubr.f32.gmra.mrb[0].mxu0 %v359
  %v1068 = vpop.f32.mrb[0].mxu0
  %v1069 = vadd.f32 0.0, %v1068
  %v1070 = vpop.f32.mrb[0].mxu0
  %v1071 = vadd.f32 0.0, %v1070
  %1072 = vdwg.mxu0
  %1073 = vmatprep.subr.mxu0 %v175
  %1074 = vmatpush1.msra.mxu0 %v177
  %1075 = vmatprep.subr.mxu0 %v176
  %1076 = vmatpush1.msra.mxu0 %v178
  %1077 = vmatprep.subr.mxu0 %v46
  %1078 = vmatpush1.msra.mxu0 %v45
  %1079 = vmatprep.subr.mxu0 %v68
  %1080 = vmatpush1.msra.mxu0 %v67
  %1081 = vmatprep.subr.mxu0 %v306
  %1082 = vmatpush1.msra.mxu0 %v308
  %1083 = vmatprep.subr.mxu0 %v307
  %1084 = vmatpush1.msra.mxu0 %v309
  %1085 = vmatprep.subr.mxu0 0.0
  %1086 = vmatpush1.msra.mxu0 0.0
  %1087 = vmatprep.subr.mxu0 0.0
  %1088 = vmatpush1.msra.mxu0 0.0
  %1089 = vmatprep.subr.mxu0 0.0
  %1090 = vmatpush1.msra.mxu0 0.0
  %1091 = vmatprep.subr.mxu0 0.0
  %1092 = vmatpush1.msra.mxu0 0.0
  %1093 = vmatprep.subr.mxu0 0.0
  %1094 = vmatpush1.msra.mxu0 0.0
  %1095 = vmatprep.subr.mxu0 0.0
  %1096 = vmatpush1.msra.mxu0 0.0
  %1097 = vmatprep.subr.mxu0 0.0
  %1098 = vmatpush1.msra.mxu0 0.0
  %1099 = vmatprep.subr.mxu0 0.0
  %1100 = vmatpush1.msra.mxu0 0.0
  %1101 = vmatprep.subr.mxu0 0.0
  %1102 = vmatpush1.msra.mxu0 0.0
  %1103 = vmatprep.subr.mxu0 0.0
  %1104 = vmatpush1.msra.mxu0 0.0
  %1105 = vmatprep.subr.mxu0 0.0
  %1106 = vmatpush1.msra.mxu0 0.0
  %1107 = vmatprep.subr.mxu0 0.0
  %1108 = vmatpush1.msra.mxu0 0.0
  %1109 = vmatprep.subr.mxu0 0.0
  %1110 = vmatpush1.msra.mxu0 0.0
  %1111 = vmatprep.subr.mxu0 0.0
  %1112 = vmatpush1.msra.mxu0 0.0
  %1113 = vmatprep.subr.mxu0 0.0
  %1114 = vmatpush1.msra.mxu0 0.0
  %1115 = vmatprep.subr.mxu0 0.0
  %1116 = vmatpush1.msra.mxu0 0.0
  %1117 = vmatprep.subr.mxu0 0.0
  %1118 = vmatpush1.msra.mxu0 0.0
  %1119 = vmatprep.subr.mxu0 0.0
  %1120 = vmatpush1.msra.mxu0 0.0
  %1121 = vmatprep.subr.mxu0 0.0
  %1122 = vmatpush1.msra.mxu0 0.0
  %1123 = vmatprep.subr.mxu0 0.0
  %1124 = vmatpush1.msra.mxu0 0.0
  %1125 = vmatprep.subr.mxu0 0.0
  %1126 = vmatpush1.msra.mxu0 0.0
  %1127 = vmatprep.subr.mxu0 0.0
  %1128 = vmatpush1.msra.mxu0 0.0
  %1129 = vmatprep.subr.mxu0 0.0
  %1130 = vmatpush1.msra.mxu0 0.0
  %1131 = vmatprep.subr.mxu0 0.0
  %1132 = vmatpush1.msra.mxu0 0.0
  %1133 = vmatprep.subr.mxu0 0.0
  %1134 = vmatpush1.msra.mxu0 0.0
  %1135 = vmatprep.subr.mxu0 0.0
  %1136 = vmatpush1.msra.mxu0 0.0
  %1137 = vmatprep.mubr.f32.mxu0 0.0
  %1138 = vmatmul.mubr.f32.gmra.mrb[0].mxu0 %v350
  %v1139 = vpop.f32.mrb[0].mxu0
  %v1140 = vadd.f32 0.0, %v1139
  %v1141 = vpop.f32.mrb[0].mxu0
  %v1142 = vadd.f32 0.0, %v1141
  %1143 = vmatprep.mubr.f32.mxu0 0.0
  %1144 = vmatmul.mubr.f32.gmra.mrb[0].mxu0 %v353
  %v1145 = vpop.f32.mrb[0].mxu0
  %v1146 = vadd.f32 0.0, %v1145
  %v1147 = vpop.f32.mrb[0].mxu0
  %v1148 = vadd.f32 0.0, %v1147
  %1149 = vmatprep.mubr.f32.mxu0 0.0
  %1150 = vmatmul.mubr.f32.gmra.mrb[0].mxu0 %v356
  %v1151 = vpop.f32.mrb[0].mxu0
  %v1152 = vadd.f32 0.0, %v1151
  %v1153 = vpop.f32.mrb[0].mxu0
  %v1154 = vadd.f32 0.0, %v1153
  %1155 = vmatprep.mubr.f32.mxu0 0.0
  %1156 = vmatmul.mubr.f32.gmra.mrb[0].mxu0 %v359
  %v1157 = vpop.f32.mrb[0].mxu0
  %v1158 = vadd.f32 0.0, %v1157
  %v1159 = vpop.f32.mrb[0].mxu0
  %v1160 = vadd.f32 0.0, %v1159
  %1161 = vdwg.mxu0
  %1162 = vmatprep.subr.mxu0 %v171
  %1163 = vmatpush1.msra.mxu0 %v173
  %1164 = vmatprep.subr.mxu0 %v172
  %1165 = vmatpush1.msra.mxu0 %v174
  %1166 = vmatprep.subr.mxu0 %v48
  %1167 = vmatpush1.msra.mxu0 %v47
  %1168 = vmatprep.subr.mxu0 %v70
  %1169 = vmatpush1.msra.mxu0 %v69
  %1170 = vmatprep.subr.mxu0 %v302
  %1171 = vmatpush1.msra.mxu0 %v304
  %1172 = vmatprep.subr.mxu0 %v303
  %1173 = vmatpush1.msra.mxu0 %v305
  %1174 = vmatprep.subr.mxu0 0.0
  %1175 = vmatpush1.msra.mxu0 0.0
  %1176 = vmatprep.subr.mxu0 0.0
  %1177 = vmatpush1.msra.mxu0 0.0
  %1178 = vmatprep.subr.mxu0 0.0
  %1179 = vmatpush1.msra.mxu0 0.0
  %1180 = vmatprep.subr.mxu0 0.0
  %1181 = vmatpush1.msra.mxu0 0.0
  %1182 = vmatprep.subr.mxu0 0.0
  %1183 = vmatpush1.msra.mxu0 0.0
  %1184 = vmatprep.subr.mxu0 0.0
  %1185 = vmatpush1.msra.mxu0 0.0
  %1186 = vmatprep.subr.mxu0 0.0
  %1187 = vmatpush1.msra.mxu0 0.0
  %1188 = vmatprep.subr.mxu0 0.0
  %1189 = vmatpush1.msra.mxu0 0.0
  %1190 = vmatprep.subr.mxu0 0.0
  %1191 = vmatpush1.msra.mxu0 0.0
  %1192 = vmatprep.subr.mxu0 0.0
  %1193 = vmatpush1.msra.mxu0 0.0
  %1194 = vmatprep.subr.mxu0 0.0
  %1195 = vmatpush1.msra.mxu0 0.0
  %1196 = vmatprep.subr.mxu0 0.0
  %1197 = vmatpush1.msra.mxu0 0.0
  %1198 = vmatprep.subr.mxu0 0.0
  %1199 = vmatpush1.msra.mxu0 0.0
  %1200 = vmatprep.subr.mxu0 0.0
  %1201 = vmatpush1.msra.mxu0 0.0
  %1202 = vmatprep.subr.mxu0 0.0
  %1203 = vmatpush1.msra.mxu0 0.0
  %1204 = vmatprep.subr.mxu0 0.0
  %1205 = vmatpush1.msra.mxu0 0.0
  %1206 = vmatprep.subr.mxu0 0.0
  %1207 = vmatpush1.msra.mxu0 0.0
  %1208 = vmatprep.subr.mxu0 0.0
  %1209 = vmatpush1.msra.mxu0 0.0
  %1210 = vmatprep.subr.mxu0 0.0
  %1211 = vmatpush1.msra.mxu0 0.0
  %1212 = vmatprep.subr.mxu0 0.0
  %1213 = vmatpush1.msra.mxu0 0.0
  %1214 = vmatprep.subr.mxu0 0.0
  %1215 = vmatpush1.msra.mxu0 0.0
  %1216 = vmatprep.subr.mxu0 0.0
  %1217 = vmatpush1.msra.mxu0 0.0
  %1218 = vmatprep.subr.mxu0 0.0
  %1219 = vmatpush1.msra.mxu0 0.0
  %1220 = vmatprep.subr.mxu0 0.0
  %1221 = vmatpush1.msra.mxu0 0.0
  %1222 = vmatprep.subr.mxu0 0.0
  %1223 = vmatpush1.msra.mxu0 0.0
  %1224 = vmatprep.subr.mxu0 0.0
  %1225 = vmatpush1.msra.mxu0 0.0
  %1226 = vmatprep.mubr.f32.mxu0 0.0
  %1227 = vmatmul.mubr.f32.gmra.mrb[0].mxu0 %v350
  %v1228 = vpop.f32.mrb[0].mxu0
  %v1229 = vadd.f32 0.0, %v1228
  %v1230 = vpop.f32.mrb[0].mxu0
  %v1231 = vadd.f32 0.0, %v1230
  %1232 = vmatprep.mubr.f32.mxu0 0.0
  %1233 = vmatmul.mubr.f32.gmra.mrb[0].mxu0 %v353
  %v1234 = vpop.f32.mrb[0].mxu0
  %v1235 = vadd.f32 0.0, %v1234
  %v1236 = vpop.f32.mrb[0].mxu0
  %v1237 = vadd.f32 0.0, %v1236
  %1238 = vmatprep.mubr.f32.mxu0 0.0
  %1239 = vmatmul.mubr.f32.gmra.mrb[0].mxu0 %v356
  %v1240 = vpop.f32.mrb[0].mxu0
  %v1241 = vadd.f32 0.0, %v1240
  %v1242 = vpop.f32.mrb[0].mxu0
  %v1243 = vadd.f32 0.0, %v1242
  %1244 = vmatprep.mubr.f32.mxu0 0.0
  %1245 = vmatmul.mubr.f32.gmra.mrb[0].mxu0 %v359
  %v1246 = vpop.f32.mrb[0].mxu0
  %v1247 = vadd.f32 0.0, %v1246
  %v1248 = vpop.f32.mrb[0].mxu0
  %v1249 = vadd.f32 0.0, %v1248
  %1250 = vdwg.mxu0
  %1251 = vmatprep.subr.mxu0 %v167
  %1252 = vmatpush1.msra.mxu0 %v169
  %1253 = vmatprep.subr.mxu0 %v168
  %1254 = vmatpush1.msra.mxu0 %v170
  %1255 = vmatprep.subr.mxu0 %v50
  %1256 = vmatpush1.msra.mxu0 %v49
  %1257 = vmatprep.subr.mxu0 %v72
  %1258 = vmatpush1.msra.mxu0 %v71
  %1259 = vmatprep.subr.mxu0 %v342
  %1260 = vmatpush1.msra.mxu0 %v300
  %1261 = vmatprep.subr.mxu0 %v343
  %1262 = vmatpush1.msra.mxu0 %v301
  %1263 = vmatprep.subr.mxu0 0.0
  %1264 = vmatpush1.msra.mxu0 0.0
  %1265 = vmatprep.subr.mxu0 0.0
  %1266 = vmatpush1.msra.mxu0 0.0
  %1267 = vmatprep.subr.mxu0 0.0
  %1268 = vmatpush1.msra.mxu0 0.0
  %1269 = vmatprep.subr.mxu0 0.0
  %1270 = vmatpush1.msra.mxu0 0.0
  %1271 = vmatprep.subr.mxu0 0.0
  %1272 = vmatpush1.msra.mxu0 0.0
  %1273 = vmatprep.subr.mxu0 0.0
  %1274 = vmatpush1.msra.mxu0 0.0
  %1275 = vmatprep.subr.mxu0 0.0
  %1276 = vmatpush1.msra.mxu0 0.0
  %1277 = vmatprep.subr.mxu0 0.0
  %1278 = vmatpush1.msra.mxu0 0.0
  %1279 = vmatprep.subr.mxu0 0.0
  %1280 = vmatpush1.msra.mxu0 0.0
  %1281 = vmatprep.subr.mxu0 0.0
  %1282 = vmatpush1.msra.mxu0 0.0
  %1283 = vmatprep.subr.mxu0 0.0
  %1284 = vmatpush1.msra.mxu0 0.0
  %1285 = vmatprep.subr.mxu0 0.0
  %1286 = vmatpush1.msra.mxu0 0.0
  %1287 = vmatprep.subr.mxu0 0.0
  %1288 = vmatpush1.msra.mxu0 0.0
  %1289 = vmatprep.subr.mxu0 0.0
  %1290 = vmatpush1.msra.mxu0 0.0
  %1291 = vmatprep.subr.mxu0 0.0
  %1292 = vmatpush1.msra.mxu0 0.0
  %1293 = vmatprep.subr.mxu0 0.0
  %1294 = vmatpush1.msra.mxu0 0.0
  %1295 = vmatprep.subr.mxu0 0.0
  %1296 = vmatpush1.msra.mxu0 0.0
  %1297 = vmatprep.subr.mxu0 0.0
  %1298 = vmatpush1.msra.mxu0 0.0
  %1299 = vmatprep.subr.mxu0 0.0
  %1300 = vmatpush1.msra.mxu0 0.0
  %1301 = vmatprep.subr.mxu0 0.0
  %1302 = vmatpush1.msra.mxu0 0.0
  %1303 = vmatprep.subr.mxu0 0.0
  %1304 = vmatpush1.msra.mxu0 0.0
  %1305 = vmatprep.subr.mxu0 0.0
  %1306 = vmatpush1.msra.mxu0 0.0
  %1307 = vmatprep.subr.mxu0 0.0
  %1308 = vmatpush1.msra.mxu0 0.0
  %1309 = vmatprep.subr.mxu0 0.0
  %1310 = vmatpush1.msra.mxu0 0.0
  %1311 = vmatprep.subr.mxu0 0.0
  %1312 = vmatpush1.msra.mxu0 0.0
  %1313 = vmatprep.subr.mxu0 0.0
  %1314 = vmatpush1.msra.mxu0 0.0
  %1315 = vmatprep.mubr.f32.mxu0 0.0
  %1316 = vmatmul.mubr.f32.gmra.mrb[0].mxu0 %v350
  %v1317 = vpop.f32.mrb[0].mxu0
  %v1318 = vadd.f32 0.0, %v1317
  %v1319 = vpop.f32.mrb[0].mxu0
  %v1320 = vadd.f32 0.0, %v1319
  %1321 = vmatprep.mubr.f32.mxu0 0.0
  %1322 = vmatmul.mubr.f32.gmra.mrb[0].mxu0 %v353
  %v1323 = vpop.f32.mrb[0].mxu0
  %v1324 = vadd.f32 0.0, %v1323
  %v1325 = vpop.f32.mrb[0].mxu0
  %v1326 = vadd.f32 0.0, %v1325
  %1327 = vmatprep.mubr.f32.mxu0 0.0
  %1328 = vmatmul.mubr.f32.gmra.mrb[0].mxu0 %v356
  %v1329 = vpop.f32.mrb[0].mxu0
  %v1330 = vadd.f32 0.0, %v1329
  %v1331 = vpop.f32.mrb[0].mxu0
  %v1332 = vadd.f32 0.0, %v1331
  %1333 = vmatprep.mubr.f32.mxu0 0.0
  %1334 = vmatmul.mubr.f32.gmra.mrb[0].mxu0 %v359
  %v1335 = vpop.f32.mrb[0].mxu0
  %v1336 = vadd.f32 0.0, %v1335
  %v1337 = vpop.f32.mrb[0].mxu0
  %v1338 = vadd.f32 0.0, %v1337
  %1339 = vdwg.mxu0
  %v1343 = vlaneseq
  %v1344 = vshrl.u32 %v1343, 7
  %v1345 = vsub.s32 0, %v1344
  %v1346 = vrot.slane %v73, %v1345
  %v1347 = vlaneseq
  %v1348 = vshrl.u32 %v1347, 7
  %v1349 = vsub.s32 1, %v1348
  %v1350 = vrot.slane %v73, %v1349
  %v1351 = vlaneseq
  %v1352 = vshrl.u32 %v1351, 7
  %v1353 = vsub.s32 2, %v1352
  %v1354 = vrot.slane %v73, %v1353
  %v1355 = vlaneseq
  %v1356 = vshrl.u32 %v1355, 7
  %v1357 = vsub.s32 3, %v1356
  %v1358 = vrot.slane %v73, %v1357
  %v1359 = vlaneseq
  %v1360 = vshrl.u32 %v1359, 7
  %v1361 = vsub.s32 4, %v1360
  %v1362 = vrot.slane %v73, %v1361
  %v1363 = vlaneseq
  %v1364 = vshrl.u32 %v1363, 7
  %v1365 = vsub.s32 5, %v1364
  %v1366 = vrot.slane %v73, %v1365
  %v1367 = vlaneseq
  %v1368 = vshrl.u32 %v1367, 7
  %v1369 = vsub.s32 6, %v1368
  %v1370 = vrot.slane %v73, %v1369
  %v1371 = vlaneseq
  %v1372 = vshrl.u32 %v1371, 7
  %v1373 = vsub.s32 7, %v1372
  %v1374 = vrot.slane %v73, %v1373
  %v1375 = vlaneseq
  %v1376 = vshrl.u32 %v1375, 7
  %v1377 = vsub.s32 0, %v1376
  %v1378 = vrot.slane %v74, %v1377
  %v1379 = vlaneseq
  %v1380 = vshrl.u32 %v1379, 7
  %v1381 = vsub.s32 1, %v1380
  %v1382 = vrot.slane %v74, %v1381
  %v1383 = vlaneseq
  %v1384 = vshrl.u32 %v1383, 7
  %v1385 = vsub.s32 2, %v1384
  %v1386 = vrot.slane %v74, %v1385
  %v1387 = vlaneseq
  %v1388 = vshrl.u32 %v1387, 7
  %v1389 = vsub.s32 3, %v1388
  %v1390 = vrot.slane %v74, %v1389
  %v1391 = vlaneseq
  %v1392 = vshrl.u32 %v1391, 7
  %v1393 = vsub.s32 4, %v1392
  %v1394 = vrot.slane %v74, %v1393
  %v1395 = vlaneseq
  %v1396 = vshrl.u32 %v1395, 7
  %v1397 = vsub.s32 5, %v1396
  %v1398 = vrot.slane %v74, %v1397
  %v1399 = vlaneseq
  %v1400 = vshrl.u32 %v1399, 7
  %v1401 = vsub.s32 6, %v1400
  %v1402 = vrot.slane %v74, %v1401
  %v1403 = vlaneseq
  %v1404 = vshrl.u32 %v1403, 7
  %v1405 = vsub.s32 7, %v1404
  %v1406 = vrot.slane %v74, %v1405
  %v1407 = vlaneseq
  %v1408 = vshrl.u32 %v1407, 7
  %v1409 = vsub.s32 0, %v1408
  %v1410 = vrot.slane %v75, %v1409
  %v1411 = vlaneseq
  %v1412 = vshrl.u32 %v1411, 7
  %v1413 = vsub.s32 1, %v1412
  %v1414 = vrot.slane %v75, %v1413
  %v1415 = vlaneseq
  %v1416 = vshrl.u32 %v1415, 7
  %v1417 = vsub.s32 2, %v1416
  %v1418 = vrot.slane %v75, %v1417
  %v1419 = vlaneseq
  %v1420 = vshrl.u32 %v1419, 7
  %v1421 = vsub.s32 3, %v1420
  %v1422 = vrot.slane %v75, %v1421
  %v1423 = vlaneseq
  %v1424 = vshrl.u32 %v1423, 7
  %v1425 = vsub.s32 4, %v1424
  %v1426 = vrot.slane %v75, %v1425
  %v1427 = vlaneseq
  %v1428 = vshrl.u32 %v1427, 7
  %v1429 = vsub.s32 5, %v1428
  %v1430 = vrot.slane %v75, %v1429
  %v1453 = vmul.f32 %v428, %v1346
  %v1454 = vmul.f32 %v430, %v1350
  %v1455 = vmul.f32 %v517, %v1354
  %v1456 = vmul.f32 %v519, %v1358
  %v1457 = vmul.f32 %v606, %v1362
  %v1458 = vmul.f32 %v608, %v1366
  %v1459 = vmul.f32 %v695, %v1370
  %v1460 = vmul.f32 %v697, %v1374
  %v1461 = vmul.f32 %v784, %v1378
  %v1462 = vmul.f32 %v786, %v1382
  %v1463 = vmul.f32 %v873, %v1386
  %v1464 = vmul.f32 %v875, %v1390
  %v1465 = vmul.f32 %v962, %v1394
  %v1466 = vmul.f32 %v964, %v1398
  %v1467 = vmul.f32 %v1051, %v1402
  %v1468 = vmul.f32 %v1053, %v1406
  %v1469 = vmul.f32 %v1140, %v1410
  %v1470 = vmul.f32 %v1142, %v1414
  %v1471 = vmul.f32 %v1229, %v1418
  %v1472 = vmul.f32 %v1231, %v1422
  %v1473 = vmul.f32 %v1318, %v1426
  %v1474 = vmul.f32 %v1320, %v1430
  %v1475 = vmul.f32 %v434, %v1346
  %v1476 = vmul.f32 %v436, %v1350
  %v1477 = vmul.f32 %v523, %v1354
  %v1478 = vmul.f32 %v525, %v1358
  %v1479 = vmul.f32 %v612, %v1362
  %v1480 = vmul.f32 %v614, %v1366
  %v1481 = vmul.f32 %v701, %v1370
  %v1482 = vmul.f32 %v703, %v1374
  %v1483 = vmul.f32 %v790, %v1378
  %v1484 = vmul.f32 %v792, %v1382
  %v1485 = vmul.f32 %v879, %v1386
  %v1486 = vmul.f32 %v881, %v1390
  %v1487 = vmul.f32 %v968, %v1394
  %v1488 = vmul.f32 %v970, %v1398
  %v1489 = vmul.f32 %v1057, %v1402
  %v1490 = vmul.f32 %v1059, %v1406
  %v1491 = vmul.f32 %v1146, %v1410
  %v1492 = vmul.f32 %v1148, %v1414
  %v1493 = vmul.f32 %v1235, %v1418
  %v1494 = vmul.f32 %v1237, %v1422
  %v1495 = vmul.f32 %v1324, %v1426
  %v1496 = vmul.f32 %v1326, %v1430
  %v1497 = vmul.f32 %v440, %v1346
  %v1498 = vmul.f32 %v442, %v1350
  %v1499 = vmul.f32 %v529, %v1354
  %v1500 = vmul.f32 %v531, %v1358
  %v1501 = vmul.f32 %v618, %v1362
  %v1502 = vmul.f32 %v620, %v1366
  %v1503 = vmul.f32 %v707, %v1370
  %v1504 = vmul.f32 %v709, %v1374
  %v1505 = vmul.f32 %v796, %v1378
  %v1506 = vmul.f32 %v798, %v1382
  %v1507 = vmul.f32 %v885, %v1386
  %v1508 = vmul.f32 %v887, %v1390
  %v1509 = vmul.f32 %v974, %v1394
  %v1510 = vmul.f32 %v976, %v1398
  %v1511 = vmul.f32 %v1063, %v1402
  %v1512 = vmul.f32 %v1065, %v1406
  %v1513 = vmul.f32 %v1152, %v1410
  %v1514 = vmul.f32 %v1154, %v1414
  %v1515 = vmul.f32 %v1241, %v1418
  %v1516 = vmul.f32 %v1243, %v1422
  %v1517 = vmul.f32 %v1330, %v1426
  %v1518 = vmul.f32 %v1332, %v1430
  %v1519 = vmul.f32 %v446, %v1346
  %v1520 = vmul.f32 %v448, %v1350
  %v1521 = vmul.f32 %v535, %v1354
  %v1522 = vmul.f32 %v537, %v1358
  %v1523 = vmul.f32 %v624, %v1362
  %v1524 = vmul.f32 %v626, %v1366
  %v1525 = vmul.f32 %v713, %v1370
  %v1526 = vmul.f32 %v715, %v1374
  %v1527 = vmul.f32 %v802, %v1378
  %v1528 = vmul.f32 %v804, %v1382
  %v1529 = vmul.f32 %v891, %v1386
  %v1530 = vmul.f32 %v893, %v1390
  %v1531 = vmul.f32 %v980, %v1394
  %v1532 = vmul.f32 %v982, %v1398
  %v1533 = vmul.f32 %v1069, %v1402
  %v1534 = vmul.f32 %v1071, %v1406
  %v1535 = vmul.f32 %v1158, %v1410
  %v1536 = vmul.f32 %v1160, %v1414
  %v1537 = vmul.f32 %v1247, %v1418
  %v1538 = vmul.f32 %v1249, %v1422
  %v1539 = vmul.f32 %v1336, %v1426
  %v1540 = vmul.f32 %v1338, %v1430
  %v1541 = vadd.f32 %v1453, %v1454
  %v1542 = vadd.f32 %v1541, %v1455
  %v1543 = vadd.f32 %v1542, %v1456
  %v1544 = vadd.f32 %v1543, %v1457
  %v1545 = vadd.f32 %v1544, %v1458
  %v1546 = vadd.f32 %v1545, %v1459
  %v1547 = vadd.f32 %v1546, %v1460
  %v1548 = vadd.f32 %v1547, %v1461
  %v1549 = vadd.f32 %v1548, %v1462
  %v1550 = vadd.f32 %v1549, %v1463
  %v1551 = vadd.f32 %v1550, %v1464
  %v1552 = vadd.f32 %v1551, %v1465
  %v1553 = vadd.f32 %v1552, %v1466
  %v1554 = vadd.f32 %v1553, %v1467
  %v1555 = vadd.f32 %v1554, %v1468
  %v1556 = vadd.f32 %v1555, %v1469
  %v1557 = vadd.f32 %v1556, %v1470
  %v1558 = vadd.f32 %v1557, %v1471
  %v1559 = vadd.f32 %v1558, %v1472
  %v1560 = vadd.f32 %v1559, %v1473
  %v1561 = vadd.f32 %v1560, %v1474
  %1562 = vadd.xlane.f32.xlu0 %v1561
  %v1563 = vpop.xlane.xlu0 %1562
  %v1564 = vadd.f32 %v1475, %v1476
  %v1565 = vadd.f32 %v1564, %v1477
  %v1566 = vadd.f32 %v1565, %v1478
  %v1567 = vadd.f32 %v1566, %v1479
  %v1568 = vadd.f32 %v1567, %v1480
  %v1569 = vadd.f32 %v1568, %v1481
  %v1570 = vadd.f32 %v1569, %v1482
  %v1571 = vadd.f32 %v1570, %v1483
  %v1572 = vadd.f32 %v1571, %v1484
  %v1573 = vadd.f32 %v1572, %v1485
  %v1574 = vadd.f32 %v1573, %v1486
  %v1575 = vadd.f32 %v1574, %v1487
  %v1576 = vadd.f32 %v1575, %v1488
  %v1577 = vadd.f32 %v1576, %v1489
  %v1578 = vadd.f32 %v1577, %v1490
  %v1579 = vadd.f32 %v1578, %v1491
  %v1580 = vadd.f32 %v1579, %v1492
  %v1581 = vadd.f32 %v1580, %v1493
  %v1582 = vadd.f32 %v1581, %v1494
  %v1583 = vadd.f32 %v1582, %v1495
  %v1584 = vadd.f32 %v1583, %v1496
  %1585 = vadd.xlane.f32.xlu0 %v1584
  %v1586 = vpop.xlane.xlu0 %1585
  %v1587 = vadd.f32 %v1497, %v1498
  %v1588 = vadd.f32 %v1587, %v1499
  %v1589 = vadd.f32 %v1588, %v1500
  %v1590 = vadd.f32 %v1589, %v1501
  %v1591 = vadd.f32 %v1590, %v1502
  %v1592 = vadd.f32 %v1591, %v1503
  %v1593 = vadd.f32 %v1592, %v1504
  %v1594 = vadd.f32 %v1593, %v1505
  %v1595 = vadd.f32 %v1594, %v1506
  %v1596 = vadd.f32 %v1595, %v1507
  %v1597 = vadd.f32 %v1596, %v1508
  %v1598 = vadd.f32 %v1597, %v1509
  %v1599 = vadd.f32 %v1598, %v1510
  %v1600 = vadd.f32 %v1599, %v1511
  %v1601 = vadd.f32 %v1600, %v1512
  %v1602 = vadd.f32 %v1601, %v1513
  %v1603 = vadd.f32 %v1602, %v1514
  %v1604 = vadd.f32 %v1603, %v1515
  %v1605 = vadd.f32 %v1604, %v1516
  %v1606 = vadd.f32 %v1605, %v1517
  %v1607 = vadd.f32 %v1606, %v1518
  %1608 = vadd.xlane.f32.xlu0 %v1607
  %v1609 = vpop.xlane.xlu0 %1608
  %v1610 = vadd.f32 %v1519, %v1520
  %v1611 = vadd.f32 %v1610, %v1521
  %v1612 = vadd.f32 %v1611, %v1522
  %v1613 = vadd.f32 %v1612, %v1523
  %v1614 = vadd.f32 %v1613, %v1524
  %v1615 = vadd.f32 %v1614, %v1525
  %v1616 = vadd.f32 %v1615, %v1526
  %v1617 = vadd.f32 %v1616, %v1527
  %v1618 = vadd.f32 %v1617, %v1528
  %v1619 = vadd.f32 %v1618, %v1529
  %v1620 = vadd.f32 %v1619, %v1530
  %v1621 = vadd.f32 %v1620, %v1531
  %v1622 = vadd.f32 %v1621, %v1532
  %v1623 = vadd.f32 %v1622, %v1533
  %v1624 = vadd.f32 %v1623, %v1534
  %v1625 = vadd.f32 %v1624, %v1535
  %v1626 = vadd.f32 %v1625, %v1536
  %v1627 = vadd.f32 %v1626, %v1537
  %v1628 = vadd.f32 %v1627, %v1538
  %v1629 = vadd.f32 %v1628, %v1539
  %v1630 = vadd.f32 %v1629, %v1540
  %1631 = vadd.xlane.f32.xlu0 %v1630
  %v1632 = vpop.xlane.xlu0 %1631
  %v1633 = vmul.f32 %v1453, %v1453
  %v1634 = vmul.f32 %v1454, %v1454
  %v1635 = vmul.f32 %v1455, %v1455
  %v1636 = vmul.f32 %v1456, %v1456
  %v1637 = vmul.f32 %v1457, %v1457
  %v1638 = vmul.f32 %v1458, %v1458
  %v1639 = vmul.f32 %v1459, %v1459
  %v1640 = vmul.f32 %v1460, %v1460
  %v1641 = vmul.f32 %v1461, %v1461
  %v1642 = vmul.f32 %v1462, %v1462
  %v1643 = vmul.f32 %v1463, %v1463
  %v1644 = vmul.f32 %v1464, %v1464
  %v1645 = vmul.f32 %v1465, %v1465
  %v1646 = vmul.f32 %v1466, %v1466
  %v1647 = vmul.f32 %v1467, %v1467
  %v1648 = vmul.f32 %v1468, %v1468
  %v1649 = vmul.f32 %v1469, %v1469
  %v1650 = vmul.f32 %v1470, %v1470
  %v1651 = vmul.f32 %v1471, %v1471
  %v1652 = vmul.f32 %v1472, %v1472
  %v1653 = vmul.f32 %v1473, %v1473
  %v1654 = vmul.f32 %v1474, %v1474
  %v1655 = vmul.f32 %v1475, %v1475
  %v1656 = vmul.f32 %v1476, %v1476
  %v1657 = vmul.f32 %v1477, %v1477
  %v1658 = vmul.f32 %v1478, %v1478
  %v1659 = vmul.f32 %v1479, %v1479
  %v1660 = vmul.f32 %v1480, %v1480
  %v1661 = vmul.f32 %v1481, %v1481
  %v1662 = vmul.f32 %v1482, %v1482
  %v1663 = vmul.f32 %v1483, %v1483
  %v1664 = vmul.f32 %v1484, %v1484
  %v1665 = vmul.f32 %v1485, %v1485
  %v1666 = vmul.f32 %v1486, %v1486
  %v1667 = vmul.f32 %v1487, %v1487
  %v1668 = vmul.f32 %v1488, %v1488
  %v1669 = vmul.f32 %v1489, %v1489
  %v1670 = vmul.f32 %v1490, %v1490
  %v1671 = vmul.f32 %v1491, %v1491
  %v1672 = vmul.f32 %v1492, %v1492
  %v1673 = vmul.f32 %v1493, %v1493
  %v1674 = vmul.f32 %v1494, %v1494
  %v1675 = vmul.f32 %v1495, %v1495
  %v1676 = vmul.f32 %v1496, %v1496
  %v1677 = vmul.f32 %v1497, %v1497
  %v1678 = vmul.f32 %v1498, %v1498
  %v1679 = vmul.f32 %v1499, %v1499
  %v1680 = vmul.f32 %v1500, %v1500
  %v1681 = vmul.f32 %v1501, %v1501
  %v1682 = vmul.f32 %v1502, %v1502
  %v1683 = vmul.f32 %v1503, %v1503
  %v1684 = vmul.f32 %v1504, %v1504
  %v1685 = vmul.f32 %v1505, %v1505
  %v1686 = vmul.f32 %v1506, %v1506
  %v1687 = vmul.f32 %v1507, %v1507
  %v1688 = vmul.f32 %v1508, %v1508
  %v1689 = vmul.f32 %v1509, %v1509
  %v1690 = vmul.f32 %v1510, %v1510
  %v1691 = vmul.f32 %v1511, %v1511
  %v1692 = vmul.f32 %v1512, %v1512
  %v1693 = vmul.f32 %v1513, %v1513
  %v1694 = vmul.f32 %v1514, %v1514
  %v1695 = vmul.f32 %v1515, %v1515
  %v1696 = vmul.f32 %v1516, %v1516
  %v1697 = vmul.f32 %v1517, %v1517
  %v1698 = vmul.f32 %v1518, %v1518
  %v1699 = vmul.f32 %v1519, %v1519
  %v1700 = vmul.f32 %v1520, %v1520
  %v1701 = vmul.f32 %v1521, %v1521
  %v1702 = vmul.f32 %v1522, %v1522
  %v1703 = vmul.f32 %v1523, %v1523
  %v1704 = vmul.f32 %v1524, %v1524
  %v1705 = vmul.f32 %v1525, %v1525
  %v1706 = vmul.f32 %v1526, %v1526
  %v1707 = vmul.f32 %v1527, %v1527
  %v1708 = vmul.f32 %v1528, %v1528
  %v1709 = vmul.f32 %v1529, %v1529
  %v1710 = vmul.f32 %v1530, %v1530
  %v1711 = vmul.f32 %v1531, %v1531
  %v1712 = vmul.f32 %v1532, %v1532
  %v1713 = vmul.f32 %v1533, %v1533
  %v1714 = vmul.f32 %v1534, %v1534
  %v1715 = vmul.f32 %v1535, %v1535
  %v1716 = vmul.f32 %v1536, %v1536
  %v1717 = vmul.f32 %v1537, %v1537
  %v1718 = vmul.f32 %v1538, %v1538
  %v1719 = vmul.f32 %v1539, %v1539
  %v1720 = vmul.f32 %v1540, %v1540
  %v1721 = vadd.f32 %v1633, %v1634
  %v1722 = vadd.f32 %v1721, %v1635
  %v1723 = vadd.f32 %v1722, %v1636
  %v1724 = vadd.f32 %v1723, %v1637
  %v1725 = vadd.f32 %v1724, %v1638
  %v1726 = vadd.f32 %v1725, %v1639
  %v1727 = vadd.f32 %v1726, %v1640
  %v1728 = vadd.f32 %v1727, %v1641
  %v1729 = vadd.f32 %v1728, %v1642
  %v1730 = vadd.f32 %v1729, %v1643
  %v1731 = vadd.f32 %v1730, %v1644
  %v1732 = vadd.f32 %v1731, %v1645
  %v1733 = vadd.f32 %v1732, %v1646
  %v1734 = vadd.f32 %v1733, %v1647
  %v1735 = vadd.f32 %v1734, %v1648
  %v1736 = vadd.f32 %v1735, %v1649
  %v1737 = vadd.f32 %v1736, %v1650
  %v1738 = vadd.f32 %v1737, %v1651
  %v1739 = vadd.f32 %v1738, %v1652
  %v1740 = vadd.f32 %v1739, %v1653
  %v1741 = vadd.f32 %v1740, %v1654
  %1742 = vadd.xlane.f32.xlu0 %v1741
  %v1743 = vpop.xlane.xlu0 %1742
  %v1744 = vadd.f32 %v1655, %v1656
  %v1745 = vadd.f32 %v1744, %v1657
  %v1746 = vadd.f32 %v1745, %v1658
  %v1747 = vadd.f32 %v1746, %v1659
  %v1748 = vadd.f32 %v1747, %v1660
  %v1749 = vadd.f32 %v1748, %v1661
  %v1750 = vadd.f32 %v1749, %v1662
  %v1751 = vadd.f32 %v1750, %v1663
  %v1752 = vadd.f32 %v1751, %v1664
  %v1753 = vadd.f32 %v1752, %v1665
  %v1754 = vadd.f32 %v1753, %v1666
  %v1755 = vadd.f32 %v1754, %v1667
  %v1756 = vadd.f32 %v1755, %v1668
  %v1757 = vadd.f32 %v1756, %v1669
  %v1758 = vadd.f32 %v1757, %v1670
  %v1759 = vadd.f32 %v1758, %v1671
  %v1760 = vadd.f32 %v1759, %v1672
  %v1761 = vadd.f32 %v1760, %v1673
  %v1762 = vadd.f32 %v1761, %v1674
  %v1763 = vadd.f32 %v1762, %v1675
  %v1764 = vadd.f32 %v1763, %v1676
  %1765 = vadd.xlane.f32.xlu0 %v1764
  %v1766 = vpop.xlane.xlu0 %1765
  %v1767 = vadd.f32 %v1677, %v1678
  %v1768 = vadd.f32 %v1767, %v1679
  %v1769 = vadd.f32 %v1768, %v1680
  %v1770 = vadd.f32 %v1769, %v1681
  %v1771 = vadd.f32 %v1770, %v1682
  %v1772 = vadd.f32 %v1771, %v1683
  %v1773 = vadd.f32 %v1772, %v1684
  %v1774 = vadd.f32 %v1773, %v1685
  %v1775 = vadd.f32 %v1774, %v1686
  %v1776 = vadd.f32 %v1775, %v1687
  %v1777 = vadd.f32 %v1776, %v1688
  %v1778 = vadd.f32 %v1777, %v1689
  %v1779 = vadd.f32 %v1778, %v1690
  %v1780 = vadd.f32 %v1779, %v1691
  %v1781 = vadd.f32 %v1780, %v1692
  %v1782 = vadd.f32 %v1781, %v1693
  %v1783 = vadd.f32 %v1782, %v1694
  %v1784 = vadd.f32 %v1783, %v1695
  %v1785 = vadd.f32 %v1784, %v1696
  %v1786 = vadd.f32 %v1785, %v1697
  %v1787 = vadd.f32 %v1786, %v1698
  %1788 = vadd.xlane.f32.xlu0 %v1787
  %v1789 = vpop.xlane.xlu0 %1788
  %v1790 = vadd.f32 %v1699, %v1700
  %v1791 = vadd.f32 %v1790, %v1701
  %v1792 = vadd.f32 %v1791, %v1702
  %v1793 = vadd.f32 %v1792, %v1703
  %v1794 = vadd.f32 %v1793, %v1704
  %v1795 = vadd.f32 %v1794, %v1705
  %v1796 = vadd.f32 %v1795, %v1706
  %v1797 = vadd.f32 %v1796, %v1707
  %v1798 = vadd.f32 %v1797, %v1708
  %v1799 = vadd.f32 %v1798, %v1709
  %v1800 = vadd.f32 %v1799, %v1710
  %v1801 = vadd.f32 %v1800, %v1711
  %v1802 = vadd.f32 %v1801, %v1712
  %v1803 = vadd.f32 %v1802, %v1713
  %v1804 = vadd.f32 %v1803, %v1714
  %v1805 = vadd.f32 %v1804, %v1715
  %v1806 = vadd.f32 %v1805, %v1716
  %v1807 = vadd.f32 %v1806, %v1717
  %v1808 = vadd.f32 %v1807, %v1718
  %v1809 = vadd.f32 %v1808, %v1719
  %v1810 = vadd.f32 %v1809, %v1720
  %1811 = vadd.xlane.f32.xlu0 %v1810
  %v1812 = vpop.xlane.xlu0 %1811
  %v1813 = vmul.f32 %v1563, 0.0003660322
  %v1814 = vmul.f32 %v1586, 0.0003660322
  %v1815 = vmul.f32 %v1609, 0.0003660322
  %v1816 = vmul.f32 %v1632, 0.0003660322
  %v1817 = vmul.f32 %v1743, 0.0003660322
  %v1818 = vmul.f32 %v1766, 0.0003660322
  %v1819 = vmul.f32 %v1789, 0.0003660322
  %v1820 = vmul.f32 %v1812, 0.0003660322
  %v1821 = vmul.f32 %v1813, %v1813
  %v1822 = vmul.f32 %v1814, %v1814
  %v1823 = vmul.f32 %v1815, %v1815
  %v1824 = vmul.f32 %v1816, %v1816
  %v1825 = vsub.f32 %v1817, %v1821
  %v1826 = vsub.f32 %v1818, %v1822
  %v1827 = vsub.f32 %v1819, %v1823
  %v1828 = vsub.f32 %v1820, %v1824
  %v1829 = vmax.f32 %v1825, 0.0
  %v1830 = vmax.f32 %v1826, 0.0
  %v1831 = vmax.f32 %v1827, 0.0
  %v1832 = vmax.f32 %v1828, 0.0
  %v1833 = vadd.f32 %v1829, 1e-05
  %v1834 = vadd.f32 %v1830, 1e-05
  %v1835 = vadd.f32 %v1831, 1e-05
  %v1836 = vadd.f32 %v1832, 1e-05
  %v1837 = vrsqrt.pop %v1833
  %v1838 = vrsqrt.pop %v1834
  %v1839 = vrsqrt.pop %v1835
  %v1840 = vrsqrt.pop %v1836
  %v1841 = vld [vmem:[%s3] sm:$0xff]
  %v1842 = vld [vmem:[%s3 + $0x8] sm:$0xff]
  %v1843 = vld [vmem:[%s3 + $0x10] sm:$0xff]
  %v1844 = vld [vmem:[%s3 + $0x18] sm:$0xff]
  %v1845 = vmul.f32 %v1837, %v1841
  %v1846 = vmul.f32 %v1838, %v1842
  %v1847 = vmul.f32 %v1839, %v1843
  %v1848 = vmul.f32 %v1840, %v1844
  %v1849 = vld [vmem:[%s4] sm:$0xff]
  %v1850 = vld [vmem:[%s4 + $0x8] sm:$0xff]
  %v1851 = vld [vmem:[%s4 + $0x10] sm:$0xff]
  %v1852 = vld [vmem:[%s4 + $0x18] sm:$0xff]
  %v1853 = vmul.f32 %v1813, %v1845
  %v1854 = vmul.f32 %v1814, %v1846
  %v1855 = vmul.f32 %v1815, %v1847
  %v1856 = vmul.f32 %v1816, %v1848
  %v1857 = vsub.f32 %v1849, %v1853
  %v1858 = vsub.f32 %v1850, %v1854
  %v1859 = vsub.f32 %v1851, %v1855
  %v1860 = vsub.f32 %v1852, %v1856
  %1862 = vset.pattern.permute.xlu0 0
  %1863 = vperm.xlu0 %1862, %v1845
  %v1864 = vpop.permute.xlu0 %1863
  %1867 = vset.pattern.permute.xlu0 0
  %1868 = vperm.xlu0 %1867, %v1846
  %v1869 = vpop.permute.xlu0 %1868
  %1872 = vset.pattern.permute.xlu0 0
  %1873 = vperm.xlu0 %1872, %v1847
  %v1874 = vpop.permute.xlu0 %1873
  %1877 = vset.pattern.permute.xlu0 0
  %1878 = vperm.xlu0 %1877, %v1848
  %v1879 = vpop.permute.xlu0 %1878
  %v1881 = vmul.f32 %v1453, %v1864
  %v1882 = vmul.f32 %v1454, %v1864
  %v1883 = vmul.f32 %v1455, %v1864
  %v1884 = vmul.f32 %v1456, %v1864
  %v1885 = vmul.f32 %v1457, %v1864
  %v1886 = vmul.f32 %v1458, %v1864
  %v1887 = vmul.f32 %v1459, %v1864
  %v1888 = vmul.f32 %v1460, %v1864
  %v1889 = vmul.f32 %v1461, %v1864
  %v1890 = vmul.f32 %v1462, %v1864
  %v1891 = vmul.f32 %v1463, %v1864
  %v1892 = vmul.f32 %v1464, %v1864
  %v1893 = vmul.f32 %v1465, %v1864
  %v1894 = vmul.f32 %v1466, %v1864
  %v1895 = vmul.f32 %v1467, %v1864
  %v1896 = vmul.f32 %v1468, %v1864
  %v1897 = vmul.f32 %v1469, %v1864
  %v1898 = vmul.f32 %v1470, %v1864
  %v1899 = vmul.f32 %v1471, %v1864
  %v1900 = vmul.f32 %v1472, %v1864
  %v1901 = vmul.f32 %v1473, %v1864
  %v1902 = vmul.f32 %v1474, %v1864
  %v1903 = vmul.f32 %v1475, %v1869
  %v1904 = vmul.f32 %v1476, %v1869
  %v1905 = vmul.f32 %v1477, %v1869
  %v1906 = vmul.f32 %v1478, %v1869
  %v1907 = vmul.f32 %v1479, %v1869
  %v1908 = vmul.f32 %v1480, %v1869
  %v1909 = vmul.f32 %v1481, %v1869
  %v1910 = vmul.f32 %v1482, %v1869
  %v1911 = vmul.f32 %v1483, %v1869
  %v1912 = vmul.f32 %v1484, %v1869
  %v1913 = vmul.f32 %v1485, %v1869
  %v1914 = vmul.f32 %v1486, %v1869
  %v1915 = vmul.f32 %v1487, %v1869
  %v1916 = vmul.f32 %v1488, %v1869
  %v1917 = vmul.f32 %v1489, %v1869
  %v1918 = vmul.f32 %v1490, %v1869
  %v1919 = vmul.f32 %v1491, %v1869
  %v1920 = vmul.f32 %v1492, %v1869
  %v1921 = vmul.f32 %v1493, %v1869
  %v1922 = vmul.f32 %v1494, %v1869
  %v1923 = vmul.f32 %v1495, %v1869
  %v1924 = vmul.f32 %v1496, %v1869
  %v1925 = vmul.f32 %v1497, %v1874
  %v1926 = vmul.f32 %v1498, %v1874
  %v1927 = vmul.f32 %v1499, %v1874
  %v1928 = vmul.f32 %v1500, %v1874
  %v1929 = vmul.f32 %v1501, %v1874
  %v1930 = vmul.f32 %v1502, %v1874
  %v1931 = vmul.f32 %v1503, %v1874
  %v1932 = vmul.f32 %v1504, %v1874
  %v1933 = vmul.f32 %v1505, %v1874
  %v1934 = vmul.f32 %v1506, %v1874
  %v1935 = vmul.f32 %v1507, %v1874
  %v1936 = vmul.f32 %v1508, %v1874
  %v1937 = vmul.f32 %v1509, %v1874
  %v1938 = vmul.f32 %v1510, %v1874
  %v1939 = vmul.f32 %v1511, %v1874
  %v1940 = vmul.f32 %v1512, %v1874
  %v1941 = vmul.f32 %v1513, %v1874
  %v1942 = vmul.f32 %v1514, %v1874
  %v1943 = vmul.f32 %v1515, %v1874
  %v1944 = vmul.f32 %v1516, %v1874
  %v1945 = vmul.f32 %v1517, %v1874
  %v1946 = vmul.f32 %v1518, %v1874
  %v1947 = vmul.f32 %v1519, %v1879
  %v1948 = vmul.f32 %v1520, %v1879
  %v1949 = vmul.f32 %v1521, %v1879
  %v1950 = vmul.f32 %v1522, %v1879
  %v1951 = vmul.f32 %v1523, %v1879
  %v1952 = vmul.f32 %v1524, %v1879
  %v1953 = vmul.f32 %v1525, %v1879
  %v1954 = vmul.f32 %v1526, %v1879
  %v1955 = vmul.f32 %v1527, %v1879
  %v1956 = vmul.f32 %v1528, %v1879
  %v1957 = vmul.f32 %v1529, %v1879
  %v1958 = vmul.f32 %v1530, %v1879
  %v1959 = vmul.f32 %v1531, %v1879
  %v1960 = vmul.f32 %v1532, %v1879
  %v1961 = vmul.f32 %v1533, %v1879
  %v1962 = vmul.f32 %v1534, %v1879
  %v1963 = vmul.f32 %v1535, %v1879
  %v1964 = vmul.f32 %v1536, %v1879
  %v1965 = vmul.f32 %v1537, %v1879
  %v1966 = vmul.f32 %v1538, %v1879
  %v1967 = vmul.f32 %v1539, %v1879
  %v1968 = vmul.f32 %v1540, %v1879
  %1970 = vset.pattern.permute.xlu0 0
  %1971 = vperm.xlu0 %1970, %v1857
  %v1972 = vpop.permute.xlu0 %1971
  %1975 = vset.pattern.permute.xlu0 0
  %1976 = vperm.xlu0 %1975, %v1858
  %v1977 = vpop.permute.xlu0 %1976
  %1980 = vset.pattern.permute.xlu0 0
  %1981 = vperm.xlu0 %1980, %v1859
  %v1982 = vpop.permute.xlu0 %1981
  %1985 = vset.pattern.permute.xlu0 0
  %1986 = vperm.xlu0 %1985, %v1860
  %v1987 = vpop.permute.xlu0 %1986
  %v1989 = vadd.f32 %v1881, %v1972
  %v1990 = vadd.f32 %v1882, %v1972
  %v1991 = vadd.f32 %v1883, %v1972
  %v1992 = vadd.f32 %v1884, %v1972
  %v1993 = vadd.f32 %v1885, %v1972
  %v1994 = vadd.f32 %v1886, %v1972
  %v1995 = vadd.f32 %v1887, %v1972
  %v1996 = vadd.f32 %v1888, %v1972
  %v1997 = vadd.f32 %v1889, %v1972
  %v1998 = vadd.f32 %v1890, %v1972
  %v1999 = vadd.f32 %v1891, %v1972
  %v2000 = vadd.f32 %v1892, %v1972
  %v2001 = vadd.f32 %v1893, %v1972
  %v2002 = vadd.f32 %v1894, %v1972
  %v2003 = vadd.f32 %v1895, %v1972
  %v2004 = vadd.f32 %v1896, %v1972
  %v2005 = vadd.f32 %v1897, %v1972
  %v2006 = vadd.f32 %v1898, %v1972
  %v2007 = vadd.f32 %v1899, %v1972
  %v2008 = vadd.f32 %v1900, %v1972
  %v2009 = vadd.f32 %v1901, %v1972
  %v2010 = vadd.f32 %v1902, %v1972
  %v2011 = vadd.f32 %v1903, %v1977
  %v2012 = vadd.f32 %v1904, %v1977
  %v2013 = vadd.f32 %v1905, %v1977
  %v2014 = vadd.f32 %v1906, %v1977
  %v2015 = vadd.f32 %v1907, %v1977
  %v2016 = vadd.f32 %v1908, %v1977
  %v2017 = vadd.f32 %v1909, %v1977
  %v2018 = vadd.f32 %v1910, %v1977
  %v2019 = vadd.f32 %v1911, %v1977
  %v2020 = vadd.f32 %v1912, %v1977
  %v2021 = vadd.f32 %v1913, %v1977
  %v2022 = vadd.f32 %v1914, %v1977
  %v2023 = vadd.f32 %v1915, %v1977
  %v2024 = vadd.f32 %v1916, %v1977
  %v2025 = vadd.f32 %v1917, %v1977
  %v2026 = vadd.f32 %v1918, %v1977
  %v2027 = vadd.f32 %v1919, %v1977
  %v2028 = vadd.f32 %v1920, %v1977
  %v2029 = vadd.f32 %v1921, %v1977
  %v2030 = vadd.f32 %v1922, %v1977
  %v2031 = vadd.f32 %v1923, %v1977
  %v2032 = vadd.f32 %v1924, %v1977
  %v2033 = vadd.f32 %v1925, %v1982
  %v2034 = vadd.f32 %v1926, %v1982
  %v2035 = vadd.f32 %v1927, %v1982
  %v2036 = vadd.f32 %v1928, %v1982
  %v2037 = vadd.f32 %v1929, %v1982
  %v2038 = vadd.f32 %v1930, %v1982
  %v2039 = vadd.f32 %v1931, %v1982
  %v2040 = vadd.f32 %v1932, %v1982
  %v2041 = vadd.f32 %v1933, %v1982
  %v2042 = vadd.f32 %v1934, %v1982
  %v2043 = vadd.f32 %v1935, %v1982
  %v2044 = vadd.f32 %v1936, %v1982
  %v2045 = vadd.f32 %v1937, %v1982
  %v2046 = vadd.f32 %v1938, %v1982
  %v2047 = vadd.f32 %v1939, %v1982
  %v2048 = vadd.f32 %v1940, %v1982
  %v2049 = vadd.f32 %v1941, %v1982
  %v2050 = vadd.f32 %v1942, %v1982
  %v2051 = vadd.f32 %v1943, %v1982
  %v2052 = vadd.f32 %v1944, %v1982
  %v2053 = vadd.f32 %v1945, %v1982
  %v2054 = vadd.f32 %v1946, %v1982
  %v2055 = vadd.f32 %v1947, %v1987
  %v2056 = vadd.f32 %v1948, %v1987
  %v2057 = vadd.f32 %v1949, %v1987
  %v2058 = vadd.f32 %v1950, %v1987
  %v2059 = vadd.f32 %v1951, %v1987
  %v2060 = vadd.f32 %v1952, %v1987
  %v2061 = vadd.f32 %v1953, %v1987
  %v2062 = vadd.f32 %v1954, %v1987
  %v2063 = vadd.f32 %v1955, %v1987
  %v2064 = vadd.f32 %v1956, %v1987
  %v2065 = vadd.f32 %v1957, %v1987
  %v2066 = vadd.f32 %v1958, %v1987
  %v2067 = vadd.f32 %v1959, %v1987
  %v2068 = vadd.f32 %v1960, %v1987
  %v2069 = vadd.f32 %v1961, %v1987
  %v2070 = vadd.f32 %v1962, %v1987
  %v2071 = vadd.f32 %v1963, %v1987
  %v2072 = vadd.f32 %v1964, %v1987
  %v2073 = vadd.f32 %v1965, %v1987
  %v2074 = vadd.f32 %v1966, %v1987
  %v2075 = vadd.f32 %v1967, %v1987
  %v2076 = vadd.f32 %v1968, %v1987
  %v2077 = vmul.f32 %v1989, 0.5
  %v2078 = vmul.f32 %v1990, 0.5
  %v2079 = vmul.f32 %v1991, 0.5
  %v2080 = vmul.f32 %v1992, 0.5
  %v2081 = vmul.f32 %v1993, 0.5
  %v2082 = vmul.f32 %v1994, 0.5
  %v2083 = vmul.f32 %v1995, 0.5
  %v2084 = vmul.f32 %v1996, 0.5
  %v2085 = vmul.f32 %v1997, 0.5
  %v2086 = vmul.f32 %v1998, 0.5
  %v2087 = vmul.f32 %v1999, 0.5
  %v2088 = vmul.f32 %v2000, 0.5
  %v2089 = vmul.f32 %v2001, 0.5
  %v2090 = vmul.f32 %v2002, 0.5
  %v2091 = vmul.f32 %v2003, 0.5
  %v2092 = vmul.f32 %v2004, 0.5
  %v2093 = vmul.f32 %v2005, 0.5
  %v2094 = vmul.f32 %v2006, 0.5
  %v2095 = vmul.f32 %v2007, 0.5
  %v2096 = vmul.f32 %v2008, 0.5
  %v2097 = vmul.f32 %v2009, 0.5
  %v2098 = vmul.f32 %v2010, 0.5
  %v2099 = vmul.f32 %v2011, 0.5
  %v2100 = vmul.f32 %v2012, 0.5
  %v2101 = vmul.f32 %v2013, 0.5
  %v2102 = vmul.f32 %v2014, 0.5
  %v2103 = vmul.f32 %v2015, 0.5
  %v2104 = vmul.f32 %v2016, 0.5
  %v2105 = vmul.f32 %v2017, 0.5
  %v2106 = vmul.f32 %v2018, 0.5
  %v2107 = vmul.f32 %v2019, 0.5
  %v2108 = vmul.f32 %v2020, 0.5
  %v2109 = vmul.f32 %v2021, 0.5
  %v2110 = vmul.f32 %v2022, 0.5
  %v2111 = vmul.f32 %v2023, 0.5
  %v2112 = vmul.f32 %v2024, 0.5
  %v2113 = vmul.f32 %v2025, 0.5
  %v2114 = vmul.f32 %v2026, 0.5
  %v2115 = vmul.f32 %v2027, 0.5
  %v2116 = vmul.f32 %v2028, 0.5
  %v2117 = vmul.f32 %v2029, 0.5
  %v2118 = vmul.f32 %v2030, 0.5
  %v2119 = vmul.f32 %v2031, 0.5
  %v2120 = vmul.f32 %v2032, 0.5
  %v2121 = vmul.f32 %v2033, 0.5
  %v2122 = vmul.f32 %v2034, 0.5
  %v2123 = vmul.f32 %v2035, 0.5
  %v2124 = vmul.f32 %v2036, 0.5
  %v2125 = vmul.f32 %v2037, 0.5
  %v2126 = vmul.f32 %v2038, 0.5
  %v2127 = vmul.f32 %v2039, 0.5
  %v2128 = vmul.f32 %v2040, 0.5
  %v2129 = vmul.f32 %v2041, 0.5
  %v2130 = vmul.f32 %v2042, 0.5
  %v2131 = vmul.f32 %v2043, 0.5
  %v2132 = vmul.f32 %v2044, 0.5
  %v2133 = vmul.f32 %v2045, 0.5
  %v2134 = vmul.f32 %v2046, 0.5
  %v2135 = vmul.f32 %v2047, 0.5
  %v2136 = vmul.f32 %v2048, 0.5
  %v2137 = vmul.f32 %v2049, 0.5
  %v2138 = vmul.f32 %v2050, 0.5
  %v2139 = vmul.f32 %v2051, 0.5
  %v2140 = vmul.f32 %v2052, 0.5
  %v2141 = vmul.f32 %v2053, 0.5
  %v2142 = vmul.f32 %v2054, 0.5
  %v2143 = vmul.f32 %v2055, 0.5
  %v2144 = vmul.f32 %v2056, 0.5
  %v2145 = vmul.f32 %v2057, 0.5
  %v2146 = vmul.f32 %v2058, 0.5
  %v2147 = vmul.f32 %v2059, 0.5
  %v2148 = vmul.f32 %v2060, 0.5
  %v2149 = vmul.f32 %v2061, 0.5
  %v2150 = vmul.f32 %v2062, 0.5
  %v2151 = vmul.f32 %v2063, 0.5
  %v2152 = vmul.f32 %v2064, 0.5
  %v2153 = vmul.f32 %v2065, 0.5
  %v2154 = vmul.f32 %v2066, 0.5
  %v2155 = vmul.f32 %v2067, 0.5
  %v2156 = vmul.f32 %v2068, 0.5
  %v2157 = vmul.f32 %v2069, 0.5
  %v2158 = vmul.f32 %v2070, 0.5
  %v2159 = vmul.f32 %v2071, 0.5
  %v2160 = vmul.f32 %v2072, 0.5
  %v2161 = vmul.f32 %v2073, 0.5
  %v2162 = vmul.f32 %v2074, 0.5
  %v2163 = vmul.f32 %v2075, 0.5
  %v2164 = vmul.f32 %v2076, 0.5
  %v2165 = vmul.f32 %v1989, 0.70710677
  %v2166 = vmul.f32 %v1990, 0.70710677
  %v2167 = vmul.f32 %v1991, 0.70710677
  %v2168 = vmul.f32 %v1992, 0.70710677
  %v2169 = vmul.f32 %v1993, 0.70710677
  %v2170 = vmul.f32 %v1994, 0.70710677
  %v2171 = vmul.f32 %v1995, 0.70710677
  %v2172 = vmul.f32 %v1996, 0.70710677
  %v2173 = vmul.f32 %v1997, 0.70710677
  %v2174 = vmul.f32 %v1998, 0.70710677
  %v2175 = vmul.f32 %v1999, 0.70710677
  %v2176 = vmul.f32 %v2000, 0.70710677
  %v2177 = vmul.f32 %v2001, 0.70710677
  %v2178 = vmul.f32 %v2002, 0.70710677
  %v2179 = vmul.f32 %v2003, 0.70710677
  %v2180 = vmul.f32 %v2004, 0.70710677
  %v2181 = vmul.f32 %v2005, 0.70710677
  %v2182 = vmul.f32 %v2006, 0.70710677
  %v2183 = vmul.f32 %v2007, 0.70710677
  %v2184 = vmul.f32 %v2008, 0.70710677
  %v2185 = vmul.f32 %v2009, 0.70710677
  %v2186 = vmul.f32 %v2010, 0.70710677
  %v2187 = vmul.f32 %v2011, 0.70710677
  %v2188 = vmul.f32 %v2012, 0.70710677
  %v2189 = vmul.f32 %v2013, 0.70710677
  %v2190 = vmul.f32 %v2014, 0.70710677
  %v2191 = vmul.f32 %v2015, 0.70710677
  %v2192 = vmul.f32 %v2016, 0.70710677
  %v2193 = vmul.f32 %v2017, 0.70710677
  %v2194 = vmul.f32 %v2018, 0.70710677
  %v2195 = vmul.f32 %v2019, 0.70710677
  %v2196 = vmul.f32 %v2020, 0.70710677
  %v2197 = vmul.f32 %v2021, 0.70710677
  %v2198 = vmul.f32 %v2022, 0.70710677
  %v2199 = vmul.f32 %v2023, 0.70710677
  %v2200 = vmul.f32 %v2024, 0.70710677
  %v2201 = vmul.f32 %v2025, 0.70710677
  %v2202 = vmul.f32 %v2026, 0.70710677
  %v2203 = vmul.f32 %v2027, 0.70710677
  %v2204 = vmul.f32 %v2028, 0.70710677
  %v2205 = vmul.f32 %v2029, 0.70710677
  %v2206 = vmul.f32 %v2030, 0.70710677
  %v2207 = vmul.f32 %v2031, 0.70710677
  %v2208 = vmul.f32 %v2032, 0.70710677
  %v2209 = vmul.f32 %v2033, 0.70710677
  %v2210 = vmul.f32 %v2034, 0.70710677
  %v2211 = vmul.f32 %v2035, 0.70710677
  %v2212 = vmul.f32 %v2036, 0.70710677
  %v2213 = vmul.f32 %v2037, 0.70710677
  %v2214 = vmul.f32 %v2038, 0.70710677
  %v2215 = vmul.f32 %v2039, 0.70710677
  %v2216 = vmul.f32 %v2040, 0.70710677
  %v2217 = vmul.f32 %v2041, 0.70710677
  %v2218 = vmul.f32 %v2042, 0.70710677
  %v2219 = vmul.f32 %v2043, 0.70710677
  %v2220 = vmul.f32 %v2044, 0.70710677
  %v2221 = vmul.f32 %v2045, 0.70710677
  %v2222 = vmul.f32 %v2046, 0.70710677
  %v2223 = vmul.f32 %v2047, 0.70710677
  %v2224 = vmul.f32 %v2048, 0.70710677
  %v2225 = vmul.f32 %v2049, 0.70710677
  %v2226 = vmul.f32 %v2050, 0.70710677
  %v2227 = vmul.f32 %v2051, 0.70710677
  %v2228 = vmul.f32 %v2052, 0.70710677
  %v2229 = vmul.f32 %v2053, 0.70710677
  %v2230 = vmul.f32 %v2054, 0.70710677
  %v2231 = vmul.f32 %v2055, 0.70710677
  %v2232 = vmul.f32 %v2056, 0.70710677
  %v2233 = vmul.f32 %v2057, 0.70710677
  %v2234 = vmul.f32 %v2058, 0.70710677
  %v2235 = vmul.f32 %v2059, 0.70710677
  %v2236 = vmul.f32 %v2060, 0.70710677
  %v2237 = vmul.f32 %v2061, 0.70710677
  %v2238 = vmul.f32 %v2062, 0.70710677
  %v2239 = vmul.f32 %v2063, 0.70710677
  %v2240 = vmul.f32 %v2064, 0.70710677
  %v2241 = vmul.f32 %v2065, 0.70710677
  %v2242 = vmul.f32 %v2066, 0.70710677
  %v2243 = vmul.f32 %v2067, 0.70710677
  %v2244 = vmul.f32 %v2068, 0.70710677
  %v2245 = vmul.f32 %v2069, 0.70710677
  %v2246 = vmul.f32 %v2070, 0.70710677
  %v2247 = vmul.f32 %v2071, 0.70710677
  %v2248 = vmul.f32 %v2072, 0.70710677
  %v2249 = vmul.f32 %v2073, 0.70710677
  %v2250 = vmul.f32 %v2074, 0.70710677
  %v2251 = vmul.f32 %v2075, 0.70710677
  %v2252 = vmul.f32 %v2076, 0.70710677
  %vm2253 = vcmp.lt.f32.partialorder %v2165, 0.0
  %vm2254 = vcmp.lt.f32.partialorder %v2166, 0.0
  %vm2255 = vcmp.lt.f32.partialorder %v2167, 0.0
  %vm2256 = vcmp.lt.f32.partialorder %v2168, 0.0
  %vm2257 = vcmp.lt.f32.partialorder %v2169, 0.0
  %vm2258 = vcmp.lt.f32.partialorder %v2170, 0.0
  %vm2259 = vcmp.lt.f32.partialorder %v2171, 0.0
  %vm2260 = vcmp.lt.f32.partialorder %v2172, 0.0
  %vm2261 = vcmp.lt.f32.partialorder %v2173, 0.0
  %vm2262 = vcmp.lt.f32.partialorder %v2174, 0.0
  %vm2263 = vcmp.lt.f32.partialorder %v2175, 0.0
  %vm2264 = vcmp.lt.f32.partialorder %v2176, 0.0
  %vm2265 = vcmp.lt.f32.partialorder %v2177, 0.0
  %vm2266 = vcmp.lt.f32.partialorder %v2178, 0.0
  %vm2267 = vcmp.lt.f32.partialorder %v2179, 0.0
  %vm2268 = vcmp.lt.f32.partialorder %v2180, 0.0
  %vm2269 = vcmp.lt.f32.partialorder %v2181, 0.0
  %vm2270 = vcmp.lt.f32.partialorder %v2182, 0.0
  %vm2271 = vcmp.lt.f32.partialorder %v2183, 0.0
  %vm2272 = vcmp.lt.f32.partialorder %v2184, 0.0
  %vm2273 = vcmp.lt.f32.partialorder %v2185, 0.0
  %vm2274 = vcmp.lt.f32.partialorder %v2186, 0.0
  %vm2275 = vcmp.lt.f32.partialorder %v2187, 0.0
  %vm2276 = vcmp.lt.f32.partialorder %v2188, 0.0
  %vm2277 = vcmp.lt.f32.partialorder %v2189, 0.0
  %vm2278 = vcmp.lt.f32.partialorder %v2190, 0.0
  %vm2279 = vcmp.lt.f32.partialorder %v2191, 0.0
  %vm2280 = vcmp.lt.f32.partialorder %v2192, 0.0
  %vm2281 = vcmp.lt.f32.partialorder %v2193, 0.0
  %vm2282 = vcmp.lt.f32.partialorder %v2194, 0.0
  %vm2283 = vcmp.lt.f32.partialorder %v2195, 0.0
  %vm2284 = vcmp.lt.f32.partialorder %v2196, 0.0
  %vm2285 = vcmp.lt.f32.partialorder %v2197, 0.0
  %vm2286 = vcmp.lt.f32.partialorder %v2198, 0.0
  %vm2287 = vcmp.lt.f32.partialorder %v2199, 0.0
  %vm2288 = vcmp.lt.f32.partialorder %v2200, 0.0
  %vm2289 = vcmp.lt.f32.partialorder %v2201, 0.0
  %vm2290 = vcmp.lt.f32.partialorder %v2202, 0.0
  %vm2291 = vcmp.lt.f32.partialorder %v2203, 0.0
  %vm2292 = vcmp.lt.f32.partialorder %v2204, 0.0
  %vm2293 = vcmp.lt.f32.partialorder %v2205, 0.0
  %vm2294 = vcmp.lt.f32.partialorder %v2206, 0.0
  %vm2295 = vcmp.lt.f32.partialorder %v2207, 0.0
  %vm2296 = vcmp.lt.f32.partialorder %v2208, 0.0
  %vm2297 = vcmp.lt.f32.partialorder %v2209, 0.0
  %vm2298 = vcmp.lt.f32.partialorder %v2210, 0.0
  %vm2299 = vcmp.lt.f32.partialorder %v2211, 0.0
  %vm2300 = vcmp.lt.f32.partialorder %v2212, 0.0
  %vm2301 = vcmp.lt.f32.partialorder %v2213, 0.0
  %vm2302 = vcmp.lt.f32.partialorder %v2214, 0.0
  %vm2303 = vcmp.lt.f32.partialorder %v2215, 0.0
  %vm2304 = vcmp.lt.f32.partialorder %v2216, 0.0
  %vm2305 = vcmp.lt.f32.partialorder %v2217, 0.0
  %vm2306 = vcmp.lt.f32.partialorder %v2218, 0.0
  %vm2307 = vcmp.lt.f32.partialorder %v2219, 0.0
  %vm2308 = vcmp.lt.f32.partialorder %v2220, 0.0
  %vm2309 = vcmp.lt.f32.partialorder %v2221, 0.0
  %vm2310 = vcmp.lt.f32.partialorder %v2222, 0.0
  %vm2311 = vcmp.lt.f32.partialorder %v2223, 0.0
  %vm2312 = vcmp.lt.f32.partialorder %v2224, 0.0
  %vm2313 = vcmp.lt.f32.partialorder %v2225, 0.0
  %vm2314 = vcmp.lt.f32.partialorder %v2226, 0.0
  %vm2315 = vcmp.lt.f32.partialorder %v2227, 0.0
  %vm2316 = vcmp.lt.f32.partialorder %v2228, 0.0
  %vm2317 = vcmp.lt.f32.partialorder %v2229, 0.0
  %vm2318 = vcmp.lt.f32.partialorder %v2230, 0.0
  %vm2319 = vcmp.lt.f32.partialorder %v2231, 0.0
  %vm2320 = vcmp.lt.f32.partialorder %v2232, 0.0
  %vm2321 = vcmp.lt.f32.partialorder %v2233, 0.0
  %vm2322 = vcmp.lt.f32.partialorder %v2234, 0.0
  %vm2323 = vcmp.lt.f32.partialorder %v2235, 0.0
  %vm2324 = vcmp.lt.f32.partialorder %v2236, 0.0
  %vm2325 = vcmp.lt.f32.partialorder %v2237, 0.0
  %vm2326 = vcmp.lt.f32.partialorder %v2238, 0.0
  %vm2327 = vcmp.lt.f32.partialorder %v2239, 0.0
  %vm2328 = vcmp.lt.f32.partialorder %v2240, 0.0
  %vm2329 = vcmp.lt.f32.partialorder %v2241, 0.0
  %vm2330 = vcmp.lt.f32.partialorder %v2242, 0.0
  %vm2331 = vcmp.lt.f32.partialorder %v2243, 0.0
  %vm2332 = vcmp.lt.f32.partialorder %v2244, 0.0
  %vm2333 = vcmp.lt.f32.partialorder %v2245, 0.0
  %vm2334 = vcmp.lt.f32.partialorder %v2246, 0.0
  %vm2335 = vcmp.lt.f32.partialorder %v2247, 0.0
  %vm2336 = vcmp.lt.f32.partialorder %v2248, 0.0
  %vm2337 = vcmp.lt.f32.partialorder %v2249, 0.0
  %vm2338 = vcmp.lt.f32.partialorder %v2250, 0.0
  %vm2339 = vcmp.lt.f32.partialorder %v2251, 0.0
  %vm2340 = vcmp.lt.f32.partialorder %v2252, 0.0
  %v2341 = vsel %vm2253, -1.0, 1.0
  %v2342 = vsel %vm2254, -1.0, 1.0
  %v2343 = vsel %vm2255, -1.0, 1.0
  %v2344 = vsel %vm2256, -1.0, 1.0
  %v2345 = vsel %vm2257, -1.0, 1.0
  %v2346 = vsel %vm2258, -1.0, 1.0
  %v2347 = vsel %vm2259, -1.0, 1.0
  %v2348 = vsel %vm2260, -1.0, 1.0
  %v2349 = vsel %vm2261, -1.0, 1.0
  %v2350 = vsel %vm2262, -1.0, 1.0
  %v2351 = vsel %vm2263, -1.0, 1.0
  %v2352 = vsel %vm2264, -1.0, 1.0
  %v2353 = vsel %vm2265, -1.0, 1.0
  %v2354 = vsel %vm2266, -1.0, 1.0
  %v2355 = vsel %vm2267, -1.0, 1.0
  %v2356 = vsel %vm2268, -1.0, 1.0
  %v2357 = vsel %vm2269, -1.0, 1.0
  %v2358 = vsel %vm2270, -1.0, 1.0
  %v2359 = vsel %vm2271, -1.0, 1.0
  %v2360 = vsel %vm2272, -1.0, 1.0
  %v2361 = vsel %vm2273, -1.0, 1.0
  %v2362 = vsel %vm2274, -1.0, 1.0
  %v2363 = vsel %vm2275, -1.0, 1.0
  %v2364 = vsel %vm2276, -1.0, 1.0
  %v2365 = vsel %vm2277, -1.0, 1.0
  %v2366 = vsel %vm2278, -1.0, 1.0
  %v2367 = vsel %vm2279, -1.0, 1.0
  %v2368 = vsel %vm2280, -1.0, 1.0
  %v2369 = vsel %vm2281, -1.0, 1.0
  %v2370 = vsel %vm2282, -1.0, 1.0
  %v2371 = vsel %vm2283, -1.0, 1.0
  %v2372 = vsel %vm2284, -1.0, 1.0
  %v2373 = vsel %vm2285, -1.0, 1.0
  %v2374 = vsel %vm2286, -1.0, 1.0
  %v2375 = vsel %vm2287, -1.0, 1.0
  %v2376 = vsel %vm2288, -1.0, 1.0
  %v2377 = vsel %vm2289, -1.0, 1.0
  %v2378 = vsel %vm2290, -1.0, 1.0
  %v2379 = vsel %vm2291, -1.0, 1.0
  %v2380 = vsel %vm2292, -1.0, 1.0
  %v2381 = vsel %vm2293, -1.0, 1.0
  %v2382 = vsel %vm2294, -1.0, 1.0
  %v2383 = vsel %vm2295, -1.0, 1.0
  %v2384 = vsel %vm2296, -1.0, 1.0
  %v2385 = vsel %vm2297, -1.0, 1.0
  %v2386 = vsel %vm2298, -1.0, 1.0
  %v2387 = vsel %vm2299, -1.0, 1.0
  %v2388 = vsel %vm2300, -1.0, 1.0
  %v2389 = vsel %vm2301, -1.0, 1.0
  %v2390 = vsel %vm2302, -1.0, 1.0
  %v2391 = vsel %vm2303, -1.0, 1.0
  %v2392 = vsel %vm2304, -1.0, 1.0
  %v2393 = vsel %vm2305, -1.0, 1.0
  %v2394 = vsel %vm2306, -1.0, 1.0
  %v2395 = vsel %vm2307, -1.0, 1.0
  %v2396 = vsel %vm2308, -1.0, 1.0
  %v2397 = vsel %vm2309, -1.0, 1.0
  %v2398 = vsel %vm2310, -1.0, 1.0
  %v2399 = vsel %vm2311, -1.0, 1.0
  %v2400 = vsel %vm2312, -1.0, 1.0
  %v2401 = vsel %vm2313, -1.0, 1.0
  %v2402 = vsel %vm2314, -1.0, 1.0
  %v2403 = vsel %vm2315, -1.0, 1.0
  %v2404 = vsel %vm2316, -1.0, 1.0
  %v2405 = vsel %vm2317, -1.0, 1.0
  %v2406 = vsel %vm2318, -1.0, 1.0
  %v2407 = vsel %vm2319, -1.0, 1.0
  %v2408 = vsel %vm2320, -1.0, 1.0
  %v2409 = vsel %vm2321, -1.0, 1.0
  %v2410 = vsel %vm2322, -1.0, 1.0
  %v2411 = vsel %vm2323, -1.0, 1.0
  %v2412 = vsel %vm2324, -1.0, 1.0
  %v2413 = vsel %vm2325, -1.0, 1.0
  %v2414 = vsel %vm2326, -1.0, 1.0
  %v2415 = vsel %vm2327, -1.0, 1.0
  %v2416 = vsel %vm2328, -1.0, 1.0
  %v2417 = vsel %vm2329, -1.0, 1.0
  %v2418 = vsel %vm2330, -1.0, 1.0
  %v2419 = vsel %vm2331, -1.0, 1.0
  %v2420 = vsel %vm2332, -1.0, 1.0
  %v2421 = vsel %vm2333, -1.0, 1.0
  %v2422 = vsel %vm2334, -1.0, 1.0
  %v2423 = vsel %vm2335, -1.0, 1.0
  %v2424 = vsel %vm2336, -1.0, 1.0
  %v2425 = vsel %vm2337, -1.0, 1.0
  %v2426 = vsel %vm2338, -1.0, 1.0
  %v2427 = vsel %vm2339, -1.0, 1.0
  %v2428 = vsel %vm2340, -1.0, 1.0
  %v2429 = vand.u32 2147483647, %v2165
  %v2430 = vand.u32 2147483647, %v2166
  %v2431 = vand.u32 2147483647, %v2167
  %v2432 = vand.u32 2147483647, %v2168
  %v2433 = vand.u32 2147483647, %v2169
  %v2434 = vand.u32 2147483647, %v2170
  %v2435 = vand.u32 2147483647, %v2171
  %v2436 = vand.u32 2147483647, %v2172
  %v2437 = vand.u32 2147483647, %v2173
  %v2438 = vand.u32 2147483647, %v2174
  %v2439 = vand.u32 2147483647, %v2175
  %v2440 = vand.u32 2147483647, %v2176
  %v2441 = vand.u32 2147483647, %v2177
  %v2442 = vand.u32 2147483647, %v2178
  %v2443 = vand.u32 2147483647, %v2179
  %v2444 = vand.u32 2147483647, %v2180
  %v2445 = vand.u32 2147483647, %v2181
  %v2446 = vand.u32 2147483647, %v2182
  %v2447 = vand.u32 2147483647, %v2183
  %v2448 = vand.u32 2147483647, %v2184
  %v2449 = vand.u32 2147483647, %v2185
  %v2450 = vand.u32 2147483647, %v2186
  %v2451 = vand.u32 2147483647, %v2187
  %v2452 = vand.u32 2147483647, %v2188
  %v2453 = vand.u32 2147483647, %v2189
  %v2454 = vand.u32 2147483647, %v2190
  %v2455 = vand.u32 2147483647, %v2191
  %v2456 = vand.u32 2147483647, %v2192
  %v2457 = vand.u32 2147483647, %v2193
  %v2458 = vand.u32 2147483647, %v2194
  %v2459 = vand.u32 2147483647, %v2195
  %v2460 = vand.u32 2147483647, %v2196
  %v2461 = vand.u32 2147483647, %v2197
  %v2462 = vand.u32 2147483647, %v2198
  %v2463 = vand.u32 2147483647, %v2199
  %v2464 = vand.u32 2147483647, %v2200
  %v2465 = vand.u32 2147483647, %v2201
  %v2466 = vand.u32 2147483647, %v2202
  %v2467 = vand.u32 2147483647, %v2203
  %v2468 = vand.u32 2147483647, %v2204
  %v2469 = vand.u32 2147483647, %v2205
  %v2470 = vand.u32 2147483647, %v2206
  %v2471 = vand.u32 2147483647, %v2207
  %v2472 = vand.u32 2147483647, %v2208
  %v2473 = vand.u32 2147483647, %v2209
  %v2474 = vand.u32 2147483647, %v2210
  %v2475 = vand.u32 2147483647, %v2211
  %v2476 = vand.u32 2147483647, %v2212
  %v2477 = vand.u32 2147483647, %v2213
  %v2478 = vand.u32 2147483647, %v2214
  %v2479 = vand.u32 2147483647, %v2215
  %v2480 = vand.u32 2147483647, %v2216
  %v2481 = vand.u32 2147483647, %v2217
  %v2482 = vand.u32 2147483647, %v2218
  %v2483 = vand.u32 2147483647, %v2219
  %v2484 = vand.u32 2147483647, %v2220
  %v2485 = vand.u32 2147483647, %v2221
  %v2486 = vand.u32 2147483647, %v2222
  %v2487 = vand.u32 2147483647, %v2223
  %v2488 = vand.u32 2147483647, %v2224
  %v2489 = vand.u32 2147483647, %v2225
  %v2490 = vand.u32 2147483647, %v2226
  %v2491 = vand.u32 2147483647, %v2227
  %v2492 = vand.u32 2147483647, %v2228
  %v2493 = vand.u32 2147483647, %v2229
  %v2494 = vand.u32 2147483647, %v2230
  %v2495 = vand.u32 2147483647, %v2231
  %v2496 = vand.u32 2147483647, %v2232
  %v2497 = vand.u32 2147483647, %v2233
  %v2498 = vand.u32 2147483647, %v2234
  %v2499 = vand.u32 2147483647, %v2235
  %v2500 = vand.u32 2147483647, %v2236
  %v2501 = vand.u32 2147483647, %v2237
  %v2502 = vand.u32 2147483647, %v2238
  %v2503 = vand.u32 2147483647, %v2239
  %v2504 = vand.u32 2147483647, %v2240
  %v2505 = vand.u32 2147483647, %v2241
  %v2506 = vand.u32 2147483647, %v2242
  %v2507 = vand.u32 2147483647, %v2243
  %v2508 = vand.u32 2147483647, %v2244
  %v2509 = vand.u32 2147483647, %v2245
  %v2510 = vand.u32 2147483647, %v2246
  %v2511 = vand.u32 2147483647, %v2247
  %v2512 = vand.u32 2147483647, %v2248
  %v2513 = vand.u32 2147483647, %v2249
  %v2514 = vand.u32 2147483647, %v2250
  %v2515 = vand.u32 2147483647, %v2251
  %v2516 = vand.u32 2147483647, %v2252
  %v2517 = vmul.f32 %v2429, 0.3275911
  %v2518 = vmul.f32 %v2430, 0.3275911
  %v2519 = vmul.f32 %v2431, 0.3275911
  %v2520 = vmul.f32 %v2432, 0.3275911
  %v2521 = vmul.f32 %v2433, 0.3275911
  %v2522 = vmul.f32 %v2434, 0.3275911
  %v2523 = vmul.f32 %v2435, 0.3275911
  %v2524 = vmul.f32 %v2436, 0.3275911
  %v2525 = vmul.f32 %v2437, 0.3275911
  %v2526 = vmul.f32 %v2438, 0.3275911
  %v2527 = vmul.f32 %v2439, 0.3275911
  %v2528 = vmul.f32 %v2440, 0.3275911
  %v2529 = vmul.f32 %v2441, 0.3275911
  %v2530 = vmul.f32 %v2442, 0.3275911
  %v2531 = vmul.f32 %v2443, 0.3275911
  %v2532 = vmul.f32 %v2444, 0.3275911
  %v2533 = vmul.f32 %v2445, 0.3275911
  %v2534 = vmul.f32 %v2446, 0.3275911
  %v2535 = vmul.f32 %v2447, 0.3275911
  %v2536 = vmul.f32 %v2448, 0.3275911
  %v2537 = vmul.f32 %v2449, 0.3275911
  %v2538 = vmul.f32 %v2450, 0.3275911
  %v2539 = vmul.f32 %v2451, 0.3275911
  %v2540 = vmul.f32 %v2452, 0.3275911
  %v2541 = vmul.f32 %v2453, 0.3275911
  %v2542 = vmul.f32 %v2454, 0.3275911
  %v2543 = vmul.f32 %v2455, 0.3275911
  %v2544 = vmul.f32 %v2456, 0.3275911
  %v2545 = vmul.f32 %v2457, 0.3275911
  %v2546 = vmul.f32 %v2458, 0.3275911
  %v2547 = vmul.f32 %v2459, 0.3275911
  %v2548 = vmul.f32 %v2460, 0.3275911
  %v2549 = vmul.f32 %v2461, 0.3275911
  %v2550 = vmul.f32 %v2462, 0.3275911
  %v2551 = vmul.f32 %v2463, 0.3275911
  %v2552 = vmul.f32 %v2464, 0.3275911
  %v2553 = vmul.f32 %v2465, 0.3275911
  %v2554 = vmul.f32 %v2466, 0.3275911
  %v2555 = vmul.f32 %v2467, 0.3275911
  %v2556 = vmul.f32 %v2468, 0.3275911
  %v2557 = vmul.f32 %v2469, 0.3275911
  %v2558 = vmul.f32 %v2470, 0.3275911
  %v2559 = vmul.f32 %v2471, 0.3275911
  %v2560 = vmul.f32 %v2472, 0.3275911
  %v2561 = vmul.f32 %v2473, 0.3275911
  %v2562 = vmul.f32 %v2474, 0.3275911
  %v2563 = vmul.f32 %v2475, 0.3275911
  %v2564 = vmul.f32 %v2476, 0.3275911
  %v2565 = vmul.f32 %v2477, 0.3275911
  %v2566 = vmul.f32 %v2478, 0.3275911
  %v2567 = vmul.f32 %v2479, 0.3275911
  %v2568 = vmul.f32 %v2480, 0.3275911
  %v2569 = vmul.f32 %v2481, 0.3275911
  %v2570 = vmul.f32 %v2482, 0.3275911
  %v2571 = vmul.f32 %v2483, 0.3275911
  %v2572 = vmul.f32 %v2484, 0.3275911
  %v2573 = vmul.f32 %v2485, 0.3275911
  %v2574 = vmul.f32 %v2486, 0.3275911
  %v2575 = vmul.f32 %v2487, 0.3275911
  %v2576 = vmul.f32 %v2488, 0.3275911
  %v2577 = vmul.f32 %v2489, 0.3275911
  %v2578 = vmul.f32 %v2490, 0.3275911
  %v2579 = vmul.f32 %v2491, 0.3275911
  %v2580 = vmul.f32 %v2492, 0.3275911
  %v2581 = vmul.f32 %v2493, 0.3275911
  %v2582 = vmul.f32 %v2494, 0.3275911
  %v2583 = vmul.f32 %v2495, 0.3275911
  %v2584 = vmul.f32 %v2496, 0.3275911
  %v2585 = vmul.f32 %v2497, 0.3275911
  %v2586 = vmul.f32 %v2498, 0.3275911
  %v2587 = vmul.f32 %v2499, 0.3275911
  %v2588 = vmul.f32 %v2500, 0.3275911
  %v2589 = vmul.f32 %v2501, 0.3275911
  %v2590 = vmul.f32 %v2502, 0.3275911
  %v2591 = vmul.f32 %v2503, 0.3275911
  %v2592 = vmul.f32 %v2504, 0.3275911
  %v2593 = vmul.f32 %v2505, 0.3275911
  %v2594 = vmul.f32 %v2506, 0.3275911
  %v2595 = vmul.f32 %v2507, 0.3275911
  %v2596 = vmul.f32 %v2508, 0.3275911
  %v2597 = vmul.f32 %v2509, 0.3275911
  %v2598 = vmul.f32 %v2510, 0.3275911
  %v2599 = vmul.f32 %v2511, 0.3275911
  %v2600 = vmul.f32 %v2512, 0.3275911
  %v2601 = vmul.f32 %v2513, 0.3275911
  %v2602 = vmul.f32 %v2514, 0.3275911
  %v2603 = vmul.f32 %v2515, 0.3275911
  %v2604 = vmul.f32 %v2516, 0.3275911
  %v2605 = vadd.f32 %v2517, 1.0
  %v2606 = vadd.f32 %v2518, 1.0
  %v2607 = vadd.f32 %v2519, 1.0
  %v2608 = vadd.f32 %v2520, 1.0
  %v2609 = vadd.f32 %v2521, 1.0
  %v2610 = vadd.f32 %v2522, 1.0
  %v2611 = vadd.f32 %v2523, 1.0
  %v2612 = vadd.f32 %v2524, 1.0
  %v2613 = vadd.f32 %v2525, 1.0
  %v2614 = vadd.f32 %v2526, 1.0
  %v2615 = vadd.f32 %v2527, 1.0
  %v2616 = vadd.f32 %v2528, 1.0
  %v2617 = vadd.f32 %v2529, 1.0
  %v2618 = vadd.f32 %v2530, 1.0
  %v2619 = vadd.f32 %v2531, 1.0
  %v2620 = vadd.f32 %v2532, 1.0
  %v2621 = vadd.f32 %v2533, 1.0
  %v2622 = vadd.f32 %v2534, 1.0
  %v2623 = vadd.f32 %v2535, 1.0
  %v2624 = vadd.f32 %v2536, 1.0
  %v2625 = vadd.f32 %v2537, 1.0
  %v2626 = vadd.f32 %v2538, 1.0
  %v2627 = vadd.f32 %v2539, 1.0
  %v2628 = vadd.f32 %v2540, 1.0
  %v2629 = vadd.f32 %v2541, 1.0
  %v2630 = vadd.f32 %v2542, 1.0
  %v2631 = vadd.f32 %v2543, 1.0
  %v2632 = vadd.f32 %v2544, 1.0
  %v2633 = vadd.f32 %v2545, 1.0
  %v2634 = vadd.f32 %v2546, 1.0
  %v2635 = vadd.f32 %v2547, 1.0
  %v2636 = vadd.f32 %v2548, 1.0
  %v2637 = vadd.f32 %v2549, 1.0
  %v2638 = vadd.f32 %v2550, 1.0
  %v2639 = vadd.f32 %v2551, 1.0
  %v2640 = vadd.f32 %v2552, 1.0
  %v2641 = vadd.f32 %v2553, 1.0
  %v2642 = vadd.f32 %v2554, 1.0
  %v2643 = vadd.f32 %v2555, 1.0
  %v2644 = vadd.f32 %v2556, 1.0
  %v2645 = vadd.f32 %v2557, 1.0
  %v2646 = vadd.f32 %v2558, 1.0
  %v2647 = vadd.f32 %v2559, 1.0
  %v2648 = vadd.f32 %v2560, 1.0
  %v2649 = vadd.f32 %v2561, 1.0
  %v2650 = vadd.f32 %v2562, 1.0
  %v2651 = vadd.f32 %v2563, 1.0
  %v2652 = vadd.f32 %v2564, 1.0
  %v2653 = vadd.f32 %v2565, 1.0
  %v2654 = vadd.f32 %v2566, 1.0
  %v2655 = vadd.f32 %v2567, 1.0
  %v2656 = vadd.f32 %v2568, 1.0
  %v2657 = vadd.f32 %v2569, 1.0
  %v2658 = vadd.f32 %v2570, 1.0
  %v2659 = vadd.f32 %v2571, 1.0
  %v2660 = vadd.f32 %v2572, 1.0
  %v2661 = vadd.f32 %v2573, 1.0
  %v2662 = vadd.f32 %v2574, 1.0
  %v2663 = vadd.f32 %v2575, 1.0
  %v2664 = vadd.f32 %v2576, 1.0
  %v2665 = vadd.f32 %v2577, 1.0
  %v2666 = vadd.f32 %v2578, 1.0
  %v2667 = vadd.f32 %v2579, 1.0
  %v2668 = vadd.f32 %v2580, 1.0
  %v2669 = vadd.f32 %v2581, 1.0
  %v2670 = vadd.f32 %v2582, 1.0
  %v2671 = vadd.f32 %v2583, 1.0
  %v2672 = vadd.f32 %v2584, 1.0
  %v2673 = vadd.f32 %v2585, 1.0
  %v2674 = vadd.f32 %v2586, 1.0
  %v2675 = vadd.f32 %v2587, 1.0
  %v2676 = vadd.f32 %v2588, 1.0
  %v2677 = vadd.f32 %v2589, 1.0
  %v2678 = vadd.f32 %v2590, 1.0
  %v2679 = vadd.f32 %v2591, 1.0
  %v2680 = vadd.f32 %v2592, 1.0
  %v2681 = vadd.f32 %v2593, 1.0
  %v2682 = vadd.f32 %v2594, 1.0
  %v2683 = vadd.f32 %v2595, 1.0
  %v2684 = vadd.f32 %v2596, 1.0
  %v2685 = vadd.f32 %v2597, 1.0
  %v2686 = vadd.f32 %v2598, 1.0
  %v2687 = vadd.f32 %v2599, 1.0
  %v2688 = vadd.f32 %v2600, 1.0
  %v2689 = vadd.f32 %v2601, 1.0
  %v2690 = vadd.f32 %v2602, 1.0
  %v2691 = vadd.f32 %v2603, 1.0
  %v2692 = vadd.f32 %v2604, 1.0
  %v2693 = vrcp.pop %v2605
  %v2694 = vmul.f32 1.0, %v2693
  %v2695 = vrcp.pop %v2606
  %v2696 = vmul.f32 1.0, %v2695
  %v2697 = vrcp.pop %v2607
  %v2698 = vmul.f32 1.0, %v2697
  %v2699 = vrcp.pop %v2608
  %v2700 = vmul.f32 1.0, %v2699
  %v2701 = vrcp.pop %v2609
  %v2702 = vmul.f32 1.0, %v2701
  %v2703 = vrcp.pop %v2610
  %v2704 = vmul.f32 1.0, %v2703
  %v2705 = vrcp.pop %v2611
  %v2706 = vmul.f32 1.0, %v2705
  %v2707 = vrcp.pop %v2612
  %v2708 = vmul.f32 1.0, %v2707
  %v2709 = vrcp.pop %v2613
  %v2710 = vmul.f32 1.0, %v2709
  %v2711 = vrcp.pop %v2614
  %v2712 = vmul.f32 1.0, %v2711
  %v2713 = vrcp.pop %v2615
  %v2714 = vmul.f32 1.0, %v2713
  %v2715 = vrcp.pop %v2616
  %v2716 = vmul.f32 1.0, %v2715
  %v2717 = vrcp.pop %v2617
  %v2718 = vmul.f32 1.0, %v2717
  %v2719 = vrcp.pop %v2618
  %v2720 = vmul.f32 1.0, %v2719
  %v2721 = vrcp.pop %v2619
  %v2722 = vmul.f32 1.0, %v2721
  %v2723 = vrcp.pop %v2620
  %v2724 = vmul.f32 1.0, %v2723
  %v2725 = vrcp.pop %v2621
  %v2726 = vmul.f32 1.0, %v2725
  %v2727 = vrcp.pop %v2622
  %v2728 = vmul.f32 1.0, %v2727
  %v2729 = vrcp.pop %v2623
  %v2730 = vmul.f32 1.0, %v2729
  %v2731 = vrcp.pop %v2624
  %v2732 = vmul.f32 1.0, %v2731
  %v2733 = vrcp.pop %v2625
  %v2734 = vmul.f32 1.0, %v2733
  %v2735 = vrcp.pop %v2626
  %v2736 = vmul.f32 1.0, %v2735
  %v2737 = vrcp.pop %v2627
  %v2738 = vmul.f32 1.0, %v2737
  %v2739 = vrcp.pop %v2628
  %v2740 = vmul.f32 1.0, %v2739
  %v2741 = vrcp.pop %v2629
  %v2742 = vmul.f32 1.0, %v2741
  %v2743 = vrcp.pop %v2630
  %v2744 = vmul.f32 1.0, %v2743
  %v2745 = vrcp.pop %v2631
  %v2746 = vmul.f32 1.0, %v2745
  %v2747 = vrcp.pop %v2632
  %v2748 = vmul.f32 1.0, %v2747
  %v2749 = vrcp.pop %v2633
  %v2750 = vmul.f32 1.0, %v2749
  %v2751 = vrcp.pop %v2634
  %v2752 = vmul.f32 1.0, %v2751
  %v2753 = vrcp.pop %v2635
  %v2754 = vmul.f32 1.0, %v2753
  %v2755 = vrcp.pop %v2636
  %v2756 = vmul.f32 1.0, %v2755
  %v2757 = vrcp.pop %v2637
  %v2758 = vmul.f32 1.0, %v2757
  %v2759 = vrcp.pop %v2638
  %v2760 = vmul.f32 1.0, %v2759
  %v2761 = vrcp.pop %v2639
  %v2762 = vmul.f32 1.0, %v2761
  %v2763 = vrcp.pop %v2640
  %v2764 = vmul.f32 1.0, %v2763
  %v2765 = vrcp.pop %v2641
  %v2766 = vmul.f32 1.0, %v2765
  %v2767 = vrcp.pop %v2642
  %v2768 = vmul.f32 1.0, %v2767
  %v2769 = vrcp.pop %v2643
  %v2770 = vmul.f32 1.0, %v2769
  %v2771 = vrcp.pop %v2644
  %v2772 = vmul.f32 1.0, %v2771
  %v2773 = vrcp.pop %v2645
  %v2774 = vmul.f32 1.0, %v2773
  %v2775 = vrcp.pop %v2646
  %v2776 = vmul.f32 1.0, %v2775
  %v2777 = vrcp.pop %v2647
  %v2778 = vmul.f32 1.0, %v2777
  %v2779 = vrcp.pop %v2648
  %v2780 = vmul.f32 1.0, %v2779
  %v2781 = vrcp.pop %v2649
  %v2782 = vmul.f32 1.0, %v2781
  %v2783 = vrcp.pop %v2650
  %v2784 = vmul.f32 1.0, %v2783
  %v2785 = vrcp.pop %v2651
  %v2786 = vmul.f32 1.0, %v2785
  %v2787 = vrcp.pop %v2652
  %v2788 = vmul.f32 1.0, %v2787
  %v2789 = vrcp.pop %v2653
  %v2790 = vmul.f32 1.0, %v2789
  %v2791 = vrcp.pop %v2654
  %v2792 = vmul.f32 1.0, %v2791
  %v2793 = vrcp.pop %v2655
  %v2794 = vmul.f32 1.0, %v2793
  %v2795 = vrcp.pop %v2656
  %v2796 = vmul.f32 1.0, %v2795
  %v2797 = vrcp.pop %v2657
  %v2798 = vmul.f32 1.0, %v2797
  %v2799 = vrcp.pop %v2658
  %v2800 = vmul.f32 1.0, %v2799
  %v2801 = vrcp.pop %v2659
  %v2802 = vmul.f32 1.0, %v2801
  %v2803 = vrcp.pop %v2660
  %v2804 = vmul.f32 1.0, %v2803
  %v2805 = vrcp.pop %v2661
  %v2806 = vmul.f32 1.0, %v2805
  %v2807 = vrcp.pop %v2662
  %v2808 = vmul.f32 1.0, %v2807
  %v2809 = vrcp.pop %v2663
  %v2810 = vmul.f32 1.0, %v2809
  %v2811 = vrcp.pop %v2664
  %v2812 = vmul.f32 1.0, %v2811
  %v2813 = vrcp.pop %v2665
  %v2814 = vmul.f32 1.0, %v2813
  %v2815 = vrcp.pop %v2666
  %v2816 = vmul.f32 1.0, %v2815
  %v2817 = vrcp.pop %v2667
  %v2818 = vmul.f32 1.0, %v2817
  %v2819 = vrcp.pop %v2668
  %v2820 = vmul.f32 1.0, %v2819
  %v2821 = vrcp.pop %v2669
  %v2822 = vmul.f32 1.0, %v2821
  %v2823 = vrcp.pop %v2670
  %v2824 = vmul.f32 1.0, %v2823
  %v2825 = vrcp.pop %v2671
  %v2826 = vmul.f32 1.0, %v2825
  %v2827 = vrcp.pop %v2672
  %v2828 = vmul.f32 1.0, %v2827
  %v2829 = vrcp.pop %v2673
  %v2830 = vmul.f32 1.0, %v2829
  %v2831 = vrcp.pop %v2674
  %v2832 = vmul.f32 1.0, %v2831
  %v2833 = vrcp.pop %v2675
  %v2834 = vmul.f32 1.0, %v2833
  %v2835 = vrcp.pop %v2676
  %v2836 = vmul.f32 1.0, %v2835
  %v2837 = vrcp.pop %v2677
  %v2838 = vmul.f32 1.0, %v2837
  %v2839 = vrcp.pop %v2678
  %v2840 = vmul.f32 1.0, %v2839
  %v2841 = vrcp.pop %v2679
  %v2842 = vmul.f32 1.0, %v2841
  %v2843 = vrcp.pop %v2680
  %v2844 = vmul.f32 1.0, %v2843
  %v2845 = vrcp.pop %v2681
  %v2846 = vmul.f32 1.0, %v2845
  %v2847 = vrcp.pop %v2682
  %v2848 = vmul.f32 1.0, %v2847
  %v2849 = vrcp.pop %v2683
  %v2850 = vmul.f32 1.0, %v2849
  %v2851 = vrcp.pop %v2684
  %v2852 = vmul.f32 1.0, %v2851
  %v2853 = vrcp.pop %v2685
  %v2854 = vmul.f32 1.0, %v2853
  %v2855 = vrcp.pop %v2686
  %v2856 = vmul.f32 1.0, %v2855
  %v2857 = vrcp.pop %v2687
  %v2858 = vmul.f32 1.0, %v2857
  %v2859 = vrcp.pop %v2688
  %v2860 = vmul.f32 1.0, %v2859
  %v2861 = vrcp.pop %v2689
  %v2862 = vmul.f32 1.0, %v2861
  %v2863 = vrcp.pop %v2690
  %v2864 = vmul.f32 1.0, %v2863
  %v2865 = vrcp.pop %v2691
  %v2866 = vmul.f32 1.0, %v2865
  %v2867 = vrcp.pop %v2692
  %v2868 = vmul.f32 1.0, %v2867
  %v2869 = vmul.f32 %v2694, 1.0614054
  %v2870 = vmul.f32 %v2696, 1.0614054
  %v2871 = vmul.f32 %v2698, 1.0614054
  %v2872 = vmul.f32 %v2700, 1.0614054
  %v2873 = vmul.f32 %v2702, 1.0614054
  %v2874 = vmul.f32 %v2704, 1.0614054
  %v2875 = vmul.f32 %v2706, 1.0614054
  %v2876 = vmul.f32 %v2708, 1.0614054
  %v2877 = vmul.f32 %v2710, 1.0614054
  %v2878 = vmul.f32 %v2712, 1.0614054
  %v2879 = vmul.f32 %v2714, 1.0614054
  %v2880 = vmul.f32 %v2716, 1.0614054
  %v2881 = vmul.f32 %v2718, 1.0614054
  %v2882 = vmul.f32 %v2720, 1.0614054
  %v2883 = vmul.f32 %v2722, 1.0614054
  %v2884 = vmul.f32 %v2724, 1.0614054
  %v2885 = vmul.f32 %v2726, 1.0614054
  %v2886 = vmul.f32 %v2728, 1.0614054
  %v2887 = vmul.f32 %v2730, 1.0614054
  %v2888 = vmul.f32 %v2732, 1.0614054
  %v2889 = vmul.f32 %v2734, 1.0614054
  %v2890 = vmul.f32 %v2736, 1.0614054
  %v2891 = vmul.f32 %v2738, 1.0614054
  %v2892 = vmul.f32 %v2740, 1.0614054
  %v2893 = vmul.f32 %v2742, 1.0614054
  %v2894 = vmul.f32 %v2744, 1.0614054
  %v2895 = vmul.f32 %v2746, 1.0614054
  %v2896 = vmul.f32 %v2748, 1.0614054
  %v2897 = vmul.f32 %v2750, 1.0614054
  %v2898 = vmul.f32 %v2752, 1.0614054
  %v2899 = vmul.f32 %v2754, 1.0614054
  %v2900 = vmul.f32 %v2756, 1.0614054
  %v2901 = vmul.f32 %v2758, 1.0614054
  %v2902 = vmul.f32 %v2760, 1.0614054
  %v2903 = vmul.f32 %v2762, 1.0614054
  %v2904 = vmul.f32 %v2764, 1.0614054
  %v2905 = vmul.f32 %v2766, 1.0614054
  %v2906 = vmul.f32 %v2768, 1.0614054
  %v2907 = vmul.f32 %v2770, 1.0614054
  %v2908 = vmul.f32 %v2772, 1.0614054
  %v2909 = vmul.f32 %v2774, 1.0614054
  %v2910 = vmul.f32 %v2776, 1.0614054
  %v2911 = vmul.f32 %v2778, 1.0614054
  %v2912 = vmul.f32 %v2780, 1.0614054
  %v2913 = vmul.f32 %v2782, 1.0614054
  %v2914 = vmul.f32 %v2784, 1.0614054
  %v2915 = vmul.f32 %v2786, 1.0614054
  %v2916 = vmul.f32 %v2788, 1.0614054
  %v2917 = vmul.f32 %v2790, 1.0614054
  %v2918 = vmul.f32 %v2792, 1.0614054
  %v2919 = vmul.f32 %v2794, 1.0614054
  %v2920 = vmul.f32 %v2796, 1.0614054
  %v2921 = vmul.f32 %v2798, 1.0614054
  %v2922 = vmul.f32 %v2800, 1.0614054
  %v2923 = vmul.f32 %v2802, 1.0614054
  %v2924 = vmul.f32 %v2804, 1.0614054
  %v2925 = vmul.f32 %v2806, 1.0614054
  %v2926 = vmul.f32 %v2808, 1.0614054
  %v2927 = vmul.f32 %v2810, 1.0614054
  %v2928 = vmul.f32 %v2812, 1.0614054
  %v2929 = vmul.f32 %v2814, 1.0614054
  %v2930 = vmul.f32 %v2816, 1.0614054
  %v2931 = vmul.f32 %v2818, 1.0614054
  %v2932 = vmul.f32 %v2820, 1.0614054
  %v2933 = vmul.f32 %v2822, 1.0614054
  %v2934 = vmul.f32 %v2824, 1.0614054
  %v2935 = vmul.f32 %v2826, 1.0614054
  %v2936 = vmul.f32 %v2828, 1.0614054
  %v2937 = vmul.f32 %v2830, 1.0614054
  %v2938 = vmul.f32 %v2832, 1.0614054
  %v2939 = vmul.f32 %v2834, 1.0614054
  %v2940 = vmul.f32 %v2836, 1.0614054
  %v2941 = vmul.f32 %v2838, 1.0614054
  %v2942 = vmul.f32 %v2840, 1.0614054
  %v2943 = vmul.f32 %v2842, 1.0614054
  %v2944 = vmul.f32 %v2844, 1.0614054
  %v2945 = vmul.f32 %v2846, 1.0614054
  %v2946 = vmul.f32 %v2848, 1.0614054
  %v2947 = vmul.f32 %v2850, 1.0614054
  %v2948 = vmul.f32 %v2852, 1.0614054
  %v2949 = vmul.f32 %v2854, 1.0614054
  %v2950 = vmul.f32 %v2856, 1.0614054
  %v2951 = vmul.f32 %v2858, 1.0614054
  %v2952 = vmul.f32 %v2860, 1.0614054
  %v2953 = vmul.f32 %v2862, 1.0614054
  %v2954 = vmul.f32 %v2864, 1.0614054
  %v2955 = vmul.f32 %v2866, 1.0614054
  %v2956 = vmul.f32 %v2868, 1.0614054
  %v2957 = vadd.f32 %v2869, -1.4531521
  %v2958 = vadd.f32 %v2870, -1.4531521
  %v2959 = vadd.f32 %v2871, -1.4531521
  %v2960 = vadd.f32 %v2872, -1.4531521
  %v2961 = vadd.f32 %v2873, -1.4531521
  %v2962 = vadd.f32 %v2874, -1.4531521
  %v2963 = vadd.f32 %v2875, -1.4531521
  %v2964 = vadd.f32 %v2876, -1.4531521
  %v2965 = vadd.f32 %v2877, -1.4531521
  %v2966 = vadd.f32 %v2878, -1.4531521
  %v2967 = vadd.f32 %v2879, -1.4531521
  %v2968 = vadd.f32 %v2880, -1.4531521
  %v2969 = vadd.f32 %v2881, -1.4531521
  %v2970 = vadd.f32 %v2882, -1.4531521
  %v2971 = vadd.f32 %v2883, -1.4531521
  %v2972 = vadd.f32 %v2884, -1.4531521
  %v2973 = vadd.f32 %v2885, -1.4531521
  %v2974 = vadd.f32 %v2886, -1.4531521
  %v2975 = vadd.f32 %v2887, -1.4531521
  %v2976 = vadd.f32 %v2888, -1.4531521
  %v2977 = vadd.f32 %v2889, -1.4531521
  %v2978 = vadd.f32 %v2890, -1.4531521
  %v2979 = vadd.f32 %v2891, -1.4531521
  %v2980 = vadd.f32 %v2892, -1.4531521
  %v2981 = vadd.f32 %v2893, -1.4531521
  %v2982 = vadd.f32 %v2894, -1.4531521
  %v2983 = vadd.f32 %v2895, -1.4531521
  %v2984 = vadd.f32 %v2896, -1.4531521
  %v2985 = vadd.f32 %v2897, -1.4531521
  %v2986 = vadd.f32 %v2898, -1.4531521
  %v2987 = vadd.f32 %v2899, -1.4531521
  %v2988 = vadd.f32 %v2900, -1.4531521
  %v2989 = vadd.f32 %v2901, -1.4531521
  %v2990 = vadd.f32 %v2902, -1.4531521
  %v2991 = vadd.f32 %v2903, -1.4531521
  %v2992 = vadd.f32 %v2904, -1.4531521
  %v2993 = vadd.f32 %v2905, -1.4531521
  %v2994 = vadd.f32 %v2906, -1.4531521
  %v2995 = vadd.f32 %v2907, -1.4531521
  %v2996 = vadd.f32 %v2908, -1.4531521
  %v2997 = vadd.f32 %v2909, -1.4531521
  %v2998 = vadd.f32 %v2910, -1.4531521
  %v2999 = vadd.f32 %v2911, -1.4531521
  %v3000 = vadd.f32 %v2912, -1.4531521
  %v3001 = vadd.f32 %v2913, -1.4531521
  %v3002 = vadd.f32 %v2914, -1.4531521
  %v3003 = vadd.f32 %v2915, -1.4531521
  %v3004 = vadd.f32 %v2916, -1.4531521
  %v3005 = vadd.f32 %v2917, -1.4531521
  %v3006 = vadd.f32 %v2918, -1.4531521
  %v3007 = vadd.f32 %v2919, -1.4531521
  %v3008 = vadd.f32 %v2920, -1.4531521
  %v3009 = vadd.f32 %v2921, -1.4531521
  %v3010 = vadd.f32 %v2922, -1.4531521
  %v3011 = vadd.f32 %v2923, -1.4531521
  %v3012 = vadd.f32 %v2924, -1.4531521
  %v3013 = vadd.f32 %v2925, -1.4531521
  %v3014 = vadd.f32 %v2926, -1.4531521
  %v3015 = vadd.f32 %v2927, -1.4531521
  %v3016 = vadd.f32 %v2928, -1.4531521
  %v3017 = vadd.f32 %v2929, -1.4531521
  %v3018 = vadd.f32 %v2930, -1.4531521
  %v3019 = vadd.f32 %v2931, -1.4531521
  %v3020 = vadd.f32 %v2932, -1.4531521
  %v3021 = vadd.f32 %v2933, -1.4531521
  %v3022 = vadd.f32 %v2934, -1.4531521
  %v3023 = vadd.f32 %v2935, -1.4531521
  %v3024 = vadd.f32 %v2936, -1.4531521
  %v3025 = vadd.f32 %v2937, -1.4531521
  %v3026 = vadd.f32 %v2938, -1.4531521
  %v3027 = vadd.f32 %v2939, -1.4531521
  %v3028 = vadd.f32 %v2940, -1.4531521
  %v3029 = vadd.f32 %v2941, -1.4531521
  %v3030 = vadd.f32 %v2942, -1.4531521
  %v3031 = vadd.f32 %v2943, -1.4531521
  %v3032 = vadd.f32 %v2944, -1.4531521
  %v3033 = vadd.f32 %v2945, -1.4531521
  %v3034 = vadd.f32 %v2946, -1.4531521
  %v3035 = vadd.f32 %v2947, -1.4531521
  %v3036 = vadd.f32 %v2948, -1.4531521
  %v3037 = vadd.f32 %v2949, -1.4531521
  %v3038 = vadd.f32 %v2950, -1.4531521
  %v3039 = vadd.f32 %v2951, -1.4531521
  %v3040 = vadd.f32 %v2952, -1.4531521
  %v3041 = vadd.f32 %v2953, -1.4531521
  %v3042 = vadd.f32 %v2954, -1.4531521
  %v3043 = vadd.f32 %v2955, -1.4531521
  %v3044 = vadd.f32 %v2956, -1.4531521
  %v3045 = vmul.f32 %v2694, %v2957
  %v3046 = vmul.f32 %v2696, %v2958
  %v3047 = vmul.f32 %v2698, %v2959
  %v3048 = vmul.f32 %v2700, %v2960
  %v3049 = vmul.f32 %v2702, %v2961
  %v3050 = vmul.f32 %v2704, %v2962
  %v3051 = vmul.f32 %v2706, %v2963
  %v3052 = vmul.f32 %v2708, %v2964
  %v3053 = vmul.f32 %v2710, %v2965
  %v3054 = vmul.f32 %v2712, %v2966
  %v3055 = vmul.f32 %v2714, %v2967
  %v3056 = vmul.f32 %v2716, %v2968
  %v3057 = vmul.f32 %v2718, %v2969
  %v3058 = vmul.f32 %v2720, %v2970
  %v3059 = vmul.f32 %v2722, %v2971
  %v3060 = vmul.f32 %v2724, %v2972
  %v3061 = vmul.f32 %v2726, %v2973
  %v3062 = vmul.f32 %v2728, %v2974
  %v3063 = vmul.f32 %v2730, %v2975
  %v3064 = vmul.f32 %v2732, %v2976
  %v3065 = vmul.f32 %v2734, %v2977
  %v3066 = vmul.f32 %v2736, %v2978
  %v3067 = vmul.f32 %v2738, %v2979
  %v3068 = vmul.f32 %v2740, %v2980
  %v3069 = vmul.f32 %v2742, %v2981
  %v3070 = vmul.f32 %v2744, %v2982
  %v3071 = vmul.f32 %v2746, %v2983
  %v3072 = vmul.f32 %v2748, %v2984
  %v3073 = vmul.f32 %v2750, %v2985
  %v3074 = vmul.f32 %v2752, %v2986
  %v3075 = vmul.f32 %v2754, %v2987
  %v3076 = vmul.f32 %v2756, %v2988
  %v3077 = vmul.f32 %v2758, %v2989
  %v3078 = vmul.f32 %v2760, %v2990
  %v3079 = vmul.f32 %v2762, %v2991
  %v3080 = vmul.f32 %v2764, %v2992
  %v3081 = vmul.f32 %v2766, %v2993
  %v3082 = vmul.f32 %v2768, %v2994
  %v3083 = vmul.f32 %v2770, %v2995
  %v3084 = vmul.f32 %v2772, %v2996
  %v3085 = vmul.f32 %v2774, %v2997
  %v3086 = vmul.f32 %v2776, %v2998
  %v3087 = vmul.f32 %v2778, %v2999
  %v3088 = vmul.f32 %v2780, %v3000
  %v3089 = vmul.f32 %v2782, %v3001
  %v3090 = vmul.f32 %v2784, %v3002
  %v3091 = vmul.f32 %v2786, %v3003
  %v3092 = vmul.f32 %v2788, %v3004
  %v3093 = vmul.f32 %v2790, %v3005
  %v3094 = vmul.f32 %v2792, %v3006
  %v3095 = vmul.f32 %v2794, %v3007
  %v3096 = vmul.f32 %v2796, %v3008
  %v3097 = vmul.f32 %v2798, %v3009
  %v3098 = vmul.f32 %v2800, %v3010
  %v3099 = vmul.f32 %v2802, %v3011
  %v3100 = vmul.f32 %v2804, %v3012
  %v3101 = vmul.f32 %v2806, %v3013
  %v3102 = vmul.f32 %v2808, %v3014
  %v3103 = vmul.f32 %v2810, %v3015
  %v3104 = vmul.f32 %v2812, %v3016
  %v3105 = vmul.f32 %v2814, %v3017
  %v3106 = vmul.f32 %v2816, %v3018
  %v3107 = vmul.f32 %v2818, %v3019
  %v3108 = vmul.f32 %v2820, %v3020
  %v3109 = vmul.f32 %v2822, %v3021
  %v3110 = vmul.f32 %v2824, %v3022
  %v3111 = vmul.f32 %v2826, %v3023
  %v3112 = vmul.f32 %v2828, %v3024
  %v3113 = vmul.f32 %v2830, %v3025
  %v3114 = vmul.f32 %v2832, %v3026
  %v3115 = vmul.f32 %v2834, %v3027
  %v3116 = vmul.f32 %v2836, %v3028
  %v3117 = vmul.f32 %v2838, %v3029
  %v3118 = vmul.f32 %v2840, %v3030
  %v3119 = vmul.f32 %v2842, %v3031
  %v3120 = vmul.f32 %v2844, %v3032
  %v3121 = vmul.f32 %v2846, %v3033
  %v3122 = vmul.f32 %v2848, %v3034
  %v3123 = vmul.f32 %v2850, %v3035
  %v3124 = vmul.f32 %v2852, %v3036
  %v3125 = vmul.f32 %v2854, %v3037
  %v3126 = vmul.f32 %v2856, %v3038
  %v3127 = vmul.f32 %v2858, %v3039
  %v3128 = vmul.f32 %v2860, %v3040
  %v3129 = vmul.f32 %v2862, %v3041
  %v3130 = vmul.f32 %v2864, %v3042
  %v3131 = vmul.f32 %v2866, %v3043
  %v3132 = vmul.f32 %v2868, %v3044
  %v3133 = vadd.f32 %v3045, 1.4214138
  %v3134 = vadd.f32 %v3046, 1.4214138
  %v3135 = vadd.f32 %v3047, 1.4214138
  %v3136 = vadd.f32 %v3048, 1.4214138
  %v3137 = vadd.f32 %v3049, 1.4214138
  %v3138 = vadd.f32 %v3050, 1.4214138
  %v3139 = vadd.f32 %v3051, 1.4214138
  %v3140 = vadd.f32 %v3052, 1.4214138
  %v3141 = vadd.f32 %v3053, 1.4214138
  %v3142 = vadd.f32 %v3054, 1.4214138
  %v3143 = vadd.f32 %v3055, 1.4214138
  %v3144 = vadd.f32 %v3056, 1.4214138
  %v3145 = vadd.f32 %v3057, 1.4214138
  %v3146 = vadd.f32 %v3058, 1.4214138
  %v3147 = vadd.f32 %v3059, 1.4214138
  %v3148 = vadd.f32 %v3060, 1.4214138
  %v3149 = vadd.f32 %v3061, 1.4214138
  %v3150 = vadd.f32 %v3062, 1.4214138
  %v3151 = vadd.f32 %v3063, 1.4214138
  %v3152 = vadd.f32 %v3064, 1.4214138
  %v3153 = vadd.f32 %v3065, 1.4214138
  %v3154 = vadd.f32 %v3066, 1.4214138
  %v3155 = vadd.f32 %v3067, 1.4214138
  %v3156 = vadd.f32 %v3068, 1.4214138
  %v3157 = vadd.f32 %v3069, 1.4214138
  %v3158 = vadd.f32 %v3070, 1.4214138
  %v3159 = vadd.f32 %v3071, 1.4214138
  %v3160 = vadd.f32 %v3072, 1.4214138
  %v3161 = vadd.f32 %v3073, 1.4214138
  %v3162 = vadd.f32 %v3074, 1.4214138
  %v3163 = vadd.f32 %v3075, 1.4214138
  %v3164 = vadd.f32 %v3076, 1.4214138
  %v3165 = vadd.f32 %v3077, 1.4214138
  %v3166 = vadd.f32 %v3078, 1.4214138
  %v3167 = vadd.f32 %v3079, 1.4214138
  %v3168 = vadd.f32 %v3080, 1.4214138
  %v3169 = vadd.f32 %v3081, 1.4214138
  %v3170 = vadd.f32 %v3082, 1.4214138
  %v3171 = vadd.f32 %v3083, 1.4214138
  %v3172 = vadd.f32 %v3084, 1.4214138
  %v3173 = vadd.f32 %v3085, 1.4214138
  %v3174 = vadd.f32 %v3086, 1.4214138
  %v3175 = vadd.f32 %v3087, 1.4214138
  %v3176 = vadd.f32 %v3088, 1.4214138
  %v3177 = vadd.f32 %v3089, 1.4214138
  %v3178 = vadd.f32 %v3090, 1.4214138
  %v3179 = vadd.f32 %v3091, 1.4214138
  %v3180 = vadd.f32 %v3092, 1.4214138
  %v3181 = vadd.f32 %v3093, 1.4214138
  %v3182 = vadd.f32 %v3094, 1.4214138
  %v3183 = vadd.f32 %v3095, 1.4214138
  %v3184 = vadd.f32 %v3096, 1.4214138
  %v3185 = vadd.f32 %v3097, 1.4214138
  %v3186 = vadd.f32 %v3098, 1.4214138
  %v3187 = vadd.f32 %v3099, 1.4214138
  %v3188 = vadd.f32 %v3100, 1.4214138
  %v3189 = vadd.f32 %v3101, 1.4214138
  %v3190 = vadd.f32 %v3102, 1.4214138
  %v3191 = vadd.f32 %v3103, 1.4214138
  %v3192 = vadd.f32 %v3104, 1.4214138
  %v3193 = vadd.f32 %v3105, 1.4214138
  %v3194 = vadd.f32 %v3106, 1.4214138
  %v3195 = vadd.f32 %v3107, 1.4214138
  %v3196 = vadd.f32 %v3108, 1.4214138
  %v3197 = vadd.f32 %v3109, 1.4214138
  %v3198 = vadd.f32 %v3110, 1.4214138
  %v3199 = vadd.f32 %v3111, 1.4214138
  %v3200 = vadd.f32 %v3112, 1.4214138
  %v3201 = vadd.f32 %v3113, 1.4214138
  %v3202 = vadd.f32 %v3114, 1.4214138
  %v3203 = vadd.f32 %v3115, 1.4214138
  %v3204 = vadd.f32 %v3116, 1.4214138
  %v3205 = vadd.f32 %v3117, 1.4214138
  %v3206 = vadd.f32 %v3118, 1.4214138
  %v3207 = vadd.f32 %v3119, 1.4214138
  %v3208 = vadd.f32 %v3120, 1.4214138
  %v3209 = vadd.f32 %v3121, 1.4214138
  %v3210 = vadd.f32 %v3122, 1.4214138
  %v3211 = vadd.f32 %v3123, 1.4214138
  %v3212 = vadd.f32 %v3124, 1.4214138
  %v3213 = vadd.f32 %v3125, 1.4214138
  %v3214 = vadd.f32 %v3126, 1.4214138
  %v3215 = vadd.f32 %v3127, 1.4214138
  %v3216 = vadd.f32 %v3128, 1.4214138
  %v3217 = vadd.f32 %v3129, 1.4214138
  %v3218 = vadd.f32 %v3130, 1.4214138
  %v3219 = vadd.f32 %v3131, 1.4214138
  %v3220 = vadd.f32 %v3132, 1.4214138
  %v3221 = vmul.f32 %v2694, %v3133
  %v3222 = vmul.f32 %v2696, %v3134
  %v3223 = vmul.f32 %v2698, %v3135
  %v3224 = vmul.f32 %v2700, %v3136
  %v3225 = vmul.f32 %v2702, %v3137
  %v3226 = vmul.f32 %v2704, %v3138
  %v3227 = vmul.f32 %v2706, %v3139
  %v3228 = vmul.f32 %v2708, %v3140
  %v3229 = vmul.f32 %v2710, %v3141
  %v3230 = vmul.f32 %v2712, %v3142
  %v3231 = vmul.f32 %v2714, %v3143
  %v3232 = vmul.f32 %v2716, %v3144
  %v3233 = vmul.f32 %v2718, %v3145
  %v3234 = vmul.f32 %v2720, %v3146
  %v3235 = vmul.f32 %v2722, %v3147
  %v3236 = vmul.f32 %v2724, %v3148
  %v3237 = vmul.f32 %v2726, %v3149
  %v3238 = vmul.f32 %v2728, %v3150
  %v3239 = vmul.f32 %v2730, %v3151
  %v3240 = vmul.f32 %v2732, %v3152
  %v3241 = vmul.f32 %v2734, %v3153
  %v3242 = vmul.f32 %v2736, %v3154
  %v3243 = vmul.f32 %v2738, %v3155
  %v3244 = vmul.f32 %v2740, %v3156
  %v3245 = vmul.f32 %v2742, %v3157
  %v3246 = vmul.f32 %v2744, %v3158
  %v3247 = vmul.f32 %v2746, %v3159
  %v3248 = vmul.f32 %v2748, %v3160
  %v3249 = vmul.f32 %v2750, %v3161
  %v3250 = vmul.f32 %v2752, %v3162
  %v3251 = vmul.f32 %v2754, %v3163
  %v3252 = vmul.f32 %v2756, %v3164
  %v3253 = vmul.f32 %v2758, %v3165
  %v3254 = vmul.f32 %v2760, %v3166
  %v3255 = vmul.f32 %v2762, %v3167
  %v3256 = vmul.f32 %v2764, %v3168
  %v3257 = vmul.f32 %v2766, %v3169
  %v3258 = vmul.f32 %v2768, %v3170
  %v3259 = vmul.f32 %v2770, %v3171
  %v3260 = vmul.f32 %v2772, %v3172
  %v3261 = vmul.f32 %v2774, %v3173
  %v3262 = vmul.f32 %v2776, %v3174
  %v3263 = vmul.f32 %v2778, %v3175
  %v3264 = vmul.f32 %v2780, %v3176
  %v3265 = vmul.f32 %v2782, %v3177
  %v3266 = vmul.f32 %v2784, %v3178
  %v3267 = vmul.f32 %v2786, %v3179
  %v3268 = vmul.f32 %v2788, %v3180
  %v3269 = vmul.f32 %v2790, %v3181
  %v3270 = vmul.f32 %v2792, %v3182
  %v3271 = vmul.f32 %v2794, %v3183
  %v3272 = vmul.f32 %v2796, %v3184
  %v3273 = vmul.f32 %v2798, %v3185
  %v3274 = vmul.f32 %v2800, %v3186
  %v3275 = vmul.f32 %v2802, %v3187
  %v3276 = vmul.f32 %v2804, %v3188
  %v3277 = vmul.f32 %v2806, %v3189
  %v3278 = vmul.f32 %v2808, %v3190
  %v3279 = vmul.f32 %v2810, %v3191
  %v3280 = vmul.f32 %v2812, %v3192
  %v3281 = vmul.f32 %v2814, %v3193
  %v3282 = vmul.f32 %v2816, %v3194
  %v3283 = vmul.f32 %v2818, %v3195
  %v3284 = vmul.f32 %v2820, %v3196
  %v3285 = vmul.f32 %v2822, %v3197
  %v3286 = vmul.f32 %v2824, %v3198
  %v3287 = vmul.f32 %v2826, %v3199
  %v3288 = vmul.f32 %v2828, %v3200
  %v3289 = vmul.f32 %v2830, %v3201
  %v3290 = vmul.f32 %v2832, %v3202
  %v3291 = vmul.f32 %v2834, %v3203
  %v3292 = vmul.f32 %v2836, %v3204
  %v3293 = vmul.f32 %v2838, %v3205
  %v3294 = vmul.f32 %v2840, %v3206
  %v3295 = vmul.f32 %v2842, %v3207
  %v3296 = vmul.f32 %v2844, %v3208
  %v3297 = vmul.f32 %v2846, %v3209
  %v3298 = vmul.f32 %v2848, %v3210
  %v3299 = vmul.f32 %v2850, %v3211
  %v3300 = vmul.f32 %v2852, %v3212
  %v3301 = vmul.f32 %v2854, %v3213
  %v3302 = vmul.f32 %v2856, %v3214
  %v3303 = vmul.f32 %v2858, %v3215
  %v3304 = vmul.f32 %v2860, %v3216
  %v3305 = vmul.f32 %v2862, %v3217
  %v3306 = vmul.f32 %v2864, %v3218
  %v3307 = vmul.f32 %v2866, %v3219
  %v3308 = vmul.f32 %v2868, %v3220
  %v3309 = vadd.f32 %v3221, -0.28449672
  %v3310 = vadd.f32 %v3222, -0.28449672
  %v3311 = vadd.f32 %v3223, -0.28449672
  %v3312 = vadd.f32 %v3224, -0.28449672
  %v3313 = vadd.f32 %v3225, -0.28449672
  %v3314 = vadd.f32 %v3226, -0.28449672
  %v3315 = vadd.f32 %v3227, -0.28449672
  %v3316 = vadd.f32 %v3228, -0.28449672
  %v3317 = vadd.f32 %v3229, -0.28449672
  %v3318 = vadd.f32 %v3230, -0.28449672
  %v3319 = vadd.f32 %v3231, -0.28449672
  %v3320 = vadd.f32 %v3232, -0.28449672
  %v3321 = vadd.f32 %v3233, -0.28449672
  %v3322 = vadd.f32 %v3234, -0.28449672
  %v3323 = vadd.f32 %v3235, -0.28449672
  %v3324 = vadd.f32 %v3236, -0.28449672
  %v3325 = vadd.f32 %v3237, -0.28449672
  %v3326 = vadd.f32 %v3238, -0.28449672
  %v3327 = vadd.f32 %v3239, -0.28449672
  %v3328 = vadd.f32 %v3240, -0.28449672
  %v3329 = vadd.f32 %v3241, -0.28449672
  %v3330 = vadd.f32 %v3242, -0.28449672
  %v3331 = vadd.f32 %v3243, -0.28449672
  %v3332 = vadd.f32 %v3244, -0.28449672
  %v3333 = vadd.f32 %v3245, -0.28449672
  %v3334 = vadd.f32 %v3246, -0.28449672
  %v3335 = vadd.f32 %v3247, -0.28449672
  %v3336 = vadd.f32 %v3248, -0.28449672
  %v3337 = vadd.f32 %v3249, -0.28449672
  %v3338 = vadd.f32 %v3250, -0.28449672
  %v3339 = vadd.f32 %v3251, -0.28449672
  %v3340 = vadd.f32 %v3252, -0.28449672
  %v3341 = vadd.f32 %v3253, -0.28449672
  %v3342 = vadd.f32 %v3254, -0.28449672
  %v3343 = vadd.f32 %v3255, -0.28449672
  %v3344 = vadd.f32 %v3256, -0.28449672
  %v3345 = vadd.f32 %v3257, -0.28449672
  %v3346 = vadd.f32 %v3258, -0.28449672
  %v3347 = vadd.f32 %v3259, -0.28449672
  %v3348 = vadd.f32 %v3260, -0.28449672
  %v3349 = vadd.f32 %v3261, -0.28449672
  %v3350 = vadd.f32 %v3262, -0.28449672
  %v3351 = vadd.f32 %v3263, -0.28449672
  %v3352 = vadd.f32 %v3264, -0.28449672
  %v3353 = vadd.f32 %v3265, -0.28449672
  %v3354 = vadd.f32 %v3266, -0.28449672
  %v3355 = vadd.f32 %v3267, -0.28449672
  %v3356 = vadd.f32 %v3268, -0.28449672
  %v3357 = vadd.f32 %v3269, -0.28449672
  %v3358 = vadd.f32 %v3270, -0.28449672
  %v3359 = vadd.f32 %v3271, -0.28449672
  %v3360 = vadd.f32 %v3272, -0.28449672
  %v3361 = vadd.f32 %v3273, -0.28449672
  %v3362 = vadd.f32 %v3274, -0.28449672
  %v3363 = vadd.f32 %v3275, -0.28449672
  %v3364 = vadd.f32 %v3276, -0.28449672
  %v3365 = vadd.f32 %v3277, -0.28449672
  %v3366 = vadd.f32 %v3278, -0.28449672
  %v3367 = vadd.f32 %v3279, -0.28449672
  %v3368 = vadd.f32 %v3280, -0.28449672
  %v3369 = vadd.f32 %v3281, -0.28449672
  %v3370 = vadd.f32 %v3282, -0.28449672
  %v3371 = vadd.f32 %v3283, -0.28449672
  %v3372 = vadd.f32 %v3284, -0.28449672
  %v3373 = vadd.f32 %v3285, -0.28449672
  %v3374 = vadd.f32 %v3286, -0.28449672
  %v3375 = vadd.f32 %v3287, -0.28449672
  %v3376 = vadd.f32 %v3288, -0.28449672
  %v3377 = vadd.f32 %v3289, -0.28449672
  %v3378 = vadd.f32 %v3290, -0.28449672
  %v3379 = vadd.f32 %v3291, -0.28449672
  %v3380 = vadd.f32 %v3292, -0.28449672
  %v3381 = vadd.f32 %v3293, -0.28449672
  %v3382 = vadd.f32 %v3294, -0.28449672
  %v3383 = vadd.f32 %v3295, -0.28449672
  %v3384 = vadd.f32 %v3296, -0.28449672
  %v3385 = vadd.f32 %v3297, -0.28449672
  %v3386 = vadd.f32 %v3298, -0.28449672
  %v3387 = vadd.f32 %v3299, -0.28449672
  %v3388 = vadd.f32 %v3300, -0.28449672
  %v3389 = vadd.f32 %v3301, -0.28449672
  %v3390 = vadd.f32 %v3302, -0.28449672
  %v3391 = vadd.f32 %v3303, -0.28449672
  %v3392 = vadd.f32 %v3304, -0.28449672
  %v3393 = vadd.f32 %v3305, -0.28449672
  %v3394 = vadd.f32 %v3306, -0.28449672
  %v3395 = vadd.f32 %v3307, -0.28449672
  %v3396 = vadd.f32 %v3308, -0.28449672
  %v3397 = vmul.f32 %v2694, %v3309
  %v3398 = vmul.f32 %v2696, %v3310
  %v3399 = vmul.f32 %v2698, %v3311
  %v3400 = vmul.f32 %v2700, %v3312
  %v3401 = vmul.f32 %v2702, %v3313
  %v3402 = vmul.f32 %v2704, %v3314
  %v3403 = vmul.f32 %v2706, %v3315
  %v3404 = vmul.f32 %v2708, %v3316
  %v3405 = vmul.f32 %v2710, %v3317
  %v3406 = vmul.f32 %v2712, %v3318
  %v3407 = vmul.f32 %v2714, %v3319
  %v3408 = vmul.f32 %v2716, %v3320
  %v3409 = vmul.f32 %v2718, %v3321
  %v3410 = vmul.f32 %v2720, %v3322
  %v3411 = vmul.f32 %v2722, %v3323
  %v3412 = vmul.f32 %v2724, %v3324
  %v3413 = vmul.f32 %v2726, %v3325
  %v3414 = vmul.f32 %v2728, %v3326
  %v3415 = vmul.f32 %v2730, %v3327
  %v3416 = vmul.f32 %v2732, %v3328
  %v3417 = vmul.f32 %v2734, %v3329
  %v3418 = vmul.f32 %v2736, %v3330
  %v3419 = vmul.f32 %v2738, %v3331
  %v3420 = vmul.f32 %v2740, %v3332
  %v3421 = vmul.f32 %v2742, %v3333
  %v3422 = vmul.f32 %v2744, %v3334
  %v3423 = vmul.f32 %v2746, %v3335
  %v3424 = vmul.f32 %v2748, %v3336
  %v3425 = vmul.f32 %v2750, %v3337
  %v3426 = vmul.f32 %v2752, %v3338
  %v3427 = vmul.f32 %v2754, %v3339
  %v3428 = vmul.f32 %v2756, %v3340
  %v3429 = vmul.f32 %v2758, %v3341
  %v3430 = vmul.f32 %v2760, %v3342
  %v3431 = vmul.f32 %v2762, %v3343
  %v3432 = vmul.f32 %v2764, %v3344
  %v3433 = vmul.f32 %v2766, %v3345
  %v3434 = vmul.f32 %v2768, %v3346
  %v3435 = vmul.f32 %v2770, %v3347
  %v3436 = vmul.f32 %v2772, %v3348
  %v3437 = vmul.f32 %v2774, %v3349
  %v3438 = vmul.f32 %v2776, %v3350
  %v3439 = vmul.f32 %v2778, %v3351
  %v3440 = vmul.f32 %v2780, %v3352
  %v3441 = vmul.f32 %v2782, %v3353
  %v3442 = vmul.f32 %v2784, %v3354
  %v3443 = vmul.f32 %v2786, %v3355
  %v3444 = vmul.f32 %v2788, %v3356
  %v3445 = vmul.f32 %v2790, %v3357
  %v3446 = vmul.f32 %v2792, %v3358
  %v3447 = vmul.f32 %v2794, %v3359
  %v3448 = vmul.f32 %v2796, %v3360
  %v3449 = vmul.f32 %v2798, %v3361
  %v3450 = vmul.f32 %v2800, %v3362
  %v3451 = vmul.f32 %v2802, %v3363
  %v3452 = vmul.f32 %v2804, %v3364
  %v3453 = vmul.f32 %v2806, %v3365
  %v3454 = vmul.f32 %v2808, %v3366
  %v3455 = vmul.f32 %v2810, %v3367
  %v3456 = vmul.f32 %v2812, %v3368
  %v3457 = vmul.f32 %v2814, %v3369
  %v3458 = vmul.f32 %v2816, %v3370
  %v3459 = vmul.f32 %v2818, %v3371
  %v3460 = vmul.f32 %v2820, %v3372
  %v3461 = vmul.f32 %v2822, %v3373
  %v3462 = vmul.f32 %v2824, %v3374
  %v3463 = vmul.f32 %v2826, %v3375
  %v3464 = vmul.f32 %v2828, %v3376
  %v3465 = vmul.f32 %v2830, %v3377
  %v3466 = vmul.f32 %v2832, %v3378
  %v3467 = vmul.f32 %v2834, %v3379
  %v3468 = vmul.f32 %v2836, %v3380
  %v3469 = vmul.f32 %v2838, %v3381
  %v3470 = vmul.f32 %v2840, %v3382
  %v3471 = vmul.f32 %v2842, %v3383
  %v3472 = vmul.f32 %v2844, %v3384
  %v3473 = vmul.f32 %v2846, %v3385
  %v3474 = vmul.f32 %v2848, %v3386
  %v3475 = vmul.f32 %v2850, %v3387
  %v3476 = vmul.f32 %v2852, %v3388
  %v3477 = vmul.f32 %v2854, %v3389
  %v3478 = vmul.f32 %v2856, %v3390
  %v3479 = vmul.f32 %v2858, %v3391
  %v3480 = vmul.f32 %v2860, %v3392
  %v3481 = vmul.f32 %v2862, %v3393
  %v3482 = vmul.f32 %v2864, %v3394
  %v3483 = vmul.f32 %v2866, %v3395
  %v3484 = vmul.f32 %v2868, %v3396
  %v3485 = vadd.f32 %v3397, 0.2548296
  %v3486 = vadd.f32 %v3398, 0.2548296
  %v3487 = vadd.f32 %v3399, 0.2548296
  %v3488 = vadd.f32 %v3400, 0.2548296
  %v3489 = vadd.f32 %v3401, 0.2548296
  %v3490 = vadd.f32 %v3402, 0.2548296
  %v3491 = vadd.f32 %v3403, 0.2548296
  %v3492 = vadd.f32 %v3404, 0.2548296
  %v3493 = vadd.f32 %v3405, 0.2548296
  %v3494 = vadd.f32 %v3406, 0.2548296
  %v3495 = vadd.f32 %v3407, 0.2548296
  %v3496 = vadd.f32 %v3408, 0.2548296
  %v3497 = vadd.f32 %v3409, 0.2548296
  %v3498 = vadd.f32 %v3410, 0.2548296
  %v3499 = vadd.f32 %v3411, 0.2548296
  %v3500 = vadd.f32 %v3412, 0.2548296
  %v3501 = vadd.f32 %v3413, 0.2548296
  %v3502 = vadd.f32 %v3414, 0.2548296
  %v3503 = vadd.f32 %v3415, 0.2548296
  %v3504 = vadd.f32 %v3416, 0.2548296
  %v3505 = vadd.f32 %v3417, 0.2548296
  %v3506 = vadd.f32 %v3418, 0.2548296
  %v3507 = vadd.f32 %v3419, 0.2548296
  %v3508 = vadd.f32 %v3420, 0.2548296
  %v3509 = vadd.f32 %v3421, 0.2548296
  %v3510 = vadd.f32 %v3422, 0.2548296
  %v3511 = vadd.f32 %v3423, 0.2548296
  %v3512 = vadd.f32 %v3424, 0.2548296
  %v3513 = vadd.f32 %v3425, 0.2548296
  %v3514 = vadd.f32 %v3426, 0.2548296
  %v3515 = vadd.f32 %v3427, 0.2548296
  %v3516 = vadd.f32 %v3428, 0.2548296
  %v3517 = vadd.f32 %v3429, 0.2548296
  %v3518 = vadd.f32 %v3430, 0.2548296
  %v3519 = vadd.f32 %v3431, 0.2548296
  %v3520 = vadd.f32 %v3432, 0.2548296
  %v3521 = vadd.f32 %v3433, 0.2548296
  %v3522 = vadd.f32 %v3434, 0.2548296
  %v3523 = vadd.f32 %v3435, 0.2548296
  %v3524 = vadd.f32 %v3436, 0.2548296
  %v3525 = vadd.f32 %v3437, 0.2548296
  %v3526 = vadd.f32 %v3438, 0.2548296
  %v3527 = vadd.f32 %v3439, 0.2548296
  %v3528 = vadd.f32 %v3440, 0.2548296
  %v3529 = vadd.f32 %v3441, 0.2548296
  %v3530 = vadd.f32 %v3442, 0.2548296
  %v3531 = vadd.f32 %v3443, 0.2548296
  %v3532 = vadd.f32 %v3444, 0.2548296
  %v3533 = vadd.f32 %v3445, 0.2548296
  %v3534 = vadd.f32 %v3446, 0.2548296
  %v3535 = vadd.f32 %v3447, 0.2548296
  %v3536 = vadd.f32 %v3448, 0.2548296
  %v3537 = vadd.f32 %v3449, 0.2548296
  %v3538 = vadd.f32 %v3450, 0.2548296
  %v3539 = vadd.f32 %v3451, 0.2548296
  %v3540 = vadd.f32 %v3452, 0.2548296
  %v3541 = vadd.f32 %v3453, 0.2548296
  %v3542 = vadd.f32 %v3454, 0.2548296
  %v3543 = vadd.f32 %v3455, 0.2548296
  %v3544 = vadd.f32 %v3456, 0.2548296
  %v3545 = vadd.f32 %v3457, 0.2548296
  %v3546 = vadd.f32 %v3458, 0.2548296
  %v3547 = vadd.f32 %v3459, 0.2548296
  %v3548 = vadd.f32 %v3460, 0.2548296
  %v3549 = vadd.f32 %v3461, 0.2548296
  %v3550 = vadd.f32 %v3462, 0.2548296
  %v3551 = vadd.f32 %v3463, 0.2548296
  %v3552 = vadd.f32 %v3464, 0.2548296
  %v3553 = vadd.f32 %v3465, 0.2548296
  %v3554 = vadd.f32 %v3466, 0.2548296
  %v3555 = vadd.f32 %v3467, 0.2548296
  %v3556 = vadd.f32 %v3468, 0.2548296
  %v3557 = vadd.f32 %v3469, 0.2548296
  %v3558 = vadd.f32 %v3470, 0.2548296
  %v3559 = vadd.f32 %v3471, 0.2548296
  %v3560 = vadd.f32 %v3472, 0.2548296
  %v3561 = vadd.f32 %v3473, 0.2548296
  %v3562 = vadd.f32 %v3474, 0.2548296
  %v3563 = vadd.f32 %v3475, 0.2548296
  %v3564 = vadd.f32 %v3476, 0.2548296
  %v3565 = vadd.f32 %v3477, 0.2548296
  %v3566 = vadd.f32 %v3478, 0.2548296
  %v3567 = vadd.f32 %v3479, 0.2548296
  %v3568 = vadd.f32 %v3480, 0.2548296
  %v3569 = vadd.f32 %v3481, 0.2548296
  %v3570 = vadd.f32 %v3482, 0.2548296
  %v3571 = vadd.f32 %v3483, 0.2548296
  %v3572 = vadd.f32 %v3484, 0.2548296
  %v3573 = vmul.f32 %v2694, %v3485
  %v3574 = vmul.f32 %v2696, %v3486
  %v3575 = vmul.f32 %v2698, %v3487
  %v3576 = vmul.f32 %v2700, %v3488
  %v3577 = vmul.f32 %v2702, %v3489
  %v3578 = vmul.f32 %v2704, %v3490
  %v3579 = vmul.f32 %v2706, %v3491
  %v3580 = vmul.f32 %v2708, %v3492
  %v3581 = vmul.f32 %v2710, %v3493
  %v3582 = vmul.f32 %v2712, %v3494
  %v3583 = vmul.f32 %v2714, %v3495
  %v3584 = vmul.f32 %v2716, %v3496
  %v3585 = vmul.f32 %v2718, %v3497
  %v3586 = vmul.f32 %v2720, %v3498
  %v3587 = vmul.f32 %v2722, %v3499
  %v3588 = vmul.f32 %v2724, %v3500
  %v3589 = vmul.f32 %v2726, %v3501
  %v3590 = vmul.f32 %v2728, %v3502
  %v3591 = vmul.f32 %v2730, %v3503
  %v3592 = vmul.f32 %v2732, %v3504
  %v3593 = vmul.f32 %v2734, %v3505
  %v3594 = vmul.f32 %v2736, %v3506
  %v3595 = vmul.f32 %v2738, %v3507
  %v3596 = vmul.f32 %v2740, %v3508
  %v3597 = vmul.f32 %v2742, %v3509
  %v3598 = vmul.f32 %v2744, %v3510
  %v3599 = vmul.f32 %v2746, %v3511
  %v3600 = vmul.f32 %v2748, %v3512
  %v3601 = vmul.f32 %v2750, %v3513
  %v3602 = vmul.f32 %v2752, %v3514
  %v3603 = vmul.f32 %v2754, %v3515
  %v3604 = vmul.f32 %v2756, %v3516
  %v3605 = vmul.f32 %v2758, %v3517
  %v3606 = vmul.f32 %v2760, %v3518
  %v3607 = vmul.f32 %v2762, %v3519
  %v3608 = vmul.f32 %v2764, %v3520
  %v3609 = vmul.f32 %v2766, %v3521
  %v3610 = vmul.f32 %v2768, %v3522
  %v3611 = vmul.f32 %v2770, %v3523
  %v3612 = vmul.f32 %v2772, %v3524
  %v3613 = vmul.f32 %v2774, %v3525
  %v3614 = vmul.f32 %v2776, %v3526
  %v3615 = vmul.f32 %v2778, %v3527
  %v3616 = vmul.f32 %v2780, %v3528
  %v3617 = vmul.f32 %v2782, %v3529
  %v3618 = vmul.f32 %v2784, %v3530
  %v3619 = vmul.f32 %v2786, %v3531
  %v3620 = vmul.f32 %v2788, %v3532
  %v3621 = vmul.f32 %v2790, %v3533
  %v3622 = vmul.f32 %v2792, %v3534
  %v3623 = vmul.f32 %v2794, %v3535
  %v3624 = vmul.f32 %v2796, %v3536
  %v3625 = vmul.f32 %v2798, %v3537
  %v3626 = vmul.f32 %v2800, %v3538
  %v3627 = vmul.f32 %v2802, %v3539
  %v3628 = vmul.f32 %v2804, %v3540
  %v3629 = vmul.f32 %v2806, %v3541
  %v3630 = vmul.f32 %v2808, %v3542
  %v3631 = vmul.f32 %v2810, %v3543
  %v3632 = vmul.f32 %v2812, %v3544
  %v3633 = vmul.f32 %v2814, %v3545
  %v3634 = vmul.f32 %v2816, %v3546
  %v3635 = vmul.f32 %v2818, %v3547
  %v3636 = vmul.f32 %v2820, %v3548
  %v3637 = vmul.f32 %v2822, %v3549
  %v3638 = vmul.f32 %v2824, %v3550
  %v3639 = vmul.f32 %v2826, %v3551
  %v3640 = vmul.f32 %v2828, %v3552
  %v3641 = vmul.f32 %v2830, %v3553
  %v3642 = vmul.f32 %v2832, %v3554
  %v3643 = vmul.f32 %v2834, %v3555
  %v3644 = vmul.f32 %v2836, %v3556
  %v3645 = vmul.f32 %v2838, %v3557
  %v3646 = vmul.f32 %v2840, %v3558
  %v3647 = vmul.f32 %v2842, %v3559
  %v3648 = vmul.f32 %v2844, %v3560
  %v3649 = vmul.f32 %v2846, %v3561
  %v3650 = vmul.f32 %v2848, %v3562
  %v3651 = vmul.f32 %v2850, %v3563
  %v3652 = vmul.f32 %v2852, %v3564
  %v3653 = vmul.f32 %v2854, %v3565
  %v3654 = vmul.f32 %v2856, %v3566
  %v3655 = vmul.f32 %v2858, %v3567
  %v3656 = vmul.f32 %v2860, %v3568
  %v3657 = vmul.f32 %v2862, %v3569
  %v3658 = vmul.f32 %v2864, %v3570
  %v3659 = vmul.f32 %v2866, %v3571
  %v3660 = vmul.f32 %v2868, %v3572
  %v3661 = vsub.f32 0.0, %v2429
  %v3662 = vsub.f32 0.0, %v2430
  %v3663 = vsub.f32 0.0, %v2431
  %v3664 = vsub.f32 0.0, %v2432
  %v3665 = vsub.f32 0.0, %v2433
  %v3666 = vsub.f32 0.0, %v2434
  %v3667 = vsub.f32 0.0, %v2435
  %v3668 = vsub.f32 0.0, %v2436
  %v3669 = vsub.f32 0.0, %v2437
  %v3670 = vsub.f32 0.0, %v2438
  %v3671 = vsub.f32 0.0, %v2439
  %v3672 = vsub.f32 0.0, %v2440
  %v3673 = vsub.f32 0.0, %v2441
  %v3674 = vsub.f32 0.0, %v2442
  %v3675 = vsub.f32 0.0, %v2443
  %v3676 = vsub.f32 0.0, %v2444
  %v3677 = vsub.f32 0.0, %v2445
  %v3678 = vsub.f32 0.0, %v2446
  %v3679 = vsub.f32 0.0, %v2447
  %v3680 = vsub.f32 0.0, %v2448
  %v3681 = vsub.f32 0.0, %v2449
  %v3682 = vsub.f32 0.0, %v2450
  %v3683 = vsub.f32 0.0, %v2451
  %v3684 = vsub.f32 0.0, %v2452
  %v3685 = vsub.f32 0.0, %v2453
  %v3686 = vsub.f32 0.0, %v2454
  %v3687 = vsub.f32 0.0, %v2455
  %v3688 = vsub.f32 0.0, %v2456
  %v3689 = vsub.f32 0.0, %v2457
  %v3690 = vsub.f32 0.0, %v2458
  %v3691 = vsub.f32 0.0, %v2459
  %v3692 = vsub.f32 0.0, %v2460
  %v3693 = vsub.f32 0.0, %v2461
  %v3694 = vsub.f32 0.0, %v2462
  %v3695 = vsub.f32 0.0, %v2463
  %v3696 = vsub.f32 0.0, %v2464
  %v3697 = vsub.f32 0.0, %v2465
  %v3698 = vsub.f32 0.0, %v2466
  %v3699 = vsub.f32 0.0, %v2467
  %v3700 = vsub.f32 0.0, %v2468
  %v3701 = vsub.f32 0.0, %v2469
  %v3702 = vsub.f32 0.0, %v2470
  %v3703 = vsub.f32 0.0, %v2471
  %v3704 = vsub.f32 0.0, %v2472
  %v3705 = vsub.f32 0.0, %v2473
  %v3706 = vsub.f32 0.0, %v2474
  %v3707 = vsub.f32 0.0, %v2475
  %v3708 = vsub.f32 0.0, %v2476
  %v3709 = vsub.f32 0.0, %v2477
  %v3710 = vsub.f32 0.0, %v2478
  %v3711 = vsub.f32 0.0, %v2479
  %v3712 = vsub.f32 0.0, %v2480
  %v3713 = vsub.f32 0.0, %v2481
  %v3714 = vsub.f32 0.0, %v2482
  %v3715 = vsub.f32 0.0, %v2483
  %v3716 = vsub.f32 0.0, %v2484
  %v3717 = vsub.f32 0.0, %v2485
  %v3718 = vsub.f32 0.0, %v2486
  %v3719 = vsub.f32 0.0, %v2487
  %v3720 = vsub.f32 0.0, %v2488
  %v3721 = vsub.f32 0.0, %v2489
  %v3722 = vsub.f32 0.0, %v2490
  %v3723 = vsub.f32 0.0, %v2491
  %v3724 = vsub.f32 0.0, %v2492
  %v3725 = vsub.f32 0.0, %v2493
  %v3726 = vsub.f32 0.0, %v2494
  %v3727 = vsub.f32 0.0, %v2495
  %v3728 = vsub.f32 0.0, %v2496
  %v3729 = vsub.f32 0.0, %v2497
  %v3730 = vsub.f32 0.0, %v2498
  %v3731 = vsub.f32 0.0, %v2499
  %v3732 = vsub.f32 0.0, %v2500
  %v3733 = vsub.f32 0.0, %v2501
  %v3734 = vsub.f32 0.0, %v2502
  %v3735 = vsub.f32 0.0, %v2503
  %v3736 = vsub.f32 0.0, %v2504
  %v3737 = vsub.f32 0.0, %v2505
  %v3738 = vsub.f32 0.0, %v2506
  %v3739 = vsub.f32 0.0, %v2507
  %v3740 = vsub.f32 0.0, %v2508
  %v3741 = vsub.f32 0.0, %v2509
  %v3742 = vsub.f32 0.0, %v2510
  %v3743 = vsub.f32 0.0, %v2511
  %v3744 = vsub.f32 0.0, %v2512
  %v3745 = vsub.f32 0.0, %v2513
  %v3746 = vsub.f32 0.0, %v2514
  %v3747 = vsub.f32 0.0, %v2515
  %v3748 = vsub.f32 0.0, %v2516
  %v3749 = vmul.f32 %v3661, %v2429
  %v3750 = vmul.f32 %v3662, %v2430
  %v3751 = vmul.f32 %v3663, %v2431
  %v3752 = vmul.f32 %v3664, %v2432
  %v3753 = vmul.f32 %v3665, %v2433
  %v3754 = vmul.f32 %v3666, %v2434
  %v3755 = vmul.f32 %v3667, %v2435
  %v3756 = vmul.f32 %v3668, %v2436
  %v3757 = vmul.f32 %v3669, %v2437
  %v3758 = vmul.f32 %v3670, %v2438
  %v3759 = vmul.f32 %v3671, %v2439
  %v3760 = vmul.f32 %v3672, %v2440
  %v3761 = vmul.f32 %v3673, %v2441
  %v3762 = vmul.f32 %v3674, %v2442
  %v3763 = vmul.f32 %v3675, %v2443
  %v3764 = vmul.f32 %v3676, %v2444
  %v3765 = vmul.f32 %v3677, %v2445
  %v3766 = vmul.f32 %v3678, %v2446
  %v3767 = vmul.f32 %v3679, %v2447
  %v3768 = vmul.f32 %v3680, %v2448
  %v3769 = vmul.f32 %v3681, %v2449
  %v3770 = vmul.f32 %v3682, %v2450
  %v3771 = vmul.f32 %v3683, %v2451
  %v3772 = vmul.f32 %v3684, %v2452
  %v3773 = vmul.f32 %v3685, %v2453
  %v3774 = vmul.f32 %v3686, %v2454
  %v3775 = vmul.f32 %v3687, %v2455
  %v3776 = vmul.f32 %v3688, %v2456
  %v3777 = vmul.f32 %v3689, %v2457
  %v3778 = vmul.f32 %v3690, %v2458
  %v3779 = vmul.f32 %v3691, %v2459
  %v3780 = vmul.f32 %v3692, %v2460
  %v3781 = vmul.f32 %v3693, %v2461
  %v3782 = vmul.f32 %v3694, %v2462
  %v3783 = vmul.f32 %v3695, %v2463
  %v3784 = vmul.f32 %v3696, %v2464
  %v3785 = vmul.f32 %v3697, %v2465
  %v3786 = vmul.f32 %v3698, %v2466
  %v3787 = vmul.f32 %v3699, %v2467
  %v3788 = vmul.f32 %v3700, %v2468
  %v3789 = vmul.f32 %v3701, %v2469
  %v3790 = vmul.f32 %v3702, %v2470
  %v3791 = vmul.f32 %v3703, %v2471
  %v3792 = vmul.f32 %v3704, %v2472
  %v3793 = vmul.f32 %v3705, %v2473
  %v3794 = vmul.f32 %v3706, %v2474
  %v3795 = vmul.f32 %v3707, %v2475
  %v3796 = vmul.f32 %v3708, %v2476
  %v3797 = vmul.f32 %v3709, %v2477
  %v3798 = vmul.f32 %v3710, %v2478
  %v3799 = vmul.f32 %v3711, %v2479
  %v3800 = vmul.f32 %v3712, %v2480
  %v3801 = vmul.f32 %v3713, %v2481
  %v3802 = vmul.f32 %v3714, %v2482
  %v3803 = vmul.f32 %v3715, %v2483
  %v3804 = vmul.f32 %v3716, %v2484
  %v3805 = vmul.f32 %v3717, %v2485
  %v3806 = vmul.f32 %v3718, %v2486
  %v3807 = vmul.f32 %v3719, %v2487
  %v3808 = vmul.f32 %v3720, %v2488
  %v3809 = vmul.f32 %v3721, %v2489
  %v3810 = vmul.f32 %v3722, %v2490
  %v3811 = vmul.f32 %v3723, %v2491
  %v3812 = vmul.f32 %v3724, %v2492
  %v3813 = vmul.f32 %v3725, %v2493
  %v3814 = vmul.f32 %v3726, %v2494
  %v3815 = vmul.f32 %v3727, %v2495
  %v3816 = vmul.f32 %v3728, %v2496
  %v3817 = vmul.f32 %v3729, %v2497
  %v3818 = vmul.f32 %v3730, %v2498
  %v3819 = vmul.f32 %v3731, %v2499
  %v3820 = vmul.f32 %v3732, %v2500
  %v3821 = vmul.f32 %v3733, %v2501
  %v3822 = vmul.f32 %v3734, %v2502
  %v3823 = vmul.f32 %v3735, %v2503
  %v3824 = vmul.f32 %v3736, %v2504
  %v3825 = vmul.f32 %v3737, %v2505
  %v3826 = vmul.f32 %v3738, %v2506
  %v3827 = vmul.f32 %v3739, %v2507
  %v3828 = vmul.f32 %v3740, %v2508
  %v3829 = vmul.f32 %v3741, %v2509
  %v3830 = vmul.f32 %v3742, %v2510
  %v3831 = vmul.f32 %v3743, %v2511
  %v3832 = vmul.f32 %v3744, %v2512
  %v3833 = vmul.f32 %v3745, %v2513
  %v3834 = vmul.f32 %v3746, %v2514
  %v3835 = vmul.f32 %v3747, %v2515
  %v3836 = vmul.f32 %v3748, %v2516
  %v3837 = vmul.f32 %v3749, 1.442695
  %v3838 = vpow.pop %v3837
  %v3839 = vmul.f32 %v3750, 1.442695
  %v3840 = vpow.pop %v3839
  %v3841 = vmul.f32 %v3751, 1.442695
  %v3842 = vpow.pop %v3841
  %v3843 = vmul.f32 %v3752, 1.442695
  %v3844 = vpow.pop %v3843
  %v3845 = vmul.f32 %v3753, 1.442695
  %v3846 = vpow.pop %v3845
  %v3847 = vmul.f32 %v3754, 1.442695
  %v3848 = vpow.pop %v3847
  %v3849 = vmul.f32 %v3755, 1.442695
  %v3850 = vpow.pop %v3849
  %v3851 = vmul.f32 %v3756, 1.442695
  %v3852 = vpow.pop %v3851
  %v3853 = vmul.f32 %v3757, 1.442695
  %v3854 = vpow.pop %v3853
  %v3855 = vmul.f32 %v3758, 1.442695
  %v3856 = vpow.pop %v3855
  %v3857 = vmul.f32 %v3759, 1.442695
  %v3858 = vpow.pop %v3857
  %v3859 = vmul.f32 %v3760, 1.442695
  %v3860 = vpow.pop %v3859
  %v3861 = vmul.f32 %v3761, 1.442695
  %v3862 = vpow.pop %v3861
  %v3863 = vmul.f32 %v3762, 1.442695
  %v3864 = vpow.pop %v3863
  %v3865 = vmul.f32 %v3763, 1.442695
  %v3866 = vpow.pop %v3865
  %v3867 = vmul.f32 %v3764, 1.442695
  %v3868 = vpow.pop %v3867
  %v3869 = vmul.f32 %v3765, 1.442695
  %v3870 = vpow.pop %v3869
  %v3871 = vmul.f32 %v3766, 1.442695
  %v3872 = vpow.pop %v3871
  %v3873 = vmul.f32 %v3767, 1.442695
  %v3874 = vpow.pop %v3873
  %v3875 = vmul.f32 %v3768, 1.442695
  %v3876 = vpow.pop %v3875
  %v3877 = vmul.f32 %v3769, 1.442695
  %v3878 = vpow.pop %v3877
  %v3879 = vmul.f32 %v3770, 1.442695
  %v3880 = vpow.pop %v3879
  %v3881 = vmul.f32 %v3771, 1.442695
  %v3882 = vpow.pop %v3881
  %v3883 = vmul.f32 %v3772, 1.442695
  %v3884 = vpow.pop %v3883
  %v3885 = vmul.f32 %v3773, 1.442695
  %v3886 = vpow.pop %v3885
  %v3887 = vmul.f32 %v3774, 1.442695
  %v3888 = vpow.pop %v3887
  %v3889 = vmul.f32 %v3775, 1.442695
  %v3890 = vpow.pop %v3889
  %v3891 = vmul.f32 %v3776, 1.442695
  %v3892 = vpow.pop %v3891
  %v3893 = vmul.f32 %v3777, 1.442695
  %v3894 = vpow.pop %v3893
  %v3895 = vmul.f32 %v3778, 1.442695
  %v3896 = vpow.pop %v3895
  %v3897 = vmul.f32 %v3779, 1.442695
  %v3898 = vpow.pop %v3897
  %v3899 = vmul.f32 %v3780, 1.442695
  %v3900 = vpow.pop %v3899
  %v3901 = vmul.f32 %v3781, 1.442695
  %v3902 = vpow.pop %v3901
  %v3903 = vmul.f32 %v3782, 1.442695
  %v3904 = vpow.pop %v3903
  %v3905 = vmul.f32 %v3783, 1.442695
  %v3906 = vpow.pop %v3905
  %v3907 = vmul.f32 %v3784, 1.442695
  %v3908 = vpow.pop %v3907
  %v3909 = vmul.f32 %v3785, 1.442695
  %v3910 = vpow.pop %v3909
  %v3911 = vmul.f32 %v3786, 1.442695
  %v3912 = vpow.pop %v3911
  %v3913 = vmul.f32 %v3787, 1.442695
  %v3914 = vpow.pop %v3913
  %v3915 = vmul.f32 %v3788, 1.442695
  %v3916 = vpow.pop %v3915
  %v3917 = vmul.f32 %v3789, 1.442695
  %v3918 = vpow.pop %v3917
  %v3919 = vmul.f32 %v3790, 1.442695
  %v3920 = vpow.pop %v3919
  %v3921 = vmul.f32 %v3791, 1.442695
  %v3922 = vpow.pop %v3921
  %v3923 = vmul.f32 %v3792, 1.442695
  %v3924 = vpow.pop %v3923
  %v3925 = vmul.f32 %v3793, 1.442695
  %v3926 = vpow.pop %v3925
  %v3927 = vmul.f32 %v3794, 1.442695
  %v3928 = vpow.pop %v3927
  %v3929 = vmul.f32 %v3795, 1.442695
  %v3930 = vpow.pop %v3929
  %v3931 = vmul.f32 %v3796, 1.442695
  %v3932 = vpow.pop %v3931
  %v3933 = vmul.f32 %v3797, 1.442695
  %v3934 = vpow.pop %v3933
  %v3935 = vmul.f32 %v3798, 1.442695
  %v3936 = vpow.pop %v3935
  %v3937 = vmul.f32 %v3799, 1.442695
  %v3938 = vpow.pop %v3937
  %v3939 = vmul.f32 %v3800, 1.442695
  %v3940 = vpow.pop %v3939
  %v3941 = vmul.f32 %v3801, 1.442695
  %v3942 = vpow.pop %v3941
  %v3943 = vmul.f32 %v3802, 1.442695
  %v3944 = vpow.pop %v3943
  %v3945 = vmul.f32 %v3803, 1.442695
  %v3946 = vpow.pop %v3945
  %v3947 = vmul.f32 %v3804, 1.442695
  %v3948 = vpow.pop %v3947
  %v3949 = vmul.f32 %v3805, 1.442695
  %v3950 = vpow.pop %v3949
  %v3951 = vmul.f32 %v3806, 1.442695
  %v3952 = vpow.pop %v3951
  %v3953 = vmul.f32 %v3807, 1.442695
  %v3954 = vpow.pop %v3953
  %v3955 = vmul.f32 %v3808, 1.442695
  %v3956 = vpow.pop %v3955
  %v3957 = vmul.f32 %v3809, 1.442695
  %v3958 = vpow.pop %v3957
  %v3959 = vmul.f32 %v3810, 1.442695
  %v3960 = vpow.pop %v3959
  %v3961 = vmul.f32 %v3811, 1.442695
  %v3962 = vpow.pop %v3961
  %v3963 = vmul.f32 %v3812, 1.442695
  %v3964 = vpow.pop %v3963
  %v3965 = vmul.f32 %v3813, 1.442695
  %v3966 = vpow.pop %v3965
  %v3967 = vmul.f32 %v3814, 1.442695
  %v3968 = vpow.pop %v3967
  %v3969 = vmul.f32 %v3815, 1.442695
  %v3970 = vpow.pop %v3969
  %v3971 = vmul.f32 %v3816, 1.442695
  %v3972 = vpow.pop %v3971
  %v3973 = vmul.f32 %v3817, 1.442695
  %v3974 = vpow.pop %v3973
  %v3975 = vmul.f32 %v3818, 1.442695
  %v3976 = vpow.pop %v3975
  %v3977 = vmul.f32 %v3819, 1.442695
  %v3978 = vpow.pop %v3977
  %v3979 = vmul.f32 %v3820, 1.442695
  %v3980 = vpow.pop %v3979
  %v3981 = vmul.f32 %v3821, 1.442695
  %v3982 = vpow.pop %v3981
  %v3983 = vmul.f32 %v3822, 1.442695
  %v3984 = vpow.pop %v3983
  %v3985 = vmul.f32 %v3823, 1.442695
  %v3986 = vpow.pop %v3985
  %v3987 = vmul.f32 %v3824, 1.442695
  %v3988 = vpow.pop %v3987
  %v3989 = vmul.f32 %v3825, 1.442695
  %v3990 = vpow.pop %v3989
  %v3991 = vmul.f32 %v3826, 1.442695
  %v3992 = vpow.pop %v3991
  %v3993 = vmul.f32 %v3827, 1.442695
  %v3994 = vpow.pop %v3993
  %v3995 = vmul.f32 %v3828, 1.442695
  %v3996 = vpow.pop %v3995
  %v3997 = vmul.f32 %v3829, 1.442695
  %v3998 = vpow.pop %v3997
  %v3999 = vmul.f32 %v3830, 1.442695
  %v4000 = vpow.pop %v3999
  %v4001 = vmul.f32 %v3831, 1.442695
  %v4002 = vpow.pop %v4001
  %v4003 = vmul.f32 %v3832, 1.442695
  %v4004 = vpow.pop %v4003
  %v4005 = vmul.f32 %v3833, 1.442695
  %v4006 = vpow.pop %v4005
  %v4007 = vmul.f32 %v3834, 1.442695
  %v4008 = vpow.pop %v4007
  %v4009 = vmul.f32 %v3835, 1.442695
  %v4010 = vpow.pop %v4009
  %v4011 = vmul.f32 %v3836, 1.442695
  %v4012 = vpow.pop %v4011
  %v4013 = vmul.f32 %v3573, %v3838
  %v4014 = vmul.f32 %v3574, %v3840
  %v4015 = vmul.f32 %v3575, %v3842
  %v4016 = vmul.f32 %v3576, %v3844
  %v4017 = vmul.f32 %v3577, %v3846
  %v4018 = vmul.f32 %v3578, %v3848
  %v4019 = vmul.f32 %v3579, %v3850
  %v4020 = vmul.f32 %v3580, %v3852
  %v4021 = vmul.f32 %v3581, %v3854
  %v4022 = vmul.f32 %v3582, %v3856
  %v4023 = vmul.f32 %v3583, %v3858
  %v4024 = vmul.f32 %v3584, %v3860
  %v4025 = vmul.f32 %v3585, %v3862
  %v4026 = vmul.f32 %v3586, %v3864
  %v4027 = vmul.f32 %v3587, %v3866
  %v4028 = vmul.f32 %v3588, %v3868
  %v4029 = vmul.f32 %v3589, %v3870
  %v4030 = vmul.f32 %v3590, %v3872
  %v4031 = vmul.f32 %v3591, %v3874
  %v4032 = vmul.f32 %v3592, %v3876
  %v4033 = vmul.f32 %v3593, %v3878
  %v4034 = vmul.f32 %v3594, %v3880
  %v4035 = vmul.f32 %v3595, %v3882
  %v4036 = vmul.f32 %v3596, %v3884
  %v4037 = vmul.f32 %v3597, %v3886
  %v4038 = vmul.f32 %v3598, %v3888
  %v4039 = vmul.f32 %v3599, %v3890
  %v4040 = vmul.f32 %v3600, %v3892
  %v4041 = vmul.f32 %v3601, %v3894
  %v4042 = vmul.f32 %v3602, %v3896
  %v4043 = vmul.f32 %v3603, %v3898
  %v4044 = vmul.f32 %v3604, %v3900
  %v4045 = vmul.f32 %v3605, %v3902
  %v4046 = vmul.f32 %v3606, %v3904
  %v4047 = vmul.f32 %v3607, %v3906
  %v4048 = vmul.f32 %v3608, %v3908
  %v4049 = vmul.f32 %v3609, %v3910
  %v4050 = vmul.f32 %v3610, %v3912
  %v4051 = vmul.f32 %v3611, %v3914
  %v4052 = vmul.f32 %v3612, %v3916
  %v4053 = vmul.f32 %v3613, %v3918
  %v4054 = vmul.f32 %v3614, %v3920
  %v4055 = vmul.f32 %v3615, %v3922
  %v4056 = vmul.f32 %v3616, %v3924
  %v4057 = vmul.f32 %v3617, %v3926
  %v4058 = vmul.f32 %v3618, %v3928
  %v4059 = vmul.f32 %v3619, %v3930
  %v4060 = vmul.f32 %v3620, %v3932
  %v4061 = vmul.f32 %v3621, %v3934
  %v4062 = vmul.f32 %v3622, %v3936
  %v4063 = vmul.f32 %v3623, %v3938
  %v4064 = vmul.f32 %v3624, %v3940
  %v4065 = vmul.f32 %v3625, %v3942
  %v4066 = vmul.f32 %v3626, %v3944
  %v4067 = vmul.f32 %v3627, %v3946
  %v4068 = vmul.f32 %v3628, %v3948
  %v4069 = vmul.f32 %v3629, %v3950
  %v4070 = vmul.f32 %v3630, %v3952
  %v4071 = vmul.f32 %v3631, %v3954
  %v4072 = vmul.f32 %v3632, %v3956
  %v4073 = vmul.f32 %v3633, %v3958
  %v4074 = vmul.f32 %v3634, %v3960
  %v4075 = vmul.f32 %v3635, %v3962
  %v4076 = vmul.f32 %v3636, %v3964
  %v4077 = vmul.f32 %v3637, %v3966
  %v4078 = vmul.f32 %v3638, %v3968
  %v4079 = vmul.f32 %v3639, %v3970
  %v4080 = vmul.f32 %v3640, %v3972
  %v4081 = vmul.f32 %v3641, %v3974
  %v4082 = vmul.f32 %v3642, %v3976
  %v4083 = vmul.f32 %v3643, %v3978
  %v4084 = vmul.f32 %v3644, %v3980
  %v4085 = vmul.f32 %v3645, %v3982
  %v4086 = vmul.f32 %v3646, %v3984
  %v4087 = vmul.f32 %v3647, %v3986
  %v4088 = vmul.f32 %v3648, %v3988
  %v4089 = vmul.f32 %v3649, %v3990
  %v4090 = vmul.f32 %v3650, %v3992
  %v4091 = vmul.f32 %v3651, %v3994
  %v4092 = vmul.f32 %v3652, %v3996
  %v4093 = vmul.f32 %v3653, %v3998
  %v4094 = vmul.f32 %v3654, %v4000
  %v4095 = vmul.f32 %v3655, %v4002
  %v4096 = vmul.f32 %v3656, %v4004
  %v4097 = vmul.f32 %v3657, %v4006
  %v4098 = vmul.f32 %v3658, %v4008
  %v4099 = vmul.f32 %v3659, %v4010
  %v4100 = vmul.f32 %v3660, %v4012
  %v4101 = vsub.f32 1.0, %v4013
  %v4102 = vsub.f32 1.0, %v4014
  %v4103 = vsub.f32 1.0, %v4015
  %v4104 = vsub.f32 1.0, %v4016
  %v4105 = vsub.f32 1.0, %v4017
  %v4106 = vsub.f32 1.0, %v4018
  %v4107 = vsub.f32 1.0, %v4019
  %v4108 = vsub.f32 1.0, %v4020
  %v4109 = vsub.f32 1.0, %v4021
  %v4110 = vsub.f32 1.0, %v4022
  %v4111 = vsub.f32 1.0, %v4023
  %v4112 = vsub.f32 1.0, %v4024
  %v4113 = vsub.f32 1.0, %v4025
  %v4114 = vsub.f32 1.0, %v4026
  %v4115 = vsub.f32 1.0, %v4027
  %v4116 = vsub.f32 1.0, %v4028
  %v4117 = vsub.f32 1.0, %v4029
  %v4118 = vsub.f32 1.0, %v4030
  %v4119 = vsub.f32 1.0, %v4031
  %v4120 = vsub.f32 1.0, %v4032
  %v4121 = vsub.f32 1.0, %v4033
  %v4122 = vsub.f32 1.0, %v4034
  %v4123 = vsub.f32 1.0, %v4035
  %v4124 = vsub.f32 1.0, %v4036
  %v4125 = vsub.f32 1.0, %v4037
  %v4126 = vsub.f32 1.0, %v4038
  %v4127 = vsub.f32 1.0, %v4039
  %v4128 = vsub.f32 1.0, %v4040
  %v4129 = vsub.f32 1.0, %v4041
  %v4130 = vsub.f32 1.0, %v4042
  %v4131 = vsub.f32 1.0, %v4043
  %v4132 = vsub.f32 1.0, %v4044
  %v4133 = vsub.f32 1.0, %v4045
  %v4134 = vsub.f32 1.0, %v4046
  %v4135 = vsub.f32 1.0, %v4047
  %v4136 = vsub.f32 1.0, %v4048
  %v4137 = vsub.f32 1.0, %v4049
  %v4138 = vsub.f32 1.0, %v4050
  %v4139 = vsub.f32 1.0, %v4051
  %v4140 = vsub.f32 1.0, %v4052
  %v4141 = vsub.f32 1.0, %v4053
  %v4142 = vsub.f32 1.0, %v4054
  %v4143 = vsub.f32 1.0, %v4055
  %v4144 = vsub.f32 1.0, %v4056
  %v4145 = vsub.f32 1.0, %v4057
  %v4146 = vsub.f32 1.0, %v4058
  %v4147 = vsub.f32 1.0, %v4059
  %v4148 = vsub.f32 1.0, %v4060
  %v4149 = vsub.f32 1.0, %v4061
  %v4150 = vsub.f32 1.0, %v4062
  %v4151 = vsub.f32 1.0, %v4063
  %v4152 = vsub.f32 1.0, %v4064
  %v4153 = vsub.f32 1.0, %v4065
  %v4154 = vsub.f32 1.0, %v4066
  %v4155 = vsub.f32 1.0, %v4067
  %v4156 = vsub.f32 1.0, %v4068
  %v4157 = vsub.f32 1.0, %v4069
  %v4158 = vsub.f32 1.0, %v4070
  %v4159 = vsub.f32 1.0, %v4071
  %v4160 = vsub.f32 1.0, %v4072
  %v4161 = vsub.f32 1.0, %v4073
  %v4162 = vsub.f32 1.0, %v4074
  %v4163 = vsub.f32 1.0, %v4075
  %v4164 = vsub.f32 1.0, %v4076
  %v4165 = vsub.f32 1.0, %v4077
  %v4166 = vsub.f32 1.0, %v4078
  %v4167 = vsub.f32 1.0, %v4079
  %v4168 = vsub.f32 1.0, %v4080
  %v4169 = vsub.f32 1.0, %v4081
  %v4170 = vsub.f32 1.0, %v4082
  %v4171 = vsub.f32 1.0, %v4083
  %v4172 = vsub.f32 1.0, %v4084
  %v4173 = vsub.f32 1.0, %v4085
  %v4174 = vsub.f32 1.0, %v4086
  %v4175 = vsub.f32 1.0, %v4087
  %v4176 = vsub.f32 1.0, %v4088
  %v4177 = vsub.f32 1.0, %v4089
  %v4178 = vsub.f32 1.0, %v4090
  %v4179 = vsub.f32 1.0, %v4091
  %v4180 = vsub.f32 1.0, %v4092
  %v4181 = vsub.f32 1.0, %v4093
  %v4182 = vsub.f32 1.0, %v4094
  %v4183 = vsub.f32 1.0, %v4095
  %v4184 = vsub.f32 1.0, %v4096
  %v4185 = vsub.f32 1.0, %v4097
  %v4186 = vsub.f32 1.0, %v4098
  %v4187 = vsub.f32 1.0, %v4099
  %v4188 = vsub.f32 1.0, %v4100
  %v4189 = vmul.f32 %v2341, %v4101
  %v4190 = vmul.f32 %v2342, %v4102
  %v4191 = vmul.f32 %v2343, %v4103
  %v4192 = vmul.f32 %v2344, %v4104
  %v4193 = vmul.f32 %v2345, %v4105
  %v4194 = vmul.f32 %v2346, %v4106
  %v4195 = vmul.f32 %v2347, %v4107
  %v4196 = vmul.f32 %v2348, %v4108
  %v4197 = vmul.f32 %v2349, %v4109
  %v4198 = vmul.f32 %v2350, %v4110
  %v4199 = vmul.f32 %v2351, %v4111
  %v4200 = vmul.f32 %v2352, %v4112
  %v4201 = vmul.f32 %v2353, %v4113
  %v4202 = vmul.f32 %v2354, %v4114
  %v4203 = vmul.f32 %v2355, %v4115
  %v4204 = vmul.f32 %v2356, %v4116
  %v4205 = vmul.f32 %v2357, %v4117
  %v4206 = vmul.f32 %v2358, %v4118
  %v4207 = vmul.f32 %v2359, %v4119
  %v4208 = vmul.f32 %v2360, %v4120
  %v4209 = vmul.f32 %v2361, %v4121
  %v4210 = vmul.f32 %v2362, %v4122
  %v4211 = vmul.f32 %v2363, %v4123
  %v4212 = vmul.f32 %v2364, %v4124
  %v4213 = vmul.f32 %v2365, %v4125
  %v4214 = vmul.f32 %v2366, %v4126
  %v4215 = vmul.f32 %v2367, %v4127
  %v4216 = vmul.f32 %v2368, %v4128
  %v4217 = vmul.f32 %v2369, %v4129
  %v4218 = vmul.f32 %v2370, %v4130
  %v4219 = vmul.f32 %v2371, %v4131
  %v4220 = vmul.f32 %v2372, %v4132
  %v4221 = vmul.f32 %v2373, %v4133
  %v4222 = vmul.f32 %v2374, %v4134
  %v4223 = vmul.f32 %v2375, %v4135
  %v4224 = vmul.f32 %v2376, %v4136
  %v4225 = vmul.f32 %v2377, %v4137
  %v4226 = vmul.f32 %v2378, %v4138
  %v4227 = vmul.f32 %v2379, %v4139
  %v4228 = vmul.f32 %v2380, %v4140
  %v4229 = vmul.f32 %v2381, %v4141
  %v4230 = vmul.f32 %v2382, %v4142
  %v4231 = vmul.f32 %v2383, %v4143
  %v4232 = vmul.f32 %v2384, %v4144
  %v4233 = vmul.f32 %v2385, %v4145
  %v4234 = vmul.f32 %v2386, %v4146
  %v4235 = vmul.f32 %v2387, %v4147
  %v4236 = vmul.f32 %v2388, %v4148
  %v4237 = vmul.f32 %v2389, %v4149
  %v4238 = vmul.f32 %v2390, %v4150
  %v4239 = vmul.f32 %v2391, %v4151
  %v4240 = vmul.f32 %v2392, %v4152
  %v4241 = vmul.f32 %v2393, %v4153
  %v4242 = vmul.f32 %v2394, %v4154
  %v4243 = vmul.f32 %v2395, %v4155
  %v4244 = vmul.f32 %v2396, %v4156
  %v4245 = vmul.f32 %v2397, %v4157
  %v4246 = vmul.f32 %v2398, %v4158
  %v4247 = vmul.f32 %v2399, %v4159
  %v4248 = vmul.f32 %v2400, %v4160
  %v4249 = vmul.f32 %v2401, %v4161
  %v4250 = vmul.f32 %v2402, %v4162
  %v4251 = vmul.f32 %v2403, %v4163
  %v4252 = vmul.f32 %v2404, %v4164
  %v4253 = vmul.f32 %v2405, %v4165
  %v4254 = vmul.f32 %v2406, %v4166
  %v4255 = vmul.f32 %v2407, %v4167
  %v4256 = vmul.f32 %v2408, %v4168
  %v4257 = vmul.f32 %v2409, %v4169
  %v4258 = vmul.f32 %v2410, %v4170
  %v4259 = vmul.f32 %v2411, %v4171
  %v4260 = vmul.f32 %v2412, %v4172
  %v4261 = vmul.f32 %v2413, %v4173
  %v4262 = vmul.f32 %v2414, %v4174
  %v4263 = vmul.f32 %v2415, %v4175
  %v4264 = vmul.f32 %v2416, %v4176
  %v4265 = vmul.f32 %v2417, %v4177
  %v4266 = vmul.f32 %v2418, %v4178
  %v4267 = vmul.f32 %v2419, %v4179
  %v4268 = vmul.f32 %v2420, %v4180
  %v4269 = vmul.f32 %v2421, %v4181
  %v4270 = vmul.f32 %v2422, %v4182
  %v4271 = vmul.f32 %v2423, %v4183
  %v4272 = vmul.f32 %v2424, %v4184
  %v4273 = vmul.f32 %v2425, %v4185
  %v4274 = vmul.f32 %v2426, %v4186
  %v4275 = vmul.f32 %v2427, %v4187
  %v4276 = vmul.f32 %v2428, %v4188
  %v4277 = vadd.f32 %v4189, 1.0
  %v4278 = vadd.f32 %v4190, 1.0
  %v4279 = vadd.f32 %v4191, 1.0
  %v4280 = vadd.f32 %v4192, 1.0
  %v4281 = vadd.f32 %v4193, 1.0
  %v4282 = vadd.f32 %v4194, 1.0
  %v4283 = vadd.f32 %v4195, 1.0
  %v4284 = vadd.f32 %v4196, 1.0
  %v4285 = vadd.f32 %v4197, 1.0
  %v4286 = vadd.f32 %v4198, 1.0
  %v4287 = vadd.f32 %v4199, 1.0
  %v4288 = vadd.f32 %v4200, 1.0
  %v4289 = vadd.f32 %v4201, 1.0
  %v4290 = vadd.f32 %v4202, 1.0
  %v4291 = vadd.f32 %v4203, 1.0
  %v4292 = vadd.f32 %v4204, 1.0
  %v4293 = vadd.f32 %v4205, 1.0
  %v4294 = vadd.f32 %v4206, 1.0
  %v4295 = vadd.f32 %v4207, 1.0
  %v4296 = vadd.f32 %v4208, 1.0
  %v4297 = vadd.f32 %v4209, 1.0
  %v4298 = vadd.f32 %v4210, 1.0
  %v4299 = vadd.f32 %v4211, 1.0
  %v4300 = vadd.f32 %v4212, 1.0
  %v4301 = vadd.f32 %v4213, 1.0
  %v4302 = vadd.f32 %v4214, 1.0
  %v4303 = vadd.f32 %v4215, 1.0
  %v4304 = vadd.f32 %v4216, 1.0
  %v4305 = vadd.f32 %v4217, 1.0
  %v4306 = vadd.f32 %v4218, 1.0
  %v4307 = vadd.f32 %v4219, 1.0
  %v4308 = vadd.f32 %v4220, 1.0
  %v4309 = vadd.f32 %v4221, 1.0
  %v4310 = vadd.f32 %v4222, 1.0
  %v4311 = vadd.f32 %v4223, 1.0
  %v4312 = vadd.f32 %v4224, 1.0
  %v4313 = vadd.f32 %v4225, 1.0
  %v4314 = vadd.f32 %v4226, 1.0
  %v4315 = vadd.f32 %v4227, 1.0
  %v4316 = vadd.f32 %v4228, 1.0
  %v4317 = vadd.f32 %v4229, 1.0
  %v4318 = vadd.f32 %v4230, 1.0
  %v4319 = vadd.f32 %v4231, 1.0
  %v4320 = vadd.f32 %v4232, 1.0
  %v4321 = vadd.f32 %v4233, 1.0
  %v4322 = vadd.f32 %v4234, 1.0
  %v4323 = vadd.f32 %v4235, 1.0
  %v4324 = vadd.f32 %v4236, 1.0
  %v4325 = vadd.f32 %v4237, 1.0
  %v4326 = vadd.f32 %v4238, 1.0
  %v4327 = vadd.f32 %v4239, 1.0
  %v4328 = vadd.f32 %v4240, 1.0
  %v4329 = vadd.f32 %v4241, 1.0
  %v4330 = vadd.f32 %v4242, 1.0
  %v4331 = vadd.f32 %v4243, 1.0
  %v4332 = vadd.f32 %v4244, 1.0
  %v4333 = vadd.f32 %v4245, 1.0
  %v4334 = vadd.f32 %v4246, 1.0
  %v4335 = vadd.f32 %v4247, 1.0
  %v4336 = vadd.f32 %v4248, 1.0
  %v4337 = vadd.f32 %v4249, 1.0
  %v4338 = vadd.f32 %v4250, 1.0
  %v4339 = vadd.f32 %v4251, 1.0
  %v4340 = vadd.f32 %v4252, 1.0
  %v4341 = vadd.f32 %v4253, 1.0
  %v4342 = vadd.f32 %v4254, 1.0
  %v4343 = vadd.f32 %v4255, 1.0
  %v4344 = vadd.f32 %v4256, 1.0
  %v4345 = vadd.f32 %v4257, 1.0
  %v4346 = vadd.f32 %v4258, 1.0
  %v4347 = vadd.f32 %v4259, 1.0
  %v4348 = vadd.f32 %v4260, 1.0
  %v4349 = vadd.f32 %v4261, 1.0
  %v4350 = vadd.f32 %v4262, 1.0
  %v4351 = vadd.f32 %v4263, 1.0
  %v4352 = vadd.f32 %v4264, 1.0
  %v4353 = vadd.f32 %v4265, 1.0
  %v4354 = vadd.f32 %v4266, 1.0
  %v4355 = vadd.f32 %v4267, 1.0
  %v4356 = vadd.f32 %v4268, 1.0
  %v4357 = vadd.f32 %v4269, 1.0
  %v4358 = vadd.f32 %v4270, 1.0
  %v4359 = vadd.f32 %v4271, 1.0
  %v4360 = vadd.f32 %v4272, 1.0
  %v4361 = vadd.f32 %v4273, 1.0
  %v4362 = vadd.f32 %v4274, 1.0
  %v4363 = vadd.f32 %v4275, 1.0
  %v4364 = vadd.f32 %v4276, 1.0
  %v4365 = vmul.f32 %v2077, %v4277
  %v4366 = vmul.f32 %v2078, %v4278
  %v4367 = vmul.f32 %v2079, %v4279
  %v4368 = vmul.f32 %v2080, %v4280
  %v4369 = vmul.f32 %v2081, %v4281
  %v4370 = vmul.f32 %v2082, %v4282
  %v4371 = vmul.f32 %v2083, %v4283
  %v4372 = vmul.f32 %v2084, %v4284
  %v4373 = vmul.f32 %v2085, %v4285
  %v4374 = vmul.f32 %v2086, %v4286
  %v4375 = vmul.f32 %v2087, %v4287
  %v4376 = vmul.f32 %v2088, %v4288
  %v4377 = vmul.f32 %v2089, %v4289
  %v4378 = vmul.f32 %v2090, %v4290
  %v4379 = vmul.f32 %v2091, %v4291
  %v4380 = vmul.f32 %v2092, %v4292
  %v4381 = vmul.f32 %v2093, %v4293
  %v4382 = vmul.f32 %v2094, %v4294
  %v4383 = vmul.f32 %v2095, %v4295
  %v4384 = vmul.f32 %v2096, %v4296
  %v4385 = vmul.f32 %v2097, %v4297
  %v4386 = vmul.f32 %v2098, %v4298
  %v4387 = vmul.f32 %v2099, %v4299
  %v4388 = vmul.f32 %v2100, %v4300
  %v4389 = vmul.f32 %v2101, %v4301
  %v4390 = vmul.f32 %v2102, %v4302
  %v4391 = vmul.f32 %v2103, %v4303
  %v4392 = vmul.f32 %v2104, %v4304
  %v4393 = vmul.f32 %v2105, %v4305
  %v4394 = vmul.f32 %v2106, %v4306
  %v4395 = vmul.f32 %v2107, %v4307
  %v4396 = vmul.f32 %v2108, %v4308
  %v4397 = vmul.f32 %v2109, %v4309
  %v4398 = vmul.f32 %v2110, %v4310
  %v4399 = vmul.f32 %v2111, %v4311
  %v4400 = vmul.f32 %v2112, %v4312
  %v4401 = vmul.f32 %v2113, %v4313
  %v4402 = vmul.f32 %v2114, %v4314
  %v4403 = vmul.f32 %v2115, %v4315
  %v4404 = vmul.f32 %v2116, %v4316
  %v4405 = vmul.f32 %v2117, %v4317
  %v4406 = vmul.f32 %v2118, %v4318
  %v4407 = vmul.f32 %v2119, %v4319
  %v4408 = vmul.f32 %v2120, %v4320
  %v4409 = vmul.f32 %v2121, %v4321
  %v4410 = vmul.f32 %v2122, %v4322
  %v4411 = vmul.f32 %v2123, %v4323
  %v4412 = vmul.f32 %v2124, %v4324
  %v4413 = vmul.f32 %v2125, %v4325
  %v4414 = vmul.f32 %v2126, %v4326
  %v4415 = vmul.f32 %v2127, %v4327
  %v4416 = vmul.f32 %v2128, %v4328
  %v4417 = vmul.f32 %v2129, %v4329
  %v4418 = vmul.f32 %v2130, %v4330
  %v4419 = vmul.f32 %v2131, %v4331
  %v4420 = vmul.f32 %v2132, %v4332
  %v4421 = vmul.f32 %v2133, %v4333
  %v4422 = vmul.f32 %v2134, %v4334
  %v4423 = vmul.f32 %v2135, %v4335
  %v4424 = vmul.f32 %v2136, %v4336
  %v4425 = vmul.f32 %v2137, %v4337
  %v4426 = vmul.f32 %v2138, %v4338
  %v4427 = vmul.f32 %v2139, %v4339
  %v4428 = vmul.f32 %v2140, %v4340
  %v4429 = vmul.f32 %v2141, %v4341
  %v4430 = vmul.f32 %v2142, %v4342
  %v4431 = vmul.f32 %v2143, %v4343
  %v4432 = vmul.f32 %v2144, %v4344
  %v4433 = vmul.f32 %v2145, %v4345
  %v4434 = vmul.f32 %v2146, %v4346
  %v4435 = vmul.f32 %v2147, %v4347
  %v4436 = vmul.f32 %v2148, %v4348
  %v4437 = vmul.f32 %v2149, %v4349
  %v4438 = vmul.f32 %v2150, %v4350
  %v4439 = vmul.f32 %v2151, %v4351
  %v4440 = vmul.f32 %v2152, %v4352
  %v4441 = vmul.f32 %v2153, %v4353
  %v4442 = vmul.f32 %v2154, %v4354
  %v4443 = vmul.f32 %v2155, %v4355
  %v4444 = vmul.f32 %v2156, %v4356
  %v4445 = vmul.f32 %v2157, %v4357
  %v4446 = vmul.f32 %v2158, %v4358
  %v4447 = vmul.f32 %v2159, %v4359
  %v4448 = vmul.f32 %v2160, %v4360
  %v4449 = vmul.f32 %v2161, %v4361
  %v4450 = vmul.f32 %v2162, %v4362
  %v4451 = vmul.f32 %v2163, %v4363
  %v4452 = vmul.f32 %v2164, %v4364
  %v4453 = vmul.f32 %v4365, %v1346
  %v4454 = vmul.f32 %v4366, %v1350
  %v4455 = vmul.f32 %v4367, %v1354
  %v4456 = vmul.f32 %v4368, %v1358
  %v4457 = vmul.f32 %v4369, %v1362
  %v4458 = vmul.f32 %v4370, %v1366
  %v4459 = vmul.f32 %v4371, %v1370
  %v4460 = vmul.f32 %v4372, %v1374
  %v4461 = vmul.f32 %v4373, %v1378
  %v4462 = vmul.f32 %v4374, %v1382
  %v4463 = vmul.f32 %v4375, %v1386
  %v4464 = vmul.f32 %v4376, %v1390
  %v4465 = vmul.f32 %v4377, %v1394
  %v4466 = vmul.f32 %v4378, %v1398
  %v4467 = vmul.f32 %v4379, %v1402
  %v4468 = vmul.f32 %v4380, %v1406
  %v4469 = vmul.f32 %v4381, %v1410
  %v4470 = vmul.f32 %v4382, %v1414
  %v4471 = vmul.f32 %v4383, %v1418
  %v4472 = vmul.f32 %v4384, %v1422
  %v4473 = vmul.f32 %v4385, %v1426
  %v4474 = vmul.f32 %v4386, %v1430
  %v4475 = vmul.f32 %v4387, %v1346
  %v4476 = vmul.f32 %v4388, %v1350
  %v4477 = vmul.f32 %v4389, %v1354
  %v4478 = vmul.f32 %v4390, %v1358
  %v4479 = vmul.f32 %v4391, %v1362
  %v4480 = vmul.f32 %v4392, %v1366
  %v4481 = vmul.f32 %v4393, %v1370
  %v4482 = vmul.f32 %v4394, %v1374
  %v4483 = vmul.f32 %v4395, %v1378
  %v4484 = vmul.f32 %v4396, %v1382
  %v4485 = vmul.f32 %v4397, %v1386
  %v4486 = vmul.f32 %v4398, %v1390
  %v4487 = vmul.f32 %v4399, %v1394
  %v4488 = vmul.f32 %v4400, %v1398
  %v4489 = vmul.f32 %v4401, %v1402
  %v4490 = vmul.f32 %v4402, %v1406
  %v4491 = vmul.f32 %v4403, %v1410
  %v4492 = vmul.f32 %v4404, %v1414
  %v4493 = vmul.f32 %v4405, %v1418
  %v4494 = vmul.f32 %v4406, %v1422
  %v4495 = vmul.f32 %v4407, %v1426
  %v4496 = vmul.f32 %v4408, %v1430
  %v4497 = vmul.f32 %v4409, %v1346
  %v4498 = vmul.f32 %v4410, %v1350
  %v4499 = vmul.f32 %v4411, %v1354
  %v4500 = vmul.f32 %v4412, %v1358
  %v4501 = vmul.f32 %v4413, %v1362
  %v4502 = vmul.f32 %v4414, %v1366
  %v4503 = vmul.f32 %v4415, %v1370
  %v4504 = vmul.f32 %v4416, %v1374
  %v4505 = vmul.f32 %v4417, %v1378
  %v4506 = vmul.f32 %v4418, %v1382
  %v4507 = vmul.f32 %v4419, %v1386
  %v4508 = vmul.f32 %v4420, %v1390
  %v4509 = vmul.f32 %v4421, %v1394
  %v4510 = vmul.f32 %v4422, %v1398
  %v4511 = vmul.f32 %v4423, %v1402
  %v4512 = vmul.f32 %v4424, %v1406
  %v4513 = vmul.f32 %v4425, %v1410
  %v4514 = vmul.f32 %v4426, %v1414
  %v4515 = vmul.f32 %v4427, %v1418
  %v4516 = vmul.f32 %v4428, %v1422
  %v4517 = vmul.f32 %v4429, %v1426
  %v4518 = vmul.f32 %v4430, %v1430
  %v4519 = vmul.f32 %v4431, %v1346
  %v4520 = vmul.f32 %v4432, %v1350
  %v4521 = vmul.f32 %v4433, %v1354
  %v4522 = vmul.f32 %v4434, %v1358
  %v4523 = vmul.f32 %v4435, %v1362
  %v4524 = vmul.f32 %v4436, %v1366
  %v4525 = vmul.f32 %v4437, %v1370
  %v4526 = vmul.f32 %v4438, %v1374
  %v4527 = vmul.f32 %v4439, %v1378
  %v4528 = vmul.f32 %v4440, %v1382
  %v4529 = vmul.f32 %v4441, %v1386
  %v4530 = vmul.f32 %v4442, %v1390
  %v4531 = vmul.f32 %v4443, %v1394
  %v4532 = vmul.f32 %v4444, %v1398
  %v4533 = vmul.f32 %v4445, %v1402
  %v4534 = vmul.f32 %v4446, %v1406
  %v4535 = vmul.f32 %v4447, %v1410
  %v4536 = vmul.f32 %v4448, %v1414
  %v4537 = vmul.f32 %v4449, %v1418
  %v4538 = vmul.f32 %v4450, %v1422
  %v4539 = vmul.f32 %v4451, %v1426
  %v4540 = vmul.f32 %v4452, %v1430
  %4541 = vrot.lane.b32.xlu0 %v4453, 1
  %v4542 = vpop.permute.xlu0 %4541
  %4543 = vrot.lane.b32.xlu0 %v4475, 1
  %v4544 = vpop.permute.xlu0 %4543
  %4545 = vrot.lane.b32.xlu0 %v4497, 1
  %v4546 = vpop.permute.xlu0 %4545
  %4547 = vrot.lane.b32.xlu0 %v4519, 1
  %v4548 = vpop.permute.xlu0 %4547
  %4549 = vrot.lane.b32.xlu0 %v4454, 1
  %v4550 = vpop.permute.xlu0 %4549
  %4551 = vrot.lane.b32.xlu0 %v4476, 1
  %v4552 = vpop.permute.xlu0 %4551
  %4553 = vrot.lane.b32.xlu0 %v4498, 1
  %v4554 = vpop.permute.xlu0 %4553
  %4555 = vrot.lane.b32.xlu0 %v4520, 1
  %v4556 = vpop.permute.xlu0 %4555
  %4557 = vrot.lane.b32.xlu0 %v4455, 1
  %v4558 = vpop.permute.xlu0 %4557
  %4559 = vrot.lane.b32.xlu0 %v4477, 1
  %v4560 = vpop.permute.xlu0 %4559
  %4561 = vrot.lane.b32.xlu0 %v4499, 1
  %v4562 = vpop.permute.xlu0 %4561
  %4563 = vrot.lane.b32.xlu0 %v4521, 1
  %v4564 = vpop.permute.xlu0 %4563
  %4565 = vrot.lane.b32.xlu0 %v4456, 1
  %v4566 = vpop.permute.xlu0 %4565
  %4567 = vrot.lane.b32.xlu0 %v4478, 1
  %v4568 = vpop.permute.xlu0 %4567
  %4569 = vrot.lane.b32.xlu0 %v4500, 1
  %v4570 = vpop.permute.xlu0 %4569
  %4571 = vrot.lane.b32.xlu0 %v4522, 1
  %v4572 = vpop.permute.xlu0 %4571
  %4573 = vrot.lane.b32.xlu0 %v4457, 1
  %v4574 = vpop.permute.xlu0 %4573
  %4575 = vrot.lane.b32.xlu0 %v4479, 1
  %v4576 = vpop.permute.xlu0 %4575
  %4577 = vrot.lane.b32.xlu0 %v4501, 1
  %v4578 = vpop.permute.xlu0 %4577
  %4579 = vrot.lane.b32.xlu0 %v4523, 1
  %v4580 = vpop.permute.xlu0 %4579
  %4581 = vrot.lane.b32.xlu0 %v4458, 1
  %v4582 = vpop.permute.xlu0 %4581
  %4583 = vrot.lane.b32.xlu0 %v4480, 1
  %v4584 = vpop.permute.xlu0 %4583
  %4585 = vrot.lane.b32.xlu0 %v4502, 1
  %v4586 = vpop.permute.xlu0 %4585
  %4587 = vrot.lane.b32.xlu0 %v4524, 1
  %v4588 = vpop.permute.xlu0 %4587
  %4589 = vrot.lane.b32.xlu0 %v4459, 1
  %v4590 = vpop.permute.xlu0 %4589
  %4591 = vrot.lane.b32.xlu0 %v4481, 1
  %v4592 = vpop.permute.xlu0 %4591
  %4593 = vrot.lane.b32.xlu0 %v4503, 1
  %v4594 = vpop.permute.xlu0 %4593
  %4595 = vrot.lane.b32.xlu0 %v4525, 1
  %v4596 = vpop.permute.xlu0 %4595
  %4597 = vrot.lane.b32.xlu0 %v4460, 1
  %v4598 = vpop.permute.xlu0 %4597
  %4599 = vrot.lane.b32.xlu0 %v4482, 1
  %v4600 = vpop.permute.xlu0 %4599
  %4601 = vrot.lane.b32.xlu0 %v4504, 1
  %v4602 = vpop.permute.xlu0 %4601
  %4603 = vrot.lane.b32.xlu0 %v4526, 1
  %v4604 = vpop.permute.xlu0 %4603
  %4605 = vrot.lane.b32.xlu0 %v4461, 1
  %v4606 = vpop.permute.xlu0 %4605
  %4607 = vrot.lane.b32.xlu0 %v4483, 1
  %v4608 = vpop.permute.xlu0 %4607
  %4609 = vrot.lane.b32.xlu0 %v4505, 1
  %v4610 = vpop.permute.xlu0 %4609
  %4611 = vrot.lane.b32.xlu0 %v4527, 1
  %v4612 = vpop.permute.xlu0 %4611
  %4613 = vrot.lane.b32.xlu0 %v4462, 1
  %v4614 = vpop.permute.xlu0 %4613
  %4615 = vrot.lane.b32.xlu0 %v4484, 1
  %v4616 = vpop.permute.xlu0 %4615
  %4617 = vrot.lane.b32.xlu0 %v4506, 1
  %v4618 = vpop.permute.xlu0 %4617
  %4619 = vrot.lane.b32.xlu0 %v4528, 1
  %v4620 = vpop.permute.xlu0 %4619
  %4621 = vrot.lane.b32.xlu0 %v4463, 1
  %v4622 = vpop.permute.xlu0 %4621
  %4623 = vrot.lane.b32.xlu0 %v4485, 1
  %v4624 = vpop.permute.xlu0 %4623
  %4625 = vrot.lane.b32.xlu0 %v4507, 1
  %v4626 = vpop.permute.xlu0 %4625
  %4627 = vrot.lane.b32.xlu0 %v4529, 1
  %v4628 = vpop.permute.xlu0 %4627
  %4629 = vrot.lane.b32.xlu0 %v4464, 1
  %v4630 = vpop.permute.xlu0 %4629
  %4631 = vrot.lane.b32.xlu0 %v4486, 1
  %v4632 = vpop.permute.xlu0 %4631
  %4633 = vrot.lane.b32.xlu0 %v4508, 1
  %v4634 = vpop.permute.xlu0 %4633
  %4635 = vrot.lane.b32.xlu0 %v4530, 1
  %v4636 = vpop.permute.xlu0 %4635
  %4637 = vrot.lane.b32.xlu0 %v4465, 1
  %v4638 = vpop.permute.xlu0 %4637
  %4639 = vrot.lane.b32.xlu0 %v4487, 1
  %v4640 = vpop.permute.xlu0 %4639
  %4641 = vrot.lane.b32.xlu0 %v4509, 1
  %v4642 = vpop.permute.xlu0 %4641
  %4643 = vrot.lane.b32.xlu0 %v4531, 1
  %v4644 = vpop.permute.xlu0 %4643
  %4645 = vrot.lane.b32.xlu0 %v4466, 1
  %v4646 = vpop.permute.xlu0 %4645
  %4647 = vrot.lane.b32.xlu0 %v4488, 1
  %v4648 = vpop.permute.xlu0 %4647
  %4649 = vrot.lane.b32.xlu0 %v4510, 1
  %v4650 = vpop.permute.xlu0 %4649
  %4651 = vrot.lane.b32.xlu0 %v4532, 1
  %v4652 = vpop.permute.xlu0 %4651
  %4653 = vrot.lane.b32.xlu0 %v4467, 1
  %v4654 = vpop.permute.xlu0 %4653
  %4655 = vrot.lane.b32.xlu0 %v4489, 1
  %v4656 = vpop.permute.xlu0 %4655
  %4657 = vrot.lane.b32.xlu0 %v4511, 1
  %v4658 = vpop.permute.xlu0 %4657
  %4659 = vrot.lane.b32.xlu0 %v4533, 1
  %v4660 = vpop.permute.xlu0 %4659
  %4661 = vrot.lane.b32.xlu0 %v4468, 1
  %v4662 = vpop.permute.xlu0 %4661
  %4663 = vrot.lane.b32.xlu0 %v4490, 1
  %v4664 = vpop.permute.xlu0 %4663
  %4665 = vrot.lane.b32.xlu0 %v4512, 1
  %v4666 = vpop.permute.xlu0 %4665
  %4667 = vrot.lane.b32.xlu0 %v4534, 1
  %v4668 = vpop.permute.xlu0 %4667
  %4669 = vrot.lane.b32.xlu0 %v4469, 1
  %v4670 = vpop.permute.xlu0 %4669
  %4671 = vrot.lane.b32.xlu0 %v4491, 1
  %v4672 = vpop.permute.xlu0 %4671
  %4673 = vrot.lane.b32.xlu0 %v4513, 1
  %v4674 = vpop.permute.xlu0 %4673
  %4675 = vrot.lane.b32.xlu0 %v4535, 1
  %v4676 = vpop.permute.xlu0 %4675
  %4677 = vrot.lane.b32.xlu0 %v4470, 1
  %v4678 = vpop.permute.xlu0 %4677
  %4679 = vrot.lane.b32.xlu0 %v4492, 1
  %v4680 = vpop.permute.xlu0 %4679
  %4681 = vrot.lane.b32.xlu0 %v4514, 1
  %v4682 = vpop.permute.xlu0 %4681
  %4683 = vrot.lane.b32.xlu0 %v4536, 1
  %v4684 = vpop.permute.xlu0 %4683
  %4685 = vrot.lane.b32.xlu0 %v4471, 1
  %v4686 = vpop.permute.xlu0 %4685
  %4687 = vrot.lane.b32.xlu0 %v4493, 1
  %v4688 = vpop.permute.xlu0 %4687
  %4689 = vrot.lane.b32.xlu0 %v4515, 1
  %v4690 = vpop.permute.xlu0 %4689
  %4691 = vrot.lane.b32.xlu0 %v4537, 1
  %v4692 = vpop.permute.xlu0 %4691
  %4693 = vrot.lane.b32.xlu0 %v4472, 1
  %v4694 = vpop.permute.xlu0 %4693
  %4695 = vrot.lane.b32.xlu0 %v4494, 1
  %v4696 = vpop.permute.xlu0 %4695
  %4697 = vrot.lane.b32.xlu0 %v4516, 1
  %v4698 = vpop.permute.xlu0 %4697
  %4699 = vrot.lane.b32.xlu0 %v4538, 1
  %v4700 = vpop.permute.xlu0 %4699
  %4701 = vrot.lane.b32.xlu0 %v4473, 1
  %v4702 = vpop.permute.xlu0 %4701
  %4703 = vrot.lane.b32.xlu0 %v4495, 1
  %v4704 = vpop.permute.xlu0 %4703
  %4705 = vrot.lane.b32.xlu0 %v4517, 1
  %v4706 = vpop.permute.xlu0 %4705
  %4707 = vrot.lane.b32.xlu0 %v4539, 1
  %v4708 = vpop.permute.xlu0 %4707
  %4709 = vrot.lane.b32.xlu0 %v4474, 1
  %v4710 = vpop.permute.xlu0 %4709
  %4711 = vrot.lane.b32.xlu0 %v4496, 1
  %v4712 = vpop.permute.xlu0 %4711
  %4713 = vrot.lane.b32.xlu0 %v4518, 1
  %v4714 = vpop.permute.xlu0 %4713
  %4715 = vrot.lane.b32.xlu0 %v4540, 1
  %v4716 = vpop.permute.xlu0 %4715
  %v4717 = vsel %vm166, %v4702, %v4710
  %v4718 = vsel %vm166, %v4704, %v4712
  %v4719 = vsel %vm166, %v4706, %v4714
  %v4720 = vsel %vm166, %v4708, %v4716
  %v4721 = vsel %vm166, %v4694, %v4702
  %v4722 = vsel %vm166, %v4696, %v4704
  %v4723 = vsel %vm166, %v4698, %v4706
  %v4724 = vsel %vm166, %v4700, %v4708
  %v4725 = vsel %vm166, %v4686, %v4694
  %v4726 = vsel %vm166, %v4688, %v4696
  %v4727 = vsel %vm166, %v4690, %v4698
  %v4728 = vsel %vm166, %v4692, %v4700
  %v4729 = vsel %vm166, %v4678, %v4686
  %v4730 = vsel %vm166, %v4680, %v4688
  %v4731 = vsel %vm166, %v4682, %v4690
  %v4732 = vsel %vm166, %v4684, %v4692
  %v4733 = vsel %vm166, %v4670, %v4678
  %v4734 = vsel %vm166, %v4672, %v4680
  %v4735 = vsel %vm166, %v4674, %v4682
  %v4736 = vsel %vm166, %v4676, %v4684
  %v4737 = vsel %vm166, %v4662, %v4670
  %v4738 = vsel %vm166, %v4664, %v4672
  %v4739 = vsel %vm166, %v4666, %v4674
  %v4740 = vsel %vm166, %v4668, %v4676
  %v4741 = vsel %vm166, %v4654, %v4662
  %v4742 = vsel %vm166, %v4656, %v4664
  %v4743 = vsel %vm166, %v4658, %v4666
  %v4744 = vsel %vm166, %v4660, %v4668
  %v4745 = vsel %vm166, %v4646, %v4654
  %v4746 = vsel %vm166, %v4648, %v4656
  %v4747 = vsel %vm166, %v4650, %v4658
  %v4748 = vsel %vm166, %v4652, %v4660
  %v4749 = vsel %vm166, %v4638, %v4646
  %v4750 = vsel %vm166, %v4640, %v4648
  %v4751 = vsel %vm166, %v4642, %v4650
  %v4752 = vsel %vm166, %v4644, %v4652
  %v4753 = vsel %vm166, %v4630, %v4638
  %v4754 = vsel %vm166, %v4632, %v4640
  %v4755 = vsel %vm166, %v4634, %v4642
  %v4756 = vsel %vm166, %v4636, %v4644
  %v4757 = vsel %vm166, %v4622, %v4630
  %v4758 = vsel %vm166, %v4624, %v4632
  %v4759 = vsel %vm166, %v4626, %v4634
  %v4760 = vsel %vm166, %v4628, %v4636
  %v4761 = vsel %vm166, %v4614, %v4622
  %v4762 = vsel %vm166, %v4616, %v4624
  %v4763 = vsel %vm166, %v4618, %v4626
  %v4764 = vsel %vm166, %v4620, %v4628
  %v4765 = vsel %vm166, %v4606, %v4614
  %v4766 = vsel %vm166, %v4608, %v4616
  %v4767 = vsel %vm166, %v4610, %v4618
  %v4768 = vsel %vm166, %v4612, %v4620
  %v4769 = vsel %vm166, %v4598, %v4606
  %v4770 = vsel %vm166, %v4600, %v4608
  %v4771 = vsel %vm166, %v4602, %v4610
  %v4772 = vsel %vm166, %v4604, %v4612
  %v4773 = vsel %vm166, %v4590, %v4598
  %v4774 = vsel %vm166, %v4592, %v4600
  %v4775 = vsel %vm166, %v4594, %v4602
  %v4776 = vsel %vm166, %v4596, %v4604
  %v4777 = vsel %vm166, %v4582, %v4590
  %v4778 = vsel %vm166, %v4584, %v4592
  %v4779 = vsel %vm166, %v4586, %v4594
  %v4780 = vsel %vm166, %v4588, %v4596
  %v4781 = vsel %vm166, %v4574, %v4582
  %v4782 = vsel %vm166, %v4576, %v4584
  %v4783 = vsel %vm166, %v4578, %v4586
  %v4784 = vsel %vm166, %v4580, %v4588
  %v4785 = vsel %vm166, %v4566, %v4574
  %v4786 = vsel %vm166, %v4568, %v4576
  %v4787 = vsel %vm166, %v4570, %v4578
  %v4788 = vsel %vm166, %v4572, %v4580
  %v4789 = vsel %vm166, %v4558, %v4566
  %v4790 = vsel %vm166, %v4560, %v4568
  %v4791 = vsel %vm166, %v4562, %v4570
  %v4792 = vsel %vm166, %v4564, %v4572
  %v4793 = vsel %vm166, %v4550, %v4558
  %v4794 = vsel %vm166, %v4552, %v4560
  %v4795 = vsel %vm166, %v4554, %v4562
  %v4796 = vsel %vm166, %v4556, %v4564
  %v4797 = vsel %vm166, %v4542, %v4550
  %v4798 = vsel %vm166, %v4544, %v4552
  %v4799 = vsel %vm166, %v4546, %v4554
  %v4800 = vsel %vm166, %v4548, %v4556
  %v4801 = vsel %vm166, %v4710, %v4542
  %v4802 = vsel %vm166, %v4712, %v4544
  %v4803 = vsel %vm166, %v4714, %v4546
  %v4804 = vsel %vm166, %v4716, %v4548
  %4805 = vrot.lane.b32.xlu0 %v4453, 127
  %v4806 = vpop.permute.xlu0 %4805
  %4807 = vrot.lane.b32.xlu0 %v4475, 127
  %v4808 = vpop.permute.xlu0 %4807
  %4809 = vrot.lane.b32.xlu0 %v4497, 127
  %v4810 = vpop.permute.xlu0 %4809
  %4811 = vrot.lane.b32.xlu0 %v4519, 127
  %v4812 = vpop.permute.xlu0 %4811
  %4813 = vrot.lane.b32.xlu0 %v4454, 127
  %v4814 = vpop.permute.xlu0 %4813
  %4815 = vrot.lane.b32.xlu0 %v4476, 127
  %v4816 = vpop.permute.xlu0 %4815
  %4817 = vrot.lane.b32.xlu0 %v4498, 127
  %v4818 = vpop.permute.xlu0 %4817
  %4819 = vrot.lane.b32.xlu0 %v4520, 127
  %v4820 = vpop.permute.xlu0 %4819
  %4821 = vrot.lane.b32.xlu0 %v4455, 127
  %v4822 = vpop.permute.xlu0 %4821
  %4823 = vrot.lane.b32.xlu0 %v4477, 127
  %v4824 = vpop.permute.xlu0 %4823
  %4825 = vrot.lane.b32.xlu0 %v4499, 127
  %v4826 = vpop.permute.xlu0 %4825
  %4827 = vrot.lane.b32.xlu0 %v4521, 127
  %v4828 = vpop.permute.xlu0 %4827
  %4829 = vrot.lane.b32.xlu0 %v4456, 127
  %v4830 = vpop.permute.xlu0 %4829
  %4831 = vrot.lane.b32.xlu0 %v4478, 127
  %v4832 = vpop.permute.xlu0 %4831
  %4833 = vrot.lane.b32.xlu0 %v4500, 127
  %v4834 = vpop.permute.xlu0 %4833
  %4835 = vrot.lane.b32.xlu0 %v4522, 127
  %v4836 = vpop.permute.xlu0 %4835
  %4837 = vrot.lane.b32.xlu0 %v4457, 127
  %v4838 = vpop.permute.xlu0 %4837
  %4839 = vrot.lane.b32.xlu0 %v4479, 127
  %v4840 = vpop.permute.xlu0 %4839
  %4841 = vrot.lane.b32.xlu0 %v4501, 127
  %v4842 = vpop.permute.xlu0 %4841
  %4843 = vrot.lane.b32.xlu0 %v4523, 127
  %v4844 = vpop.permute.xlu0 %4843
  %4845 = vrot.lane.b32.xlu0 %v4458, 127
  %v4846 = vpop.permute.xlu0 %4845
  %4847 = vrot.lane.b32.xlu0 %v4480, 127
  %v4848 = vpop.permute.xlu0 %4847
  %4849 = vrot.lane.b32.xlu0 %v4502, 127
  %v4850 = vpop.permute.xlu0 %4849
  %4851 = vrot.lane.b32.xlu0 %v4524, 127
  %v4852 = vpop.permute.xlu0 %4851
  %4853 = vrot.lane.b32.xlu0 %v4459, 127
  %v4854 = vpop.permute.xlu0 %4853
  %4855 = vrot.lane.b32.xlu0 %v4481, 127
  %v4856 = vpop.permute.xlu0 %4855
  %4857 = vrot.lane.b32.xlu0 %v4503, 127
  %v4858 = vpop.permute.xlu0 %4857
  %4859 = vrot.lane.b32.xlu0 %v4525, 127
  %v4860 = vpop.permute.xlu0 %4859
  %4861 = vrot.lane.b32.xlu0 %v4460, 127
  %v4862 = vpop.permute.xlu0 %4861
  %4863 = vrot.lane.b32.xlu0 %v4482, 127
  %v4864 = vpop.permute.xlu0 %4863
  %4865 = vrot.lane.b32.xlu0 %v4504, 127
  %v4866 = vpop.permute.xlu0 %4865
  %4867 = vrot.lane.b32.xlu0 %v4526, 127
  %v4868 = vpop.permute.xlu0 %4867
  %4869 = vrot.lane.b32.xlu0 %v4461, 127
  %v4870 = vpop.permute.xlu0 %4869
  %4871 = vrot.lane.b32.xlu0 %v4483, 127
  %v4872 = vpop.permute.xlu0 %4871
  %4873 = vrot.lane.b32.xlu0 %v4505, 127
  %v4874 = vpop.permute.xlu0 %4873
  %4875 = vrot.lane.b32.xlu0 %v4527, 127
  %v4876 = vpop.permute.xlu0 %4875
  %4877 = vrot.lane.b32.xlu0 %v4462, 127
  %v4878 = vpop.permute.xlu0 %4877
  %4879 = vrot.lane.b32.xlu0 %v4484, 127
  %v4880 = vpop.permute.xlu0 %4879
  %4881 = vrot.lane.b32.xlu0 %v4506, 127
  %v4882 = vpop.permute.xlu0 %4881
  %4883 = vrot.lane.b32.xlu0 %v4528, 127
  %v4884 = vpop.permute.xlu0 %4883
  %4885 = vrot.lane.b32.xlu0 %v4463, 127
  %v4886 = vpop.permute.xlu0 %4885
  %4887 = vrot.lane.b32.xlu0 %v4485, 127
  %v4888 = vpop.permute.xlu0 %4887
  %4889 = vrot.lane.b32.xlu0 %v4507, 127
  %v4890 = vpop.permute.xlu0 %4889
  %4891 = vrot.lane.b32.xlu0 %v4529, 127
  %v4892 = vpop.permute.xlu0 %4891
  %4893 = vrot.lane.b32.xlu0 %v4464, 127
  %v4894 = vpop.permute.xlu0 %4893
  %4895 = vrot.lane.b32.xlu0 %v4486, 127
  %v4896 = vpop.permute.xlu0 %4895
  %4897 = vrot.lane.b32.xlu0 %v4508, 127
  %v4898 = vpop.permute.xlu0 %4897
  %4899 = vrot.lane.b32.xlu0 %v4530, 127
  %v4900 = vpop.permute.xlu0 %4899
  %4901 = vrot.lane.b32.xlu0 %v4465, 127
  %v4902 = vpop.permute.xlu0 %4901
  %4903 = vrot.lane.b32.xlu0 %v4487, 127
  %v4904 = vpop.permute.xlu0 %4903
  %4905 = vrot.lane.b32.xlu0 %v4509, 127
  %v4906 = vpop.permute.xlu0 %4905
  %4907 = vrot.lane.b32.xlu0 %v4531, 127
  %v4908 = vpop.permute.xlu0 %4907
  %4909 = vrot.lane.b32.xlu0 %v4466, 127
  %v4910 = vpop.permute.xlu0 %4909
  %4911 = vrot.lane.b32.xlu0 %v4488, 127
  %v4912 = vpop.permute.xlu0 %4911
  %4913 = vrot.lane.b32.xlu0 %v4510, 127
  %v4914 = vpop.permute.xlu0 %4913
  %4915 = vrot.lane.b32.xlu0 %v4532, 127
  %v4916 = vpop.permute.xlu0 %4915
  %4917 = vrot.lane.b32.xlu0 %v4467, 127
  %v4918 = vpop.permute.xlu0 %4917
  %4919 = vrot.lane.b32.xlu0 %v4489, 127
  %v4920 = vpop.permute.xlu0 %4919
  %4921 = vrot.lane.b32.xlu0 %v4511, 127
  %v4922 = vpop.permute.xlu0 %4921
  %4923 = vrot.lane.b32.xlu0 %v4533, 127
  %v4924 = vpop.permute.xlu0 %4923
  %4925 = vrot.lane.b32.xlu0 %v4468, 127
  %v4926 = vpop.permute.xlu0 %4925
  %4927 = vrot.lane.b32.xlu0 %v4490, 127
  %v4928 = vpop.permute.xlu0 %4927
  %4929 = vrot.lane.b32.xlu0 %v4512, 127
  %v4930 = vpop.permute.xlu0 %4929
  %4931 = vrot.lane.b32.xlu0 %v4534, 127
  %v4932 = vpop.permute.xlu0 %4931
  %4933 = vrot.lane.b32.xlu0 %v4469, 127
  %v4934 = vpop.permute.xlu0 %4933
  %4935 = vrot.lane.b32.xlu0 %v4491, 127
  %v4936 = vpop.permute.xlu0 %4935
  %4937 = vrot.lane.b32.xlu0 %v4513, 127
  %v4938 = vpop.permute.xlu0 %4937
  %4939 = vrot.lane.b32.xlu0 %v4535, 127
  %v4940 = vpop.permute.xlu0 %4939
  %4941 = vrot.lane.b32.xlu0 %v4470, 127
  %v4942 = vpop.permute.xlu0 %4941
  %4943 = vrot.lane.b32.xlu0 %v4492, 127
  %v4944 = vpop.permute.xlu0 %4943
  %4945 = vrot.lane.b32.xlu0 %v4514, 127
  %v4946 = vpop.permute.xlu0 %4945
  %4947 = vrot.lane.b32.xlu0 %v4536, 127
  %v4948 = vpop.permute.xlu0 %4947
  %4949 = vrot.lane.b32.xlu0 %v4471, 127
  %v4950 = vpop.permute.xlu0 %4949
  %4951 = vrot.lane.b32.xlu0 %v4493, 127
  %v4952 = vpop.permute.xlu0 %4951
  %4953 = vrot.lane.b32.xlu0 %v4515, 127
  %v4954 = vpop.permute.xlu0 %4953
  %4955 = vrot.lane.b32.xlu0 %v4537, 127
  %v4956 = vpop.permute.xlu0 %4955
  %4957 = vrot.lane.b32.xlu0 %v4472, 127
  %v4958 = vpop.permute.xlu0 %4957
  %4959 = vrot.lane.b32.xlu0 %v4494, 127
  %v4960 = vpop.permute.xlu0 %4959
  %4961 = vrot.lane.b32.xlu0 %v4516, 127
  %v4962 = vpop.permute.xlu0 %4961
  %4963 = vrot.lane.b32.xlu0 %v4538, 127
  %v4964 = vpop.permute.xlu0 %4963
  %4965 = vrot.lane.b32.xlu0 %v4473, 127
  %v4966 = vpop.permute.xlu0 %4965
  %4967 = vrot.lane.b32.xlu0 %v4495, 127
  %v4968 = vpop.permute.xlu0 %4967
  %4969 = vrot.lane.b32.xlu0 %v4517, 127
  %v4970 = vpop.permute.xlu0 %4969
  %4971 = vrot.lane.b32.xlu0 %v4539, 127
  %v4972 = vpop.permute.xlu0 %4971
  %4973 = vrot.lane.b32.xlu0 %v4474, 127
  %v4974 = vpop.permute.xlu0 %4973
  %4975 = vrot.lane.b32.xlu0 %v4496, 127
  %v4976 = vpop.permute.xlu0 %4975
  %4977 = vrot.lane.b32.xlu0 %v4518, 127
  %v4978 = vpop.permute.xlu0 %4977
  %4979 = vrot.lane.b32.xlu0 %v4540, 127
  %v4980 = vpop.permute.xlu0 %4979
  %v4981 = vsel %vm299, %v4966, %v4974
  %v4982 = vsel %vm299, %v4968, %v4976
  %v4983 = vsel %vm299, %v4970, %v4978
  %v4984 = vsel %vm299, %v4972, %v4980
  %v4985 = vsel %vm299, %v4958, %v4966
  %v4986 = vsel %vm299, %v4960, %v4968
  %v4987 = vsel %vm299, %v4962, %v4970
  %v4988 = vsel %vm299, %v4964, %v4972
  %v4989 = vsel %vm299, %v4950, %v4958
  %v4990 = vsel %vm299, %v4952, %v4960
  %v4991 = vsel %vm299, %v4954, %v4962
  %v4992 = vsel %vm299, %v4956, %v4964
  %v4993 = vsel %vm299, %v4942, %v4950
  %v4994 = vsel %vm299, %v4944, %v4952
  %v4995 = vsel %vm299, %v4946, %v4954
  %v4996 = vsel %vm299, %v4948, %v4956
  %v4997 = vsel %vm299, %v4934, %v4942
  %v4998 = vsel %vm299, %v4936, %v4944
  %v4999 = vsel %vm299, %v4938, %v4946
  %v5000 = vsel %vm299, %v4940, %v4948
  %v5001 = vsel %vm299, %v4926, %v4934
  %v5002 = vsel %vm299, %v4928, %v4936
  %v5003 = vsel %vm299, %v4930, %v4938
  %v5004 = vsel %vm299, %v4932, %v4940
  %v5005 = vsel %vm299, %v4918, %v4926
  %v5006 = vsel %vm299, %v4920, %v4928
  %v5007 = vsel %vm299, %v4922, %v4930
  %v5008 = vsel %vm299, %v4924, %v4932
  %v5009 = vsel %vm299, %v4910, %v4918
  %v5010 = vsel %vm299, %v4912, %v4920
  %v5011 = vsel %vm299, %v4914, %v4922
  %v5012 = vsel %vm299, %v4916, %v4924
  %v5013 = vsel %vm299, %v4902, %v4910
  %v5014 = vsel %vm299, %v4904, %v4912
  %v5015 = vsel %vm299, %v4906, %v4914
  %v5016 = vsel %vm299, %v4908, %v4916
  %v5017 = vsel %vm299, %v4894, %v4902
  %v5018 = vsel %vm299, %v4896, %v4904
  %v5019 = vsel %vm299, %v4898, %v4906
  %v5020 = vsel %vm299, %v4900, %v4908
  %v5021 = vsel %vm299, %v4886, %v4894
  %v5022 = vsel %vm299, %v4888, %v4896
  %v5023 = vsel %vm299, %v4890, %v4898
  %v5024 = vsel %vm299, %v4892, %v4900
  %v5025 = vsel %vm299, %v4878, %v4886
  %v5026 = vsel %vm299, %v4880, %v4888
  %v5027 = vsel %vm299, %v4882, %v4890
  %v5028 = vsel %vm299, %v4884, %v4892
  %v5029 = vsel %vm299, %v4870, %v4878
  %v5030 = vsel %vm299, %v4872, %v4880
  %v5031 = vsel %vm299, %v4874, %v4882
  %v5032 = vsel %vm299, %v4876, %v4884
  %v5033 = vsel %vm299, %v4862, %v4870
  %v5034 = vsel %vm299, %v4864, %v4872
  %v5035 = vsel %vm299, %v4866, %v4874
  %v5036 = vsel %vm299, %v4868, %v4876
  %v5037 = vsel %vm299, %v4854, %v4862
  %v5038 = vsel %vm299, %v4856, %v4864
  %v5039 = vsel %vm299, %v4858, %v4866
  %v5040 = vsel %vm299, %v4860, %v4868
  %v5041 = vsel %vm299, %v4846, %v4854
  %v5042 = vsel %vm299, %v4848, %v4856
  %v5043 = vsel %vm299, %v4850, %v4858
  %v5044 = vsel %vm299, %v4852, %v4860
  %v5045 = vsel %vm299, %v4838, %v4846
  %v5046 = vsel %vm299, %v4840, %v4848
  %v5047 = vsel %vm299, %v4842, %v4850
  %v5048 = vsel %vm299, %v4844, %v4852
  %v5049 = vsel %vm299, %v4830, %v4838
  %v5050 = vsel %vm299, %v4832, %v4840
  %v5051 = vsel %vm299, %v4834, %v4842
  %v5052 = vsel %vm299, %v4836, %v4844
  %v5053 = vsel %vm299, %v4822, %v4830
  %v5054 = vsel %vm299, %v4824, %v4832
  %v5055 = vsel %vm299, %v4826, %v4834
  %v5056 = vsel %vm299, %v4828, %v4836
  %v5057 = vsel %vm299, %v4814, %v4822
  %v5058 = vsel %vm299, %v4816, %v4824
  %v5059 = vsel %vm299, %v4818, %v4826
  %v5060 = vsel %vm299, %v4820, %v4828
  %v5061 = vsel %vm299, %v4806, %v4814
  %v5062 = vsel %vm299, %v4808, %v4816
  %v5063 = vsel %vm299, %v4810, %v4818
  %v5064 = vsel %vm299, %v4812, %v4820
  %v5065 = vsel %vm299, %v4974, %v4806
  %v5066 = vsel %vm299, %v4976, %v4808
  %v5067 = vsel %vm299, %v4978, %v4810
  %v5068 = vsel %vm299, %v4980, %v4812
  %v5069 = vld [vmem:[%s5] sm:$0xff]
  %v5070 = vld [vmem:[%s5 + $0x8] sm:$0xf]
  %vm5071 = vcmask 785408
  %v5073 = vsel %vm5071, %v5069, 0
  %v5076 = vsel %vm5071, %v5070, 0
  %5078 = vmatprep.subr.mxu0 %v4797
  %5079 = vmatpush1.msra.mxu0 %v4801
  %5080 = vmatprep.subr.mxu0 %v4798
  %5081 = vmatpush1.msra.mxu0 %v4802
  %5082 = vmatprep.subr.mxu0 %v4799
  %5083 = vmatpush1.msra.mxu0 %v4803
  %5084 = vmatprep.subr.mxu0 %v4800
  %5085 = vmatpush1.msra.mxu0 %v4804
  %5086 = vmatprep.subr.mxu0 %v4454
  %5087 = vmatpush1.msra.mxu0 %v4453
  %5088 = vmatprep.subr.mxu0 %v4476
  %5089 = vmatpush1.msra.mxu0 %v4475
  %5090 = vmatprep.subr.mxu0 %v4498
  %5091 = vmatpush1.msra.mxu0 %v4497
  %5092 = vmatprep.subr.mxu0 %v4520
  %5093 = vmatpush1.msra.mxu0 %v4519
  %5094 = vmatprep.subr.mxu0 %v5057
  %5095 = vmatpush1.msra.mxu0 %v5061
  %5096 = vmatprep.subr.mxu0 %v5058
  %5097 = vmatpush1.msra.mxu0 %v5062
  %5098 = vmatprep.subr.mxu0 %v5059
  %5099 = vmatpush1.msra.mxu0 %v5063
  %5100 = vmatprep.subr.mxu0 %v5060
  %5101 = vmatpush1.msra.mxu0 %v5064
  %5102 = vmatprep.subr.mxu0 0.0
  %5103 = vmatpush1.msra.mxu0 0.0
  %5104 = vmatprep.subr.mxu0 0.0
  %5105 = vmatpush1.msra.mxu0 0.0
  %5106 = vmatprep.subr.mxu0 0.0
  %5107 = vmatpush1.msra.mxu0 0.0
  %5108 = vmatprep.subr.mxu0 0.0
  %5109 = vmatpush1.msra.mxu0 0.0
  %5110 = vmatprep.subr.mxu0 0.0
  %5111 = vmatpush1.msra.mxu0 0.0
  %5112 = vmatprep.subr.mxu0 0.0
  %5113 = vmatpush1.msra.mxu0 0.0
  %5114 = vmatprep.subr.mxu0 0.0
  %5115 = vmatpush1.msra.mxu0 0.0
  %5116 = vmatprep.subr.mxu0 0.0
  %5117 = vmatpush1.msra.mxu0 0.0
  %5118 = vmatprep.subr.mxu0 0.0
  %5119 = vmatpush1.msra.mxu0 0.0
  %5120 = vmatprep.subr.mxu0 0.0
  %5121 = vmatpush1.msra.mxu0 0.0
  %5122 = vmatprep.subr.mxu0 0.0
  %5123 = vmatpush1.msra.mxu0 0.0
  %5124 = vmatprep.subr.mxu0 0.0
  %5125 = vmatpush1.msra.mxu0 0.0
  %5126 = vmatprep.subr.mxu0 0.0
  %5127 = vmatpush1.msra.mxu0 0.0
  %5128 = vmatprep.subr.mxu0 0.0
  %5129 = vmatpush1.msra.mxu0 0.0
  %5130 = vmatprep.subr.mxu0 0.0
  %5131 = vmatpush1.msra.mxu0 0.0
  %5132 = vmatprep.subr.mxu0 0.0
  %5133 = vmatpush1.msra.mxu0 0.0
  %5134 = vmatprep.subr.mxu0 0.0
  %5135 = vmatpush1.msra.mxu0 0.0
  %5136 = vmatprep.subr.mxu0 0.0
  %5137 = vmatpush1.msra.mxu0 0.0
  %5138 = vmatprep.subr.mxu0 0.0
  %5139 = vmatpush1.msra.mxu0 0.0
  %5140 = vmatprep.subr.mxu0 0.0
  %5141 = vmatpush1.msra.mxu0 0.0
  %5142 = vmatprep.mubr.f32.mxu0 0.0
  %5143 = vmatmul.mubr.f32.gmra.mrb[0].mxu0 %v5073
  %v5144 = vpop.f32.mrb[0].mxu0
  %v5145 = vadd.f32 0.0, %v5144
  %v5146 = vpop.f32.mrb[0].mxu0
  %v5147 = vadd.f32 0.0, %v5146
  %5148 = vmatprep.mubr.f32.mxu0 0.0
  %5149 = vmatmul.mubr.f32.gmra.mrb[0].mxu0 %v5076
  %v5150 = vpop.f32.mrb[0].mxu0
  %v5151 = vadd.f32 0.0, %v5150
  %v5152 = vpop.f32.mrb[0].mxu0
  %v5153 = vadd.f32 0.0, %v5152
  %5154 = vdwg.mxu0
  %5155 = vmatprep.subr.mxu0 %v4789
  %5156 = vmatpush1.msra.mxu0 %v4793
  %5157 = vmatprep.subr.mxu0 %v4790
  %5158 = vmatpush1.msra.mxu0 %v4794
  %5159 = vmatprep.subr.mxu0 %v4791
  %5160 = vmatpush1.msra.mxu0 %v4795
  %5161 = vmatprep.subr.mxu0 %v4792
  %5162 = vmatpush1.msra.mxu0 %v4796
  %5163 = vmatprep.subr.mxu0 %v4456
  %5164 = vmatpush1.msra.mxu0 %v4455
  %5165 = vmatprep.subr.mxu0 %v4478
  %5166 = vmatpush1.msra.mxu0 %v4477
  %5167 = vmatprep.subr.mxu0 %v4500
  %5168 = vmatpush1.msra.mxu0 %v4499
  %5169 = vmatprep.subr.mxu0 %v4522
  %5170 = vmatpush1.msra.mxu0 %v4521
  %5171 = vmatprep.subr.mxu0 %v5049
  %5172 = vmatpush1.msra.mxu0 %v5053
  %5173 = vmatprep.subr.mxu0 %v5050
  %5174 = vmatpush1.msra.mxu0 %v5054
  %5175 = vmatprep.subr.mxu0 %v5051
  %5176 = vmatpush1.msra.mxu0 %v5055
  %5177 = vmatprep.subr.mxu0 %v5052
  %5178 = vmatpush1.msra.mxu0 %v5056
  %5179 = vmatprep.subr.mxu0 0.0
  %5180 = vmatpush1.msra.mxu0 0.0
  %5181 = vmatprep.subr.mxu0 0.0
  %5182 = vmatpush1.msra.mxu0 0.0
  %5183 = vmatprep.subr.mxu0 0.0
  %5184 = vmatpush1.msra.mxu0 0.0
  %5185 = vmatprep.subr.mxu0 0.0
  %5186 = vmatpush1.msra.mxu0 0.0
  %5187 = vmatprep.subr.mxu0 0.0
  %5188 = vmatpush1.msra.mxu0 0.0
  %5189 = vmatprep.subr.mxu0 0.0
  %5190 = vmatpush1.msra.mxu0 0.0
  %5191 = vmatprep.subr.mxu0 0.0
  %5192 = vmatpush1.msra.mxu0 0.0
  %5193 = vmatprep.subr.mxu0 0.0
  %5194 = vmatpush1.msra.mxu0 0.0
  %5195 = vmatprep.subr.mxu0 0.0
  %5196 = vmatpush1.msra.mxu0 0.0
  %5197 = vmatprep.subr.mxu0 0.0
  %5198 = vmatpush1.msra.mxu0 0.0
  %5199 = vmatprep.subr.mxu0 0.0
  %5200 = vmatpush1.msra.mxu0 0.0
  %5201 = vmatprep.subr.mxu0 0.0
  %5202 = vmatpush1.msra.mxu0 0.0
  %5203 = vmatprep.subr.mxu0 0.0
  %5204 = vmatpush1.msra.mxu0 0.0
  %5205 = vmatprep.subr.mxu0 0.0
  %5206 = vmatpush1.msra.mxu0 0.0
  %5207 = vmatprep.subr.mxu0 0.0
  %5208 = vmatpush1.msra.mxu0 0.0
  %5209 = vmatprep.subr.mxu0 0.0
  %5210 = vmatpush1.msra.mxu0 0.0
  %5211 = vmatprep.subr.mxu0 0.0
  %5212 = vmatpush1.msra.mxu0 0.0
  %5213 = vmatprep.subr.mxu0 0.0
  %5214 = vmatpush1.msra.mxu0 0.0
  %5215 = vmatprep.subr.mxu0 0.0
  %5216 = vmatpush1.msra.mxu0 0.0
  %5217 = vmatprep.subr.mxu0 0.0
  %5218 = vmatpush1.msra.mxu0 0.0
  %5219 = vmatprep.mubr.f32.mxu0 0.0
  %5220 = vmatmul.mubr.f32.gmra.mrb[0].mxu0 %v5073
  %v5221 = vpop.f32.mrb[0].mxu0
  %v5222 = vadd.f32 0.0, %v5221
  %v5223 = vpop.f32.mrb[0].mxu0
  %v5224 = vadd.f32 0.0, %v5223
  %5225 = vmatprep.mubr.f32.mxu0 0.0
  %5226 = vmatmul.mubr.f32.gmra.mrb[0].mxu0 %v5076
  %v5227 = vpop.f32.mrb[0].mxu0
  %v5228 = vadd.f32 0.0, %v5227
  %v5229 = vpop.f32.mrb[0].mxu0
  %v5230 = vadd.f32 0.0, %v5229
  %5231 = vdwg.mxu0
  %5232 = vmatprep.subr.mxu0 %v4781
  %5233 = vmatpush1.msra.mxu0 %v4785
  %5234 = vmatprep.subr.mxu0 %v4782
  %5235 = vmatpush1.msra.mxu0 %v4786
  %5236 = vmatprep.subr.mxu0 %v4783
  %5237 = vmatpush1.msra.mxu0 %v4787
  %5238 = vmatprep.subr.mxu0 %v4784
  %5239 = vmatpush1.msra.mxu0 %v4788
  %5240 = vmatprep.subr.mxu0 %v4458
  %5241 = vmatpush1.msra.mxu0 %v4457
  %5242 = vmatprep.subr.mxu0 %v4480
  %5243 = vmatpush1.msra.mxu0 %v4479
  %5244 = vmatprep.subr.mxu0 %v4502
  %5245 = vmatpush1.msra.mxu0 %v4501
  %5246 = vmatprep.subr.mxu0 %v4524
  %5247 = vmatpush1.msra.mxu0 %v4523
  %5248 = vmatprep.subr.mxu0 %v5041
  %5249 = vmatpush1.msra.mxu0 %v5045
  %5250 = vmatprep.subr.mxu0 %v5042
  %5251 = vmatpush1.msra.mxu0 %v5046
  %5252 = vmatprep.subr.mxu0 %v5043
  %5253 = vmatpush1.msra.mxu0 %v5047
  %5254 = vmatprep.subr.mxu0 %v5044
  %5255 = vmatpush1.msra.mxu0 %v5048
  %5256 = vmatprep.subr.mxu0 0.0
  %5257 = vmatpush1.msra.mxu0 0.0
  %5258 = vmatprep.subr.mxu0 0.0
  %5259 = vmatpush1.msra.mxu0 0.0
  %5260 = vmatprep.subr.mxu0 0.0
  %5261 = vmatpush1.msra.mxu0 0.0
  %5262 = vmatprep.subr.mxu0 0.0
  %5263 = vmatpush1.msra.mxu0 0.0
  %5264 = vmatprep.subr.mxu0 0.0
  %5265 = vmatpush1.msra.mxu0 0.0
  %5266 = vmatprep.subr.mxu0 0.0
  %5267 = vmatpush1.msra.mxu0 0.0
  %5268 = vmatprep.subr.mxu0 0.0
  %5269 = vmatpush1.msra.mxu0 0.0
  %5270 = vmatprep.subr.mxu0 0.0
  %5271 = vmatpush1.msra.mxu0 0.0
  %5272 = vmatprep.subr.mxu0 0.0
  %5273 = vmatpush1.msra.mxu0 0.0
  %5274 = vmatprep.subr.mxu0 0.0
  %5275 = vmatpush1.msra.mxu0 0.0
  %5276 = vmatprep.subr.mxu0 0.0
  %5277 = vmatpush1.msra.mxu0 0.0
  %5278 = vmatprep.subr.mxu0 0.0
  %5279 = vmatpush1.msra.mxu0 0.0
  %5280 = vmatprep.subr.mxu0 0.0
  %5281 = vmatpush1.msra.mxu0 0.0
  %5282 = vmatprep.subr.mxu0 0.0
  %5283 = vmatpush1.msra.mxu0 0.0
  %5284 = vmatprep.subr.mxu0 0.0
  %5285 = vmatpush1.msra.mxu0 0.0
  %5286 = vmatprep.subr.mxu0 0.0
  %5287 = vmatpush1.msra.mxu0 0.0
  %5288 = vmatprep.subr.mxu0 0.0
  %5289 = vmatpush1.msra.mxu0 0.0
  %5290 = vmatprep.subr.mxu0 0.0
  %5291 = vmatpush1.msra.mxu0 0.0
  %5292 = vmatprep.subr.mxu0 0.0
  %5293 = vmatpush1.msra.mxu0 0.0
  %5294 = vmatprep.subr.mxu0 0.0
  %5295 = vmatpush1.msra.mxu0 0.0
  %5296 = vmatprep.mubr.f32.mxu0 0.0
  %5297 = vmatmul.mubr.f32.gmra.mrb[0].mxu0 %v5073
  %v5298 = vpop.f32.mrb[0].mxu0
  %v5299 = vadd.f32 0.0, %v5298
  %v5300 = vpop.f32.mrb[0].mxu0
  %v5301 = vadd.f32 0.0, %v5300
  %5302 = vmatprep.mubr.f32.mxu0 0.0
  %5303 = vmatmul.mubr.f32.gmra.mrb[0].mxu0 %v5076
  %v5304 = vpop.f32.mrb[0].mxu0
  %v5305 = vadd.f32 0.0, %v5304
  %v5306 = vpop.f32.mrb[0].mxu0
  %v5307 = vadd.f32 0.0, %v5306
  %5308 = vdwg.mxu0
  %5309 = vmatprep.subr.mxu0 %v4773
  %5310 = vmatpush1.msra.mxu0 %v4777
  %5311 = vmatprep.subr.mxu0 %v4774
  %5312 = vmatpush1.msra.mxu0 %v4778
  %5313 = vmatprep.subr.mxu0 %v4775
  %5314 = vmatpush1.msra.mxu0 %v4779
  %5315 = vmatprep.subr.mxu0 %v4776
  %5316 = vmatpush1.msra.mxu0 %v4780
  %5317 = vmatprep.subr.mxu0 %v4460
  %5318 = vmatpush1.msra.mxu0 %v4459
  %5319 = vmatprep.subr.mxu0 %v4482
  %5320 = vmatpush1.msra.mxu0 %v4481
  %5321 = vmatprep.subr.mxu0 %v4504
  %5322 = vmatpush1.msra.mxu0 %v4503
  %5323 = vmatprep.subr.mxu0 %v4526
  %5324 = vmatpush1.msra.mxu0 %v4525
  %5325 = vmatprep.subr.mxu0 %v5033
  %5326 = vmatpush1.msra.mxu0 %v5037
  %5327 = vmatprep.subr.mxu0 %v5034
  %5328 = vmatpush1.msra.mxu0 %v5038
  %5329 = vmatprep.subr.mxu0 %v5035
  %5330 = vmatpush1.msra.mxu0 %v5039
  %5331 = vmatprep.subr.mxu0 %v5036
  %5332 = vmatpush1.msra.mxu0 %v5040
  %5333 = vmatprep.subr.mxu0 0.0
  %5334 = vmatpush1.msra.mxu0 0.0
  %5335 = vmatprep.subr.mxu0 0.0
  %5336 = vmatpush1.msra.mxu0 0.0
  %5337 = vmatprep.subr.mxu0 0.0
  %5338 = vmatpush1.msra.mxu0 0.0
  %5339 = vmatprep.subr.mxu0 0.0
  %5340 = vmatpush1.msra.mxu0 0.0
  %5341 = vmatprep.subr.mxu0 0.0
  %5342 = vmatpush1.msra.mxu0 0.0
  %5343 = vmatprep.subr.mxu0 0.0
  %5344 = vmatpush1.msra.mxu0 0.0
  %5345 = vmatprep.subr.mxu0 0.0
  %5346 = vmatpush1.msra.mxu0 0.0
  %5347 = vmatprep.subr.mxu0 0.0
  %5348 = vmatpush1.msra.mxu0 0.0
  %5349 = vmatprep.subr.mxu0 0.0
  %5350 = vmatpush1.msra.mxu0 0.0
  %5351 = vmatprep.subr.mxu0 0.0
  %5352 = vmatpush1.msra.mxu0 0.0
  %5353 = vmatprep.subr.mxu0 0.0
  %5354 = vmatpush1.msra.mxu0 0.0
  %5355 = vmatprep.subr.mxu0 0.0
  %5356 = vmatpush1.msra.mxu0 0.0
  %5357 = vmatprep.subr.mxu0 0.0
  %5358 = vmatpush1.msra.mxu0 0.0
  %5359 = vmatprep.subr.mxu0 0.0
  %5360 = vmatpush1.msra.mxu0 0.0
  %5361 = vmatprep.subr.mxu0 0.0
  %5362 = vmatpush1.msra.mxu0 0.0
  %5363 = vmatprep.subr.mxu0 0.0
  %5364 = vmatpush1.msra.mxu0 0.0
  %5365 = vmatprep.subr.mxu0 0.0
  %5366 = vmatpush1.msra.mxu0 0.0
  %5367 = vmatprep.subr.mxu0 0.0
  %5368 = vmatpush1.msra.mxu0 0.0
  %5369 = vmatprep.subr.mxu0 0.0
  %5370 = vmatpush1.msra.mxu0 0.0
  %5371 = vmatprep.subr.mxu0 0.0
  %5372 = vmatpush1.msra.mxu0 0.0
  %5373 = vmatprep.mubr.f32.mxu0 0.0
  %5374 = vmatmul.mubr.f32.gmra.mrb[0].mxu0 %v5073
  %v5375 = vpop.f32.mrb[0].mxu0
  %v5376 = vadd.f32 0.0, %v5375
  %v5377 = vpop.f32.mrb[0].mxu0
  %v5378 = vadd.f32 0.0, %v5377
  %5379 = vmatprep.mubr.f32.mxu0 0.0
  %5380 = vmatmul.mubr.f32.gmra.mrb[0].mxu0 %v5076
  %v5381 = vpop.f32.mrb[0].mxu0
  %v5382 = vadd.f32 0.0, %v5381
  %v5383 = vpop.f32.mrb[0].mxu0
  %v5384 = vadd.f32 0.0, %v5383
  %5385 = vdwg.mxu0
  %5386 = vmatprep.subr.mxu0 %v4765
  %5387 = vmatpush1.msra.mxu0 %v4769
  %5388 = vmatprep.subr.mxu0 %v4766
  %5389 = vmatpush1.msra.mxu0 %v4770
  %5390 = vmatprep.subr.mxu0 %v4767
  %5391 = vmatpush1.msra.mxu0 %v4771
  %5392 = vmatprep.subr.mxu0 %v4768
  %5393 = vmatpush1.msra.mxu0 %v4772
  %5394 = vmatprep.subr.mxu0 %v4462
  %5395 = vmatpush1.msra.mxu0 %v4461
  %5396 = vmatprep.subr.mxu0 %v4484
  %5397 = vmatpush1.msra.mxu0 %v4483
  %5398 = vmatprep.subr.mxu0 %v4506
  %5399 = vmatpush1.msra.mxu0 %v4505
  %5400 = vmatprep.subr.mxu0 %v4528
  %5401 = vmatpush1.msra.mxu0 %v4527
  %5402 = vmatprep.subr.mxu0 %v5025
  %5403 = vmatpush1.msra.mxu0 %v5029
  %5404 = vmatprep.subr.mxu0 %v5026
  %5405 = vmatpush1.msra.mxu0 %v5030
  %5406 = vmatprep.subr.mxu0 %v5027
  %5407 = vmatpush1.msra.mxu0 %v5031
  %5408 = vmatprep.subr.mxu0 %v5028
  %5409 = vmatpush1.msra.mxu0 %v5032
  %5410 = vmatprep.subr.mxu0 0.0
  %5411 = vmatpush1.msra.mxu0 0.0
  %5412 = vmatprep.subr.mxu0 0.0
  %5413 = vmatpush1.msra.mxu0 0.0
  %5414 = vmatprep.subr.mxu0 0.0
  %5415 = vmatpush1.msra.mxu0 0.0
  %5416 = vmatprep.subr.mxu0 0.0
  %5417 = vmatpush1.msra.mxu0 0.0
  %5418 = vmatprep.subr.mxu0 0.0
  %5419 = vmatpush1.msra.mxu0 0.0
  %5420 = vmatprep.subr.mxu0 0.0
  %5421 = vmatpush1.msra.mxu0 0.0
  %5422 = vmatprep.subr.mxu0 0.0
  %5423 = vmatpush1.msra.mxu0 0.0
  %5424 = vmatprep.subr.mxu0 0.0
  %5425 = vmatpush1.msra.mxu0 0.0
  %5426 = vmatprep.subr.mxu0 0.0
  %5427 = vmatpush1.msra.mxu0 0.0
  %5428 = vmatprep.subr.mxu0 0.0
  %5429 = vmatpush1.msra.mxu0 0.0
  %5430 = vmatprep.subr.mxu0 0.0
  %5431 = vmatpush1.msra.mxu0 0.0
  %5432 = vmatprep.subr.mxu0 0.0
  %5433 = vmatpush1.msra.mxu0 0.0
  %5434 = vmatprep.subr.mxu0 0.0
  %5435 = vmatpush1.msra.mxu0 0.0
  %5436 = vmatprep.subr.mxu0 0.0
  %5437 = vmatpush1.msra.mxu0 0.0
  %5438 = vmatprep.subr.mxu0 0.0
  %5439 = vmatpush1.msra.mxu0 0.0
  %5440 = vmatprep.subr.mxu0 0.0
  %5441 = vmatpush1.msra.mxu0 0.0
  %5442 = vmatprep.subr.mxu0 0.0
  %5443 = vmatpush1.msra.mxu0 0.0
  %5444 = vmatprep.subr.mxu0 0.0
  %5445 = vmatpush1.msra.mxu0 0.0
  %5446 = vmatprep.subr.mxu0 0.0
  %5447 = vmatpush1.msra.mxu0 0.0
  %5448 = vmatprep.subr.mxu0 0.0
  %5449 = vmatpush1.msra.mxu0 0.0
  %5450 = vmatprep.mubr.f32.mxu0 0.0
  %5451 = vmatmul.mubr.f32.gmra.mrb[0].mxu0 %v5073
  %v5452 = vpop.f32.mrb[0].mxu0
  %v5453 = vadd.f32 0.0, %v5452
  %v5454 = vpop.f32.mrb[0].mxu0
  %v5455 = vadd.f32 0.0, %v5454
  %5456 = vmatprep.mubr.f32.mxu0 0.0
  %5457 = vmatmul.mubr.f32.gmra.mrb[0].mxu0 %v5076
  %v5458 = vpop.f32.mrb[0].mxu0
  %v5459 = vadd.f32 0.0, %v5458
  %v5460 = vpop.f32.mrb[0].mxu0
  %v5461 = vadd.f32 0.0, %v5460
  %5462 = vdwg.mxu0
  %5463 = vmatprep.subr.mxu0 %v4757
  %5464 = vmatpush1.msra.mxu0 %v4761
  %5465 = vmatprep.subr.mxu0 %v4758
  %5466 = vmatpush1.msra.mxu0 %v4762
  %5467 = vmatprep.subr.mxu0 %v4759
  %5468 = vmatpush1.msra.mxu0 %v4763
  %5469 = vmatprep.subr.mxu0 %v4760
  %5470 = vmatpush1.msra.mxu0 %v4764
  %5471 = vmatprep.subr.mxu0 %v4464
  %5472 = vmatpush1.msra.mxu0 %v4463
  %5473 = vmatprep.subr.mxu0 %v4486
  %5474 = vmatpush1.msra.mxu0 %v4485
  %5475 = vmatprep.subr.mxu0 %v4508
  %5476 = vmatpush1.msra.mxu0 %v4507
  %5477 = vmatprep.subr.mxu0 %v4530
  %5478 = vmatpush1.msra.mxu0 %v4529
  %5479 = vmatprep.subr.mxu0 %v5017
  %5480 = vmatpush1.msra.mxu0 %v5021
  %5481 = vmatprep.subr.mxu0 %v5018
  %5482 = vmatpush1.msra.mxu0 %v5022
  %5483 = vmatprep.subr.mxu0 %v5019
  %5484 = vmatpush1.msra.mxu0 %v5023
  %5485 = vmatprep.subr.mxu0 %v5020
  %5486 = vmatpush1.msra.mxu0 %v5024
  %5487 = vmatprep.subr.mxu0 0.0
  %5488 = vmatpush1.msra.mxu0 0.0
  %5489 = vmatprep.subr.mxu0 0.0
  %5490 = vmatpush1.msra.mxu0 0.0
  %5491 = vmatprep.subr.mxu0 0.0
  %5492 = vmatpush1.msra.mxu0 0.0
  %5493 = vmatprep.subr.mxu0 0.0
  %5494 = vmatpush1.msra.mxu0 0.0
  %5495 = vmatprep.subr.mxu0 0.0
  %5496 = vmatpush1.msra.mxu0 0.0
  %5497 = vmatprep.subr.mxu0 0.0
  %5498 = vmatpush1.msra.mxu0 0.0
  %5499 = vmatprep.subr.mxu0 0.0
  %5500 = vmatpush1.msra.mxu0 0.0
  %5501 = vmatprep.subr.mxu0 0.0
  %5502 = vmatpush1.msra.mxu0 0.0
  %5503 = vmatprep.subr.mxu0 0.0
  %5504 = vmatpush1.msra.mxu0 0.0
  %5505 = vmatprep.subr.mxu0 0.0
  %5506 = vmatpush1.msra.mxu0 0.0
  %5507 = vmatprep.subr.mxu0 0.0
  %5508 = vmatpush1.msra.mxu0 0.0
  %5509 = vmatprep.subr.mxu0 0.0
  %5510 = vmatpush1.msra.mxu0 0.0
  %5511 = vmatprep.subr.mxu0 0.0
  %5512 = vmatpush1.msra.mxu0 0.0
  %5513 = vmatprep.subr.mxu0 0.0
  %5514 = vmatpush1.msra.mxu0 0.0
  %5515 = vmatprep.subr.mxu0 0.0
  %5516 = vmatpush1.msra.mxu0 0.0
  %5517 = vmatprep.subr.mxu0 0.0
  %5518 = vmatpush1.msra.mxu0 0.0
  %5519 = vmatprep.subr.mxu0 0.0
  %5520 = vmatpush1.msra.mxu0 0.0
  %5521 = vmatprep.subr.mxu0 0.0
  %5522 = vmatpush1.msra.mxu0 0.0
  %5523 = vmatprep.subr.mxu0 0.0
  %5524 = vmatpush1.msra.mxu0 0.0
  %5525 = vmatprep.subr.mxu0 0.0
  %5526 = vmatpush1.msra.mxu0 0.0
  %5527 = vmatprep.mubr.f32.mxu0 0.0
  %5528 = vmatmul.mubr.f32.gmra.mrb[0].mxu0 %v5073
  %v5529 = vpop.f32.mrb[0].mxu0
  %v5530 = vadd.f32 0.0, %v5529
  %v5531 = vpop.f32.mrb[0].mxu0
  %v5532 = vadd.f32 0.0, %v5531
  %5533 = vmatprep.mubr.f32.mxu0 0.0
  %5534 = vmatmul.mubr.f32.gmra.mrb[0].mxu0 %v5076
  %v5535 = vpop.f32.mrb[0].mxu0
  %v5536 = vadd.f32 0.0, %v5535
  %v5537 = vpop.f32.mrb[0].mxu0
  %v5538 = vadd.f32 0.0, %v5537
  %5539 = vdwg.mxu0
  %5540 = vmatprep.subr.mxu0 %v4749
  %5541 = vmatpush1.msra.mxu0 %v4753
  %5542 = vmatprep.subr.mxu0 %v4750
  %5543 = vmatpush1.msra.mxu0 %v4754
  %5544 = vmatprep.subr.mxu0 %v4751
  %5545 = vmatpush1.msra.mxu0 %v4755
  %5546 = vmatprep.subr.mxu0 %v4752
  %5547 = vmatpush1.msra.mxu0 %v4756
  %5548 = vmatprep.subr.mxu0 %v4466
  %5549 = vmatpush1.msra.mxu0 %v4465
  %5550 = vmatprep.subr.mxu0 %v4488
  %5551 = vmatpush1.msra.mxu0 %v4487
  %5552 = vmatprep.subr.mxu0 %v4510
  %5553 = vmatpush1.msra.mxu0 %v4509
  %5554 = vmatprep.subr.mxu0 %v4532
  %5555 = vmatpush1.msra.mxu0 %v4531
  %5556 = vmatprep.subr.mxu0 %v5009
  %5557 = vmatpush1.msra.mxu0 %v5013
  %5558 = vmatprep.subr.mxu0 %v5010
  %5559 = vmatpush1.msra.mxu0 %v5014
  %5560 = vmatprep.subr.mxu0 %v5011
  %5561 = vmatpush1.msra.mxu0 %v5015
  %5562 = vmatprep.subr.mxu0 %v5012
  %5563 = vmatpush1.msra.mxu0 %v5016
  %5564 = vmatprep.subr.mxu0 0.0
  %5565 = vmatpush1.msra.mxu0 0.0
  %5566 = vmatprep.subr.mxu0 0.0
  %5567 = vmatpush1.msra.mxu0 0.0
  %5568 = vmatprep.subr.mxu0 0.0
  %5569 = vmatpush1.msra.mxu0 0.0
  %5570 = vmatprep.subr.mxu0 0.0
  %5571 = vmatpush1.msra.mxu0 0.0
  %5572 = vmatprep.subr.mxu0 0.0
  %5573 = vmatpush1.msra.mxu0 0.0
  %5574 = vmatprep.subr.mxu0 0.0
  %5575 = vmatpush1.msra.mxu0 0.0
  %5576 = vmatprep.subr.mxu0 0.0
  %5577 = vmatpush1.msra.mxu0 0.0
  %5578 = vmatprep.subr.mxu0 0.0
  %5579 = vmatpush1.msra.mxu0 0.0
  %5580 = vmatprep.subr.mxu0 0.0
  %5581 = vmatpush1.msra.mxu0 0.0
  %5582 = vmatprep.subr.mxu0 0.0
  %5583 = vmatpush1.msra.mxu0 0.0
  %5584 = vmatprep.subr.mxu0 0.0
  %5585 = vmatpush1.msra.mxu0 0.0
  %5586 = vmatprep.subr.mxu0 0.0
  %5587 = vmatpush1.msra.mxu0 0.0
  %5588 = vmatprep.subr.mxu0 0.0
  %5589 = vmatpush1.msra.mxu0 0.0
  %5590 = vmatprep.subr.mxu0 0.0
  %5591 = vmatpush1.msra.mxu0 0.0
  %5592 = vmatprep.subr.mxu0 0.0
  %5593 = vmatpush1.msra.mxu0 0.0
  %5594 = vmatprep.subr.mxu0 0.0
  %5595 = vmatpush1.msra.mxu0 0.0
  %5596 = vmatprep.subr.mxu0 0.0
  %5597 = vmatpush1.msra.mxu0 0.0
  %5598 = vmatprep.subr.mxu0 0.0
  %5599 = vmatpush1.msra.mxu0 0.0
  %5600 = vmatprep.subr.mxu0 0.0
  %5601 = vmatpush1.msra.mxu0 0.0
  %5602 = vmatprep.subr.mxu0 0.0
  %5603 = vmatpush1.msra.mxu0 0.0
  %5604 = vmatprep.mubr.f32.mxu0 0.0
  %5605 = vmatmul.mubr.f32.gmra.mrb[0].mxu0 %v5073
  %v5606 = vpop.f32.mrb[0].mxu0
  %v5607 = vadd.f32 0.0, %v5606
  %v5608 = vpop.f32.mrb[0].mxu0
  %v5609 = vadd.f32 0.0, %v5608
  %5610 = vmatprep.mubr.f32.mxu0 0.0
  %5611 = vmatmul.mubr.f32.gmra.mrb[0].mxu0 %v5076
  %v5612 = vpop.f32.mrb[0].mxu0
  %v5613 = vadd.f32 0.0, %v5612
  %v5614 = vpop.f32.mrb[0].mxu0
  %v5615 = vadd.f32 0.0, %v5614
  %5616 = vdwg.mxu0
  %5617 = vmatprep.subr.mxu0 %v4741
  %5618 = vmatpush1.msra.mxu0 %v4745
  %5619 = vmatprep.subr.mxu0 %v4742
  %5620 = vmatpush1.msra.mxu0 %v4746
  %5621 = vmatprep.subr.mxu0 %v4743
  %5622 = vmatpush1.msra.mxu0 %v4747
  %5623 = vmatprep.subr.mxu0 %v4744
  %5624 = vmatpush1.msra.mxu0 %v4748
  %5625 = vmatprep.subr.mxu0 %v4468
  %5626 = vmatpush1.msra.mxu0 %v4467
  %5627 = vmatprep.subr.mxu0 %v4490
  %5628 = vmatpush1.msra.mxu0 %v4489
  %5629 = vmatprep.subr.mxu0 %v4512
  %5630 = vmatpush1.msra.mxu0 %v4511
  %5631 = vmatprep.subr.mxu0 %v4534
  %5632 = vmatpush1.msra.mxu0 %v4533
  %5633 = vmatprep.subr.mxu0 %v5001
  %5634 = vmatpush1.msra.mxu0 %v5005
  %5635 = vmatprep.subr.mxu0 %v5002
  %5636 = vmatpush1.msra.mxu0 %v5006
  %5637 = vmatprep.subr.mxu0 %v5003
  %5638 = vmatpush1.msra.mxu0 %v5007
  %5639 = vmatprep.subr.mxu0 %v5004
  %5640 = vmatpush1.msra.mxu0 %v5008
  %5641 = vmatprep.subr.mxu0 0.0
  %5642 = vmatpush1.msra.mxu0 0.0
  %5643 = vmatprep.subr.mxu0 0.0
  %5644 = vmatpush1.msra.mxu0 0.0
  %5645 = vmatprep.subr.mxu0 0.0
  %5646 = vmatpush1.msra.mxu0 0.0
  %5647 = vmatprep.subr.mxu0 0.0
  %5648 = vmatpush1.msra.mxu0 0.0
  %5649 = vmatprep.subr.mxu0 0.0
  %5650 = vmatpush1.msra.mxu0 0.0
  %5651 = vmatprep.subr.mxu0 0.0
  %5652 = vmatpush1.msra.mxu0 0.0
  %5653 = vmatprep.subr.mxu0 0.0
  %5654 = vmatpush1.msra.mxu0 0.0
  %5655 = vmatprep.subr.mxu0 0.0
  %5656 = vmatpush1.msra.mxu0 0.0
  %5657 = vmatprep.subr.mxu0 0.0
  %5658 = vmatpush1.msra.mxu0 0.0
  %5659 = vmatprep.subr.mxu0 0.0
  %5660 = vmatpush1.msra.mxu0 0.0
  %5661 = vmatprep.subr.mxu0 0.0
  %5662 = vmatpush1.msra.mxu0 0.0
  %5663 = vmatprep.subr.mxu0 0.0
  %5664 = vmatpush1.msra.mxu0 0.0
  %5665 = vmatprep.subr.mxu0 0.0
  %5666 = vmatpush1.msra.mxu0 0.0
  %5667 = vmatprep.subr.mxu0 0.0
  %5668 = vmatpush1.msra.mxu0 0.0
  %5669 = vmatprep.subr.mxu0 0.0
  %5670 = vmatpush1.msra.mxu0 0.0
  %5671 = vmatprep.subr.mxu0 0.0
  %5672 = vmatpush1.msra.mxu0 0.0
  %5673 = vmatprep.subr.mxu0 0.0
  %5674 = vmatpush1.msra.mxu0 0.0
  %5675 = vmatprep.subr.mxu0 0.0
  %5676 = vmatpush1.msra.mxu0 0.0
  %5677 = vmatprep.subr.mxu0 0.0
  %5678 = vmatpush1.msra.mxu0 0.0
  %5679 = vmatprep.subr.mxu0 0.0
  %5680 = vmatpush1.msra.mxu0 0.0
  %5681 = vmatprep.mubr.f32.mxu0 0.0
  %5682 = vmatmul.mubr.f32.gmra.mrb[0].mxu0 %v5073
  %v5683 = vpop.f32.mrb[0].mxu0
  %v5684 = vadd.f32 0.0, %v5683
  %v5685 = vpop.f32.mrb[0].mxu0
  %v5686 = vadd.f32 0.0, %v5685
  %5687 = vmatprep.mubr.f32.mxu0 0.0
  %5688 = vmatmul.mubr.f32.gmra.mrb[0].mxu0 %v5076
  %v5689 = vpop.f32.mrb[0].mxu0
  %v5690 = vadd.f32 0.0, %v5689
  %v5691 = vpop.f32.mrb[0].mxu0
  %v5692 = vadd.f32 0.0, %v5691
  %5693 = vdwg.mxu0
  %5694 = vmatprep.subr.mxu0 %v4733
  %5695 = vmatpush1.msra.mxu0 %v4737
  %5696 = vmatprep.subr.mxu0 %v4734
  %5697 = vmatpush1.msra.mxu0 %v4738
  %5698 = vmatprep.subr.mxu0 %v4735
  %5699 = vmatpush1.msra.mxu0 %v4739
  %5700 = vmatprep.subr.mxu0 %v4736
  %5701 = vmatpush1.msra.mxu0 %v4740
  %5702 = vmatprep.subr.mxu0 %v4470
  %5703 = vmatpush1.msra.mxu0 %v4469
  %5704 = vmatprep.subr.mxu0 %v4492
  %5705 = vmatpush1.msra.mxu0 %v4491
  %5706 = vmatprep.subr.mxu0 %v4514
  %5707 = vmatpush1.msra.mxu0 %v4513
  %5708 = vmatprep.subr.mxu0 %v4536
  %5709 = vmatpush1.msra.mxu0 %v4535
  %5710 = vmatprep.subr.mxu0 %v4993
  %5711 = vmatpush1.msra.mxu0 %v4997
  %5712 = vmatprep.subr.mxu0 %v4994
  %5713 = vmatpush1.msra.mxu0 %v4998
  %5714 = vmatprep.subr.mxu0 %v4995
  %5715 = vmatpush1.msra.mxu0 %v4999
  %5716 = vmatprep.subr.mxu0 %v4996
  %5717 = vmatpush1.msra.mxu0 %v5000
  %5718 = vmatprep.subr.mxu0 0.0
  %5719 = vmatpush1.msra.mxu0 0.0
  %5720 = vmatprep.subr.mxu0 0.0
  %5721 = vmatpush1.msra.mxu0 0.0
  %5722 = vmatprep.subr.mxu0 0.0
  %5723 = vmatpush1.msra.mxu0 0.0
  %5724 = vmatprep.subr.mxu0 0.0
  %5725 = vmatpush1.msra.mxu0 0.0
  %5726 = vmatprep.subr.mxu0 0.0
  %5727 = vmatpush1.msra.mxu0 0.0
  %5728 = vmatprep.subr.mxu0 0.0
  %5729 = vmatpush1.msra.mxu0 0.0
  %5730 = vmatprep.subr.mxu0 0.0
  %5731 = vmatpush1.msra.mxu0 0.0
  %5732 = vmatprep.subr.mxu0 0.0
  %5733 = vmatpush1.msra.mxu0 0.0
  %5734 = vmatprep.subr.mxu0 0.0
  %5735 = vmatpush1.msra.mxu0 0.0
  %5736 = vmatprep.subr.mxu0 0.0
  %5737 = vmatpush1.msra.mxu0 0.0
  %5738 = vmatprep.subr.mxu0 0.0
  %5739 = vmatpush1.msra.mxu0 0.0
  %5740 = vmatprep.subr.mxu0 0.0
  %5741 = vmatpush1.msra.mxu0 0.0
  %5742 = vmatprep.subr.mxu0 0.0
  %5743 = vmatpush1.msra.mxu0 0.0
  %5744 = vmatprep.subr.mxu0 0.0
  %5745 = vmatpush1.msra.mxu0 0.0
  %5746 = vmatprep.subr.mxu0 0.0
  %5747 = vmatpush1.msra.mxu0 0.0
  %5748 = vmatprep.subr.mxu0 0.0
  %5749 = vmatpush1.msra.mxu0 0.0
  %5750 = vmatprep.subr.mxu0 0.0
  %5751 = vmatpush1.msra.mxu0 0.0
  %5752 = vmatprep.subr.mxu0 0.0
  %5753 = vmatpush1.msra.mxu0 0.0
  %5754 = vmatprep.subr.mxu0 0.0
  %5755 = vmatpush1.msra.mxu0 0.0
  %5756 = vmatprep.subr.mxu0 0.0
  %5757 = vmatpush1.msra.mxu0 0.0
  %5758 = vmatprep.mubr.f32.mxu0 0.0
  %5759 = vmatmul.mubr.f32.gmra.mrb[0].mxu0 %v5073
  %v5760 = vpop.f32.mrb[0].mxu0
  %v5761 = vadd.f32 0.0, %v5760
  %v5762 = vpop.f32.mrb[0].mxu0
  %v5763 = vadd.f32 0.0, %v5762
  %5764 = vmatprep.mubr.f32.mxu0 0.0
  %5765 = vmatmul.mubr.f32.gmra.mrb[0].mxu0 %v5076
  %v5766 = vpop.f32.mrb[0].mxu0
  %v5767 = vadd.f32 0.0, %v5766
  %v5768 = vpop.f32.mrb[0].mxu0
  %v5769 = vadd.f32 0.0, %v5768
  %5770 = vdwg.mxu0
  %5771 = vmatprep.subr.mxu0 %v4725
  %5772 = vmatpush1.msra.mxu0 %v4729
  %5773 = vmatprep.subr.mxu0 %v4726
  %5774 = vmatpush1.msra.mxu0 %v4730
  %5775 = vmatprep.subr.mxu0 %v4727
  %5776 = vmatpush1.msra.mxu0 %v4731
  %5777 = vmatprep.subr.mxu0 %v4728
  %5778 = vmatpush1.msra.mxu0 %v4732
  %5779 = vmatprep.subr.mxu0 %v4472
  %5780 = vmatpush1.msra.mxu0 %v4471
  %5781 = vmatprep.subr.mxu0 %v4494
  %5782 = vmatpush1.msra.mxu0 %v4493
  %5783 = vmatprep.subr.mxu0 %v4516
  %5784 = vmatpush1.msra.mxu0 %v4515
  %5785 = vmatprep.subr.mxu0 %v4538
  %5786 = vmatpush1.msra.mxu0 %v4537
  %5787 = vmatprep.subr.mxu0 %v4985
  %5788 = vmatpush1.msra.mxu0 %v4989
  %5789 = vmatprep.subr.mxu0 %v4986
  %5790 = vmatpush1.msra.mxu0 %v4990
  %5791 = vmatprep.subr.mxu0 %v4987
  %5792 = vmatpush1.msra.mxu0 %v4991
  %5793 = vmatprep.subr.mxu0 %v4988
  %5794 = vmatpush1.msra.mxu0 %v4992
  %5795 = vmatprep.subr.mxu0 0.0
  %5796 = vmatpush1.msra.mxu0 0.0
  %5797 = vmatprep.subr.mxu0 0.0
  %5798 = vmatpush1.msra.mxu0 0.0
  %5799 = vmatprep.subr.mxu0 0.0
  %5800 = vmatpush1.msra.mxu0 0.0
  %5801 = vmatprep.subr.mxu0 0.0
  %5802 = vmatpush1.msra.mxu0 0.0
  %5803 = vmatprep.subr.mxu0 0.0
  %5804 = vmatpush1.msra.mxu0 0.0
  %5805 = vmatprep.subr.mxu0 0.0
  %5806 = vmatpush1.msra.mxu0 0.0
  %5807 = vmatprep.subr.mxu0 0.0
  %5808 = vmatpush1.msra.mxu0 0.0
  %5809 = vmatprep.subr.mxu0 0.0
  %5810 = vmatpush1.msra.mxu0 0.0
  %5811 = vmatprep.subr.mxu0 0.0
  %5812 = vmatpush1.msra.mxu0 0.0
  %5813 = vmatprep.subr.mxu0 0.0
  %5814 = vmatpush1.msra.mxu0 0.0
  %5815 = vmatprep.subr.mxu0 0.0
  %5816 = vmatpush1.msra.mxu0 0.0
  %5817 = vmatprep.subr.mxu0 0.0
  %5818 = vmatpush1.msra.mxu0 0.0
  %5819 = vmatprep.subr.mxu0 0.0
  %5820 = vmatpush1.msra.mxu0 0.0
  %5821 = vmatprep.subr.mxu0 0.0
  %5822 = vmatpush1.msra.mxu0 0.0
  %5823 = vmatprep.subr.mxu0 0.0
  %5824 = vmatpush1.msra.mxu0 0.0
  %5825 = vmatprep.subr.mxu0 0.0
  %5826 = vmatpush1.msra.mxu0 0.0
  %5827 = vmatprep.subr.mxu0 0.0
  %5828 = vmatpush1.msra.mxu0 0.0
  %5829 = vmatprep.subr.mxu0 0.0
  %5830 = vmatpush1.msra.mxu0 0.0
  %5831 = vmatprep.subr.mxu0 0.0
  %5832 = vmatpush1.msra.mxu0 0.0
  %5833 = vmatprep.subr.mxu0 0.0
  %5834 = vmatpush1.msra.mxu0 0.0
  %5835 = vmatprep.mubr.f32.mxu0 0.0
  %5836 = vmatmul.mubr.f32.gmra.mrb[0].mxu0 %v5073
  %v5837 = vpop.f32.mrb[0].mxu0
  %v5838 = vadd.f32 0.0, %v5837
  %v5839 = vpop.f32.mrb[0].mxu0
  %v5840 = vadd.f32 0.0, %v5839
  %5841 = vmatprep.mubr.f32.mxu0 0.0
  %5842 = vmatmul.mubr.f32.gmra.mrb[0].mxu0 %v5076
  %v5843 = vpop.f32.mrb[0].mxu0
  %v5844 = vadd.f32 0.0, %v5843
  %v5845 = vpop.f32.mrb[0].mxu0
  %v5846 = vadd.f32 0.0, %v5845
  %5847 = vdwg.mxu0
  %5848 = vmatprep.subr.mxu0 %v4717
  %5849 = vmatpush1.msra.mxu0 %v4721
  %5850 = vmatprep.subr.mxu0 %v4718
  %5851 = vmatpush1.msra.mxu0 %v4722
  %5852 = vmatprep.subr.mxu0 %v4719
  %5853 = vmatpush1.msra.mxu0 %v4723
  %5854 = vmatprep.subr.mxu0 %v4720
  %5855 = vmatpush1.msra.mxu0 %v4724
  %5856 = vmatprep.subr.mxu0 %v4474
  %5857 = vmatpush1.msra.mxu0 %v4473
  %5858 = vmatprep.subr.mxu0 %v4496
  %5859 = vmatpush1.msra.mxu0 %v4495
  %5860 = vmatprep.subr.mxu0 %v4518
  %5861 = vmatpush1.msra.mxu0 %v4517
  %5862 = vmatprep.subr.mxu0 %v4540
  %5863 = vmatpush1.msra.mxu0 %v4539
  %5864 = vmatprep.subr.mxu0 %v5065
  %5865 = vmatpush1.msra.mxu0 %v4981
  %5866 = vmatprep.subr.mxu0 %v5066
  %5867 = vmatpush1.msra.mxu0 %v4982
  %5868 = vmatprep.subr.mxu0 %v5067
  %5869 = vmatpush1.msra.mxu0 %v4983
  %5870 = vmatprep.subr.mxu0 %v5068
  %5871 = vmatpush1.msra.mxu0 %v4984
  %5872 = vmatprep.subr.mxu0 0.0
  %5873 = vmatpush1.msra.mxu0 0.0
  %5874 = vmatprep.subr.mxu0 0.0
  %5875 = vmatpush1.msra.mxu0 0.0
  %5876 = vmatprep.subr.mxu0 0.0
  %5877 = vmatpush1.msra.mxu0 0.0
  %5878 = vmatprep.subr.mxu0 0.0
  %5879 = vmatpush1.msra.mxu0 0.0
  %5880 = vmatprep.subr.mxu0 0.0
  %5881 = vmatpush1.msra.mxu0 0.0
  %5882 = vmatprep.subr.mxu0 0.0
  %5883 = vmatpush1.msra.mxu0 0.0
  %5884 = vmatprep.subr.mxu0 0.0
  %5885 = vmatpush1.msra.mxu0 0.0
  %5886 = vmatprep.subr.mxu0 0.0
  %5887 = vmatpush1.msra.mxu0 0.0
  %5888 = vmatprep.subr.mxu0 0.0
  %5889 = vmatpush1.msra.mxu0 0.0
  %5890 = vmatprep.subr.mxu0 0.0
  %5891 = vmatpush1.msra.mxu0 0.0
  %5892 = vmatprep.subr.mxu0 0.0
  %5893 = vmatpush1.msra.mxu0 0.0
  %5894 = vmatprep.subr.mxu0 0.0
  %5895 = vmatpush1.msra.mxu0 0.0
  %5896 = vmatprep.subr.mxu0 0.0
  %5897 = vmatpush1.msra.mxu0 0.0
  %5898 = vmatprep.subr.mxu0 0.0
  %5899 = vmatpush1.msra.mxu0 0.0
  %5900 = vmatprep.subr.mxu0 0.0
  %5901 = vmatpush1.msra.mxu0 0.0
  %5902 = vmatprep.subr.mxu0 0.0
  %5903 = vmatpush1.msra.mxu0 0.0
  %5904 = vmatprep.subr.mxu0 0.0
  %5905 = vmatpush1.msra.mxu0 0.0
  %5906 = vmatprep.subr.mxu0 0.0
  %5907 = vmatpush1.msra.mxu0 0.0
  %5908 = vmatprep.subr.mxu0 0.0
  %5909 = vmatpush1.msra.mxu0 0.0
  %5910 = vmatprep.subr.mxu0 0.0
  %5911 = vmatpush1.msra.mxu0 0.0
  %5912 = vmatprep.mubr.f32.mxu0 0.0
  %5913 = vmatmul.mubr.f32.gmra.mrb[0].mxu0 %v5073
  %v5914 = vpop.f32.mrb[0].mxu0
  %v5915 = vadd.f32 0.0, %v5914
  %v5916 = vpop.f32.mrb[0].mxu0
  %v5917 = vadd.f32 0.0, %v5916
  %5918 = vmatprep.mubr.f32.mxu0 0.0
  %5919 = vmatmul.mubr.f32.gmra.mrb[0].mxu0 %v5076
  %v5920 = vpop.f32.mrb[0].mxu0
  %v5921 = vadd.f32 0.0, %v5920
  %v5922 = vpop.f32.mrb[0].mxu0
  %v5923 = vadd.f32 0.0, %v5922
  %5924 = vdwg.mxu0
  %v5925 = vmul.f32 %v5145, %v1346
  %v5926 = vmul.f32 %v5147, %v1350
  %v5927 = vmul.f32 %v5222, %v1354
  %v5928 = vmul.f32 %v5224, %v1358
  %v5929 = vmul.f32 %v5299, %v1362
  %v5930 = vmul.f32 %v5301, %v1366
  %v5931 = vmul.f32 %v5376, %v1370
  %v5932 = vmul.f32 %v5378, %v1374
  %v5933 = vmul.f32 %v5453, %v1378
  %v5934 = vmul.f32 %v5455, %v1382
  %v5935 = vmul.f32 %v5530, %v1386
  %v5936 = vmul.f32 %v5532, %v1390
  %v5937 = vmul.f32 %v5607, %v1394
  %v5938 = vmul.f32 %v5609, %v1398
  %v5939 = vmul.f32 %v5684, %v1402
  %v5940 = vmul.f32 %v5686, %v1406
  %v5941 = vmul.f32 %v5761, %v1410
  %v5942 = vmul.f32 %v5763, %v1414
  %v5943 = vmul.f32 %v5838, %v1418
  %v5944 = vmul.f32 %v5840, %v1422
  %v5945 = vmul.f32 %v5915, %v1426
  %v5946 = vmul.f32 %v5917, %v1430
  %v5947 = vmul.f32 %v5151, %v1346
  %v5948 = vmul.f32 %v5153, %v1350
  %v5949 = vmul.f32 %v5228, %v1354
  %v5950 = vmul.f32 %v5230, %v1358
  %v5951 = vmul.f32 %v5305, %v1362
  %v5952 = vmul.f32 %v5307, %v1366
  %v5953 = vmul.f32 %v5382, %v1370
  %v5954 = vmul.f32 %v5384, %v1374
  %v5955 = vmul.f32 %v5459, %v1378
  %v5956 = vmul.f32 %v5461, %v1382
  %v5957 = vmul.f32 %v5536, %v1386
  %v5958 = vmul.f32 %v5538, %v1390
  %v5959 = vmul.f32 %v5613, %v1394
  %v5960 = vmul.f32 %v5615, %v1398
  %v5961 = vmul.f32 %v5690, %v1402
  %v5962 = vmul.f32 %v5692, %v1406
  %v5963 = vmul.f32 %v5767, %v1410
  %v5964 = vmul.f32 %v5769, %v1414
  %v5965 = vmul.f32 %v5844, %v1418
  %v5966 = vmul.f32 %v5846, %v1422
  %v5967 = vmul.f32 %v5921, %v1426
  %v5968 = vmul.f32 %v5923, %v1430
  %v5969 = vadd.f32 %v5925, %v5926
  %v5970 = vadd.f32 %v5969, %v5927
  %v5971 = vadd.f32 %v5970, %v5928
  %v5972 = vadd.f32 %v5971, %v5929
  %v5973 = vadd.f32 %v5972, %v5930
  %v5974 = vadd.f32 %v5973, %v5931
  %v5975 = vadd.f32 %v5974, %v5932
  %v5976 = vadd.f32 %v5975, %v5933
  %v5977 = vadd.f32 %v5976, %v5934
  %v5978 = vadd.f32 %v5977, %v5935
  %v5979 = vadd.f32 %v5978, %v5936
  %v5980 = vadd.f32 %v5979, %v5937
  %v5981 = vadd.f32 %v5980, %v5938
  %v5982 = vadd.f32 %v5981, %v5939
  %v5983 = vadd.f32 %v5982, %v5940
  %v5984 = vadd.f32 %v5983, %v5941
  %v5985 = vadd.f32 %v5984, %v5942
  %v5986 = vadd.f32 %v5985, %v5943
  %v5987 = vadd.f32 %v5986, %v5944
  %v5988 = vadd.f32 %v5987, %v5945
  %v5989 = vadd.f32 %v5988, %v5946
  %5990 = vadd.xlane.f32.xlu0 %v5989
  %v5991 = vpop.xlane.xlu0 %5990
  %vm5992 = vcmask 1043456
  %v5993 = vsel %vm5992, %v5947, 0.0
  %v5994 = vsel %vm5992, %v5948, 0.0
  %v5995 = vadd.f32 %v5993, %v5994
  %v5996 = vsel %vm5992, %v5949, 0.0
  %v5997 = vadd.f32 %v5995, %v5996
  %v5998 = vsel %vm5992, %v5950, 0.0
  %v5999 = vadd.f32 %v5997, %v5998
  %v6000 = vsel %vm5992, %v5951, 0.0
  %v6001 = vadd.f32 %v5999, %v6000
  %v6002 = vsel %vm5992, %v5952, 0.0
  %v6003 = vadd.f32 %v6001, %v6002
  %v6004 = vsel %vm5992, %v5953, 0.0
  %v6005 = vadd.f32 %v6003, %v6004
  %v6006 = vsel %vm5992, %v5954, 0.0
  %v6007 = vadd.f32 %v6005, %v6006
  %v6008 = vsel %vm5992, %v5955, 0.0
  %v6009 = vadd.f32 %v6007, %v6008
  %v6010 = vsel %vm5992, %v5956, 0.0
  %v6011 = vadd.f32 %v6009, %v6010
  %v6012 = vsel %vm5992, %v5957, 0.0
  %v6013 = vadd.f32 %v6011, %v6012
  %v6014 = vsel %vm5992, %v5958, 0.0
  %v6015 = vadd.f32 %v6013, %v6014
  %v6016 = vsel %vm5992, %v5959, 0.0
  %v6017 = vadd.f32 %v6015, %v6016
  %v6018 = vsel %vm5992, %v5960, 0.0
  %v6019 = vadd.f32 %v6017, %v6018
  %v6020 = vsel %vm5992, %v5961, 0.0
  %v6021 = vadd.f32 %v6019, %v6020
  %v6022 = vsel %vm5992, %v5962, 0.0
  %v6023 = vadd.f32 %v6021, %v6022
  %v6024 = vsel %vm5992, %v5963, 0.0
  %v6025 = vadd.f32 %v6023, %v6024
  %v6026 = vsel %vm5992, %v5964, 0.0
  %v6027 = vadd.f32 %v6025, %v6026
  %v6028 = vsel %vm5992, %v5965, 0.0
  %v6029 = vadd.f32 %v6027, %v6028
  %v6030 = vsel %vm5992, %v5966, 0.0
  %v6031 = vadd.f32 %v6029, %v6030
  %v6032 = vsel %vm5992, %v5967, 0.0
  %v6033 = vadd.f32 %v6031, %v6032
  %v6034 = vsel %vm5992, %v5968, 0.0
  %v6035 = vadd.f32 %v6033, %v6034
  %6036 = vadd.xlane.f32.xlu0 %v6035
  %v6037 = vpop.xlane.xlu0 %6036
  %v6038 = vmul.f32 %v5925, %v5925
  %v6039 = vmul.f32 %v5926, %v5926
  %v6040 = vmul.f32 %v5927, %v5927
  %v6041 = vmul.f32 %v5928, %v5928
  %v6042 = vmul.f32 %v5929, %v5929
  %v6043 = vmul.f32 %v5930, %v5930
  %v6044 = vmul.f32 %v5931, %v5931
  %v6045 = vmul.f32 %v5932, %v5932
  %v6046 = vmul.f32 %v5933, %v5933
  %v6047 = vmul.f32 %v5934, %v5934
  %v6048 = vmul.f32 %v5935, %v5935
  %v6049 = vmul.f32 %v5936, %v5936
  %v6050 = vmul.f32 %v5937, %v5937
  %v6051 = vmul.f32 %v5938, %v5938
  %v6052 = vmul.f32 %v5939, %v5939
  %v6053 = vmul.f32 %v5940, %v5940
  %v6054 = vmul.f32 %v5941, %v5941
  %v6055 = vmul.f32 %v5942, %v5942
  %v6056 = vmul.f32 %v5943, %v5943
  %v6057 = vmul.f32 %v5944, %v5944
  %v6058 = vmul.f32 %v5945, %v5945
  %v6059 = vmul.f32 %v5946, %v5946
  %v6060 = vmul.f32 %v5947, %v5947
  %v6061 = vmul.f32 %v5948, %v5948
  %v6062 = vmul.f32 %v5949, %v5949
  %v6063 = vmul.f32 %v5950, %v5950
  %v6064 = vmul.f32 %v5951, %v5951
  %v6065 = vmul.f32 %v5952, %v5952
  %v6066 = vmul.f32 %v5953, %v5953
  %v6067 = vmul.f32 %v5954, %v5954
  %v6068 = vmul.f32 %v5955, %v5955
  %v6069 = vmul.f32 %v5956, %v5956
  %v6070 = vmul.f32 %v5957, %v5957
  %v6071 = vmul.f32 %v5958, %v5958
  %v6072 = vmul.f32 %v5959, %v5959
  %v6073 = vmul.f32 %v5960, %v5960
  %v6074 = vmul.f32 %v5961, %v5961
  %v6075 = vmul.f32 %v5962, %v5962
  %v6076 = vmul.f32 %v5963, %v5963
  %v6077 = vmul.f32 %v5964, %v5964
  %v6078 = vmul.f32 %v5965, %v5965
  %v6079 = vmul.f32 %v5966, %v5966
  %v6080 = vmul.f32 %v5967, %v5967
  %v6081 = vmul.f32 %v5968, %v5968
  %v6082 = vadd.f32 %v6038, %v6039
  %v6083 = vadd.f32 %v6082, %v6040
  %v6084 = vadd.f32 %v6083, %v6041
  %v6085 = vadd.f32 %v6084, %v6042
  %v6086 = vadd.f32 %v6085, %v6043
  %v6087 = vadd.f32 %v6086, %v6044
  %v6088 = vadd.f32 %v6087, %v6045
  %v6089 = vadd.f32 %v6088, %v6046
  %v6090 = vadd.f32 %v6089, %v6047
  %v6091 = vadd.f32 %v6090, %v6048
  %v6092 = vadd.f32 %v6091, %v6049
  %v6093 = vadd.f32 %v6092, %v6050
  %v6094 = vadd.f32 %v6093, %v6051
  %v6095 = vadd.f32 %v6094, %v6052
  %v6096 = vadd.f32 %v6095, %v6053
  %v6097 = vadd.f32 %v6096, %v6054
  %v6098 = vadd.f32 %v6097, %v6055
  %v6099 = vadd.f32 %v6098, %v6056
  %v6100 = vadd.f32 %v6099, %v6057
  %v6101 = vadd.f32 %v6100, %v6058
  %v6102 = vadd.f32 %v6101, %v6059
  %6103 = vadd.xlane.f32.xlu0 %v6102
  %v6104 = vpop.xlane.xlu0 %6103
  %v6105 = vsel %vm5992, %v6060, 0.0
  %v6106 = vsel %vm5992, %v6061, 0.0
  %v6107 = vadd.f32 %v6105, %v6106
  %v6108 = vsel %vm5992, %v6062, 0.0
  %v6109 = vadd.f32 %v6107, %v6108
  %v6110 = vsel %vm5992, %v6063, 0.0
  %v6111 = vadd.f32 %v6109, %v6110
  %v6112 = vsel %vm5992, %v6064, 0.0
  %v6113 = vadd.f32 %v6111, %v6112
  %v6114 = vsel %vm5992, %v6065, 0.0
  %v6115 = vadd.f32 %v6113, %v6114
  %v6116 = vsel %vm5992, %v6066, 0.0
  %v6117 = vadd.f32 %v6115, %v6116
  %v6118 = vsel %vm5992, %v6067, 0.0
  %v6119 = vadd.f32 %v6117, %v6118
  %v6120 = vsel %vm5992, %v6068, 0.0
  %v6121 = vadd.f32 %v6119, %v6120
  %v6122 = vsel %vm5992, %v6069, 0.0
  %v6123 = vadd.f32 %v6121, %v6122
  %v6124 = vsel %vm5992, %v6070, 0.0
  %v6125 = vadd.f32 %v6123, %v6124
  %v6126 = vsel %vm5992, %v6071, 0.0
  %v6127 = vadd.f32 %v6125, %v6126
  %v6128 = vsel %vm5992, %v6072, 0.0
  %v6129 = vadd.f32 %v6127, %v6128
  %v6130 = vsel %vm5992, %v6073, 0.0
  %v6131 = vadd.f32 %v6129, %v6130
  %v6132 = vsel %vm5992, %v6074, 0.0
  %v6133 = vadd.f32 %v6131, %v6132
  %v6134 = vsel %vm5992, %v6075, 0.0
  %v6135 = vadd.f32 %v6133, %v6134
  %v6136 = vsel %vm5992, %v6076, 0.0
  %v6137 = vadd.f32 %v6135, %v6136
  %v6138 = vsel %vm5992, %v6077, 0.0
  %v6139 = vadd.f32 %v6137, %v6138
  %v6140 = vsel %vm5992, %v6078, 0.0
  %v6141 = vadd.f32 %v6139, %v6140
  %v6142 = vsel %vm5992, %v6079, 0.0
  %v6143 = vadd.f32 %v6141, %v6142
  %v6144 = vsel %vm5992, %v6080, 0.0
  %v6145 = vadd.f32 %v6143, %v6144
  %v6146 = vsel %vm5992, %v6081, 0.0
  %v6147 = vadd.f32 %v6145, %v6146
  %6148 = vadd.xlane.f32.xlu0 %v6147
  %v6149 = vpop.xlane.xlu0 %6148
  %v6150 = vmul.f32 %v5991, 0.0003660322
  %v6151 = vmul.f32 %v6037, 0.0003660322
  %v6152 = vmul.f32 %v6104, 0.0003660322
  %v6153 = vmul.f32 %v6149, 0.0003660322
  %v6154 = vmul.f32 %v6150, %v6150
  %v6155 = vmul.f32 %v6151, %v6151
  %v6156 = vsub.f32 %v6152, %v6154
  %v6157 = vsub.f32 %v6153, %v6155
  %v6158 = vmax.f32 %v6156, 0.0
  %v6159 = vmax.f32 %v6157, 0.0
  %v6160 = vadd.f32 %v6158, 1e-05
  %v6161 = vadd.f32 %v6159, 1e-05
  %v6162 = vrsqrt.pop %v6160
  %v6163 = vrsqrt.pop %v6161
  %v6164 = vld [vmem:[%s6] sm:$0xff]
  %v6165 = vld [vmem:[%s6 + $0x8] sm:$0xf]
  %v6166 = vmul.f32 %v6162, %v6164
  %v6167 = vmul.f32 %v6163, %v6165
  %v6168 = vld [vmem:[%s7] sm:$0xff]
  %v6169 = vld [vmem:[%s7 + $0x8] sm:$0xf]
  %v6170 = vmul.f32 %v6150, %v6166
  %v6171 = vmul.f32 %v6151, %v6167
  %v6172 = vsub.f32 %v6168, %v6170
  %v6173 = vsub.f32 %v6169, %v6171
  %6175 = vset.pattern.permute.xlu0 0
  %6176 = vperm.xlu0 %6175, %v6166
  %v6177 = vpop.permute.xlu0 %6176
  %6180 = vset.pattern.permute.xlu0 0
  %6181 = vperm.xlu0 %6180, %v6167
  %v6182 = vpop.permute.xlu0 %6181
  %v6184 = vmul.f32 %v5925, %v6177
  %v6185 = vmul.f32 %v5926, %v6177
  %v6186 = vmul.f32 %v5927, %v6177
  %v6187 = vmul.f32 %v5928, %v6177
  %v6188 = vmul.f32 %v5929, %v6177
  %v6189 = vmul.f32 %v5930, %v6177
  %v6190 = vmul.f32 %v5931, %v6177
  %v6191 = vmul.f32 %v5932, %v6177
  %v6192 = vmul.f32 %v5933, %v6177
  %v6193 = vmul.f32 %v5934, %v6177
  %v6194 = vmul.f32 %v5935, %v6177
  %v6195 = vmul.f32 %v5936, %v6177
  %v6196 = vmul.f32 %v5937, %v6177
  %v6197 = vmul.f32 %v5938, %v6177
  %v6198 = vmul.f32 %v5939, %v6177
  %v6199 = vmul.f32 %v5940, %v6177
  %v6200 = vmul.f32 %v5941, %v6177
  %v6201 = vmul.f32 %v5942, %v6177
  %v6202 = vmul.f32 %v5943, %v6177
  %v6203 = vmul.f32 %v5944, %v6177
  %v6204 = vmul.f32 %v5945, %v6177
  %v6205 = vmul.f32 %v5946, %v6177
  %v6206 = vmul.f32 %v5947, %v6182
  %v6207 = vmul.f32 %v5948, %v6182
  %v6208 = vmul.f32 %v5949, %v6182
  %v6209 = vmul.f32 %v5950, %v6182
  %v6210 = vmul.f32 %v5951, %v6182
  %v6211 = vmul.f32 %v5952, %v6182
  %v6212 = vmul.f32 %v5953, %v6182
  %v6213 = vmul.f32 %v5954, %v6182
  %v6214 = vmul.f32 %v5955, %v6182
  %v6215 = vmul.f32 %v5956, %v6182
  %v6216 = vmul.f32 %v5957, %v6182
  %v6217 = vmul.f32 %v5958, %v6182
  %v6218 = vmul.f32 %v5959, %v6182
  %v6219 = vmul.f32 %v5960, %v6182
  %v6220 = vmul.f32 %v5961, %v6182
  %v6221 = vmul.f32 %v5962, %v6182
  %v6222 = vmul.f32 %v5963, %v6182
  %v6223 = vmul.f32 %v5964, %v6182
  %v6224 = vmul.f32 %v5965, %v6182
  %v6225 = vmul.f32 %v5966, %v6182
  %v6226 = vmul.f32 %v5967, %v6182
  %v6227 = vmul.f32 %v5968, %v6182
  %6229 = vset.pattern.permute.xlu0 0
  %6230 = vperm.xlu0 %6229, %v6172
  %v6231 = vpop.permute.xlu0 %6230
  %6234 = vset.pattern.permute.xlu0 0
  %6235 = vperm.xlu0 %6234, %v6173
  %v6236 = vpop.permute.xlu0 %6235
  %v6238 = vadd.f32 %v6184, %v6231
  %v6239 = vadd.f32 %v6185, %v6231
  %v6240 = vadd.f32 %v6186, %v6231
  %v6241 = vadd.f32 %v6187, %v6231
  %v6242 = vadd.f32 %v6188, %v6231
  %v6243 = vadd.f32 %v6189, %v6231
  %v6244 = vadd.f32 %v6190, %v6231
  %v6245 = vadd.f32 %v6191, %v6231
  %v6246 = vadd.f32 %v6192, %v6231
  %v6247 = vadd.f32 %v6193, %v6231
  %v6248 = vadd.f32 %v6194, %v6231
  %v6249 = vadd.f32 %v6195, %v6231
  %v6250 = vadd.f32 %v6196, %v6231
  %v6251 = vadd.f32 %v6197, %v6231
  %v6252 = vadd.f32 %v6198, %v6231
  %v6253 = vadd.f32 %v6199, %v6231
  %v6254 = vadd.f32 %v6200, %v6231
  %v6255 = vadd.f32 %v6201, %v6231
  %v6256 = vadd.f32 %v6202, %v6231
  %v6257 = vadd.f32 %v6203, %v6231
  %v6258 = vadd.f32 %v6204, %v6231
  %v6259 = vadd.f32 %v6205, %v6231
  %v6260 = vadd.f32 %v6206, %v6236
  %v6261 = vadd.f32 %v6207, %v6236
  %v6262 = vadd.f32 %v6208, %v6236
  %v6263 = vadd.f32 %v6209, %v6236
  %v6264 = vadd.f32 %v6210, %v6236
  %v6265 = vadd.f32 %v6211, %v6236
  %v6266 = vadd.f32 %v6212, %v6236
  %v6267 = vadd.f32 %v6213, %v6236
  %v6268 = vadd.f32 %v6214, %v6236
  %v6269 = vadd.f32 %v6215, %v6236
  %v6270 = vadd.f32 %v6216, %v6236
  %v6271 = vadd.f32 %v6217, %v6236
  %v6272 = vadd.f32 %v6218, %v6236
  %v6273 = vadd.f32 %v6219, %v6236
  %v6274 = vadd.f32 %v6220, %v6236
  %v6275 = vadd.f32 %v6221, %v6236
  %v6276 = vadd.f32 %v6222, %v6236
  %v6277 = vadd.f32 %v6223, %v6236
  %v6278 = vadd.f32 %v6224, %v6236
  %v6279 = vadd.f32 %v6225, %v6236
  %v6280 = vadd.f32 %v6226, %v6236
  %v6281 = vadd.f32 %v6227, %v6236
  %v6282 = vmul.f32 %v6238, 0.5
  %v6283 = vmul.f32 %v6239, 0.5
  %v6284 = vmul.f32 %v6240, 0.5
  %v6285 = vmul.f32 %v6241, 0.5
  %v6286 = vmul.f32 %v6242, 0.5
  %v6287 = vmul.f32 %v6243, 0.5
  %v6288 = vmul.f32 %v6244, 0.5
  %v6289 = vmul.f32 %v6245, 0.5
  %v6290 = vmul.f32 %v6246, 0.5
  %v6291 = vmul.f32 %v6247, 0.5
  %v6292 = vmul.f32 %v6248, 0.5
  %v6293 = vmul.f32 %v6249, 0.5
  %v6294 = vmul.f32 %v6250, 0.5
  %v6295 = vmul.f32 %v6251, 0.5
  %v6296 = vmul.f32 %v6252, 0.5
  %v6297 = vmul.f32 %v6253, 0.5
  %v6298 = vmul.f32 %v6254, 0.5
  %v6299 = vmul.f32 %v6255, 0.5
  %v6300 = vmul.f32 %v6256, 0.5
  %v6301 = vmul.f32 %v6257, 0.5
  %v6302 = vmul.f32 %v6258, 0.5
  %v6303 = vmul.f32 %v6259, 0.5
  %v6304 = vmul.f32 %v6260, 0.5
  %v6305 = vmul.f32 %v6261, 0.5
  %v6306 = vmul.f32 %v6262, 0.5
  %v6307 = vmul.f32 %v6263, 0.5
  %v6308 = vmul.f32 %v6264, 0.5
  %v6309 = vmul.f32 %v6265, 0.5
  %v6310 = vmul.f32 %v6266, 0.5
  %v6311 = vmul.f32 %v6267, 0.5
  %v6312 = vmul.f32 %v6268, 0.5
  %v6313 = vmul.f32 %v6269, 0.5
  %v6314 = vmul.f32 %v6270, 0.5
  %v6315 = vmul.f32 %v6271, 0.5
  %v6316 = vmul.f32 %v6272, 0.5
  %v6317 = vmul.f32 %v6273, 0.5
  %v6318 = vmul.f32 %v6274, 0.5
  %v6319 = vmul.f32 %v6275, 0.5
  %v6320 = vmul.f32 %v6276, 0.5
  %v6321 = vmul.f32 %v6277, 0.5
  %v6322 = vmul.f32 %v6278, 0.5
  %v6323 = vmul.f32 %v6279, 0.5
  %v6324 = vmul.f32 %v6280, 0.5
  %v6325 = vmul.f32 %v6281, 0.5
  %v6326 = vmul.f32 %v6238, 0.70710677
  %v6327 = vmul.f32 %v6239, 0.70710677
  %v6328 = vmul.f32 %v6240, 0.70710677
  %v6329 = vmul.f32 %v6241, 0.70710677
  %v6330 = vmul.f32 %v6242, 0.70710677
  %v6331 = vmul.f32 %v6243, 0.70710677
  %v6332 = vmul.f32 %v6244, 0.70710677
  %v6333 = vmul.f32 %v6245, 0.70710677
  %v6334 = vmul.f32 %v6246, 0.70710677
  %v6335 = vmul.f32 %v6247, 0.70710677
  %v6336 = vmul.f32 %v6248, 0.70710677
  %v6337 = vmul.f32 %v6249, 0.70710677
  %v6338 = vmul.f32 %v6250, 0.70710677
  %v6339 = vmul.f32 %v6251, 0.70710677
  %v6340 = vmul.f32 %v6252, 0.70710677
  %v6341 = vmul.f32 %v6253, 0.70710677
  %v6342 = vmul.f32 %v6254, 0.70710677
  %v6343 = vmul.f32 %v6255, 0.70710677
  %v6344 = vmul.f32 %v6256, 0.70710677
  %v6345 = vmul.f32 %v6257, 0.70710677
  %v6346 = vmul.f32 %v6258, 0.70710677
  %v6347 = vmul.f32 %v6259, 0.70710677
  %v6348 = vmul.f32 %v6260, 0.70710677
  %v6349 = vmul.f32 %v6261, 0.70710677
  %v6350 = vmul.f32 %v6262, 0.70710677
  %v6351 = vmul.f32 %v6263, 0.70710677
  %v6352 = vmul.f32 %v6264, 0.70710677
  %v6353 = vmul.f32 %v6265, 0.70710677
  %v6354 = vmul.f32 %v6266, 0.70710677
  %v6355 = vmul.f32 %v6267, 0.70710677
  %v6356 = vmul.f32 %v6268, 0.70710677
  %v6357 = vmul.f32 %v6269, 0.70710677
  %v6358 = vmul.f32 %v6270, 0.70710677
  %v6359 = vmul.f32 %v6271, 0.70710677
  %v6360 = vmul.f32 %v6272, 0.70710677
  %v6361 = vmul.f32 %v6273, 0.70710677
  %v6362 = vmul.f32 %v6274, 0.70710677
  %v6363 = vmul.f32 %v6275, 0.70710677
  %v6364 = vmul.f32 %v6276, 0.70710677
  %v6365 = vmul.f32 %v6277, 0.70710677
  %v6366 = vmul.f32 %v6278, 0.70710677
  %v6367 = vmul.f32 %v6279, 0.70710677
  %v6368 = vmul.f32 %v6280, 0.70710677
  %v6369 = vmul.f32 %v6281, 0.70710677
  %vm6370 = vcmp.lt.f32.partialorder %v6326, 0.0
  %vm6371 = vcmp.lt.f32.partialorder %v6327, 0.0
  %vm6372 = vcmp.lt.f32.partialorder %v6328, 0.0
  %vm6373 = vcmp.lt.f32.partialorder %v6329, 0.0
  %vm6374 = vcmp.lt.f32.partialorder %v6330, 0.0
  %vm6375 = vcmp.lt.f32.partialorder %v6331, 0.0
  %vm6376 = vcmp.lt.f32.partialorder %v6332, 0.0
  %vm6377 = vcmp.lt.f32.partialorder %v6333, 0.0
  %vm6378 = vcmp.lt.f32.partialorder %v6334, 0.0
  %vm6379 = vcmp.lt.f32.partialorder %v6335, 0.0
  %vm6380 = vcmp.lt.f32.partialorder %v6336, 0.0
  %vm6381 = vcmp.lt.f32.partialorder %v6337, 0.0
  %vm6382 = vcmp.lt.f32.partialorder %v6338, 0.0
  %vm6383 = vcmp.lt.f32.partialorder %v6339, 0.0
  %vm6384 = vcmp.lt.f32.partialorder %v6340, 0.0
  %vm6385 = vcmp.lt.f32.partialorder %v6341, 0.0
  %vm6386 = vcmp.lt.f32.partialorder %v6342, 0.0
  %vm6387 = vcmp.lt.f32.partialorder %v6343, 0.0
  %vm6388 = vcmp.lt.f32.partialorder %v6344, 0.0
  %vm6389 = vcmp.lt.f32.partialorder %v6345, 0.0
  %vm6390 = vcmp.lt.f32.partialorder %v6346, 0.0
  %vm6391 = vcmp.lt.f32.partialorder %v6347, 0.0
  %vm6392 = vcmp.lt.f32.partialorder %v6348, 0.0
  %vm6393 = vcmp.lt.f32.partialorder %v6349, 0.0
  %vm6394 = vcmp.lt.f32.partialorder %v6350, 0.0
  %vm6395 = vcmp.lt.f32.partialorder %v6351, 0.0
  %vm6396 = vcmp.lt.f32.partialorder %v6352, 0.0
  %vm6397 = vcmp.lt.f32.partialorder %v6353, 0.0
  %vm6398 = vcmp.lt.f32.partialorder %v6354, 0.0
  %vm6399 = vcmp.lt.f32.partialorder %v6355, 0.0
  %vm6400 = vcmp.lt.f32.partialorder %v6356, 0.0
  %vm6401 = vcmp.lt.f32.partialorder %v6357, 0.0
  %vm6402 = vcmp.lt.f32.partialorder %v6358, 0.0
  %vm6403 = vcmp.lt.f32.partialorder %v6359, 0.0
  %vm6404 = vcmp.lt.f32.partialorder %v6360, 0.0
  %vm6405 = vcmp.lt.f32.partialorder %v6361, 0.0
  %vm6406 = vcmp.lt.f32.partialorder %v6362, 0.0
  %vm6407 = vcmp.lt.f32.partialorder %v6363, 0.0
  %vm6408 = vcmp.lt.f32.partialorder %v6364, 0.0
  %vm6409 = vcmp.lt.f32.partialorder %v6365, 0.0
  %vm6410 = vcmp.lt.f32.partialorder %v6366, 0.0
  %vm6411 = vcmp.lt.f32.partialorder %v6367, 0.0
  %vm6412 = vcmp.lt.f32.partialorder %v6368, 0.0
  %vm6413 = vcmp.lt.f32.partialorder %v6369, 0.0
  %v6414 = vsel %vm6370, -1.0, 1.0
  %v6415 = vsel %vm6371, -1.0, 1.0
  %v6416 = vsel %vm6372, -1.0, 1.0
  %v6417 = vsel %vm6373, -1.0, 1.0
  %v6418 = vsel %vm6374, -1.0, 1.0
  %v6419 = vsel %vm6375, -1.0, 1.0
  %v6420 = vsel %vm6376, -1.0, 1.0
  %v6421 = vsel %vm6377, -1.0, 1.0
  %v6422 = vsel %vm6378, -1.0, 1.0
  %v6423 = vsel %vm6379, -1.0, 1.0
  %v6424 = vsel %vm6380, -1.0, 1.0
  %v6425 = vsel %vm6381, -1.0, 1.0
  %v6426 = vsel %vm6382, -1.0, 1.0
  %v6427 = vsel %vm6383, -1.0, 1.0
  %v6428 = vsel %vm6384, -1.0, 1.0
  %v6429 = vsel %vm6385, -1.0, 1.0
  %v6430 = vsel %vm6386, -1.0, 1.0
  %v6431 = vsel %vm6387, -1.0, 1.0
  %v6432 = vsel %vm6388, -1.0, 1.0
  %v6433 = vsel %vm6389, -1.0, 1.0
  %v6434 = vsel %vm6390, -1.0, 1.0
  %v6435 = vsel %vm6391, -1.0, 1.0
  %v6436 = vsel %vm6392, -1.0, 1.0
  %v6437 = vsel %vm6393, -1.0, 1.0
  %v6438 = vsel %vm6394, -1.0, 1.0
  %v6439 = vsel %vm6395, -1.0, 1.0
  %v6440 = vsel %vm6396, -1.0, 1.0
  %v6441 = vsel %vm6397, -1.0, 1.0
  %v6442 = vsel %vm6398, -1.0, 1.0
  %v6443 = vsel %vm6399, -1.0, 1.0
  %v6444 = vsel %vm6400, -1.0, 1.0
  %v6445 = vsel %vm6401, -1.0, 1.0
  %v6446 = vsel %vm6402, -1.0, 1.0
  %v6447 = vsel %vm6403, -1.0, 1.0
  %v6448 = vsel %vm6404, -1.0, 1.0
  %v6449 = vsel %vm6405, -1.0, 1.0
  %v6450 = vsel %vm6406, -1.0, 1.0
  %v6451 = vsel %vm6407, -1.0, 1.0
  %v6452 = vsel %vm6408, -1.0, 1.0
  %v6453 = vsel %vm6409, -1.0, 1.0
  %v6454 = vsel %vm6410, -1.0, 1.0
  %v6455 = vsel %vm6411, -1.0, 1.0
  %v6456 = vsel %vm6412, -1.0, 1.0
  %v6457 = vsel %vm6413, -1.0, 1.0
  %v6458 = vand.u32 2147483647, %v6326
  %v6459 = vand.u32 2147483647, %v6327
  %v6460 = vand.u32 2147483647, %v6328
  %v6461 = vand.u32 2147483647, %v6329
  %v6462 = vand.u32 2147483647, %v6330
  %v6463 = vand.u32 2147483647, %v6331
  %v6464 = vand.u32 2147483647, %v6332
  %v6465 = vand.u32 2147483647, %v6333
  %v6466 = vand.u32 2147483647, %v6334
  %v6467 = vand.u32 2147483647, %v6335
  %v6468 = vand.u32 2147483647, %v6336
  %v6469 = vand.u32 2147483647, %v6337
  %v6470 = vand.u32 2147483647, %v6338
  %v6471 = vand.u32 2147483647, %v6339
  %v6472 = vand.u32 2147483647, %v6340
  %v6473 = vand.u32 2147483647, %v6341
  %v6474 = vand.u32 2147483647, %v6342
  %v6475 = vand.u32 2147483647, %v6343
  %v6476 = vand.u32 2147483647, %v6344
  %v6477 = vand.u32 2147483647, %v6345
  %v6478 = vand.u32 2147483647, %v6346
  %v6479 = vand.u32 2147483647, %v6347
  %v6480 = vand.u32 2147483647, %v6348
  %v6481 = vand.u32 2147483647, %v6349
  %v6482 = vand.u32 2147483647, %v6350
  %v6483 = vand.u32 2147483647, %v6351
  %v6484 = vand.u32 2147483647, %v6352
  %v6485 = vand.u32 2147483647, %v6353
  %v6486 = vand.u32 2147483647, %v6354
  %v6487 = vand.u32 2147483647, %v6355
  %v6488 = vand.u32 2147483647, %v6356
  %v6489 = vand.u32 2147483647, %v6357
  %v6490 = vand.u32 2147483647, %v6358
  %v6491 = vand.u32 2147483647, %v6359
  %v6492 = vand.u32 2147483647, %v6360
  %v6493 = vand.u32 2147483647, %v6361
  %v6494 = vand.u32 2147483647, %v6362
  %v6495 = vand.u32 2147483647, %v6363
  %v6496 = vand.u32 2147483647, %v6364
  %v6497 = vand.u32 2147483647, %v6365
  %v6498 = vand.u32 2147483647, %v6366
  %v6499 = vand.u32 2147483647, %v6367
  %v6500 = vand.u32 2147483647, %v6368
  %v6501 = vand.u32 2147483647, %v6369
  %v6502 = vmul.f32 %v6458, 0.3275911
  %v6503 = vmul.f32 %v6459, 0.3275911
  %v6504 = vmul.f32 %v6460, 0.3275911
  %v6505 = vmul.f32 %v6461, 0.3275911
  %v6506 = vmul.f32 %v6462, 0.3275911
  %v6507 = vmul.f32 %v6463, 0.3275911
  %v6508 = vmul.f32 %v6464, 0.3275911
  %v6509 = vmul.f32 %v6465, 0.3275911
  %v6510 = vmul.f32 %v6466, 0.3275911
  %v6511 = vmul.f32 %v6467, 0.3275911
  %v6512 = vmul.f32 %v6468, 0.3275911
  %v6513 = vmul.f32 %v6469, 0.3275911
  %v6514 = vmul.f32 %v6470, 0.3275911
  %v6515 = vmul.f32 %v6471, 0.3275911
  %v6516 = vmul.f32 %v6472, 0.3275911
  %v6517 = vmul.f32 %v6473, 0.3275911
  %v6518 = vmul.f32 %v6474, 0.3275911
  %v6519 = vmul.f32 %v6475, 0.3275911
  %v6520 = vmul.f32 %v6476, 0.3275911
  %v6521 = vmul.f32 %v6477, 0.3275911
  %v6522 = vmul.f32 %v6478, 0.3275911
  %v6523 = vmul.f32 %v6479, 0.3275911
  %v6524 = vmul.f32 %v6480, 0.3275911
  %v6525 = vmul.f32 %v6481, 0.3275911
  %v6526 = vmul.f32 %v6482, 0.3275911
  %v6527 = vmul.f32 %v6483, 0.3275911
  %v6528 = vmul.f32 %v6484, 0.3275911
  %v6529 = vmul.f32 %v6485, 0.3275911
  %v6530 = vmul.f32 %v6486, 0.3275911
  %v6531 = vmul.f32 %v6487, 0.3275911
  %v6532 = vmul.f32 %v6488, 0.3275911
  %v6533 = vmul.f32 %v6489, 0.3275911
  %v6534 = vmul.f32 %v6490, 0.3275911
  %v6535 = vmul.f32 %v6491, 0.3275911
  %v6536 = vmul.f32 %v6492, 0.3275911
  %v6537 = vmul.f32 %v6493, 0.3275911
  %v6538 = vmul.f32 %v6494, 0.3275911
  %v6539 = vmul.f32 %v6495, 0.3275911
  %v6540 = vmul.f32 %v6496, 0.3275911
  %v6541 = vmul.f32 %v6497, 0.3275911
  %v6542 = vmul.f32 %v6498, 0.3275911
  %v6543 = vmul.f32 %v6499, 0.3275911
  %v6544 = vmul.f32 %v6500, 0.3275911
  %v6545 = vmul.f32 %v6501, 0.3275911
  %v6546 = vadd.f32 %v6502, 1.0
  %v6547 = vadd.f32 %v6503, 1.0
  %v6548 = vadd.f32 %v6504, 1.0
  %v6549 = vadd.f32 %v6505, 1.0
  %v6550 = vadd.f32 %v6506, 1.0
  %v6551 = vadd.f32 %v6507, 1.0
  %v6552 = vadd.f32 %v6508, 1.0
  %v6553 = vadd.f32 %v6509, 1.0
  %v6554 = vadd.f32 %v6510, 1.0
  %v6555 = vadd.f32 %v6511, 1.0
  %v6556 = vadd.f32 %v6512, 1.0
  %v6557 = vadd.f32 %v6513, 1.0
  %v6558 = vadd.f32 %v6514, 1.0
  %v6559 = vadd.f32 %v6515, 1.0
  %v6560 = vadd.f32 %v6516, 1.0
  %v6561 = vadd.f32 %v6517, 1.0
  %v6562 = vadd.f32 %v6518, 1.0
  %v6563 = vadd.f32 %v6519, 1.0
  %v6564 = vadd.f32 %v6520, 1.0
  %v6565 = vadd.f32 %v6521, 1.0
  %v6566 = vadd.f32 %v6522, 1.0
  %v6567 = vadd.f32 %v6523, 1.0
  %v6568 = vadd.f32 %v6524, 1.0
  %v6569 = vadd.f32 %v6525, 1.0
  %v6570 = vadd.f32 %v6526, 1.0
  %v6571 = vadd.f32 %v6527, 1.0
  %v6572 = vadd.f32 %v6528, 1.0
  %v6573 = vadd.f32 %v6529, 1.0
  %v6574 = vadd.f32 %v6530, 1.0
  %v6575 = vadd.f32 %v6531, 1.0
  %v6576 = vadd.f32 %v6532, 1.0
  %v6577 = vadd.f32 %v6533, 1.0
  %v6578 = vadd.f32 %v6534, 1.0
  %v6579 = vadd.f32 %v6535, 1.0
  %v6580 = vadd.f32 %v6536, 1.0
  %v6581 = vadd.f32 %v6537, 1.0
  %v6582 = vadd.f32 %v6538, 1.0
  %v6583 = vadd.f32 %v6539, 1.0
  %v6584 = vadd.f32 %v6540, 1.0
  %v6585 = vadd.f32 %v6541, 1.0
  %v6586 = vadd.f32 %v6542, 1.0
  %v6587 = vadd.f32 %v6543, 1.0
  %v6588 = vadd.f32 %v6544, 1.0
  %v6589 = vadd.f32 %v6545, 1.0
  %v6590 = vrcp.pop %v6546
  %v6591 = vmul.f32 1.0, %v6590
  %v6592 = vrcp.pop %v6547
  %v6593 = vmul.f32 1.0, %v6592
  %v6594 = vrcp.pop %v6548
  %v6595 = vmul.f32 1.0, %v6594
  %v6596 = vrcp.pop %v6549
  %v6597 = vmul.f32 1.0, %v6596
  %v6598 = vrcp.pop %v6550
  %v6599 = vmul.f32 1.0, %v6598
  %v6600 = vrcp.pop %v6551
  %v6601 = vmul.f32 1.0, %v6600
  %v6602 = vrcp.pop %v6552
  %v6603 = vmul.f32 1.0, %v6602
  %v6604 = vrcp.pop %v6553
  %v6605 = vmul.f32 1.0, %v6604
  %v6606 = vrcp.pop %v6554
  %v6607 = vmul.f32 1.0, %v6606
  %v6608 = vrcp.pop %v6555
  %v6609 = vmul.f32 1.0, %v6608
  %v6610 = vrcp.pop %v6556
  %v6611 = vmul.f32 1.0, %v6610
  %v6612 = vrcp.pop %v6557
  %v6613 = vmul.f32 1.0, %v6612
  %v6614 = vrcp.pop %v6558
  %v6615 = vmul.f32 1.0, %v6614
  %v6616 = vrcp.pop %v6559
  %v6617 = vmul.f32 1.0, %v6616
  %v6618 = vrcp.pop %v6560
  %v6619 = vmul.f32 1.0, %v6618
  %v6620 = vrcp.pop %v6561
  %v6621 = vmul.f32 1.0, %v6620
  %v6622 = vrcp.pop %v6562
  %v6623 = vmul.f32 1.0, %v6622
  %v6624 = vrcp.pop %v6563
  %v6625 = vmul.f32 1.0, %v6624
  %v6626 = vrcp.pop %v6564
  %v6627 = vmul.f32 1.0, %v6626
  %v6628 = vrcp.pop %v6565
  %v6629 = vmul.f32 1.0, %v6628
  %v6630 = vrcp.pop %v6566
  %v6631 = vmul.f32 1.0, %v6630
  %v6632 = vrcp.pop %v6567
  %v6633 = vmul.f32 1.0, %v6632
  %v6634 = vrcp.pop %v6568
  %v6635 = vmul.f32 1.0, %v6634
  %v6636 = vrcp.pop %v6569
  %v6637 = vmul.f32 1.0, %v6636
  %v6638 = vrcp.pop %v6570
  %v6639 = vmul.f32 1.0, %v6638
  %v6640 = vrcp.pop %v6571
  %v6641 = vmul.f32 1.0, %v6640
  %v6642 = vrcp.pop %v6572
  %v6643 = vmul.f32 1.0, %v6642
  %v6644 = vrcp.pop %v6573
  %v6645 = vmul.f32 1.0, %v6644
  %v6646 = vrcp.pop %v6574
  %v6647 = vmul.f32 1.0, %v6646
  %v6648 = vrcp.pop %v6575
  %v6649 = vmul.f32 1.0, %v6648
  %v6650 = vrcp.pop %v6576
  %v6651 = vmul.f32 1.0, %v6650
  %v6652 = vrcp.pop %v6577
  %v6653 = vmul.f32 1.0, %v6652
  %v6654 = vrcp.pop %v6578
  %v6655 = vmul.f32 1.0, %v6654
  %v6656 = vrcp.pop %v6579
  %v6657 = vmul.f32 1.0, %v6656
  %v6658 = vrcp.pop %v6580
  %v6659 = vmul.f32 1.0, %v6658
  %v6660 = vrcp.pop %v6581
  %v6661 = vmul.f32 1.0, %v6660
  %v6662 = vrcp.pop %v6582
  %v6663 = vmul.f32 1.0, %v6662
  %v6664 = vrcp.pop %v6583
  %v6665 = vmul.f32 1.0, %v6664
  %v6666 = vrcp.pop %v6584
  %v6667 = vmul.f32 1.0, %v6666
  %v6668 = vrcp.pop %v6585
  %v6669 = vmul.f32 1.0, %v6668
  %v6670 = vrcp.pop %v6586
  %v6671 = vmul.f32 1.0, %v6670
  %v6672 = vrcp.pop %v6587
  %v6673 = vmul.f32 1.0, %v6672
  %v6674 = vrcp.pop %v6588
  %v6675 = vmul.f32 1.0, %v6674
  %v6676 = vrcp.pop %v6589
  %v6677 = vmul.f32 1.0, %v6676
  %v6678 = vmul.f32 %v6591, 1.0614054
  %v6679 = vmul.f32 %v6593, 1.0614054
  %v6680 = vmul.f32 %v6595, 1.0614054
  %v6681 = vmul.f32 %v6597, 1.0614054
  %v6682 = vmul.f32 %v6599, 1.0614054
  %v6683 = vmul.f32 %v6601, 1.0614054
  %v6684 = vmul.f32 %v6603, 1.0614054
  %v6685 = vmul.f32 %v6605, 1.0614054
  %v6686 = vmul.f32 %v6607, 1.0614054
  %v6687 = vmul.f32 %v6609, 1.0614054
  %v6688 = vmul.f32 %v6611, 1.0614054
  %v6689 = vmul.f32 %v6613, 1.0614054
  %v6690 = vmul.f32 %v6615, 1.0614054
  %v6691 = vmul.f32 %v6617, 1.0614054
  %v6692 = vmul.f32 %v6619, 1.0614054
  %v6693 = vmul.f32 %v6621, 1.0614054
  %v6694 = vmul.f32 %v6623, 1.0614054
  %v6695 = vmul.f32 %v6625, 1.0614054
  %v6696 = vmul.f32 %v6627, 1.0614054
  %v6697 = vmul.f32 %v6629, 1.0614054
  %v6698 = vmul.f32 %v6631, 1.0614054
  %v6699 = vmul.f32 %v6633, 1.0614054
  %v6700 = vmul.f32 %v6635, 1.0614054
  %v6701 = vmul.f32 %v6637, 1.0614054
  %v6702 = vmul.f32 %v6639, 1.0614054
  %v6703 = vmul.f32 %v6641, 1.0614054
  %v6704 = vmul.f32 %v6643, 1.0614054
  %v6705 = vmul.f32 %v6645, 1.0614054
  %v6706 = vmul.f32 %v6647, 1.0614054
  %v6707 = vmul.f32 %v6649, 1.0614054
  %v6708 = vmul.f32 %v6651, 1.0614054
  %v6709 = vmul.f32 %v6653, 1.0614054
  %v6710 = vmul.f32 %v6655, 1.0614054
  %v6711 = vmul.f32 %v6657, 1.0614054
  %v6712 = vmul.f32 %v6659, 1.0614054
  %v6713 = vmul.f32 %v6661, 1.0614054
  %v6714 = vmul.f32 %v6663, 1.0614054
  %v6715 = vmul.f32 %v6665, 1.0614054
  %v6716 = vmul.f32 %v6667, 1.0614054
  %v6717 = vmul.f32 %v6669, 1.0614054
  %v6718 = vmul.f32 %v6671, 1.0614054
  %v6719 = vmul.f32 %v6673, 1.0614054
  %v6720 = vmul.f32 %v6675, 1.0614054
  %v6721 = vmul.f32 %v6677, 1.0614054
  %v6722 = vadd.f32 %v6678, -1.4531521
  %v6723 = vadd.f32 %v6679, -1.4531521
  %v6724 = vadd.f32 %v6680, -1.4531521
  %v6725 = vadd.f32 %v6681, -1.4531521
  %v6726 = vadd.f32 %v6682, -1.4531521
  %v6727 = vadd.f32 %v6683, -1.4531521
  %v6728 = vadd.f32 %v6684, -1.4531521
  %v6729 = vadd.f32 %v6685, -1.4531521
  %v6730 = vadd.f32 %v6686, -1.4531521
  %v6731 = vadd.f32 %v6687, -1.4531521
  %v6732 = vadd.f32 %v6688, -1.4531521
  %v6733 = vadd.f32 %v6689, -1.4531521
  %v6734 = vadd.f32 %v6690, -1.4531521
  %v6735 = vadd.f32 %v6691, -1.4531521
  %v6736 = vadd.f32 %v6692, -1.4531521
  %v6737 = vadd.f32 %v6693, -1.4531521
  %v6738 = vadd.f32 %v6694, -1.4531521
  %v6739 = vadd.f32 %v6695, -1.4531521
  %v6740 = vadd.f32 %v6696, -1.4531521
  %v6741 = vadd.f32 %v6697, -1.4531521
  %v6742 = vadd.f32 %v6698, -1.4531521
  %v6743 = vadd.f32 %v6699, -1.4531521
  %v6744 = vadd.f32 %v6700, -1.4531521
  %v6745 = vadd.f32 %v6701, -1.4531521
  %v6746 = vadd.f32 %v6702, -1.4531521
  %v6747 = vadd.f32 %v6703, -1.4531521
  %v6748 = vadd.f32 %v6704, -1.4531521
  %v6749 = vadd.f32 %v6705, -1.4531521
  %v6750 = vadd.f32 %v6706, -1.4531521
  %v6751 = vadd.f32 %v6707, -1.4531521
  %v6752 = vadd.f32 %v6708, -1.4531521
  %v6753 = vadd.f32 %v6709, -1.4531521
  %v6754 = vadd.f32 %v6710, -1.4531521
  %v6755 = vadd.f32 %v6711, -1.4531521
  %v6756 = vadd.f32 %v6712, -1.4531521
  %v6757 = vadd.f32 %v6713, -1.4531521
  %v6758 = vadd.f32 %v6714, -1.4531521
  %v6759 = vadd.f32 %v6715, -1.4531521
  %v6760 = vadd.f32 %v6716, -1.4531521
  %v6761 = vadd.f32 %v6717, -1.4531521
  %v6762 = vadd.f32 %v6718, -1.4531521
  %v6763 = vadd.f32 %v6719, -1.4531521
  %v6764 = vadd.f32 %v6720, -1.4531521
  %v6765 = vadd.f32 %v6721, -1.4531521
  %v6766 = vmul.f32 %v6591, %v6722
  %v6767 = vmul.f32 %v6593, %v6723
  %v6768 = vmul.f32 %v6595, %v6724
  %v6769 = vmul.f32 %v6597, %v6725
  %v6770 = vmul.f32 %v6599, %v6726
  %v6771 = vmul.f32 %v6601, %v6727
  %v6772 = vmul.f32 %v6603, %v6728
  %v6773 = vmul.f32 %v6605, %v6729
  %v6774 = vmul.f32 %v6607, %v6730
  %v6775 = vmul.f32 %v6609, %v6731
  %v6776 = vmul.f32 %v6611, %v6732
  %v6777 = vmul.f32 %v6613, %v6733
  %v6778 = vmul.f32 %v6615, %v6734
  %v6779 = vmul.f32 %v6617, %v6735
  %v6780 = vmul.f32 %v6619, %v6736
  %v6781 = vmul.f32 %v6621, %v6737
  %v6782 = vmul.f32 %v6623, %v6738
  %v6783 = vmul.f32 %v6625, %v6739
  %v6784 = vmul.f32 %v6627, %v6740
  %v6785 = vmul.f32 %v6629, %v6741
  %v6786 = vmul.f32 %v6631, %v6742
  %v6787 = vmul.f32 %v6633, %v6743
  %v6788 = vmul.f32 %v6635, %v6744
  %v6789 = vmul.f32 %v6637, %v6745
  %v6790 = vmul.f32 %v6639, %v6746
  %v6791 = vmul.f32 %v6641, %v6747
  %v6792 = vmul.f32 %v6643, %v6748
  %v6793 = vmul.f32 %v6645, %v6749
  %v6794 = vmul.f32 %v6647, %v6750
  %v6795 = vmul.f32 %v6649, %v6751
  %v6796 = vmul.f32 %v6651, %v6752
  %v6797 = vmul.f32 %v6653, %v6753
  %v6798 = vmul.f32 %v6655, %v6754
  %v6799 = vmul.f32 %v6657, %v6755
  %v6800 = vmul.f32 %v6659, %v6756
  %v6801 = vmul.f32 %v6661, %v6757
  %v6802 = vmul.f32 %v6663, %v6758
  %v6803 = vmul.f32 %v6665, %v6759
  %v6804 = vmul.f32 %v6667, %v6760
  %v6805 = vmul.f32 %v6669, %v6761
  %v6806 = vmul.f32 %v6671, %v6762
  %v6807 = vmul.f32 %v6673, %v6763
  %v6808 = vmul.f32 %v6675, %v6764
  %v6809 = vmul.f32 %v6677, %v6765
  %v6810 = vadd.f32 %v6766, 1.4214138
  %v6811 = vadd.f32 %v6767, 1.4214138
  %v6812 = vadd.f32 %v6768, 1.4214138
  %v6813 = vadd.f32 %v6769, 1.4214138
  %v6814 = vadd.f32 %v6770, 1.4214138
  %v6815 = vadd.f32 %v6771, 1.4214138
  %v6816 = vadd.f32 %v6772, 1.4214138
  %v6817 = vadd.f32 %v6773, 1.4214138
  %v6818 = vadd.f32 %v6774, 1.4214138
  %v6819 = vadd.f32 %v6775, 1.4214138
  %v6820 = vadd.f32 %v6776, 1.4214138
  %v6821 = vadd.f32 %v6777, 1.4214138
  %v6822 = vadd.f32 %v6778, 1.4214138
  %v6823 = vadd.f32 %v6779, 1.4214138
  %v6824 = vadd.f32 %v6780, 1.4214138
  %v6825 = vadd.f32 %v6781, 1.4214138
  %v6826 = vadd.f32 %v6782, 1.4214138
  %v6827 = vadd.f32 %v6783, 1.4214138
  %v6828 = vadd.f32 %v6784, 1.4214138
  %v6829 = vadd.f32 %v6785, 1.4214138
  %v6830 = vadd.f32 %v6786, 1.4214138
  %v6831 = vadd.f32 %v6787, 1.4214138
  %v6832 = vadd.f32 %v6788, 1.4214138
  %v6833 = vadd.f32 %v6789, 1.4214138
  %v6834 = vadd.f32 %v6790, 1.4214138
  %v6835 = vadd.f32 %v6791, 1.4214138
  %v6836 = vadd.f32 %v6792, 1.4214138
  %v6837 = vadd.f32 %v6793, 1.4214138
  %v6838 = vadd.f32 %v6794, 1.4214138
  %v6839 = vadd.f32 %v6795, 1.4214138
  %v6840 = vadd.f32 %v6796, 1.4214138
  %v6841 = vadd.f32 %v6797, 1.4214138
  %v6842 = vadd.f32 %v6798, 1.4214138
  %v6843 = vadd.f32 %v6799, 1.4214138
  %v6844 = vadd.f32 %v6800, 1.4214138
  %v6845 = vadd.f32 %v6801, 1.4214138
  %v6846 = vadd.f32 %v6802, 1.4214138
  %v6847 = vadd.f32 %v6803, 1.4214138
  %v6848 = vadd.f32 %v6804, 1.4214138
  %v6849 = vadd.f32 %v6805, 1.4214138
  %v6850 = vadd.f32 %v6806, 1.4214138
  %v6851 = vadd.f32 %v6807, 1.4214138
  %v6852 = vadd.f32 %v6808, 1.4214138
  %v6853 = vadd.f32 %v6809, 1.4214138
  %v6854 = vmul.f32 %v6591, %v6810
  %v6855 = vmul.f32 %v6593, %v6811
  %v6856 = vmul.f32 %v6595, %v6812
  %v6857 = vmul.f32 %v6597, %v6813
  %v6858 = vmul.f32 %v6599, %v6814
  %v6859 = vmul.f32 %v6601, %v6815
  %v6860 = vmul.f32 %v6603, %v6816
  %v6861 = vmul.f32 %v6605, %v6817
  %v6862 = vmul.f32 %v6607, %v6818
  %v6863 = vmul.f32 %v6609, %v6819
  %v6864 = vmul.f32 %v6611, %v6820
  %v6865 = vmul.f32 %v6613, %v6821
  %v6866 = vmul.f32 %v6615, %v6822
  %v6867 = vmul.f32 %v6617, %v6823
  %v6868 = vmul.f32 %v6619, %v6824
  %v6869 = vmul.f32 %v6621, %v6825
  %v6870 = vmul.f32 %v6623, %v6826
  %v6871 = vmul.f32 %v6625, %v6827
  %v6872 = vmul.f32 %v6627, %v6828
  %v6873 = vmul.f32 %v6629, %v6829
  %v6874 = vmul.f32 %v6631, %v6830
  %v6875 = vmul.f32 %v6633, %v6831
  %v6876 = vmul.f32 %v6635, %v6832
  %v6877 = vmul.f32 %v6637, %v6833
  %v6878 = vmul.f32 %v6639, %v6834
  %v6879 = vmul.f32 %v6641, %v6835
  %v6880 = vmul.f32 %v6643, %v6836
  %v6881 = vmul.f32 %v6645, %v6837
  %v6882 = vmul.f32 %v6647, %v6838
  %v6883 = vmul.f32 %v6649, %v6839
  %v6884 = vmul.f32 %v6651, %v6840
  %v6885 = vmul.f32 %v6653, %v6841
  %v6886 = vmul.f32 %v6655, %v6842
  %v6887 = vmul.f32 %v6657, %v6843
  %v6888 = vmul.f32 %v6659, %v6844
  %v6889 = vmul.f32 %v6661, %v6845
  %v6890 = vmul.f32 %v6663, %v6846
  %v6891 = vmul.f32 %v6665, %v6847
  %v6892 = vmul.f32 %v6667, %v6848
  %v6893 = vmul.f32 %v6669, %v6849
  %v6894 = vmul.f32 %v6671, %v6850
  %v6895 = vmul.f32 %v6673, %v6851
  %v6896 = vmul.f32 %v6675, %v6852
  %v6897 = vmul.f32 %v6677, %v6853
  %v6898 = vadd.f32 %v6854, -0.28449672
  %v6899 = vadd.f32 %v6855, -0.28449672
  %v6900 = vadd.f32 %v6856, -0.28449672
  %v6901 = vadd.f32 %v6857, -0.28449672
  %v6902 = vadd.f32 %v6858, -0.28449672
  %v6903 = vadd.f32 %v6859, -0.28449672
  %v6904 = vadd.f32 %v6860, -0.28449672
  %v6905 = vadd.f32 %v6861, -0.28449672
  %v6906 = vadd.f32 %v6862, -0.28449672
  %v6907 = vadd.f32 %v6863, -0.28449672
  %v6908 = vadd.f32 %v6864, -0.28449672
  %v6909 = vadd.f32 %v6865, -0.28449672
  %v6910 = vadd.f32 %v6866, -0.28449672
  %v6911 = vadd.f32 %v6867, -0.28449672
  %v6912 = vadd.f32 %v6868, -0.28449672
  %v6913 = vadd.f32 %v6869, -0.28449672
  %v6914 = vadd.f32 %v6870, -0.28449672
  %v6915 = vadd.f32 %v6871, -0.28449672
  %v6916 = vadd.f32 %v6872, -0.28449672
  %v6917 = vadd.f32 %v6873, -0.28449672
  %v6918 = vadd.f32 %v6874, -0.28449672
  %v6919 = vadd.f32 %v6875, -0.28449672
  %v6920 = vadd.f32 %v6876, -0.28449672
  %v6921 = vadd.f32 %v6877, -0.28449672
  %v6922 = vadd.f32 %v6878, -0.28449672
  %v6923 = vadd.f32 %v6879, -0.28449672
  %v6924 = vadd.f32 %v6880, -0.28449672
  %v6925 = vadd.f32 %v6881, -0.28449672
  %v6926 = vadd.f32 %v6882, -0.28449672
  %v6927 = vadd.f32 %v6883, -0.28449672
  %v6928 = vadd.f32 %v6884, -0.28449672
  %v6929 = vadd.f32 %v6885, -0.28449672
  %v6930 = vadd.f32 %v6886, -0.28449672
  %v6931 = vadd.f32 %v6887, -0.28449672
  %v6932 = vadd.f32 %v6888, -0.28449672
  %v6933 = vadd.f32 %v6889, -0.28449672
  %v6934 = vadd.f32 %v6890, -0.28449672
  %v6935 = vadd.f32 %v6891, -0.28449672
  %v6936 = vadd.f32 %v6892, -0.28449672
  %v6937 = vadd.f32 %v6893, -0.28449672
  %v6938 = vadd.f32 %v6894, -0.28449672
  %v6939 = vadd.f32 %v6895, -0.28449672
  %v6940 = vadd.f32 %v6896, -0.28449672
  %v6941 = vadd.f32 %v6897, -0.28449672
  %v6942 = vmul.f32 %v6591, %v6898
  %v6943 = vmul.f32 %v6593, %v6899
  %v6944 = vmul.f32 %v6595, %v6900
  %v6945 = vmul.f32 %v6597, %v6901
  %v6946 = vmul.f32 %v6599, %v6902
  %v6947 = vmul.f32 %v6601, %v6903
  %v6948 = vmul.f32 %v6603, %v6904
  %v6949 = vmul.f32 %v6605, %v6905
  %v6950 = vmul.f32 %v6607, %v6906
  %v6951 = vmul.f32 %v6609, %v6907
  %v6952 = vmul.f32 %v6611, %v6908
  %v6953 = vmul.f32 %v6613, %v6909
  %v6954 = vmul.f32 %v6615, %v6910
  %v6955 = vmul.f32 %v6617, %v6911
  %v6956 = vmul.f32 %v6619, %v6912
  %v6957 = vmul.f32 %v6621, %v6913
  %v6958 = vmul.f32 %v6623, %v6914
  %v6959 = vmul.f32 %v6625, %v6915
  %v6960 = vmul.f32 %v6627, %v6916
  %v6961 = vmul.f32 %v6629, %v6917
  %v6962 = vmul.f32 %v6631, %v6918
  %v6963 = vmul.f32 %v6633, %v6919
  %v6964 = vmul.f32 %v6635, %v6920
  %v6965 = vmul.f32 %v6637, %v6921
  %v6966 = vmul.f32 %v6639, %v6922
  %v6967 = vmul.f32 %v6641, %v6923
  %v6968 = vmul.f32 %v6643, %v6924
  %v6969 = vmul.f32 %v6645, %v6925
  %v6970 = vmul.f32 %v6647, %v6926
  %v6971 = vmul.f32 %v6649, %v6927
  %v6972 = vmul.f32 %v6651, %v6928
  %v6973 = vmul.f32 %v6653, %v6929
  %v6974 = vmul.f32 %v6655, %v6930
  %v6975 = vmul.f32 %v6657, %v6931
  %v6976 = vmul.f32 %v6659, %v6932
  %v6977 = vmul.f32 %v6661, %v6933
  %v6978 = vmul.f32 %v6663, %v6934
  %v6979 = vmul.f32 %v6665, %v6935
  %v6980 = vmul.f32 %v6667, %v6936
  %v6981 = vmul.f32 %v6669, %v6937
  %v6982 = vmul.f32 %v6671, %v6938
  %v6983 = vmul.f32 %v6673, %v6939
  %v6984 = vmul.f32 %v6675, %v6940
  %v6985 = vmul.f32 %v6677, %v6941
  %v6986 = vadd.f32 %v6942, 0.2548296
  %v6987 = vadd.f32 %v6943, 0.2548296
  %v6988 = vadd.f32 %v6944, 0.2548296
  %v6989 = vadd.f32 %v6945, 0.2548296
  %v6990 = vadd.f32 %v6946, 0.2548296
  %v6991 = vadd.f32 %v6947, 0.2548296
  %v6992 = vadd.f32 %v6948, 0.2548296
  %v6993 = vadd.f32 %v6949, 0.2548296
  %v6994 = vadd.f32 %v6950, 0.2548296
  %v6995 = vadd.f32 %v6951, 0.2548296
  %v6996 = vadd.f32 %v6952, 0.2548296
  %v6997 = vadd.f32 %v6953, 0.2548296
  %v6998 = vadd.f32 %v6954, 0.2548296
  %v6999 = vadd.f32 %v6955, 0.2548296
  %v7000 = vadd.f32 %v6956, 0.2548296
  %v7001 = vadd.f32 %v6957, 0.2548296
  %v7002 = vadd.f32 %v6958, 0.2548296
  %v7003 = vadd.f32 %v6959, 0.2548296
  %v7004 = vadd.f32 %v6960, 0.2548296
  %v7005 = vadd.f32 %v6961, 0.2548296
  %v7006 = vadd.f32 %v6962, 0.2548296
  %v7007 = vadd.f32 %v6963, 0.2548296
  %v7008 = vadd.f32 %v6964, 0.2548296
  %v7009 = vadd.f32 %v6965, 0.2548296
  %v7010 = vadd.f32 %v6966, 0.2548296
  %v7011 = vadd.f32 %v6967, 0.2548296
  %v7012 = vadd.f32 %v6968, 0.2548296
  %v7013 = vadd.f32 %v6969, 0.2548296
  %v7014 = vadd.f32 %v6970, 0.2548296
  %v7015 = vadd.f32 %v6971, 0.2548296
  %v7016 = vadd.f32 %v6972, 0.2548296
  %v7017 = vadd.f32 %v6973, 0.2548296
  %v7018 = vadd.f32 %v6974, 0.2548296
  %v7019 = vadd.f32 %v6975, 0.2548296
  %v7020 = vadd.f32 %v6976, 0.2548296
  %v7021 = vadd.f32 %v6977, 0.2548296
  %v7022 = vadd.f32 %v6978, 0.2548296
  %v7023 = vadd.f32 %v6979, 0.2548296
  %v7024 = vadd.f32 %v6980, 0.2548296
  %v7025 = vadd.f32 %v6981, 0.2548296
  %v7026 = vadd.f32 %v6982, 0.2548296
  %v7027 = vadd.f32 %v6983, 0.2548296
  %v7028 = vadd.f32 %v6984, 0.2548296
  %v7029 = vadd.f32 %v6985, 0.2548296
  %v7030 = vmul.f32 %v6591, %v6986
  %v7031 = vmul.f32 %v6593, %v6987
  %v7032 = vmul.f32 %v6595, %v6988
  %v7033 = vmul.f32 %v6597, %v6989
  %v7034 = vmul.f32 %v6599, %v6990
  %v7035 = vmul.f32 %v6601, %v6991
  %v7036 = vmul.f32 %v6603, %v6992
  %v7037 = vmul.f32 %v6605, %v6993
  %v7038 = vmul.f32 %v6607, %v6994
  %v7039 = vmul.f32 %v6609, %v6995
  %v7040 = vmul.f32 %v6611, %v6996
  %v7041 = vmul.f32 %v6613, %v6997
  %v7042 = vmul.f32 %v6615, %v6998
  %v7043 = vmul.f32 %v6617, %v6999
  %v7044 = vmul.f32 %v6619, %v7000
  %v7045 = vmul.f32 %v6621, %v7001
  %v7046 = vmul.f32 %v6623, %v7002
  %v7047 = vmul.f32 %v6625, %v7003
  %v7048 = vmul.f32 %v6627, %v7004
  %v7049 = vmul.f32 %v6629, %v7005
  %v7050 = vmul.f32 %v6631, %v7006
  %v7051 = vmul.f32 %v6633, %v7007
  %v7052 = vmul.f32 %v6635, %v7008
  %v7053 = vmul.f32 %v6637, %v7009
  %v7054 = vmul.f32 %v6639, %v7010
  %v7055 = vmul.f32 %v6641, %v7011
  %v7056 = vmul.f32 %v6643, %v7012
  %v7057 = vmul.f32 %v6645, %v7013
  %v7058 = vmul.f32 %v6647, %v7014
  %v7059 = vmul.f32 %v6649, %v7015
  %v7060 = vmul.f32 %v6651, %v7016
  %v7061 = vmul.f32 %v6653, %v7017
  %v7062 = vmul.f32 %v6655, %v7018
  %v7063 = vmul.f32 %v6657, %v7019
  %v7064 = vmul.f32 %v6659, %v7020
  %v7065 = vmul.f32 %v6661, %v7021
  %v7066 = vmul.f32 %v6663, %v7022
  %v7067 = vmul.f32 %v6665, %v7023
  %v7068 = vmul.f32 %v6667, %v7024
  %v7069 = vmul.f32 %v6669, %v7025
  %v7070 = vmul.f32 %v6671, %v7026
  %v7071 = vmul.f32 %v6673, %v7027
  %v7072 = vmul.f32 %v6675, %v7028
  %v7073 = vmul.f32 %v6677, %v7029
  %v7074 = vsub.f32 0.0, %v6458
  %v7075 = vsub.f32 0.0, %v6459
  %v7076 = vsub.f32 0.0, %v6460
  %v7077 = vsub.f32 0.0, %v6461
  %v7078 = vsub.f32 0.0, %v6462
  %v7079 = vsub.f32 0.0, %v6463
  %v7080 = vsub.f32 0.0, %v6464
  %v7081 = vsub.f32 0.0, %v6465
  %v7082 = vsub.f32 0.0, %v6466
  %v7083 = vsub.f32 0.0, %v6467
  %v7084 = vsub.f32 0.0, %v6468
  %v7085 = vsub.f32 0.0, %v6469
  %v7086 = vsub.f32 0.0, %v6470
  %v7087 = vsub.f32 0.0, %v6471
  %v7088 = vsub.f32 0.0, %v6472
  %v7089 = vsub.f32 0.0, %v6473
  %v7090 = vsub.f32 0.0, %v6474
  %v7091 = vsub.f32 0.0, %v6475
  %v7092 = vsub.f32 0.0, %v6476
  %v7093 = vsub.f32 0.0, %v6477
  %v7094 = vsub.f32 0.0, %v6478
  %v7095 = vsub.f32 0.0, %v6479
  %v7096 = vsub.f32 0.0, %v6480
  %v7097 = vsub.f32 0.0, %v6481
  %v7098 = vsub.f32 0.0, %v6482
  %v7099 = vsub.f32 0.0, %v6483
  %v7100 = vsub.f32 0.0, %v6484
  %v7101 = vsub.f32 0.0, %v6485
  %v7102 = vsub.f32 0.0, %v6486
  %v7103 = vsub.f32 0.0, %v6487
  %v7104 = vsub.f32 0.0, %v6488
  %v7105 = vsub.f32 0.0, %v6489
  %v7106 = vsub.f32 0.0, %v6490
  %v7107 = vsub.f32 0.0, %v6491
  %v7108 = vsub.f32 0.0, %v6492
  %v7109 = vsub.f32 0.0, %v6493
  %v7110 = vsub.f32 0.0, %v6494
  %v7111 = vsub.f32 0.0, %v6495
  %v7112 = vsub.f32 0.0, %v6496
  %v7113 = vsub.f32 0.0, %v6497
  %v7114 = vsub.f32 0.0, %v6498
  %v7115 = vsub.f32 0.0, %v6499
  %v7116 = vsub.f32 0.0, %v6500
  %v7117 = vsub.f32 0.0, %v6501
  %v7118 = vmul.f32 %v7074, %v6458
  %v7119 = vmul.f32 %v7075, %v6459
  %v7120 = vmul.f32 %v7076, %v6460
  %v7121 = vmul.f32 %v7077, %v6461
  %v7122 = vmul.f32 %v7078, %v6462
  %v7123 = vmul.f32 %v7079, %v6463
  %v7124 = vmul.f32 %v7080, %v6464
  %v7125 = vmul.f32 %v7081, %v6465
  %v7126 = vmul.f32 %v7082, %v6466
  %v7127 = vmul.f32 %v7083, %v6467
  %v7128 = vmul.f32 %v7084, %v6468
  %v7129 = vmul.f32 %v7085, %v6469
  %v7130 = vmul.f32 %v7086, %v6470
  %v7131 = vmul.f32 %v7087, %v6471
  %v7132 = vmul.f32 %v7088, %v6472
  %v7133 = vmul.f32 %v7089, %v6473
  %v7134 = vmul.f32 %v7090, %v6474
  %v7135 = vmul.f32 %v7091, %v6475
  %v7136 = vmul.f32 %v7092, %v6476
  %v7137 = vmul.f32 %v7093, %v6477
  %v7138 = vmul.f32 %v7094, %v6478
  %v7139 = vmul.f32 %v7095, %v6479
  %v7140 = vmul.f32 %v7096, %v6480
  %v7141 = vmul.f32 %v7097, %v6481
  %v7142 = vmul.f32 %v7098, %v6482
  %v7143 = vmul.f32 %v7099, %v6483
  %v7144 = vmul.f32 %v7100, %v6484
  %v7145 = vmul.f32 %v7101, %v6485
  %v7146 = vmul.f32 %v7102, %v6486
  %v7147 = vmul.f32 %v7103, %v6487
  %v7148 = vmul.f32 %v7104, %v6488
  %v7149 = vmul.f32 %v7105, %v6489
  %v7150 = vmul.f32 %v7106, %v6490
  %v7151 = vmul.f32 %v7107, %v6491
  %v7152 = vmul.f32 %v7108, %v6492
  %v7153 = vmul.f32 %v7109, %v6493
  %v7154 = vmul.f32 %v7110, %v6494
  %v7155 = vmul.f32 %v7111, %v6495
  %v7156 = vmul.f32 %v7112, %v6496
  %v7157 = vmul.f32 %v7113, %v6497
  %v7158 = vmul.f32 %v7114, %v6498
  %v7159 = vmul.f32 %v7115, %v6499
  %v7160 = vmul.f32 %v7116, %v6500
  %v7161 = vmul.f32 %v7117, %v6501
  %v7162 = vmul.f32 %v7118, 1.442695
  %v7163 = vpow.pop %v7162
  %v7164 = vmul.f32 %v7119, 1.442695
  %v7165 = vpow.pop %v7164
  %v7166 = vmul.f32 %v7120, 1.442695
  %v7167 = vpow.pop %v7166
  %v7168 = vmul.f32 %v7121, 1.442695
  %v7169 = vpow.pop %v7168
  %v7170 = vmul.f32 %v7122, 1.442695
  %v7171 = vpow.pop %v7170
  %v7172 = vmul.f32 %v7123, 1.442695
  %v7173 = vpow.pop %v7172
  %v7174 = vmul.f32 %v7124, 1.442695
  %v7175 = vpow.pop %v7174
  %v7176 = vmul.f32 %v7125, 1.442695
  %v7177 = vpow.pop %v7176
  %v7178 = vmul.f32 %v7126, 1.442695
  %v7179 = vpow.pop %v7178
  %v7180 = vmul.f32 %v7127, 1.442695
  %v7181 = vpow.pop %v7180
  %v7182 = vmul.f32 %v7128, 1.442695
  %v7183 = vpow.pop %v7182
  %v7184 = vmul.f32 %v7129, 1.442695
  %v7185 = vpow.pop %v7184
  %v7186 = vmul.f32 %v7130, 1.442695
  %v7187 = vpow.pop %v7186
  %v7188 = vmul.f32 %v7131, 1.442695
  %v7189 = vpow.pop %v7188
  %v7190 = vmul.f32 %v7132, 1.442695
  %v7191 = vpow.pop %v7190
  %v7192 = vmul.f32 %v7133, 1.442695
  %v7193 = vpow.pop %v7192
  %v7194 = vmul.f32 %v7134, 1.442695
  %v7195 = vpow.pop %v7194
  %v7196 = vmul.f32 %v7135, 1.442695
  %v7197 = vpow.pop %v7196
  %v7198 = vmul.f32 %v7136, 1.442695
  %v7199 = vpow.pop %v7198
  %v7200 = vmul.f32 %v7137, 1.442695
  %v7201 = vpow.pop %v7200
  %v7202 = vmul.f32 %v7138, 1.442695
  %v7203 = vpow.pop %v7202
  %v7204 = vmul.f32 %v7139, 1.442695
  %v7205 = vpow.pop %v7204
  %v7206 = vmul.f32 %v7140, 1.442695
  %v7207 = vpow.pop %v7206
  %v7208 = vmul.f32 %v7141, 1.442695
  %v7209 = vpow.pop %v7208
  %v7210 = vmul.f32 %v7142, 1.442695
  %v7211 = vpow.pop %v7210
  %v7212 = vmul.f32 %v7143, 1.442695
  %v7213 = vpow.pop %v7212
  %v7214 = vmul.f32 %v7144, 1.442695
  %v7215 = vpow.pop %v7214
  %v7216 = vmul.f32 %v7145, 1.442695
  %v7217 = vpow.pop %v7216
  %v7218 = vmul.f32 %v7146, 1.442695
  %v7219 = vpow.pop %v7218
  %v7220 = vmul.f32 %v7147, 1.442695
  %v7221 = vpow.pop %v7220
  %v7222 = vmul.f32 %v7148, 1.442695
  %v7223 = vpow.pop %v7222
  %v7224 = vmul.f32 %v7149, 1.442695
  %v7225 = vpow.pop %v7224
  %v7226 = vmul.f32 %v7150, 1.442695
  %v7227 = vpow.pop %v7226
  %v7228 = vmul.f32 %v7151, 1.442695
  %v7229 = vpow.pop %v7228
  %v7230 = vmul.f32 %v7152, 1.442695
  %v7231 = vpow.pop %v7230
  %v7232 = vmul.f32 %v7153, 1.442695
  %v7233 = vpow.pop %v7232
  %v7234 = vmul.f32 %v7154, 1.442695
  %v7235 = vpow.pop %v7234
  %v7236 = vmul.f32 %v7155, 1.442695
  %v7237 = vpow.pop %v7236
  %v7238 = vmul.f32 %v7156, 1.442695
  %v7239 = vpow.pop %v7238
  %v7240 = vmul.f32 %v7157, 1.442695
  %v7241 = vpow.pop %v7240
  %v7242 = vmul.f32 %v7158, 1.442695
  %v7243 = vpow.pop %v7242
  %v7244 = vmul.f32 %v7159, 1.442695
  %v7245 = vpow.pop %v7244
  %v7246 = vmul.f32 %v7160, 1.442695
  %v7247 = vpow.pop %v7246
  %v7248 = vmul.f32 %v7161, 1.442695
  %v7249 = vpow.pop %v7248
  %v7250 = vmul.f32 %v7030, %v7163
  %v7251 = vmul.f32 %v7031, %v7165
  %v7252 = vmul.f32 %v7032, %v7167
  %v7253 = vmul.f32 %v7033, %v7169
  %v7254 = vmul.f32 %v7034, %v7171
  %v7255 = vmul.f32 %v7035, %v7173
  %v7256 = vmul.f32 %v7036, %v7175
  %v7257 = vmul.f32 %v7037, %v7177
  %v7258 = vmul.f32 %v7038, %v7179
  %v7259 = vmul.f32 %v7039, %v7181
  %v7260 = vmul.f32 %v7040, %v7183
  %v7261 = vmul.f32 %v7041, %v7185
  %v7262 = vmul.f32 %v7042, %v7187
  %v7263 = vmul.f32 %v7043, %v7189
  %v7264 = vmul.f32 %v7044, %v7191
  %v7265 = vmul.f32 %v7045, %v7193
  %v7266 = vmul.f32 %v7046, %v7195
  %v7267 = vmul.f32 %v7047, %v7197
  %v7268 = vmul.f32 %v7048, %v7199
  %v7269 = vmul.f32 %v7049, %v7201
  %v7270 = vmul.f32 %v7050, %v7203
  %v7271 = vmul.f32 %v7051, %v7205
  %v7272 = vmul.f32 %v7052, %v7207
  %v7273 = vmul.f32 %v7053, %v7209
  %v7274 = vmul.f32 %v7054, %v7211
  %v7275 = vmul.f32 %v7055, %v7213
  %v7276 = vmul.f32 %v7056, %v7215
  %v7277 = vmul.f32 %v7057, %v7217
  %v7278 = vmul.f32 %v7058, %v7219
  %v7279 = vmul.f32 %v7059, %v7221
  %v7280 = vmul.f32 %v7060, %v7223
  %v7281 = vmul.f32 %v7061, %v7225
  %v7282 = vmul.f32 %v7062, %v7227
  %v7283 = vmul.f32 %v7063, %v7229
  %v7284 = vmul.f32 %v7064, %v7231
  %v7285 = vmul.f32 %v7065, %v7233
  %v7286 = vmul.f32 %v7066, %v7235
  %v7287 = vmul.f32 %v7067, %v7237
  %v7288 = vmul.f32 %v7068, %v7239
  %v7289 = vmul.f32 %v7069, %v7241
  %v7290 = vmul.f32 %v7070, %v7243
  %v7291 = vmul.f32 %v7071, %v7245
  %v7292 = vmul.f32 %v7072, %v7247
  %v7293 = vmul.f32 %v7073, %v7249
  %v7294 = vsub.f32 1.0, %v7250
  %v7295 = vsub.f32 1.0, %v7251
  %v7296 = vsub.f32 1.0, %v7252
  %v7297 = vsub.f32 1.0, %v7253
  %v7298 = vsub.f32 1.0, %v7254
  %v7299 = vsub.f32 1.0, %v7255
  %v7300 = vsub.f32 1.0, %v7256
  %v7301 = vsub.f32 1.0, %v7257
  %v7302 = vsub.f32 1.0, %v7258
  %v7303 = vsub.f32 1.0, %v7259
  %v7304 = vsub.f32 1.0, %v7260
  %v7305 = vsub.f32 1.0, %v7261
  %v7306 = vsub.f32 1.0, %v7262
  %v7307 = vsub.f32 1.0, %v7263
  %v7308 = vsub.f32 1.0, %v7264
  %v7309 = vsub.f32 1.0, %v7265
  %v7310 = vsub.f32 1.0, %v7266
  %v7311 = vsub.f32 1.0, %v7267
  %v7312 = vsub.f32 1.0, %v7268
  %v7313 = vsub.f32 1.0, %v7269
  %v7314 = vsub.f32 1.0, %v7270
  %v7315 = vsub.f32 1.0, %v7271
  %v7316 = vsub.f32 1.0, %v7272
  %v7317 = vsub.f32 1.0, %v7273
  %v7318 = vsub.f32 1.0, %v7274
  %v7319 = vsub.f32 1.0, %v7275
  %v7320 = vsub.f32 1.0, %v7276
  %v7321 = vsub.f32 1.0, %v7277
  %v7322 = vsub.f32 1.0, %v7278
  %v7323 = vsub.f32 1.0, %v7279
  %v7324 = vsub.f32 1.0, %v7280
  %v7325 = vsub.f32 1.0, %v7281
  %v7326 = vsub.f32 1.0, %v7282
  %v7327 = vsub.f32 1.0, %v7283
  %v7328 = vsub.f32 1.0, %v7284
  %v7329 = vsub.f32 1.0, %v7285
  %v7330 = vsub.f32 1.0, %v7286
  %v7331 = vsub.f32 1.0, %v7287
  %v7332 = vsub.f32 1.0, %v7288
  %v7333 = vsub.f32 1.0, %v7289
  %v7334 = vsub.f32 1.0, %v7290
  %v7335 = vsub.f32 1.0, %v7291
  %v7336 = vsub.f32 1.0, %v7292
  %v7337 = vsub.f32 1.0, %v7293
  %v7338 = vmul.f32 %v6414, %v7294
  %v7339 = vmul.f32 %v6415, %v7295
  %v7340 = vmul.f32 %v6416, %v7296
  %v7341 = vmul.f32 %v6417, %v7297
  %v7342 = vmul.f32 %v6418, %v7298
  %v7343 = vmul.f32 %v6419, %v7299
  %v7344 = vmul.f32 %v6420, %v7300
  %v7345 = vmul.f32 %v6421, %v7301
  %v7346 = vmul.f32 %v6422, %v7302
  %v7347 = vmul.f32 %v6423, %v7303
  %v7348 = vmul.f32 %v6424, %v7304
  %v7349 = vmul.f32 %v6425, %v7305
  %v7350 = vmul.f32 %v6426, %v7306
  %v7351 = vmul.f32 %v6427, %v7307
  %v7352 = vmul.f32 %v6428, %v7308
  %v7353 = vmul.f32 %v6429, %v7309
  %v7354 = vmul.f32 %v6430, %v7310
  %v7355 = vmul.f32 %v6431, %v7311
  %v7356 = vmul.f32 %v6432, %v7312
  %v7357 = vmul.f32 %v6433, %v7313
  %v7358 = vmul.f32 %v6434, %v7314
  %v7359 = vmul.f32 %v6435, %v7315
  %v7360 = vmul.f32 %v6436, %v7316
  %v7361 = vmul.f32 %v6437, %v7317
  %v7362 = vmul.f32 %v6438, %v7318
  %v7363 = vmul.f32 %v6439, %v7319
  %v7364 = vmul.f32 %v6440, %v7320
  %v7365 = vmul.f32 %v6441, %v7321
  %v7366 = vmul.f32 %v6442, %v7322
  %v7367 = vmul.f32 %v6443, %v7323
  %v7368 = vmul.f32 %v6444, %v7324
  %v7369 = vmul.f32 %v6445, %v7325
  %v7370 = vmul.f32 %v6446, %v7326
  %v7371 = vmul.f32 %v6447, %v7327
  %v7372 = vmul.f32 %v6448, %v7328
  %v7373 = vmul.f32 %v6449, %v7329
  %v7374 = vmul.f32 %v6450, %v7330
  %v7375 = vmul.f32 %v6451, %v7331
  %v7376 = vmul.f32 %v6452, %v7332
  %v7377 = vmul.f32 %v6453, %v7333
  %v7378 = vmul.f32 %v6454, %v7334
  %v7379 = vmul.f32 %v6455, %v7335
  %v7380 = vmul.f32 %v6456, %v7336
  %v7381 = vmul.f32 %v6457, %v7337
  %v7382 = vadd.f32 %v7338, 1.0
  %v7383 = vadd.f32 %v7339, 1.0
  %v7384 = vadd.f32 %v7340, 1.0
  %v7385 = vadd.f32 %v7341, 1.0
  %v7386 = vadd.f32 %v7342, 1.0
  %v7387 = vadd.f32 %v7343, 1.0
  %v7388 = vadd.f32 %v7344, 1.0
  %v7389 = vadd.f32 %v7345, 1.0
  %v7390 = vadd.f32 %v7346, 1.0
  %v7391 = vadd.f32 %v7347, 1.0
  %v7392 = vadd.f32 %v7348, 1.0
  %v7393 = vadd.f32 %v7349, 1.0
  %v7394 = vadd.f32 %v7350, 1.0
  %v7395 = vadd.f32 %v7351, 1.0
  %v7396 = vadd.f32 %v7352, 1.0
  %v7397 = vadd.f32 %v7353, 1.0
  %v7398 = vadd.f32 %v7354, 1.0
  %v7399 = vadd.f32 %v7355, 1.0
  %v7400 = vadd.f32 %v7356, 1.0
  %v7401 = vadd.f32 %v7357, 1.0
  %v7402 = vadd.f32 %v7358, 1.0
  %v7403 = vadd.f32 %v7359, 1.0
  %v7404 = vadd.f32 %v7360, 1.0
  %v7405 = vadd.f32 %v7361, 1.0
  %v7406 = vadd.f32 %v7362, 1.0
  %v7407 = vadd.f32 %v7363, 1.0
  %v7408 = vadd.f32 %v7364, 1.0
  %v7409 = vadd.f32 %v7365, 1.0
  %v7410 = vadd.f32 %v7366, 1.0
  %v7411 = vadd.f32 %v7367, 1.0
  %v7412 = vadd.f32 %v7368, 1.0
  %v7413 = vadd.f32 %v7369, 1.0
  %v7414 = vadd.f32 %v7370, 1.0
  %v7415 = vadd.f32 %v7371, 1.0
  %v7416 = vadd.f32 %v7372, 1.0
  %v7417 = vadd.f32 %v7373, 1.0
  %v7418 = vadd.f32 %v7374, 1.0
  %v7419 = vadd.f32 %v7375, 1.0
  %v7420 = vadd.f32 %v7376, 1.0
  %v7421 = vadd.f32 %v7377, 1.0
  %v7422 = vadd.f32 %v7378, 1.0
  %v7423 = vadd.f32 %v7379, 1.0
  %v7424 = vadd.f32 %v7380, 1.0
  %v7425 = vadd.f32 %v7381, 1.0
  %v7426 = vmul.f32 %v6282, %v7382
  %v7427 = vmul.f32 %v6283, %v7383
  %v7428 = vmul.f32 %v6284, %v7384
  %v7429 = vmul.f32 %v6285, %v7385
  %v7430 = vmul.f32 %v6286, %v7386
  %v7431 = vmul.f32 %v6287, %v7387
  %v7432 = vmul.f32 %v6288, %v7388
  %v7433 = vmul.f32 %v6289, %v7389
  %v7434 = vmul.f32 %v6290, %v7390
  %v7435 = vmul.f32 %v6291, %v7391
  %v7436 = vmul.f32 %v6292, %v7392
  %v7437 = vmul.f32 %v6293, %v7393
  %v7438 = vmul.f32 %v6294, %v7394
  %v7439 = vmul.f32 %v6295, %v7395
  %v7440 = vmul.f32 %v6296, %v7396
  %v7441 = vmul.f32 %v6297, %v7397
  %v7442 = vmul.f32 %v6298, %v7398
  %v7443 = vmul.f32 %v6299, %v7399
  %v7444 = vmul.f32 %v6300, %v7400
  %v7445 = vmul.f32 %v6301, %v7401
  %v7446 = vmul.f32 %v6302, %v7402
  %v7447 = vmul.f32 %v6303, %v7403
  %v7448 = vmul.f32 %v6304, %v7404
  %v7449 = vmul.f32 %v6305, %v7405
  %v7450 = vmul.f32 %v6306, %v7406
  %v7451 = vmul.f32 %v6307, %v7407
  %v7452 = vmul.f32 %v6308, %v7408
  %v7453 = vmul.f32 %v6309, %v7409
  %v7454 = vmul.f32 %v6310, %v7410
  %v7455 = vmul.f32 %v6311, %v7411
  %v7456 = vmul.f32 %v6312, %v7412
  %v7457 = vmul.f32 %v6313, %v7413
  %v7458 = vmul.f32 %v6314, %v7414
  %v7459 = vmul.f32 %v6315, %v7415
  %v7460 = vmul.f32 %v6316, %v7416
  %v7461 = vmul.f32 %v6317, %v7417
  %v7462 = vmul.f32 %v6318, %v7418
  %v7463 = vmul.f32 %v6319, %v7419
  %v7464 = vmul.f32 %v6320, %v7420
  %v7465 = vmul.f32 %v6321, %v7421
  %v7466 = vmul.f32 %v6322, %v7422
  %v7467 = vmul.f32 %v6323, %v7423
  %v7468 = vmul.f32 %v6324, %v7424
  %v7469 = vmul.f32 %v6325, %v7425
  %7470 = vst [vmem:[%s8] sm:$0xff] %v7426
  %7471 = vst [vmem:[%s8 + $0x8] sm:$0xff] %v7427
  %7472 = vst [vmem:[%s8 + $0x10] sm:$0xff] %v7428
  %7473 = vst [vmem:[%s8 + $0x18] sm:$0xff] %v7429
  %7474 = vst [vmem:[%s8 + $0x20] sm:$0xff] %v7430
  %7475 = vst [vmem:[%s8 + $0x28] sm:$0xff] %v7431
  %7476 = vst [vmem:[%s8 + $0x30] sm:$0xff] %v7432
  %7477 = vst [vmem:[%s8 + $0x38] sm:$0xff] %v7433
  %7478 = vst [vmem:[%s8 + $0x40] sm:$0xff] %v7434
  %7479 = vst [vmem:[%s8 + $0x48] sm:$0xff] %v7435
  %7480 = vst [vmem:[%s8 + $0x50] sm:$0xff] %v7436
  %7481 = vst [vmem:[%s8 + $0x58] sm:$0xff] %v7437
  %7482 = vst [vmem:[%s8 + $0x60] sm:$0xff] %v7438
  %7483 = vst [vmem:[%s8 + $0x68] sm:$0xff] %v7439
  %7484 = vst [vmem:[%s8 + $0x70] sm:$0xff] %v7440
  %7485 = vst [vmem:[%s8 + $0x78] sm:$0xff] %v7441
  %7486 = vst [vmem:[%s8 + $0x80] sm:$0xff] %v7442
  %7487 = vst [vmem:[%s8 + $0x88] sm:$0xff] %v7443
  %7488 = vst [vmem:[%s8 + $0x90] sm:$0xff] %v7444
  %7489 = vst [vmem:[%s8 + $0x98] sm:$0xff] %v7445
  %7490 = vst [vmem:[%s8 + $0xa0] sm:$0xff] %v7446
  %7491 = vst [vmem:[%s8 + $0xa8] sm:$0xff] %v7447
  %7492 = vst [vmem:[%s8 + $0xb0] sm:$0xf] %v7448
  %7493 = vst [vmem:[%s8 + $0xb8] sm:$0xf] %v7449
  %7494 = vst [vmem:[%s8 + $0xc0] sm:$0xf] %v7450
  %7495 = vst [vmem:[%s8 + $0xc8] sm:$0xf] %v7451
  %7496 = vst [vmem:[%s8 + $0xd0] sm:$0xf] %v7452
  %7497 = vst [vmem:[%s8 + $0xd8] sm:$0xf] %v7453
  %7498 = vst [vmem:[%s8 + $0xe0] sm:$0xf] %v7454
  %7499 = vst [vmem:[%s8 + $0xe8] sm:$0xf] %v7455
  %7500 = vst [vmem:[%s8 + $0xf0] sm:$0xf] %v7456
  %7501 = vst [vmem:[%s8 + $0xf8] sm:$0xf] %v7457
  %7502 = vst [vmem:[%s8 + $0x100] sm:$0xf] %v7458
  %7503 = vst [vmem:[%s8 + $0x108] sm:$0xf] %v7459
  %7504 = vst [vmem:[%s8 + $0x110] sm:$0xf] %v7460
  %7505 = vst [vmem:[%s8 + $0x118] sm:$0xf] %v7461
  %7506 = vst [vmem:[%s8 + $0x120] sm:$0xf] %v7462
  %7507 = vst [vmem:[%s8 + $0x128] sm:$0xf] %v7463
  %7508 = vst [vmem:[%s8 + $0x130] sm:$0xf] %v7464
  %7509 = vst [vmem:[%s8 + $0x138] sm:$0xf] %v7465
  %7510 = vst [vmem:[%s8 + $0x140] sm:$0xf] %v7466
  %7511 = vst [vmem:[%s8 + $0x148] sm:$0xf] %v7467
  %7512 = vst [vmem:[%s8 + $0x150] sm:$0xf] %v7468
  %7513 = vst [vmem:[%s8 + $0x158] sm:$0xf] %v7469
  // Predicated region
  $region34: #{cnn_reduce.1} parent=0 // pred_check
    _
  $region35: #{cnn_reduce.1} parent=0 // pred_check_branch
    %7515 = sbr.rel (0) target = $region37
  $region36: #{cnn_reduce.1} parent=0 // pred_region
    _
  $region37: #{cnn_reduce.1} parent=0 // pred_fallthru
    _
  // Predicated region
  $region38: #{cnn_reduce.1} parent=0 // pred_check
    _
  $region39: #{cnn_reduce.1} parent=0 // pred_check_branch
    %7517 = sbr.rel (0) target = $region41
  $region40: #{cnn_reduce.1} parent=0 // pred_region
    _
  $region41: #{cnn_reduce.1} parent=0 // pred_fallthru
    _

</llo_original>
